<compile_context>
chip_gen: v5e
topology: v5e:2x2
jax: 0.10.0
libtpu: 0.0.40
codegen_flags: <defaults>
</compile_context>

<pallas_src>
import functools

import jax
import jax.numpy as jnp
from jax import lax
from jax.experimental import pallas as pl
from jax.experimental.pallas import tpu as pltpu


# (Cin, Cout, K, padding) per layer, matching the PyTorch __init__.
_LAYER_SPECS = [
    (2, 38, 1, 0),   # conv1
    (38, 29, 5, 2),  # conv2
    (29, 23, 1, 0),  # conv3
    (23, 2, 1, 0),   # conv4  (followed by abs)
    (2, 37, 2, 0),   # conv5  (valid 2x2 -> spatial shrinks by 1)
    (37, 4, 1, 0),   # conv6
    (4, 5, 1, 0),    # conv7
    (5, 4, 1, 0),    # conv8
    (4, 3, 1, 0),    # conv9  (no activation after)
]


def _gelu(v):
    # v*0.5 * (erf(v/sqrt(2)) + 1) -- exact torch decomposition.
    return (v * 0.5) * (lax.erf(v * 0.7071067811865476) + 1.0)


def _round_up(v, m):
    return ((v + m - 1) // m) * m


def _fused_kernel(x_ref,
                  w1, b1, w2, b2, w3, b3, w4, b4, w5, b5,
                  w6, b6, w7, b7, w8, b8, w9, b9,
                  o_ref,
                  rp_ref, c5_ref,
                  *, h, wd):
    """Whole 9-layer network for one batch element, channel-major in VMEM.

    x_ref:   (1, 2, H*W)           channel-major input tile
    w (1x1): (Cout, Cin)           matrices
    w2:      (25, 29, 38)          one (Cout,Cin) block per 5x5 tap
    w5:      (4, 37, 2)            one (Cout,Cin) block per 2x2 tap
    b*:      (Cout, 1)             bias columns (broadcast along lanes)
    o_ref:   (1, 3, H*W)           lane-dense output (cropped in wrapper)
    rp_ref:  (38, g + H*W + g)     conv2 zero-guarded line buffer, g = 128-pad
    c5_ref:  (2, H*W + 128)        conv5 zero-tailed line buffer
    """
    f32 = jnp.float32
    hw = h * wd
    g = _round_up(2 * wd + 2, 128)        # lane-aligned guard width
    l2 = g + hw + g                       # rp_ref lane length

    x = x_ref[0]                          # (2, hw)

    # ---- conv1: 1x1, 2 -> 38, + GELU --------------------------------------
    a = _gelu(jnp.dot(w1[...], x, preferred_element_type=f32) + b1[...])

    # ---- conv2: 5x5, pad=2, 38 -> 29, + GELU -------------------------------
    # Zero ONLY the aligned guard tiles (interior is fully overwritten below).
    rp_ref[:, 0:g] = jnp.zeros((38, g), f32)
    rp_ref[:, g + hw:l2] = jnp.zeros((38, l2 - g - hw), f32)
    rp_ref[:, g:g + hw] = a               # 128-aligned dense store

    # Column-validity masks (row padding is supplied by the zero guards).
    lane = lax.broadcasted_iota(jnp.int32, (1, hw), 1)
    col = lane % wd
    col_ok = [(col + (j - 2) >= 0) & (col + (j - 2) < wd) for j in range(5)]

    # 25 accumulating tap matmuls (no im2col scatter, no column buffer).
    # Python unroll is safe here: channel-major keeps each body ~26 live vregs.
    acc = jnp.zeros((29, hw), f32)
    for i in range(5):
        for j in range(5):
            start = g + (i - 2) * wd + (j - 2)
            tap = rp_ref[:, start:start + hw]            # (38, hw)
            if j != 2:
                tap = jnp.where(col_ok[j], tap, 0.0)
            acc = acc + jnp.dot(w2[i * 5 + j], tap,
                                preferred_element_type=f32)
    a = _gelu(acc + b2[...])

    # ---- conv3: 1x1, 29 -> 23, + GELU --------------------------------------
    a = _gelu(jnp.dot(w3[...], a, preferred_element_type=f32) + b3[...])

    # ---- conv4: 1x1, 23 -> 2, + GELU, + abs --------------------------------
    a = jnp.abs(_gelu(jnp.dot(w4[...], a, preferred_element_type=f32)
                      + b4[...]))

    # ---- conv5: 2x2 valid, 2 -> 37, + GELU ----------------------------------
    # Evaluate on the full HxW grid; lanes with r==H-1 or c==W-1 are garbage
    # (but finite, thanks to the zeroed tail) and are cropped by the wrapper.
    c5_len = hw + 128
    c5_ref[:, 0:hw] = a
    c5_ref[:, hw:c5_len] = jnp.zeros((2, 128), f32)
    acc5 = jnp.zeros((37, hw), f32)
    for i in range(2):
        for j in range(2):
            start = i * wd + j
            acc5 = acc5 + jnp.dot(w5[i * 2 + j], c5_ref[:, start:start + hw],
                                  preferred_element_type=f32)
    a = _gelu(acc5 + b5[...])

    # ---- conv6..conv8: 1x1 + GELU -------------------------------------------
    a = _gelu(jnp.dot(w6[...], a, preferred_element_type=f32) + b6[...])
    a = _gelu(jnp.dot(w7[...], a, preferred_element_type=f32) + b7[...])
    a = _gelu(jnp.dot(w8[...], a, preferred_element_type=f32) + b8[...])

    # ---- conv9: 1x1, 4 -> 3, no activation ----------------------------------
    a = jnp.dot(w9[...], a, preferred_element_type=f32) + b9[...]

    o_ref[0] = a                           # (3, hw) lane-dense store


def _pack_params(params):
    """Channel-major packing:
         1x1 conv -> (Cout, Cin) matrix
         KxK conv -> (K*K, Cout, Cin): one aligned (Cout,Cin) block per tap
         bias     -> (Cout, 1) column (broadcasts along the pixel/lane axis)
    """
    flat = []
    for (w, b), (cin, cout, k, _pad) in zip(params, _LAYER_SPECS):
        if k == 1:
            flat.append(jnp.transpose(w.reshape(cin, cout)))
        else:
            flat.append(jnp.transpose(w.reshape(k * k, cin, cout), (0, 2, 1)))
        flat.append(b.reshape(cout, 1))
    return flat


@jax.jit
def model_forward(x_nchw, params):
    """x_nchw: (N, 2, H, W) f32 -> (N, 3, H-1, W-1) f32 (same as the module)."""
    n, cin, h, wd = x_nchw.shape
    assert cin == 2
    ho, wo = h - 1, wd - 1
    hw = h * wd
    g = _round_up(2 * wd + 2, 128)

    x = x_nchw.reshape(n, cin, hw)                 # free metadata reshape
    flat = _pack_params(params)

    kern = functools.partial(_fused_kernel, h=h, wd=wd)

    in_specs = [pl.BlockSpec((1, cin, hw), lambda i: (i, 0, 0))]
    for p in flat:
        if p.ndim == 3:
            in_specs.append(pl.BlockSpec(p.shape, lambda i: (0, 0, 0)))
        else:
            in_specs.append(pl.BlockSpec(p.shape, lambda i: (0, 0)))

    out = pl.pallas_call(
        kern,
        out_shape=jax.ShapeDtypeStruct((n, 3, hw), jnp.float32),
        grid=(n,),
        in_specs=in_specs,
        out_specs=pl.BlockSpec((1, 3, hw), lambda i: (i, 0, 0)),
        scratch_shapes=[
            pltpu.VMEM((38, 2 * g + hw), jnp.float32),   # conv2 line buffer
            pltpu.VMEM((2, hw + 128), jnp.float32),      # conv5 line buffer
        ],
        compiler_params=pltpu.CompilerParams(
            dimension_semantics=("parallel",)),
    )(x, *flat)

    # lane-dense (N,3,H*W) -> NCHW, crop the valid (H-1, W-1) window (free
    # reshape + one tiny slice; no transpose ops in the wrapper anymore).
    return out.reshape(n, 3, h, wd)[:, :, :ho, :wo]


def init_params(key):
    """Deterministic PyTorch-style init: U(-1/sqrt(fan_in), 1/sqrt(fan_in))."""
    params = []
    for cin, cout, k, _pad in _LAYER_SPECS:
        key, wk, bk = jax.random.split(key, 3)
        bound = 1.0 / float(cin * k * k) ** 0.5
        w = jax.random.uniform(wk, (k, k, cin, cout), jnp.float32, -bound, bound)
        b = jax.random.uniform(bk, (cout,), jnp.float32, -bound, bound)
        params.append((w, b))
    return params


def _ref_forward(x_nchw, params):
    """Pure-JAX reference (lax.conv) for correctness checking."""
    x = jnp.transpose(x_nchw, (0, 2, 3, 1))
    dn = ('NHWC', 'HWIO', 'NHWC')
    n_layers = len(_LAYER_SPECS)
    for idx, ((w, b), (_cin, _cout, _k, pad)) in enumerate(
            zip(params, _LAYER_SPECS)):
        y = lax.conv_general_dilated(
            x, w, (1, 1), [(pad, pad), (pad, pad)],
            dimension_numbers=dn, precision=lax.Precision.HIGHEST) + b
        if idx != n_layers - 1:
            y = (y * 0.5) * (lax.erf(y * 0.7071067811865476) + 1.0)
        if idx == 3:
            y = jnp.abs(y)
        x = y
    return jnp.transpose(x, (0, 3, 1, 2))


if __name__ == "__main__":
    key = jax.random.PRNGKey(0)
    pkey, xkey = jax.random.split(key)
    params = init_params(pkey)

    # Small input consistent with the module (Cin=2). NCHW like torch.
    x = jax.random.normal(xkey, (2, 2, 16, 16), jnp.float32)

    out = jax.block_until_ready(model_forward(x, params))
    ref = jax.block_until_ready(_ref_forward(x, params))

    assert out.shape == (2, 3, 15, 15), out.shape
    assert jnp.allclose(out, ref, atol=1e-4, rtol=1e-4), (
        float(jnp.max(jnp.abs(out - ref))))

    print("KERNEL_OK")
</pallas_src>

<mosaic_0001>
module attributes {stable_mosaic.version = 11 : i64} {
  func.func @_fused_kernel(%arg0: i32, %arg1: memref<1x2x256xf32, #tpu.memory_space<vmem>>, %arg2: memref<38x2xf32, #tpu.memory_space<vmem>>, %arg3: memref<38x1xf32, #tpu.memory_space<vmem>>, %arg4: memref<25x29x38xf32, #tpu.memory_space<vmem>>, %arg5: memref<29x1xf32, #tpu.memory_space<vmem>>, %arg6: memref<23x29xf32, #tpu.memory_space<vmem>>, %arg7: memref<23x1xf32, #tpu.memory_space<vmem>>, %arg8: memref<2x23xf32, #tpu.memory_space<vmem>>, %arg9: memref<2x1xf32, #tpu.memory_space<vmem>>, %arg10: memref<4x37x2xf32, #tpu.memory_space<vmem>>, %arg11: memref<37x1xf32, #tpu.memory_space<vmem>>, %arg12: memref<4x37xf32, #tpu.memory_space<vmem>>, %arg13: memref<4x1xf32, #tpu.memory_space<vmem>>, %arg14: memref<5x4xf32, #tpu.memory_space<vmem>>, %arg15: memref<5x1xf32, #tpu.memory_space<vmem>>, %arg16: memref<4x5xf32, #tpu.memory_space<vmem>>, %arg17: memref<4x1xf32, #tpu.memory_space<vmem>>, %arg18: memref<3x4xf32, #tpu.memory_space<vmem>>, %arg19: memref<3x1xf32, #tpu.memory_space<vmem>>, %arg20: memref<1x3x256xf32, #tpu.memory_space<vmem>>, %arg21: memref<38x512xf32, #tpu.memory_space<vmem>>, %arg22: memref<2x384xf32, #tpu.memory_space<vmem>>) attributes {dimension_semantics = [#tpu.dimension_semantics<parallel>], iteration_bounds = array<i64: 2>, scalar_prefetch = 0 : i64, scratch_operands = 2 : i64, tpu.core_type = #tpu.core_type<tc>, window_params = [{transform_indices = @transform_0, window_bounds = array<i64: 1, 2, 256>}, {pipeline_mode = #tpu.pipeline_mode<synchronous>, transform_indices = @transform_1, window_bounds = array<i64: 38, 2>}, {pipeline_mode = #tpu.pipeline_mode<synchronous>, transform_indices = @transform_2, window_bounds = array<i64: 38, 1>}, {pipeline_mode = #tpu.pipeline_mode<synchronous>, transform_indices = @transform_3, window_bounds = array<i64: 25, 29, 38>}, {pipeline_mode = #tpu.pipeline_mode<synchronous>, transform_indices = @transform_4, window_bounds = array<i64: 29, 1>}, {pipeline_mode = #tpu.pipeline_mode<synchronous>, transform_indices = @transform_5, window_bounds = array<i64: 23, 29>}, {pipeline_mode = #tpu.pipeline_mode<synchronous>, transform_indices = @transform_6, window_bounds = array<i64: 23, 1>}, {pipeline_mode = #tpu.pipeline_mode<synchronous>, transform_indices = @transform_7, window_bounds = array<i64: 2, 23>}, {pipeline_mode = #tpu.pipeline_mode<synchronous>, transform_indices = @transform_8, window_bounds = array<i64: 2, 1>}, {pipeline_mode = #tpu.pipeline_mode<synchronous>, transform_indices = @transform_9, window_bounds = array<i64: 4, 37, 2>}, {pipeline_mode = #tpu.pipeline_mode<synchronous>, transform_indices = @transform_10, window_bounds = array<i64: 37, 1>}, {pipeline_mode = #tpu.pipeline_mode<synchronous>, transform_indices = @transform_11, window_bounds = array<i64: 4, 37>}, {pipeline_mode = #tpu.pipeline_mode<synchronous>, transform_indices = @transform_12, window_bounds = array<i64: 4, 1>}, {pipeline_mode = #tpu.pipeline_mode<synchronous>, transform_indices = @transform_13, window_bounds = array<i64: 5, 4>}, {pipeline_mode = #tpu.pipeline_mode<synchronous>, transform_indices = @transform_14, window_bounds = array<i64: 5, 1>}, {pipeline_mode = #tpu.pipeline_mode<synchronous>, transform_indices = @transform_15, window_bounds = array<i64: 4, 5>}, {pipeline_mode = #tpu.pipeline_mode<synchronous>, transform_indices = @transform_16, window_bounds = array<i64: 4, 1>}, {pipeline_mode = #tpu.pipeline_mode<synchronous>, transform_indices = @transform_17, window_bounds = array<i64: 3, 4>}, {pipeline_mode = #tpu.pipeline_mode<synchronous>, transform_indices = @transform_18, window_bounds = array<i64: 3, 1>}, {transform_indices = @transform_19, window_bounds = array<i64: 1, 3, 256>}]} {
    %c0 = arith.constant 0 : index
    %c0_0 = arith.constant 0 : index
    %c0_1 = arith.constant 0 : index
    %0 = vector.load %arg1[%c0, %c0_0, %c0_1] : memref<1x2x256xf32, #tpu.memory_space<vmem>>, vector<1x2x256xf32>
    %1 = vector.shape_cast %0 : vector<1x2x256xf32> to vector<2x256xf32>
    %c0_2 = arith.constant 0 : index
    %c0_3 = arith.constant 0 : index
    %2 = vector.load %arg2[%c0_2, %c0_3] : memref<38x2xf32, #tpu.memory_space<vmem>>, vector<38x2xf32>
    %cst = arith.constant dense<0.000000e+00> : vector<38x256xf32>
    %3 = tpu.matmul %2, %1, %cst {dimension_numbers = #tpu.dot_dimension_numbers<[1], [0], [0], [1], [0, 0, 1, 1], [], []>} : vector<38x2xf32>, vector<2x256xf32>, vector<38x256xf32> -> vector<38x256xf32>
    %c0_4 = arith.constant 0 : index
    %c0_5 = arith.constant 0 : index
    %4 = vector.load %arg3[%c0_4, %c0_5] : memref<38x1xf32, #tpu.memory_space<vmem>>, vector<38x1xf32>
    %5 = vector.broadcast %4 : vector<38x1xf32> to vector<38x256xf32>
    %6 = arith.addf %3, %5 : vector<38x256xf32>
    %cst_6 = arith.constant 5.000000e-01 : f32
    %7 = vector.broadcast %cst_6 : f32 to vector<38x256xf32>
    %8 = arith.mulf %6, %7 : vector<38x256xf32>
    %cst_7 = arith.constant 0.707106769 : f32
    %9 = vector.broadcast %cst_7 : f32 to vector<38x256xf32>
    %10 = arith.mulf %6, %9 : vector<38x256xf32>
    %11 = math.erf %10 : vector<38x256xf32>
    %cst_8 = arith.constant 1.000000e+00 : f32
    %12 = vector.broadcast %cst_8 : f32 to vector<38x256xf32>
    %13 = arith.addf %11, %12 : vector<38x256xf32>
    %14 = arith.mulf %8, %13 : vector<38x256xf32>
    %cst_9 = arith.constant 0.000000e+00 : f32
    %15 = vector.broadcast %cst_9 : f32 to vector<38x128xf32>
    %c0_10 = arith.constant 0 : index
    %c0_11 = arith.constant 0 : index
    %16 = vector.load %arg21[%c0_10, %c0_11] : memref<38x512xf32, #tpu.memory_space<vmem>>, vector<38x128xf32>
    tpu.vector_store %arg21[%c0_10, %c0_11], %15 {strides = array<i32>} : memref<38x512xf32, #tpu.memory_space<vmem>>, vector<38x128xf32>,
    %cst_12 = arith.constant 0.000000e+00 : f32
    %17 = vector.broadcast %cst_12 : f32 to vector<38x128xf32>
    %c0_13 = arith.constant 0 : index
    %c384 = arith.constant 384 : index
    %18 = vector.load %arg21[%c0_13, %c384] : memref<38x512xf32, #tpu.memory_space<vmem>>, vector<38x128xf32>
    tpu.vector_store %arg21[%c0_13, %c384], %17 {strides = array<i32>} : memref<38x512xf32, #tpu.memory_space<vmem>>, vector<38x128xf32>,
    %c0_14 = arith.constant 0 : index
    %c128 = arith.constant 128 : index
    %19 = vector.load %arg21[%c0_14, %c128] : memref<38x512xf32, #tpu.memory_space<vmem>>, vector<38x256xf32>
    tpu.vector_store %arg21[%c0_14, %c128], %14 {strides = array<i32>} : memref<38x512xf32, #tpu.memory_space<vmem>>, vector<38x256xf32>,
    %20 = tpu.iota {dimensions = array<i32: 1>} : vector<1x256xi32>
    %c16_i32 = arith.constant 16 : i32
    %c0_i32 = arith.constant 0 : i32
    %21 = arith.cmpi eq, %c16_i32, %c0_i32 : i32
    %c1_i32 = arith.constant 1 : i32
    %22 = arith.select %21, %c1_i32, %c16_i32 : i32
    %23 = vector.broadcast %22 : i32 to vector<1x256xi32>
    %24 = arith.remsi %20, %23 : vector<1x256xi32>
    %c0_i32_15 = arith.constant 0 : i32
    %25 = vector.broadcast %c0_i32_15 : i32 to vector<1x256xi32>
    %26 = arith.cmpi ne, %24, %25 : vector<1x256xi32>
    %c0_i32_16 = arith.constant 0 : i32
    %27 = vector.broadcast %c0_i32_16 : i32 to vector<1x256xi32>
    %28 = arith.cmpi slt, %24, %27 : vector<1x256xi32>
    %c0_i32_17 = arith.constant 0 : i32
    %29 = arith.cmpi slt, %22, %c0_i32_17 : i32
    %30 = vector.broadcast %29 : i1 to vector<1x256xi1>
    %31 = vector.broadcast %30 : vector<1x256xi1> to vector<1x256xi1>
    %32 = arith.xori %28, %31 : vector<1x256xi1>
    %33 = arith.andi %32, %26 : vector<1x256xi1>
    %34 = vector.broadcast %22 : i32 to vector<1x256xi32>
    %35 = arith.addi %24, %34 : vector<1x256xi32>
    %36 = arith.select %33, %35, %24 : vector<1x256xi1>, vector<1x256xi32>
    %c-2_i32 = arith.constant -2 : i32
    %37 = vector.broadcast %c-2_i32 : i32 to vector<1x256xi32>
    %38 = arith.addi %36, %37 : vector<1x256xi32>
    %c0_i32_18 = arith.constant 0 : i32
    %39 = vector.broadcast %c0_i32_18 : i32 to vector<1x256xi32>
    %40 = arith.cmpi sge, %38, %39 : vector<1x256xi32>
    %c-2_i32_19 = arith.constant -2 : i32
    %41 = vector.broadcast %c-2_i32_19 : i32 to vector<1x256xi32>
    %42 = arith.addi %36, %41 : vector<1x256xi32>
    %c16_i32_20 = arith.constant 16 : i32
    %43 = vector.broadcast %c16_i32_20 : i32 to vector<1x256xi32>
    %44 = arith.cmpi slt, %42, %43 : vector<1x256xi32>
    %45 = arith.andi %40, %44 : vector<1x256xi1>
    %c-1_i32 = arith.constant -1 : i32
    %46 = vector.broadcast %c-1_i32 : i32 to vector<1x256xi32>
    %47 = arith.addi %36, %46 : vector<1x256xi32>
    %c0_i32_21 = arith.constant 0 : i32
    %48 = vector.broadcast %c0_i32_21 : i32 to vector<1x256xi32>
    %49 = arith.cmpi sge, %47, %48 : vector<1x256xi32>
    %c-1_i32_22 = arith.constant -1 : i32
    %50 = vector.broadcast %c-1_i32_22 : i32 to vector<1x256xi32>
    %51 = arith.addi %36, %50 : vector<1x256xi32>
    %c16_i32_23 = arith.constant 16 : i32
    %52 = vector.broadcast %c16_i32_23 : i32 to vector<1x256xi32>
    %53 = arith.cmpi slt, %51, %52 : vector<1x256xi32>
    %54 = arith.andi %49, %53 : vector<1x256xi1>
    %c1_i32_24 = arith.constant 1 : i32
    %55 = vector.broadcast %c1_i32_24 : i32 to vector<1x256xi32>
    %56 = arith.addi %36, %55 : vector<1x256xi32>
    %c0_i32_25 = arith.constant 0 : i32
    %57 = vector.broadcast %c0_i32_25 : i32 to vector<1x256xi32>
    %58 = arith.cmpi sge, %56, %57 : vector<1x256xi32>
    %c1_i32_26 = arith.constant 1 : i32
    %59 = vector.broadcast %c1_i32_26 : i32 to vector<1x256xi32>
    %60 = arith.addi %36, %59 : vector<1x256xi32>
    %c16_i32_27 = arith.constant 16 : i32
    %61 = vector.broadcast %c16_i32_27 : i32 to vector<1x256xi32>
    %62 = arith.cmpi slt, %60, %61 : vector<1x256xi32>
    %63 = arith.andi %58, %62 : vector<1x256xi1>
    %c2_i32 = arith.constant 2 : i32
    %64 = vector.broadcast %c2_i32 : i32 to vector<1x256xi32>
    %65 = arith.addi %36, %64 : vector<1x256xi32>
    %c0_i32_28 = arith.constant 0 : i32
    %66 = vector.broadcast %c0_i32_28 : i32 to vector<1x256xi32>
    %67 = arith.cmpi sge, %65, %66 : vector<1x256xi32>
    %c2_i32_29 = arith.constant 2 : i32
    %68 = vector.broadcast %c2_i32_29 : i32 to vector<1x256xi32>
    %69 = arith.addi %36, %68 : vector<1x256xi32>
    %c16_i32_30 = arith.constant 16 : i32
    %70 = vector.broadcast %c16_i32_30 : i32 to vector<1x256xi32>
    %71 = arith.cmpi slt, %69, %70 : vector<1x256xi32>
    %72 = arith.andi %67, %71 : vector<1x256xi1>
    %cst_31 = arith.constant 0.000000e+00 : f32
    %73 = vector.broadcast %cst_31 : f32 to vector<29x256xf32>
    %c0_32 = arith.constant 0 : index
    %c94 = arith.constant 94 : index
    %74 = vector.load %arg21[%c0_32, %c94] : memref<38x512xf32, #tpu.memory_space<vmem>>, vector<38x256xf32>
    %cst_33 = arith.constant 0.000000e+00 : f32
    %75 = vector.shape_cast %45 : vector<1x256xi1> to vector<1x256xi1>
    %76 = vector.broadcast %75 : vector<1x256xi1> to vector<38x256xi1>
    %77 = vector.broadcast %cst_33 : f32 to vector<38x256xf32>
    %78 = arith.select %76, %74, %77 : vector<38x256xi1>, vector<38x256xf32>
    %c0_34 = arith.constant 0 : index
    %c0_35 = arith.constant 0 : index
    %c0_36 = arith.constant 0 : index
    %79 = vector.load %arg4[%c0_34, %c0_35, %c0_36] : memref<25x29x38xf32, #tpu.memory_space<vmem>>, vector<1x29x38xf32>
    %80 = vector.shape_cast %79 : vector<1x29x38xf32> to vector<29x38xf32>
    %cst_37 = arith.constant dense<0.000000e+00> : vector<29x256xf32>
    %81 = tpu.matmul %80, %78, %cst_37 {dimension_numbers = #tpu.dot_dimension_numbers<[1], [0], [0], [1], [0, 0, 1, 1], [], []>} : vector<29x38xf32>, vector<38x256xf32>, vector<29x256xf32> -> vector<29x256xf32>
    %82 = arith.addf %73, %81 : vector<29x256xf32>
    %c0_38 = arith.constant 0 : index
    %c95 = arith.constant 95 : index
    %83 = vector.load %arg21[%c0_38, %c95] : memref<38x512xf32, #tpu.memory_space<vmem>>, vector<38x256xf32>
    %cst_39 = arith.constant 0.000000e+00 : f32
    %84 = vector.shape_cast %54 : vector<1x256xi1> to vector<1x256xi1>
    %85 = vector.broadcast %84 : vector<1x256xi1> to vector<38x256xi1>
    %86 = vector.broadcast %cst_39 : f32 to vector<38x256xf32>
    %87 = arith.select %85, %83, %86 : vector<38x256xi1>, vector<38x256xf32>
    %c1 = arith.constant 1 : index
    %c0_40 = arith.constant 0 : index
    %c0_41 = arith.constant 0 : index
    %88 = vector.load %arg4[%c1, %c0_40, %c0_41] : memref<25x29x38xf32, #tpu.memory_space<vmem>>, vector<1x29x38xf32>
    %89 = vector.shape_cast %88 : vector<1x29x38xf32> to vector<29x38xf32>
    %cst_42 = arith.constant dense<0.000000e+00> : vector<29x256xf32>
    %90 = tpu.matmul %89, %87, %cst_42 {dimension_numbers = #tpu.dot_dimension_numbers<[1], [0], [0], [1], [0, 0, 1, 1], [], []>} : vector<29x38xf32>, vector<38x256xf32>, vector<29x256xf32> -> vector<29x256xf32>
    %91 = arith.addf %82, %90 : vector<29x256xf32>
    %c0_43 = arith.constant 0 : index
    %c96 = arith.constant 96 : index
    %92 = vector.load %arg21[%c0_43, %c96] : memref<38x512xf32, #tpu.memory_space<vmem>>, vector<38x256xf32>
    %c2 = arith.constant 2 : index
    %c0_44 = arith.constant 0 : index
    %c0_45 = arith.constant 0 : index
    %93 = vector.load %arg4[%c2, %c0_44, %c0_45] : memref<25x29x38xf32, #tpu.memory_space<vmem>>, vector<1x29x38xf32>
    %94 = vector.shape_cast %93 : vector<1x29x38xf32> to vector<29x38xf32>
    %cst_46 = arith.constant dense<0.000000e+00> : vector<29x256xf32>
    %95 = tpu.matmul %94, %92, %cst_46 {dimension_numbers = #tpu.dot_dimension_numbers<[1], [0], [0], [1], [0, 0, 1, 1], [], []>} : vector<29x38xf32>, vector<38x256xf32>, vector<29x256xf32> -> vector<29x256xf32>
    %96 = arith.addf %91, %95 : vector<29x256xf32>
    %c0_47 = arith.constant 0 : index
    %c97 = arith.constant 97 : index
    %97 = vector.load %arg21[%c0_47, %c97] : memref<38x512xf32, #tpu.memory_space<vmem>>, vector<38x256xf32>
    %cst_48 = arith.constant 0.000000e+00 : f32
    %98 = vector.shape_cast %63 : vector<1x256xi1> to vector<1x256xi1>
    %99 = vector.broadcast %98 : vector<1x256xi1> to vector<38x256xi1>
    %100 = vector.broadcast %cst_48 : f32 to vector<38x256xf32>
    %101 = arith.select %99, %97, %100 : vector<38x256xi1>, vector<38x256xf32>
    %c3 = arith.constant 3 : index
    %c0_49 = arith.constant 0 : index
    %c0_50 = arith.constant 0 : index
    %102 = vector.load %arg4[%c3, %c0_49, %c0_50] : memref<25x29x38xf32, #tpu.memory_space<vmem>>, vector<1x29x38xf32>
    %103 = vector.shape_cast %102 : vector<1x29x38xf32> to vector<29x38xf32>
    %cst_51 = arith.constant dense<0.000000e+00> : vector<29x256xf32>
    %104 = tpu.matmul %103, %101, %cst_51 {dimension_numbers = #tpu.dot_dimension_numbers<[1], [0], [0], [1], [0, 0, 1, 1], [], []>} : vector<29x38xf32>, vector<38x256xf32>, vector<29x256xf32> -> vector<29x256xf32>
    %105 = arith.addf %96, %104 : vector<29x256xf32>
    %c0_52 = arith.constant 0 : index
    %c98 = arith.constant 98 : index
    %106 = vector.load %arg21[%c0_52, %c98] : memref<38x512xf32, #tpu.memory_space<vmem>>, vector<38x256xf32>
    %cst_53 = arith.constant 0.000000e+00 : f32
    %107 = vector.shape_cast %72 : vector<1x256xi1> to vector<1x256xi1>
    %108 = vector.broadcast %107 : vector<1x256xi1> to vector<38x256xi1>
    %109 = vector.broadcast %cst_53 : f32 to vector<38x256xf32>
    %110 = arith.select %108, %106, %109 : vector<38x256xi1>, vector<38x256xf32>
    %c4 = arith.constant 4 : index
    %c0_54 = arith.constant 0 : index
    %c0_55 = arith.constant 0 : index
    %111 = vector.load %arg4[%c4, %c0_54, %c0_55] : memref<25x29x38xf32, #tpu.memory_space<vmem>>, vector<1x29x38xf32>
    %112 = vector.shape_cast %111 : vector<1x29x38xf32> to vector<29x38xf32>
    %cst_56 = arith.constant dense<0.000000e+00> : vector<29x256xf32>
    %113 = tpu.matmul %112, %110, %cst_56 {dimension_numbers = #tpu.dot_dimension_numbers<[1], [0], [0], [1], [0, 0, 1, 1], [], []>} : vector<29x38xf32>, vector<38x256xf32>, vector<29x256xf32> -> vector<29x256xf32>
    %114 = arith.addf %105, %113 : vector<29x256xf32>
    %c0_57 = arith.constant 0 : index
    %c110 = arith.constant 110 : index
    %115 = vector.load %arg21[%c0_57, %c110] : memref<38x512xf32, #tpu.memory_space<vmem>>, vector<38x256xf32>
    %cst_58 = arith.constant 0.000000e+00 : f32
    %116 = vector.shape_cast %45 : vector<1x256xi1> to vector<1x256xi1>
    %117 = vector.broadcast %116 : vector<1x256xi1> to vector<38x256xi1>
    %118 = vector.broadcast %cst_58 : f32 to vector<38x256xf32>
    %119 = arith.select %117, %115, %118 : vector<38x256xi1>, vector<38x256xf32>
    %c5 = arith.constant 5 : index
    %c0_59 = arith.constant 0 : index
    %c0_60 = arith.constant 0 : index
    %120 = vector.load %arg4[%c5, %c0_59, %c0_60] : memref<25x29x38xf32, #tpu.memory_space<vmem>>, vector<1x29x38xf32>
    %121 = vector.shape_cast %120 : vector<1x29x38xf32> to vector<29x38xf32>
    %cst_61 = arith.constant dense<0.000000e+00> : vector<29x256xf32>
    %122 = tpu.matmul %121, %119, %cst_61 {dimension_numbers = #tpu.dot_dimension_numbers<[1], [0], [0], [1], [0, 0, 1, 1], [], []>} : vector<29x38xf32>, vector<38x256xf32>, vector<29x256xf32> -> vector<29x256xf32>
    %123 = arith.addf %114, %122 : vector<29x256xf32>
    %c0_62 = arith.constant 0 : index
    %c111 = arith.constant 111 : index
    %124 = vector.load %arg21[%c0_62, %c111] : memref<38x512xf32, #tpu.memory_space<vmem>>, vector<38x256xf32>
    %cst_63 = arith.constant 0.000000e+00 : f32
    %125 = vector.shape_cast %54 : vector<1x256xi1> to vector<1x256xi1>
    %126 = vector.broadcast %125 : vector<1x256xi1> to vector<38x256xi1>
    %127 = vector.broadcast %cst_63 : f32 to vector<38x256xf32>
    %128 = arith.select %126, %124, %127 : vector<38x256xi1>, vector<38x256xf32>
    %c6 = arith.constant 6 : index
    %c0_64 = arith.constant 0 : index
    %c0_65 = arith.constant 0 : index
    %129 = vector.load %arg4[%c6, %c0_64, %c0_65] : memref<25x29x38xf32, #tpu.memory_space<vmem>>, vector<1x29x38xf32>
    %130 = vector.shape_cast %129 : vector<1x29x38xf32> to vector<29x38xf32>
    %cst_66 = arith.constant dense<0.000000e+00> : vector<29x256xf32>
    %131 = tpu.matmul %130, %128, %cst_66 {dimension_numbers = #tpu.dot_dimension_numbers<[1], [0], [0], [1], [0, 0, 1, 1], [], []>} : vector<29x38xf32>, vector<38x256xf32>, vector<29x256xf32> -> vector<29x256xf32>
    %132 = arith.addf %123, %131 : vector<29x256xf32>
    %c0_67 = arith.constant 0 : index
    %c112 = arith.constant 112 : index
    %133 = vector.load %arg21[%c0_67, %c112] : memref<38x512xf32, #tpu.memory_space<vmem>>, vector<38x256xf32>
    %c7 = arith.constant 7 : index
    %c0_68 = arith.constant 0 : index
    %c0_69 = arith.constant 0 : index
    %134 = vector.load %arg4[%c7, %c0_68, %c0_69] : memref<25x29x38xf32, #tpu.memory_space<vmem>>, vector<1x29x38xf32>
    %135 = vector.shape_cast %134 : vector<1x29x38xf32> to vector<29x38xf32>
    %cst_70 = arith.constant dense<0.000000e+00> : vector<29x256xf32>
    %136 = tpu.matmul %135, %133, %cst_70 {dimension_numbers = #tpu.dot_dimension_numbers<[1], [0], [0], [1], [0, 0, 1, 1], [], []>} : vector<29x38xf32>, vector<38x256xf32>, vector<29x256xf32> -> vector<29x256xf32>
    %137 = arith.addf %132, %136 : vector<29x256xf32>
    %c0_71 = arith.constant 0 : index
    %c113 = arith.constant 113 : index
    %138 = vector.load %arg21[%c0_71, %c113] : memref<38x512xf32, #tpu.memory_space<vmem>>, vector<38x256xf32>
    %cst_72 = arith.constant 0.000000e+00 : f32
    %139 = vector.shape_cast %63 : vector<1x256xi1> to vector<1x256xi1>
    %140 = vector.broadcast %139 : vector<1x256xi1> to vector<38x256xi1>
    %141 = vector.broadcast %cst_72 : f32 to vector<38x256xf32>
    %142 = arith.select %140, %138, %141 : vector<38x256xi1>, vector<38x256xf32>
    %c8 = arith.constant 8 : index
    %c0_73 = arith.constant 0 : index
    %c0_74 = arith.constant 0 : index
    %143 = vector.load %arg4[%c8, %c0_73, %c0_74] : memref<25x29x38xf32, #tpu.memory_space<vmem>>, vector<1x29x38xf32>
    %144 = vector.shape_cast %143 : vector<1x29x38xf32> to vector<29x38xf32>
    %cst_75 = arith.constant dense<0.000000e+00> : vector<29x256xf32>
    %145 = tpu.matmul %144, %142, %cst_75 {dimension_numbers = #tpu.dot_dimension_numbers<[1], [0], [0], [1], [0, 0, 1, 1], [], []>} : vector<29x38xf32>, vector<38x256xf32>, vector<29x256xf32> -> vector<29x256xf32>
    %146 = arith.addf %137, %145 : vector<29x256xf32>
    %c0_76 = arith.constant 0 : index
    %c114 = arith.constant 114 : index
    %147 = vector.load %arg21[%c0_76, %c114] : memref<38x512xf32, #tpu.memory_space<vmem>>, vector<38x256xf32>
    %cst_77 = arith.constant 0.000000e+00 : f32
    %148 = vector.shape_cast %72 : vector<1x256xi1> to vector<1x256xi1>
    %149 = vector.broadcast %148 : vector<1x256xi1> to vector<38x256xi1>
    %150 = vector.broadcast %cst_77 : f32 to vector<38x256xf32>
    %151 = arith.select %149, %147, %150 : vector<38x256xi1>, vector<38x256xf32>
    %c9 = arith.constant 9 : index
    %c0_78 = arith.constant 0 : index
    %c0_79 = arith.constant 0 : index
    %152 = vector.load %arg4[%c9, %c0_78, %c0_79] : memref<25x29x38xf32, #tpu.memory_space<vmem>>, vector<1x29x38xf32>
    %153 = vector.shape_cast %152 : vector<1x29x38xf32> to vector<29x38xf32>
    %cst_80 = arith.constant dense<0.000000e+00> : vector<29x256xf32>
    %154 = tpu.matmul %153, %151, %cst_80 {dimension_numbers = #tpu.dot_dimension_numbers<[1], [0], [0], [1], [0, 0, 1, 1], [], []>} : vector<29x38xf32>, vector<38x256xf32>, vector<29x256xf32> -> vector<29x256xf32>
    %155 = arith.addf %146, %154 : vector<29x256xf32>
    %c0_81 = arith.constant 0 : index
    %c126 = arith.constant 126 : index
    %156 = vector.load %arg21[%c0_81, %c126] : memref<38x512xf32, #tpu.memory_space<vmem>>, vector<38x256xf32>
    %cst_82 = arith.constant 0.000000e+00 : f32
    %157 = vector.shape_cast %45 : vector<1x256xi1> to vector<1x256xi1>
    %158 = vector.broadcast %157 : vector<1x256xi1> to vector<38x256xi1>
    %159 = vector.broadcast %cst_82 : f32 to vector<38x256xf32>
    %160 = arith.select %158, %156, %159 : vector<38x256xi1>, vector<38x256xf32>
    %c10 = arith.constant 10 : index
    %c0_83 = arith.constant 0 : index
    %c0_84 = arith.constant 0 : index
    %161 = vector.load %arg4[%c10, %c0_83, %c0_84] : memref<25x29x38xf32, #tpu.memory_space<vmem>>, vector<1x29x38xf32>
    %162 = vector.shape_cast %161 : vector<1x29x38xf32> to vector<29x38xf32>
    %cst_85 = arith.constant dense<0.000000e+00> : vector<29x256xf32>
    %163 = tpu.matmul %162, %160, %cst_85 {dimension_numbers = #tpu.dot_dimension_numbers<[1], [0], [0], [1], [0, 0, 1, 1], [], []>} : vector<29x38xf32>, vector<38x256xf32>, vector<29x256xf32> -> vector<29x256xf32>
    %164 = arith.addf %155, %163 : vector<29x256xf32>
    %c0_86 = arith.constant 0 : index
    %c127 = arith.constant 127 : index
    %165 = vector.load %arg21[%c0_86, %c127] : memref<38x512xf32, #tpu.memory_space<vmem>>, vector<38x256xf32>
    %cst_87 = arith.constant 0.000000e+00 : f32
    %166 = vector.shape_cast %54 : vector<1x256xi1> to vector<1x256xi1>
    %167 = vector.broadcast %166 : vector<1x256xi1> to vector<38x256xi1>
    %168 = vector.broadcast %cst_87 : f32 to vector<38x256xf32>
    %169 = arith.select %167, %165, %168 : vector<38x256xi1>, vector<38x256xf32>
    %c11 = arith.constant 11 : index
    %c0_88 = arith.constant 0 : index
    %c0_89 = arith.constant 0 : index
    %170 = vector.load %arg4[%c11, %c0_88, %c0_89] : memref<25x29x38xf32, #tpu.memory_space<vmem>>, vector<1x29x38xf32>
    %171 = vector.shape_cast %170 : vector<1x29x38xf32> to vector<29x38xf32>
    %cst_90 = arith.constant dense<0.000000e+00> : vector<29x256xf32>
    %172 = tpu.matmul %171, %169, %cst_90 {dimension_numbers = #tpu.dot_dimension_numbers<[1], [0], [0], [1], [0, 0, 1, 1], [], []>} : vector<29x38xf32>, vector<38x256xf32>, vector<29x256xf32> -> vector<29x256xf32>
    %173 = arith.addf %164, %172 : vector<29x256xf32>
    %c0_91 = arith.constant 0 : index
    %c128_92 = arith.constant 128 : index
    %174 = vector.load %arg21[%c0_91, %c128_92] : memref<38x512xf32, #tpu.memory_space<vmem>>, vector<38x256xf32>
    %c12 = arith.constant 12 : index
    %c0_93 = arith.constant 0 : index
    %c0_94 = arith.constant 0 : index
    %175 = vector.load %arg4[%c12, %c0_93, %c0_94] : memref<25x29x38xf32, #tpu.memory_space<vmem>>, vector<1x29x38xf32>
    %176 = vector.shape_cast %175 : vector<1x29x38xf32> to vector<29x38xf32>
    %cst_95 = arith.constant dense<0.000000e+00> : vector<29x256xf32>
    %177 = tpu.matmul %176, %174, %cst_95 {dimension_numbers = #tpu.dot_dimension_numbers<[1], [0], [0], [1], [0, 0, 1, 1], [], []>} : vector<29x38xf32>, vector<38x256xf32>, vector<29x256xf32> -> vector<29x256xf32>
    %178 = arith.addf %173, %177 : vector<29x256xf32>
    %c0_96 = arith.constant 0 : index
    %c129 = arith.constant 129 : index
    %179 = vector.load %arg21[%c0_96, %c129] : memref<38x512xf32, #tpu.memory_space<vmem>>, vector<38x256xf32>
    %cst_97 = arith.constant 0.000000e+00 : f32
    %180 = vector.shape_cast %63 : vector<1x256xi1> to vector<1x256xi1>
    %181 = vector.broadcast %180 : vector<1x256xi1> to vector<38x256xi1>
    %182 = vector.broadcast %cst_97 : f32 to vector<38x256xf32>
    %183 = arith.select %181, %179, %182 : vector<38x256xi1>, vector<38x256xf32>
    %c13 = arith.constant 13 : index
    %c0_98 = arith.constant 0 : index
    %c0_99 = arith.constant 0 : index
    %184 = vector.load %arg4[%c13, %c0_98, %c0_99] : memref<25x29x38xf32, #tpu.memory_space<vmem>>, vector<1x29x38xf32>
    %185 = vector.shape_cast %184 : vector<1x29x38xf32> to vector<29x38xf32>
    %cst_100 = arith.constant dense<0.000000e+00> : vector<29x256xf32>
    %186 = tpu.matmul %185, %183, %cst_100 {dimension_numbers = #tpu.dot_dimension_numbers<[1], [0], [0], [1], [0, 0, 1, 1], [], []>} : vector<29x38xf32>, vector<38x256xf32>, vector<29x256xf32> -> vector<29x256xf32>
    %187 = arith.addf %178, %186 : vector<29x256xf32>
    %c0_101 = arith.constant 0 : index
    %c130 = arith.constant 130 : index
    %188 = vector.load %arg21[%c0_101, %c130] : memref<38x512xf32, #tpu.memory_space<vmem>>, vector<38x256xf32>
    %cst_102 = arith.constant 0.000000e+00 : f32
    %189 = vector.shape_cast %72 : vector<1x256xi1> to vector<1x256xi1>
    %190 = vector.broadcast %189 : vector<1x256xi1> to vector<38x256xi1>
    %191 = vector.broadcast %cst_102 : f32 to vector<38x256xf32>
    %192 = arith.select %190, %188, %191 : vector<38x256xi1>, vector<38x256xf32>
    %c14 = arith.constant 14 : index
    %c0_103 = arith.constant 0 : index
    %c0_104 = arith.constant 0 : index
    %193 = vector.load %arg4[%c14, %c0_103, %c0_104] : memref<25x29x38xf32, #tpu.memory_space<vmem>>, vector<1x29x38xf32>
    %194 = vector.shape_cast %193 : vector<1x29x38xf32> to vector<29x38xf32>
    %cst_105 = arith.constant dense<0.000000e+00> : vector<29x256xf32>
    %195 = tpu.matmul %194, %192, %cst_105 {dimension_numbers = #tpu.dot_dimension_numbers<[1], [0], [0], [1], [0, 0, 1, 1], [], []>} : vector<29x38xf32>, vector<38x256xf32>, vector<29x256xf32> -> vector<29x256xf32>
    %196 = arith.addf %187, %195 : vector<29x256xf32>
    %c0_106 = arith.constant 0 : index
    %c142 = arith.constant 142 : index
    %197 = vector.load %arg21[%c0_106, %c142] : memref<38x512xf32, #tpu.memory_space<vmem>>, vector<38x256xf32>
    %cst_107 = arith.constant 0.000000e+00 : f32
    %198 = vector.shape_cast %45 : vector<1x256xi1> to vector<1x256xi1>
    %199 = vector.broadcast %198 : vector<1x256xi1> to vector<38x256xi1>
    %200 = vector.broadcast %cst_107 : f32 to vector<38x256xf32>
    %201 = arith.select %199, %197, %200 : vector<38x256xi1>, vector<38x256xf32>
    %c15 = arith.constant 15 : index
    %c0_108 = arith.constant 0 : index
    %c0_109 = arith.constant 0 : index
    %202 = vector.load %arg4[%c15, %c0_108, %c0_109] : memref<25x29x38xf32, #tpu.memory_space<vmem>>, vector<1x29x38xf32>
    %203 = vector.shape_cast %202 : vector<1x29x38xf32> to vector<29x38xf32>
    %cst_110 = arith.constant dense<0.000000e+00> : vector<29x256xf32>
    %204 = tpu.matmul %203, %201, %cst_110 {dimension_numbers = #tpu.dot_dimension_numbers<[1], [0], [0], [1], [0, 0, 1, 1], [], []>} : vector<29x38xf32>, vector<38x256xf32>, vector<29x256xf32> -> vector<29x256xf32>
    %205 = arith.addf %196, %204 : vector<29x256xf32>
    %c0_111 = arith.constant 0 : index
    %c143 = arith.constant 143 : index
    %206 = vector.load %arg21[%c0_111, %c143] : memref<38x512xf32, #tpu.memory_space<vmem>>, vector<38x256xf32>
    %cst_112 = arith.constant 0.000000e+00 : f32
    %207 = vector.shape_cast %54 : vector<1x256xi1> to vector<1x256xi1>
    %208 = vector.broadcast %207 : vector<1x256xi1> to vector<38x256xi1>
    %209 = vector.broadcast %cst_112 : f32 to vector<38x256xf32>
    %210 = arith.select %208, %206, %209 : vector<38x256xi1>, vector<38x256xf32>
    %c16 = arith.constant 16 : index
    %c0_113 = arith.constant 0 : index
    %c0_114 = arith.constant 0 : index
    %211 = vector.load %arg4[%c16, %c0_113, %c0_114] : memref<25x29x38xf32, #tpu.memory_space<vmem>>, vector<1x29x38xf32>
    %212 = vector.shape_cast %211 : vector<1x29x38xf32> to vector<29x38xf32>
    %cst_115 = arith.constant dense<0.000000e+00> : vector<29x256xf32>
    %213 = tpu.matmul %212, %210, %cst_115 {dimension_numbers = #tpu.dot_dimension_numbers<[1], [0], [0], [1], [0, 0, 1, 1], [], []>} : vector<29x38xf32>, vector<38x256xf32>, vector<29x256xf32> -> vector<29x256xf32>
    %214 = arith.addf %205, %213 : vector<29x256xf32>
    %c0_116 = arith.constant 0 : index
    %c144 = arith.constant 144 : index
    %215 = vector.load %arg21[%c0_116, %c144] : memref<38x512xf32, #tpu.memory_space<vmem>>, vector<38x256xf32>
    %c17 = arith.constant 17 : index
    %c0_117 = arith.constant 0 : index
    %c0_118 = arith.constant 0 : index
    %216 = vector.load %arg4[%c17, %c0_117, %c0_118] : memref<25x29x38xf32, #tpu.memory_space<vmem>>, vector<1x29x38xf32>
    %217 = vector.shape_cast %216 : vector<1x29x38xf32> to vector<29x38xf32>
    %cst_119 = arith.constant dense<0.000000e+00> : vector<29x256xf32>
    %218 = tpu.matmul %217, %215, %cst_119 {dimension_numbers = #tpu.dot_dimension_numbers<[1], [0], [0], [1], [0, 0, 1, 1], [], []>} : vector<29x38xf32>, vector<38x256xf32>, vector<29x256xf32> -> vector<29x256xf32>
    %219 = arith.addf %214, %218 : vector<29x256xf32>
    %c0_120 = arith.constant 0 : index
    %c145 = arith.constant 145 : index
    %220 = vector.load %arg21[%c0_120, %c145] : memref<38x512xf32, #tpu.memory_space<vmem>>, vector<38x256xf32>
    %cst_121 = arith.constant 0.000000e+00 : f32
    %221 = vector.shape_cast %63 : vector<1x256xi1> to vector<1x256xi1>
    %222 = vector.broadcast %221 : vector<1x256xi1> to vector<38x256xi1>
    %223 = vector.broadcast %cst_121 : f32 to vector<38x256xf32>
    %224 = arith.select %222, %220, %223 : vector<38x256xi1>, vector<38x256xf32>
    %c18 = arith.constant 18 : index
    %c0_122 = arith.constant 0 : index
    %c0_123 = arith.constant 0 : index
    %225 = vector.load %arg4[%c18, %c0_122, %c0_123] : memref<25x29x38xf32, #tpu.memory_space<vmem>>, vector<1x29x38xf32>
    %226 = vector.shape_cast %225 : vector<1x29x38xf32> to vector<29x38xf32>
    %cst_124 = arith.constant dense<0.000000e+00> : vector<29x256xf32>
    %227 = tpu.matmul %226, %224, %cst_124 {dimension_numbers = #tpu.dot_dimension_numbers<[1], [0], [0], [1], [0, 0, 1, 1], [], []>} : vector<29x38xf32>, vector<38x256xf32>, vector<29x256xf32> -> vector<29x256xf32>
    %228 = arith.addf %219, %227 : vector<29x256xf32>
    %c0_125 = arith.constant 0 : index
    %c146 = arith.constant 146 : index
    %229 = vector.load %arg21[%c0_125, %c146] : memref<38x512xf32, #tpu.memory_space<vmem>>, vector<38x256xf32>
    %cst_126 = arith.constant 0.000000e+00 : f32
    %230 = vector.shape_cast %72 : vector<1x256xi1> to vector<1x256xi1>
    %231 = vector.broadcast %230 : vector<1x256xi1> to vector<38x256xi1>
    %232 = vector.broadcast %cst_126 : f32 to vector<38x256xf32>
    %233 = arith.select %231, %229, %232 : vector<38x256xi1>, vector<38x256xf32>
    %c19 = arith.constant 19 : index
    %c0_127 = arith.constant 0 : index
    %c0_128 = arith.constant 0 : index
    %234 = vector.load %arg4[%c19, %c0_127, %c0_128] : memref<25x29x38xf32, #tpu.memory_space<vmem>>, vector<1x29x38xf32>
    %235 = vector.shape_cast %234 : vector<1x29x38xf32> to vector<29x38xf32>
    %cst_129 = arith.constant dense<0.000000e+00> : vector<29x256xf32>
    %236 = tpu.matmul %235, %233, %cst_129 {dimension_numbers = #tpu.dot_dimension_numbers<[1], [0], [0], [1], [0, 0, 1, 1], [], []>} : vector<29x38xf32>, vector<38x256xf32>, vector<29x256xf32> -> vector<29x256xf32>
    %237 = arith.addf %228, %236 : vector<29x256xf32>
    %c0_130 = arith.constant 0 : index
    %c158 = arith.constant 158 : index
    %238 = vector.load %arg21[%c0_130, %c158] : memref<38x512xf32, #tpu.memory_space<vmem>>, vector<38x256xf32>
    %cst_131 = arith.constant 0.000000e+00 : f32
    %239 = vector.shape_cast %45 : vector<1x256xi1> to vector<1x256xi1>
    %240 = vector.broadcast %239 : vector<1x256xi1> to vector<38x256xi1>
    %241 = vector.broadcast %cst_131 : f32 to vector<38x256xf32>
    %242 = arith.select %240, %238, %241 : vector<38x256xi1>, vector<38x256xf32>
    %c20 = arith.constant 20 : index
    %c0_132 = arith.constant 0 : index
    %c0_133 = arith.constant 0 : index
    %243 = vector.load %arg4[%c20, %c0_132, %c0_133] : memref<25x29x38xf32, #tpu.memory_space<vmem>>, vector<1x29x38xf32>
    %244 = vector.shape_cast %243 : vector<1x29x38xf32> to vector<29x38xf32>
    %cst_134 = arith.constant dense<0.000000e+00> : vector<29x256xf32>
    %245 = tpu.matmul %244, %242, %cst_134 {dimension_numbers = #tpu.dot_dimension_numbers<[1], [0], [0], [1], [0, 0, 1, 1], [], []>} : vector<29x38xf32>, vector<38x256xf32>, vector<29x256xf32> -> vector<29x256xf32>
    %246 = arith.addf %237, %245 : vector<29x256xf32>
    %c0_135 = arith.constant 0 : index
    %c159 = arith.constant 159 : index
    %247 = vector.load %arg21[%c0_135, %c159] : memref<38x512xf32, #tpu.memory_space<vmem>>, vector<38x256xf32>
    %cst_136 = arith.constant 0.000000e+00 : f32
    %248 = vector.shape_cast %54 : vector<1x256xi1> to vector<1x256xi1>
    %249 = vector.broadcast %248 : vector<1x256xi1> to vector<38x256xi1>
    %250 = vector.broadcast %cst_136 : f32 to vector<38x256xf32>
    %251 = arith.select %249, %247, %250 : vector<38x256xi1>, vector<38x256xf32>
    %c21 = arith.constant 21 : index
    %c0_137 = arith.constant 0 : index
    %c0_138 = arith.constant 0 : index
    %252 = vector.load %arg4[%c21, %c0_137, %c0_138] : memref<25x29x38xf32, #tpu.memory_space<vmem>>, vector<1x29x38xf32>
    %253 = vector.shape_cast %252 : vector<1x29x38xf32> to vector<29x38xf32>
    %cst_139 = arith.constant dense<0.000000e+00> : vector<29x256xf32>
    %254 = tpu.matmul %253, %251, %cst_139 {dimension_numbers = #tpu.dot_dimension_numbers<[1], [0], [0], [1], [0, 0, 1, 1], [], []>} : vector<29x38xf32>, vector<38x256xf32>, vector<29x256xf32> -> vector<29x256xf32>
    %255 = arith.addf %246, %254 : vector<29x256xf32>
    %c0_140 = arith.constant 0 : index
    %c160 = arith.constant 160 : index
    %256 = vector.load %arg21[%c0_140, %c160] : memref<38x512xf32, #tpu.memory_space<vmem>>, vector<38x256xf32>
    %c22 = arith.constant 22 : index
    %c0_141 = arith.constant 0 : index
    %c0_142 = arith.constant 0 : index
    %257 = vector.load %arg4[%c22, %c0_141, %c0_142] : memref<25x29x38xf32, #tpu.memory_space<vmem>>, vector<1x29x38xf32>
    %258 = vector.shape_cast %257 : vector<1x29x38xf32> to vector<29x38xf32>
    %cst_143 = arith.constant dense<0.000000e+00> : vector<29x256xf32>
    %259 = tpu.matmul %258, %256, %cst_143 {dimension_numbers = #tpu.dot_dimension_numbers<[1], [0], [0], [1], [0, 0, 1, 1], [], []>} : vector<29x38xf32>, vector<38x256xf32>, vector<29x256xf32> -> vector<29x256xf32>
    %260 = arith.addf %255, %259 : vector<29x256xf32>
    %c0_144 = arith.constant 0 : index
    %c161 = arith.constant 161 : index
    %261 = vector.load %arg21[%c0_144, %c161] : memref<38x512xf32, #tpu.memory_space<vmem>>, vector<38x256xf32>
    %cst_145 = arith.constant 0.000000e+00 : f32
    %262 = vector.shape_cast %63 : vector<1x256xi1> to vector<1x256xi1>
    %263 = vector.broadcast %262 : vector<1x256xi1> to vector<38x256xi1>
    %264 = vector.broadcast %cst_145 : f32 to vector<38x256xf32>
    %265 = arith.select %263, %261, %264 : vector<38x256xi1>, vector<38x256xf32>
    %c23 = arith.constant 23 : index
    %c0_146 = arith.constant 0 : index
    %c0_147 = arith.constant 0 : index
    %266 = vector.load %arg4[%c23, %c0_146, %c0_147] : memref<25x29x38xf32, #tpu.memory_space<vmem>>, vector<1x29x38xf32>
    %267 = vector.shape_cast %266 : vector<1x29x38xf32> to vector<29x38xf32>
    %cst_148 = arith.constant dense<0.000000e+00> : vector<29x256xf32>
    %268 = tpu.matmul %267, %265, %cst_148 {dimension_numbers = #tpu.dot_dimension_numbers<[1], [0], [0], [1], [0, 0, 1, 1], [], []>} : vector<29x38xf32>, vector<38x256xf32>, vector<29x256xf32> -> vector<29x256xf32>
    %269 = arith.addf %260, %268 : vector<29x256xf32>
    %c0_149 = arith.constant 0 : index
    %c162 = arith.constant 162 : index
    %270 = vector.load %arg21[%c0_149, %c162] : memref<38x512xf32, #tpu.memory_space<vmem>>, vector<38x256xf32>
    %cst_150 = arith.constant 0.000000e+00 : f32
    %271 = vector.shape_cast %72 : vector<1x256xi1> to vector<1x256xi1>
    %272 = vector.broadcast %271 : vector<1x256xi1> to vector<38x256xi1>
    %273 = vector.broadcast %cst_150 : f32 to vector<38x256xf32>
    %274 = arith.select %272, %270, %273 : vector<38x256xi1>, vector<38x256xf32>
    %c24 = arith.constant 24 : index
    %c0_151 = arith.constant 0 : index
    %c0_152 = arith.constant 0 : index
    %275 = vector.load %arg4[%c24, %c0_151, %c0_152] : memref<25x29x38xf32, #tpu.memory_space<vmem>>, vector<1x29x38xf32>
    %276 = vector.shape_cast %275 : vector<1x29x38xf32> to vector<29x38xf32>
    %cst_153 = arith.constant dense<0.000000e+00> : vector<29x256xf32>
    %277 = tpu.matmul %276, %274, %cst_153 {dimension_numbers = #tpu.dot_dimension_numbers<[1], [0], [0], [1], [0, 0, 1, 1], [], []>} : vector<29x38xf32>, vector<38x256xf32>, vector<29x256xf32> -> vector<29x256xf32>
    %278 = arith.addf %269, %277 : vector<29x256xf32>
    %c0_154 = arith.constant 0 : index
    %c0_155 = arith.constant 0 : index
    %279 = vector.load %arg5[%c0_154, %c0_155] : memref<29x1xf32, #tpu.memory_space<vmem>>, vector<29x1xf32>
    %280 = vector.broadcast %279 : vector<29x1xf32> to vector<29x256xf32>
    %281 = arith.addf %278, %280 : vector<29x256xf32>
    %cst_156 = arith.constant 5.000000e-01 : f32
    %282 = vector.broadcast %cst_156 : f32 to vector<29x256xf32>
    %283 = arith.mulf %281, %282 : vector<29x256xf32>
    %cst_157 = arith.constant 0.707106769 : f32
    %284 = vector.broadcast %cst_157 : f32 to vector<29x256xf32>
    %285 = arith.mulf %281, %284 : vector<29x256xf32>
    %286 = math.erf %285 : vector<29x256xf32>
    %cst_158 = arith.constant 1.000000e+00 : f32
    %287 = vector.broadcast %cst_158 : f32 to vector<29x256xf32>
    %288 = arith.addf %286, %287 : vector<29x256xf32>
    %289 = arith.mulf %283, %288 : vector<29x256xf32>
    %c0_159 = arith.constant 0 : index
    %c0_160 = arith.constant 0 : index
    %290 = vector.load %arg6[%c0_159, %c0_160] : memref<23x29xf32, #tpu.memory_space<vmem>>, vector<23x29xf32>
    %cst_161 = arith.constant dense<0.000000e+00> : vector<23x256xf32>
    %291 = tpu.matmul %290, %289, %cst_161 {dimension_numbers = #tpu.dot_dimension_numbers<[1], [0], [0], [1], [0, 0, 1, 1], [], []>} : vector<23x29xf32>, vector<29x256xf32>, vector<23x256xf32> -> vector<23x256xf32>
    %c0_162 = arith.constant 0 : index
    %c0_163 = arith.constant 0 : index
    %292 = vector.load %arg7[%c0_162, %c0_163] : memref<23x1xf32, #tpu.memory_space<vmem>>, vector<23x1xf32>
    %293 = vector.broadcast %292 : vector<23x1xf32> to vector<23x256xf32>
    %294 = arith.addf %291, %293 : vector<23x256xf32>
    %cst_164 = arith.constant 5.000000e-01 : f32
    %295 = vector.broadcast %cst_164 : f32 to vector<23x256xf32>
    %296 = arith.mulf %294, %295 : vector<23x256xf32>
    %cst_165 = arith.constant 0.707106769 : f32
    %297 = vector.broadcast %cst_165 : f32 to vector<23x256xf32>
    %298 = arith.mulf %294, %297 : vector<23x256xf32>
    %299 = math.erf %298 : vector<23x256xf32>
    %cst_166 = arith.constant 1.000000e+00 : f32
    %300 = vector.broadcast %cst_166 : f32 to vector<23x256xf32>
    %301 = arith.addf %299, %300 : vector<23x256xf32>
    %302 = arith.mulf %296, %301 : vector<23x256xf32>
    %c0_167 = arith.constant 0 : index
    %c0_168 = arith.constant 0 : index
    %303 = vector.load %arg8[%c0_167, %c0_168] : memref<2x23xf32, #tpu.memory_space<vmem>>, vector<2x23xf32>
    %cst_169 = arith.constant dense<0.000000e+00> : vector<2x256xf32>
    %304 = tpu.matmul %303, %302, %cst_169 {dimension_numbers = #tpu.dot_dimension_numbers<[1], [0], [0], [1], [0, 0, 1, 1], [], []>} : vector<2x23xf32>, vector<23x256xf32>, vector<2x256xf32> -> vector<2x256xf32>
    %c0_170 = arith.constant 0 : index
    %c0_171 = arith.constant 0 : index
    %305 = vector.load %arg9[%c0_170, %c0_171] : memref<2x1xf32, #tpu.memory_space<vmem>>, vector<2x1xf32>
    %306 = vector.broadcast %305 : vector<2x1xf32> to vector<2x256xf32>
    %307 = arith.addf %304, %306 : vector<2x256xf32>
    %cst_172 = arith.constant 5.000000e-01 : f32
    %308 = vector.broadcast %cst_172 : f32 to vector<2x256xf32>
    %309 = arith.mulf %307, %308 : vector<2x256xf32>
    %cst_173 = arith.constant 0.707106769 : f32
    %310 = vector.broadcast %cst_173 : f32 to vector<2x256xf32>
    %311 = arith.mulf %307, %310 : vector<2x256xf32>
    %312 = math.erf %311 : vector<2x256xf32>
    %cst_174 = arith.constant 1.000000e+00 : f32
    %313 = vector.broadcast %cst_174 : f32 to vector<2x256xf32>
    %314 = arith.addf %312, %313 : vector<2x256xf32>
    %315 = arith.mulf %309, %314 : vector<2x256xf32>
    %316 = math.absf %315 : vector<2x256xf32>
    %c0_175 = arith.constant 0 : index
    %c0_176 = arith.constant 0 : index
    %317 = vector.load %arg22[%c0_175, %c0_176] : memref<2x384xf32, #tpu.memory_space<vmem>>, vector<2x256xf32>
    tpu.vector_store %arg22[%c0_175, %c0_176], %316 {strides = array<i32>} : memref<2x384xf32, #tpu.memory_space<vmem>>, vector<2x256xf32>,
    %cst_177 = arith.constant 0.000000e+00 : f32
    %318 = vector.broadcast %cst_177 : f32 to vector<2x128xf32>
    %c0_178 = arith.constant 0 : index
    %c256 = arith.constant 256 : index
    %319 = vector.load %arg22[%c0_178, %c256] : memref<2x384xf32, #tpu.memory_space<vmem>>, vector<2x128xf32>
    tpu.vector_store %arg22[%c0_178, %c256], %318 {strides = array<i32>} : memref<2x384xf32, #tpu.memory_space<vmem>>, vector<2x128xf32>,
    %cst_179 = arith.constant 0.000000e+00 : f32
    %320 = vector.broadcast %cst_179 : f32 to vector<37x256xf32>
    %c0_180 = arith.constant 0 : index
    %c0_181 = arith.constant 0 : index
    %c0_182 = arith.constant 0 : index
    %321 = vector.load %arg10[%c0_180, %c0_181, %c0_182] : memref<4x37x2xf32, #tpu.memory_space<vmem>>, vector<1x37x2xf32>
    %322 = vector.shape_cast %321 : vector<1x37x2xf32> to vector<37x2xf32>
    %c0_183 = arith.constant 0 : index
    %c0_184 = arith.constant 0 : index
    %323 = vector.load %arg22[%c0_183, %c0_184] : memref<2x384xf32, #tpu.memory_space<vmem>>, vector<2x256xf32>
    %cst_185 = arith.constant dense<0.000000e+00> : vector<37x256xf32>
    %324 = tpu.matmul %322, %323, %cst_185 {dimension_numbers = #tpu.dot_dimension_numbers<[1], [0], [0], [1], [0, 0, 1, 1], [], []>} : vector<37x2xf32>, vector<2x256xf32>, vector<37x256xf32> -> vector<37x256xf32>
    %325 = arith.addf %320, %324 : vector<37x256xf32>
    %c1_186 = arith.constant 1 : index
    %c0_187 = arith.constant 0 : index
    %c0_188 = arith.constant 0 : index
    %326 = vector.load %arg10[%c1_186, %c0_187, %c0_188] : memref<4x37x2xf32, #tpu.memory_space<vmem>>, vector<1x37x2xf32>
    %327 = vector.shape_cast %326 : vector<1x37x2xf32> to vector<37x2xf32>
    %c0_189 = arith.constant 0 : index
    %c1_190 = arith.constant 1 : index
    %328 = vector.load %arg22[%c0_189, %c1_190] : memref<2x384xf32, #tpu.memory_space<vmem>>, vector<2x256xf32>
    %cst_191 = arith.constant dense<0.000000e+00> : vector<37x256xf32>
    %329 = tpu.matmul %327, %328, %cst_191 {dimension_numbers = #tpu.dot_dimension_numbers<[1], [0], [0], [1], [0, 0, 1, 1], [], []>} : vector<37x2xf32>, vector<2x256xf32>, vector<37x256xf32> -> vector<37x256xf32>
    %330 = arith.addf %325, %329 : vector<37x256xf32>
    %c2_192 = arith.constant 2 : index
    %c0_193 = arith.constant 0 : index
    %c0_194 = arith.constant 0 : index
    %331 = vector.load %arg10[%c2_192, %c0_193, %c0_194] : memref<4x37x2xf32, #tpu.memory_space<vmem>>, vector<1x37x2xf32>
    %332 = vector.shape_cast %331 : vector<1x37x2xf32> to vector<37x2xf32>
    %c0_195 = arith.constant 0 : index
    %c16_196 = arith.constant 16 : index
    %333 = vector.load %arg22[%c0_195, %c16_196] : memref<2x384xf32, #tpu.memory_space<vmem>>, vector<2x256xf32>
    %cst_197 = arith.constant dense<0.000000e+00> : vector<37x256xf32>
    %334 = tpu.matmul %332, %333, %cst_197 {dimension_numbers = #tpu.dot_dimension_numbers<[1], [0], [0], [1], [0, 0, 1, 1], [], []>} : vector<37x2xf32>, vector<2x256xf32>, vector<37x256xf32> -> vector<37x256xf32>
    %335 = arith.addf %330, %334 : vector<37x256xf32>
    %c3_198 = arith.constant 3 : index
    %c0_199 = arith.constant 0 : index
    %c0_200 = arith.constant 0 : index
    %336 = vector.load %arg10[%c3_198, %c0_199, %c0_200] : memref<4x37x2xf32, #tpu.memory_space<vmem>>, vector<1x37x2xf32>
    %337 = vector.shape_cast %336 : vector<1x37x2xf32> to vector<37x2xf32>
    %c0_201 = arith.constant 0 : index
    %c17_202 = arith.constant 17 : index
    %338 = vector.load %arg22[%c0_201, %c17_202] : memref<2x384xf32, #tpu.memory_space<vmem>>, vector<2x256xf32>
    %cst_203 = arith.constant dense<0.000000e+00> : vector<37x256xf32>
    %339 = tpu.matmul %337, %338, %cst_203 {dimension_numbers = #tpu.dot_dimension_numbers<[1], [0], [0], [1], [0, 0, 1, 1], [], []>} : vector<37x2xf32>, vector<2x256xf32>, vector<37x256xf32> -> vector<37x256xf32>
    %340 = arith.addf %335, %339 : vector<37x256xf32>
    %c0_204 = arith.constant 0 : index
    %c0_205 = arith.constant 0 : index
    %341 = vector.load %arg11[%c0_204, %c0_205] : memref<37x1xf32, #tpu.memory_space<vmem>>, vector<37x1xf32>
    %342 = vector.broadcast %341 : vector<37x1xf32> to vector<37x256xf32>
    %343 = arith.addf %340, %342 : vector<37x256xf32>
    %cst_206 = arith.constant 5.000000e-01 : f32
    %344 = vector.broadcast %cst_206 : f32 to vector<37x256xf32>
    %345 = arith.mulf %343, %344 : vector<37x256xf32>
    %cst_207 = arith.constant 0.707106769 : f32
    %346 = vector.broadcast %cst_207 : f32 to vector<37x256xf32>
    %347 = arith.mulf %343, %346 : vector<37x256xf32>
    %348 = math.erf %347 : vector<37x256xf32>
    %cst_208 = arith.constant 1.000000e+00 : f32
    %349 = vector.broadcast %cst_208 : f32 to vector<37x256xf32>
    %350 = arith.addf %348, %349 : vector<37x256xf32>
    %351 = arith.mulf %345, %350 : vector<37x256xf32>
    %c0_209 = arith.constant 0 : index
    %c0_210 = arith.constant 0 : index
    %352 = vector.load %arg12[%c0_209, %c0_210] : memref<4x37xf32, #tpu.memory_space<vmem>>, vector<4x37xf32>
    %cst_211 = arith.constant dense<0.000000e+00> : vector<4x256xf32>
    %353 = tpu.matmul %352, %351, %cst_211 {dimension_numbers = #tpu.dot_dimension_numbers<[1], [0], [0], [1], [0, 0, 1, 1], [], []>} : vector<4x37xf32>, vector<37x256xf32>, vector<4x256xf32> -> vector<4x256xf32>
    %c0_212 = arith.constant 0 : index
    %c0_213 = arith.constant 0 : index
    %354 = vector.load %arg13[%c0_212, %c0_213] : memref<4x1xf32, #tpu.memory_space<vmem>>, vector<4x1xf32>
    %355 = vector.broadcast %354 : vector<4x1xf32> to vector<4x256xf32>
    %356 = arith.addf %353, %355 : vector<4x256xf32>
    %cst_214 = arith.constant 5.000000e-01 : f32
    %357 = vector.broadcast %cst_214 : f32 to vector<4x256xf32>
    %358 = arith.mulf %356, %357 : vector<4x256xf32>
    %cst_215 = arith.constant 0.707106769 : f32
    %359 = vector.broadcast %cst_215 : f32 to vector<4x256xf32>
    %360 = arith.mulf %356, %359 : vector<4x256xf32>
    %361 = math.erf %360 : vector<4x256xf32>
    %cst_216 = arith.constant 1.000000e+00 : f32
    %362 = vector.broadcast %cst_216 : f32 to vector<4x256xf32>
    %363 = arith.addf %361, %362 : vector<4x256xf32>
    %364 = arith.mulf %358, %363 : vector<4x256xf32>
    %c0_217 = arith.constant 0 : index
    %c0_218 = arith.constant 0 : index
    %365 = vector.load %arg14[%c0_217, %c0_218] : memref<5x4xf32, #tpu.memory_space<vmem>>, vector<5x4xf32>
    %cst_219 = arith.constant dense<0.000000e+00> : vector<5x256xf32>
    %366 = tpu.matmul %365, %364, %cst_219 {dimension_numbers = #tpu.dot_dimension_numbers<[1], [0], [0], [1], [0, 0, 1, 1], [], []>} : vector<5x4xf32>, vector<4x256xf32>, vector<5x256xf32> -> vector<5x256xf32>
    %c0_220 = arith.constant 0 : index
    %c0_221 = arith.constant 0 : index
    %367 = vector.load %arg15[%c0_220, %c0_221] : memref<5x1xf32, #tpu.memory_space<vmem>>, vector<5x1xf32>
    %368 = vector.broadcast %367 : vector<5x1xf32> to vector<5x256xf32>
    %369 = arith.addf %366, %368 : vector<5x256xf32>
    %cst_222 = arith.constant 5.000000e-01 : f32
    %370 = vector.broadcast %cst_222 : f32 to vector<5x256xf32>
    %371 = arith.mulf %369, %370 : vector<5x256xf32>
    %cst_223 = arith.constant 0.707106769 : f32
    %372 = vector.broadcast %cst_223 : f32 to vector<5x256xf32>
    %373 = arith.mulf %369, %372 : vector<5x256xf32>
    %374 = math.erf %373 : vector<5x256xf32>
    %cst_224 = arith.constant 1.000000e+00 : f32
    %375 = vector.broadcast %cst_224 : f32 to vector<5x256xf32>
    %376 = arith.addf %374, %375 : vector<5x256xf32>
    %377 = arith.mulf %371, %376 : vector<5x256xf32>
    %c0_225 = arith.constant 0 : index
    %c0_226 = arith.constant 0 : index
    %378 = vector.load %arg16[%c0_225, %c0_226] : memref<4x5xf32, #tpu.memory_space<vmem>>, vector<4x5xf32>
    %cst_227 = arith.constant dense<0.000000e+00> : vector<4x256xf32>
    %379 = tpu.matmul %378, %377, %cst_227 {dimension_numbers = #tpu.dot_dimension_numbers<[1], [0], [0], [1], [0, 0, 1, 1], [], []>} : vector<4x5xf32>, vector<5x256xf32>, vector<4x256xf32> -> vector<4x256xf32>
    %c0_228 = arith.constant 0 : index
    %c0_229 = arith.constant 0 : index
    %380 = vector.load %arg17[%c0_228, %c0_229] : memref<4x1xf32, #tpu.memory_space<vmem>>, vector<4x1xf32>
    %381 = vector.broadcast %380 : vector<4x1xf32> to vector<4x256xf32>
    %382 = arith.addf %379, %381 : vector<4x256xf32>
    %cst_230 = arith.constant 5.000000e-01 : f32
    %383 = vector.broadcast %cst_230 : f32 to vector<4x256xf32>
    %384 = arith.mulf %382, %383 : vector<4x256xf32>
    %cst_231 = arith.constant 0.707106769 : f32
    %385 = vector.broadcast %cst_231 : f32 to vector<4x256xf32>
    %386 = arith.mulf %382, %385 : vector<4x256xf32>
    %387 = math.erf %386 : vector<4x256xf32>
    %cst_232 = arith.constant 1.000000e+00 : f32
    %388 = vector.broadcast %cst_232 : f32 to vector<4x256xf32>
    %389 = arith.addf %387, %388 : vector<4x256xf32>
    %390 = arith.mulf %384, %389 : vector<4x256xf32>
    %c0_233 = arith.constant 0 : index
    %c0_234 = arith.constant 0 : index
    %391 = vector.load %arg18[%c0_233, %c0_234] : memref<3x4xf32, #tpu.memory_space<vmem>>, vector<3x4xf32>
    %cst_235 = arith.constant dense<0.000000e+00> : vector<3x256xf32>
    %392 = tpu.matmul %391, %390, %cst_235 {dimension_numbers = #tpu.dot_dimension_numbers<[1], [0], [0], [1], [0, 0, 1, 1], [], []>} : vector<3x4xf32>, vector<4x256xf32>, vector<3x256xf32> -> vector<3x256xf32>
    %c0_236 = arith.constant 0 : index
    %c0_237 = arith.constant 0 : index
    %393 = vector.load %arg19[%c0_236, %c0_237] : memref<3x1xf32, #tpu.memory_space<vmem>>, vector<3x1xf32>
    %394 = vector.broadcast %393 : vector<3x1xf32> to vector<3x256xf32>
    %395 = arith.addf %392, %394 : vector<3x256xf32>
    %c0_238 = arith.constant 0 : index
    %c0_239 = arith.constant 0 : index
    %c0_240 = arith.constant 0 : index
    %396 = vector.load %arg20[%c0_238, %c0_239, %c0_240] : memref<1x3x256xf32, #tpu.memory_space<vmem>>, vector<1x3x256xf32>
    %397 = vector.shape_cast %396 : vector<1x3x256xf32> to vector<3x256xf32>
    %398 = vector.shape_cast %395 : vector<3x256xf32> to vector<1x3x256xf32>
    tpu.vector_store %arg20[%c0_238, %c0_239, %c0_240], %398 {strides = array<i32>} : memref<1x3x256xf32, #tpu.memory_space<vmem>>, vector<1x3x256xf32>,
    return
  }
  func.func @transform_0(%arg0: i32) -> (i32, i32, i32) {
    %c0_i32 = arith.constant 0 : i32
    %c0_i32_0 = arith.constant 0 : i32
    %c0_i32_1 = arith.constant 0 : i32
    return %arg0, %c0_i32, %c0_i32_0 : i32, i32, i32
  }
  func.func @transform_1(%arg0: i32) -> (i32, i32) {
    %c0_i32 = arith.constant 0 : i32
    %c0_i32_0 = arith.constant 0 : i32
    %c0_i32_1 = arith.constant 0 : i32
    return %c0_i32, %c0_i32_0 : i32, i32
  }
  func.func @transform_2(%arg0: i32) -> (i32, i32) {
    %c0_i32 = arith.constant 0 : i32
    %c0_i32_0 = arith.constant 0 : i32
    %c0_i32_1 = arith.constant 0 : i32
    return %c0_i32, %c0_i32_0 : i32, i32
  }
  func.func @transform_3(%arg0: i32) -> (i32, i32, i32) {
    %c0_i32 = arith.constant 0 : i32
    %c0_i32_0 = arith.constant 0 : i32
    %c0_i32_1 = arith.constant 0 : i32
    %c0_i32_2 = arith.constant 0 : i32
    return %c0_i32, %c0_i32_0, %c0_i32_1 : i32, i32, i32
  }
  func.func @transform_4(%arg0: i32) -> (i32, i32) {
    %c0_i32 = arith.constant 0 : i32
    %c0_i32_0 = arith.constant 0 : i32
    %c0_i32_1 = arith.constant 0 : i32
    return %c0_i32, %c0_i32_0 : i32, i32
  }
  func.func @transform_5(%arg0: i32) -> (i32, i32) {
    %c0_i32 = arith.constant 0 : i32
    %c0_i32_0 = arith.constant 0 : i32
    %c0_i32_1 = arith.constant 0 : i32
    return %c0_i32, %c0_i32_0 : i32, i32
  }
  func.func @transform_6(%arg0: i32) -> (i32, i32) {
    %c0_i32 = arith.constant 0 : i32
    %c0_i32_0 = arith.constant 0 : i32
    %c0_i32_1 = arith.constant 0 : i32
    return %c0_i32, %c0_i32_0 : i32, i32
  }
  func.func @transform_7(%arg0: i32) -> (i32, i32) {
    %c0_i32 = arith.constant 0 : i32
    %c0_i32_0 = arith.constant 0 : i32
    %c0_i32_1 = arith.constant 0 : i32
    return %c0_i32, %c0_i32_0 : i32, i32
  }
  func.func @transform_8(%arg0: i32) -> (i32, i32) {
    %c0_i32 = arith.constant 0 : i32
    %c0_i32_0 = arith.constant 0 : i32
    %c0_i32_1 = arith.constant 0 : i32
    return %c0_i32, %c0_i32_0 : i32, i32
  }
  func.func @transform_9(%arg0: i32) -> (i32, i32, i32) {
    %c0_i32 = arith.constant 0 : i32
    %c0_i32_0 = arith.constant 0 : i32
    %c0_i32_1 = arith.constant 0 : i32
    %c0_i32_2 = arith.constant 0 : i32
    return %c0_i32, %c0_i32_0, %c0_i32_1 : i32, i32, i32
  }
  func.func @transform_10(%arg0: i32) -> (i32, i32) {
    %c0_i32 = arith.constant 0 : i32
    %c0_i32_0 = arith.constant 0 : i32
    %c0_i32_1 = arith.constant 0 : i32
    return %c0_i32, %c0_i32_0 : i32, i32
  }
  func.func @transform_11(%arg0: i32) -> (i32, i32) {
    %c0_i32 = arith.constant 0 : i32
    %c0_i32_0 = arith.constant 0 : i32
    %c0_i32_1 = arith.constant 0 : i32
    return %c0_i32, %c0_i32_0 : i32, i32
  }
  func.func @transform_12(%arg0: i32) -> (i32, i32) {
    %c0_i32 = arith.constant 0 : i32
    %c0_i32_0 = arith.constant 0 : i32
    %c0_i32_1 = arith.constant 0 : i32
    return %c0_i32, %c0_i32_0 : i32, i32
  }
  func.func @transform_13(%arg0: i32) -> (i32, i32) {
    %c0_i32 = arith.constant 0 : i32
    %c0_i32_0 = arith.constant 0 : i32
    %c0_i32_1 = arith.constant 0 : i32
    return %c0_i32, %c0_i32_0 : i32, i32
  }
  func.func @transform_14(%arg0: i32) -> (i32, i32) {
    %c0_i32 = arith.constant 0 : i32
    %c0_i32_0 = arith.constant 0 : i32
    %c0_i32_1 = arith.constant 0 : i32
    return %c0_i32, %c0_i32_0 : i32, i32
  }
  func.func @transform_15(%arg0: i32) -> (i32, i32) {
    %c0_i32 = arith.constant 0 : i32
    %c0_i32_0 = arith.constant 0 : i32
    %c0_i32_1 = arith.constant 0 : i32
    return %c0_i32, %c0_i32_0 : i32, i32
  }
  func.func @transform_16(%arg0: i32) -> (i32, i32) {
    %c0_i32 = arith.constant 0 : i32
    %c0_i32_0 = arith.constant 0 : i32
    %c0_i32_1 = arith.constant 0 : i32
    return %c0_i32, %c0_i32_0 : i32, i32
  }
  func.func @transform_17(%arg0: i32) -> (i32, i32) {
    %c0_i32 = arith.constant 0 : i32
    %c0_i32_0 = arith.constant 0 : i32
    %c0_i32_1 = arith.constant 0 : i32
    return %c0_i32, %c0_i32_0 : i32, i32
  }
  func.func @transform_18(%arg0: i32) -> (i32, i32) {
    %c0_i32 = arith.constant 0 : i32
    %c0_i32_0 = arith.constant 0 : i32
    %c0_i32_1 = arith.constant 0 : i32
    return %c0_i32, %c0_i32_0 : i32, i32
  }
  func.func @transform_19(%arg0: i32) -> (i32, i32, i32) {
    %c0_i32 = arith.constant 0 : i32
    %c0_i32_0 = arith.constant 0 : i32
    %c0_i32_1 = arith.constant 0 : i32
    return %arg0, %c0_i32, %c0_i32_0 : i32, i32, i32
  }
}

</mosaic_0001>

<llo_original>
// kernel: model_forward.1
$region0: #{model_forward.1}
  #allocation0 [shape = 'u32[]', space=smem, size = 0x4, offset = 0x4, fixed_abs, tag = 'smem constant byte address 0x4 - core index']
  #allocation1 [shape = 'u32[72,128]{1,0:T(1,128)}', space=vmem, size = 0x9000, scoped, tag = 'internal scratch']
  #allocation2 [shape = 'f32[38,512]{1,0:T(8,128)}', space=vmem, size = 0x14000, scoped, tag = 'scratch operand']
  #allocation3 [shape = 'f32[2,384]{1,0:T(2,128)}', space=vmem, size = 0xc00, scoped, tag = 'scratch operand']
  %s0 = inlined_call_operand.vmem [shape: f32[2,2,256], index: 0, kind: input, shape index: {}]
  %s1 = inlined_call_operand.vmem [shape: f32[38,2], index: 1, kind: input, shape index: {}]
  %s2 = inlined_call_operand.vmem [shape: f32[38,1], index: 2, kind: input, shape index: {}]
  %s3 = inlined_call_operand.hbm [shape: f32[25,29,38], index: 3, kind: input, shape index: {}]
  %s4 = inlined_call_operand.vmem [shape: f32[29,1], index: 4, kind: input, shape index: {}]
  %s5 = inlined_call_operand.vmem [shape: f32[23,29], index: 5, kind: input, shape index: {}]
  %s6 = inlined_call_operand.vmem [shape: f32[23,1], index: 6, kind: input, shape index: {}]
  %s7 = inlined_call_operand.vmem [shape: f32[2,23], index: 7, kind: input, shape index: {}]
  %s8 = inlined_call_operand.vmem [shape: f32[2,1], index: 8, kind: input, shape index: {}]
  %s9 = inlined_call_operand.vmem [shape: f32[4,37,2], index: 9, kind: input, shape index: {}]
  %s10 = inlined_call_operand.vmem [shape: f32[37,1], index: 10, kind: input, shape index: {}]
  %s11 = inlined_call_operand.vmem [shape: f32[4,37], index: 11, kind: input, shape index: {}]
  %s12 = inlined_call_operand.vmem [shape: f32[4,1], index: 12, kind: input, shape index: {}]
  %s13 = inlined_call_operand.vmem [shape: f32[5,4], index: 13, kind: input, shape index: {}]
  %s14 = inlined_call_operand.vmem [shape: f32[5,1], index: 14, kind: input, shape index: {}]
  %s15 = inlined_call_operand.vmem [shape: f32[4,5], index: 15, kind: input, shape index: {}]
  %s16 = inlined_call_operand.vmem [shape: f32[4,1], index: 16, kind: input, shape index: {}]
  %s17 = inlined_call_operand.vmem [shape: f32[3,4], index: 17, kind: input, shape index: {}]
  %s18 = inlined_call_operand.vmem [shape: f32[3,1], index: 18, kind: input, shape index: {}]
  %s19 = inlined_call_operand.vmem [shape: f32[2,3,256], index: 19, kind: output, shape index: {}]
  %s20 = sld [smem:[#allocation0]]
  $region113: #{model_forward.1} parent=0
    _
  %s22 = ssub.s32 1, %s20
  %s23 = scalar_select 0, %s22, %s20
  $region1: #{model_forward.1} parent=0
    #allocation4 [shape = 'u8[409600]{0}', space=vmem, size = 0x64000, scoped, tag = 'input window, operand 3, single buffered']
    #allocation5 [shape = 's32[2]{0}', space=sflag, size = 0x8, scoped, tag = 'scoped memory for model_forward.1']
    %24 = vsyncpa [#allocation5], 0
    loop: start=0, step=1, limit=4
    $region2: #{model_forward.1} parent=1 // loop_pre_header
      _
    $region3: #{model_forward.1} parent=1 // loop_header
      %s26 = sphi 0, %s30
      %p27 = scmp.ge.s32.totalorder %s26, 4
      %s36 = sphi 0, %s38
      %s39 = sphi 0, %s36
      %s40 = sphi 0, %s39
      %s56 = sphi 0, %s40
      %s60 = sphi 0, %s60
      %s62 = sphi 0, %s60
      %s63 = sphi 0, %s62
      %s77 = sphi 0, %s63
      %s81 = sphi 0, %s81
      %s83 = sphi 0, %s81
      %s84 = sphi 0, %s83
      %s98 = sphi 0, %s84
      %s102 = sphi 0, %s102
      %s104 = sphi 0, %s102
      %s105 = sphi 0, %s104
      %s119 = sphi 0, %s105
      %s123 = sphi 0, %s123
      %s125 = sphi 0, %s123
      %s126 = sphi 0, %s125
      %s140 = sphi 0, %s126
      %s144 = sphi 0, %s144
      %s146 = sphi 0, %s144
      %s147 = sphi 0, %s146
      %s161 = sphi 0, %s147
      %s165 = sphi 0, %s165
      %s167 = sphi 0, %s165
      %s168 = sphi 0, %s167
      %s182 = sphi 0, %s168
      %s186 = sphi 0, %s186
      %s188 = sphi 0, %s186
      %s189 = sphi 0, %s188
      %s203 = sphi 0, %s189
      %s207 = sphi 0, %s207
      %s209 = sphi 0, %s207
      %s210 = sphi 0, %s209
      %s224 = sphi 0, %s210
      %s228 = sphi 0, %s228
      %s230 = sphi 0, %s228
      %s231 = sphi 0, %s230
      %s245 = sphi 0, %s231
      %s249 = sphi 0, %s249
      %s251 = sphi 0, %s249
      %s252 = sphi 0, %s251
      %s266 = sphi 0, %s252
      %s270 = sphi 0, %s270
      %s272 = sphi 0, %s270
      %s273 = sphi 0, %s272
      %s287 = sphi 0, %s273
      %s291 = sphi 0, %s291
      %s293 = sphi 0, %s291
      %s294 = sphi 0, %s293
      %s308 = sphi 0, %s294
      %s312 = sphi 0, %s312
      %s314 = sphi 0, %s312
      %s315 = sphi 0, %s314
      %s329 = sphi 0, %s315
      %s333 = sphi 0, %s333
      %s335 = sphi 0, %s333
      %s336 = sphi 0, %s335
      %s350 = sphi 0, %s336
      %s354 = sphi 0, %s354
      %s356 = sphi 0, %s354
      %s357 = sphi 0, %s356
      %s371 = sphi 0, %s357
      %s375 = sphi 0, %s375
      %s377 = sphi 0, %s375
      %s378 = sphi 0, %s377
      %s392 = sphi 0, %s378
      %s396 = sphi 0, %s396
      %s398 = sphi 0, %s396
      %s399 = sphi 0, %s398
      %s413 = sphi 0, %s399
      %s417 = sphi 0, %s417
      %s419 = sphi 0, %s417
      %s420 = sphi 0, %s419
      %s434 = sphi 0, %s420
      %s440 = sphi 0, %s442
      %s443 = sphi 0, %s440
      %s444 = sphi 0, %s443
      %s460 = sphi 0, %s444
    $region4: #{model_forward.1} parent=1 // loop_header_branch
      %29 = sbr.rel (%p27) target = $region8
    $region5: #{model_forward.1} parent=1 // loop_body
      %s31 = ssub.s32 %s26, 1
      %s32 = ssub.s32 %s26, 2
      %s33 = sadd.s32 %s26, 1
      %s34 = ssub.s32 %s26, %s33
      %p35 = scmp.eq.s32.totalorder %s34, 0
      %s37 = sadd.s32 %s36, 1
      %s38 = scalar_select %p35, %s36, %s37
      %p41 = pneg %p35
      %p42 = scmp.eq.s32.totalorder %s26, 1
      %p43 = por %p41, %p42
      %p44 = scmp.ne.s32.totalorder %s36, %s39
      %p45 = scmp.eq.s32.totalorder %s26, 0
      %p46 = por %p44, %p45
      %p47 = scmp.ne.s32.totalorder %s36, %s39
      %p48 = scmp.eq.s32.totalorder %s31, 1
      %p49 = por %p47, %p48
      %p50 = scmp.ne.s32.totalorder %s39, %s40
      %p51 = scmp.eq.s32.totalorder %s31, 0
      %p52 = por %p50, %p51
      %p53 = scmp.ne.s32.totalorder %s39, %s40
      %p54 = scmp.eq.s32.totalorder %s32, 1
      %p55 = por %p53, %p54
      %p57 = scmp.ne.s32.totalorder %s40, %s56
      %p58 = scmp.eq.s32.totalorder %s32, 0
      %p59 = por %p57, %p58
      %s61 = sadd.s32 %s60, 1
      %p64 = scmp.eq.s32.totalorder %s26, 1
      %p65 = scmp.ne.s32.totalorder %s60, %s62
      %p66 = scmp.eq.s32.totalorder %s26, 0
      %p67 = por %p65, %p66
      %p68 = scmp.ne.s32.totalorder %s60, %s62
      %p69 = scmp.eq.s32.totalorder %s31, 1
      %p70 = por %p68, %p69
      %p71 = scmp.ne.s32.totalorder %s62, %s63
      %p72 = scmp.eq.s32.totalorder %s31, 0
      %p73 = por %p71, %p72
      %p74 = scmp.ne.s32.totalorder %s62, %s63
      %p75 = scmp.eq.s32.totalorder %s32, 1
      %p76 = por %p74, %p75
      %p78 = scmp.ne.s32.totalorder %s63, %s77
      %p79 = scmp.eq.s32.totalorder %s32, 0
      %p80 = por %p78, %p79
      %s82 = sadd.s32 %s81, 1
      %p85 = scmp.eq.s32.totalorder %s26, 1
      %p86 = scmp.ne.s32.totalorder %s81, %s83
      %p87 = scmp.eq.s32.totalorder %s26, 0
      %p88 = por %p86, %p87
      %p89 = scmp.ne.s32.totalorder %s81, %s83
      %p90 = scmp.eq.s32.totalorder %s31, 1
      %p91 = por %p89, %p90
      %p92 = scmp.ne.s32.totalorder %s83, %s84
      %p93 = scmp.eq.s32.totalorder %s31, 0
      %p94 = por %p92, %p93
      %p95 = scmp.ne.s32.totalorder %s83, %s84
      %p96 = scmp.eq.s32.totalorder %s32, 1
      %p97 = por %p95, %p96
      %p99 = scmp.ne.s32.totalorder %s84, %s98
      %p100 = scmp.eq.s32.totalorder %s32, 0
      %p101 = por %p99, %p100
      %s103 = sadd.s32 %s102, 1
      %p106 = scmp.eq.s32.totalorder %s26, 1
      %p107 = scmp.ne.s32.totalorder %s102, %s104
      %p108 = scmp.eq.s32.totalorder %s26, 0
      %p109 = por %p107, %p108
      %p110 = scmp.ne.s32.totalorder %s102, %s104
      %p111 = scmp.eq.s32.totalorder %s31, 1
      %p112 = por %p110, %p111
      %p113 = scmp.ne.s32.totalorder %s104, %s105
      %p114 = scmp.eq.s32.totalorder %s31, 0
      %p115 = por %p113, %p114
      %p116 = scmp.ne.s32.totalorder %s104, %s105
      %p117 = scmp.eq.s32.totalorder %s32, 1
      %p118 = por %p116, %p117
      %p120 = scmp.ne.s32.totalorder %s105, %s119
      %p121 = scmp.eq.s32.totalorder %s32, 0
      %p122 = por %p120, %p121
      %s124 = sadd.s32 %s123, 1
      %p127 = scmp.eq.s32.totalorder %s26, 1
      %p128 = scmp.ne.s32.totalorder %s123, %s125
      %p129 = scmp.eq.s32.totalorder %s26, 0
      %p130 = por %p128, %p129
      %p131 = scmp.ne.s32.totalorder %s123, %s125
      %p132 = scmp.eq.s32.totalorder %s31, 1
      %p133 = por %p131, %p132
      %p134 = scmp.ne.s32.totalorder %s125, %s126
      %p135 = scmp.eq.s32.totalorder %s31, 0
      %p136 = por %p134, %p135
      %p137 = scmp.ne.s32.totalorder %s125, %s126
      %p138 = scmp.eq.s32.totalorder %s32, 1
      %p139 = por %p137, %p138
      %p141 = scmp.ne.s32.totalorder %s126, %s140
      %p142 = scmp.eq.s32.totalorder %s32, 0
      %p143 = por %p141, %p142
      %s145 = sadd.s32 %s144, 1
      %p148 = scmp.eq.s32.totalorder %s26, 1
      %p149 = scmp.ne.s32.totalorder %s144, %s146
      %p150 = scmp.eq.s32.totalorder %s26, 0
      %p151 = por %p149, %p150
      %p152 = scmp.ne.s32.totalorder %s144, %s146
      %p153 = scmp.eq.s32.totalorder %s31, 1
      %p154 = por %p152, %p153
      %p155 = scmp.ne.s32.totalorder %s146, %s147
      %p156 = scmp.eq.s32.totalorder %s31, 0
      %p157 = por %p155, %p156
      %p158 = scmp.ne.s32.totalorder %s146, %s147
      %p159 = scmp.eq.s32.totalorder %s32, 1
      %p160 = por %p158, %p159
      %p162 = scmp.ne.s32.totalorder %s147, %s161
      %p163 = scmp.eq.s32.totalorder %s32, 0
      %p164 = por %p162, %p163
      %s166 = sadd.s32 %s165, 1
      %p169 = scmp.eq.s32.totalorder %s26, 1
      %p170 = scmp.ne.s32.totalorder %s165, %s167
      %p171 = scmp.eq.s32.totalorder %s26, 0
      %p172 = por %p170, %p171
      %p173 = scmp.ne.s32.totalorder %s165, %s167
      %p174 = scmp.eq.s32.totalorder %s31, 1
      %p175 = por %p173, %p174
      %p176 = scmp.ne.s32.totalorder %s167, %s168
      %p177 = scmp.eq.s32.totalorder %s31, 0
      %p178 = por %p176, %p177
      %p179 = scmp.ne.s32.totalorder %s167, %s168
      %p180 = scmp.eq.s32.totalorder %s32, 1
      %p181 = por %p179, %p180
      %p183 = scmp.ne.s32.totalorder %s168, %s182
      %p184 = scmp.eq.s32.totalorder %s32, 0
      %p185 = por %p183, %p184
      %s187 = sadd.s32 %s186, 1
      %p190 = scmp.eq.s32.totalorder %s26, 1
      %p191 = scmp.ne.s32.totalorder %s186, %s188
      %p192 = scmp.eq.s32.totalorder %s26, 0
      %p193 = por %p191, %p192
      %p194 = scmp.ne.s32.totalorder %s186, %s188
      %p195 = scmp.eq.s32.totalorder %s31, 1
      %p196 = por %p194, %p195
      %p197 = scmp.ne.s32.totalorder %s188, %s189
      %p198 = scmp.eq.s32.totalorder %s31, 0
      %p199 = por %p197, %p198
      %p200 = scmp.ne.s32.totalorder %s188, %s189
      %p201 = scmp.eq.s32.totalorder %s32, 1
      %p202 = por %p200, %p201
      %p204 = scmp.ne.s32.totalorder %s189, %s203
      %p205 = scmp.eq.s32.totalorder %s32, 0
      %p206 = por %p204, %p205
      %s208 = sadd.s32 %s207, 1
      %p211 = scmp.eq.s32.totalorder %s26, 1
      %p212 = scmp.ne.s32.totalorder %s207, %s209
      %p213 = scmp.eq.s32.totalorder %s26, 0
      %p214 = por %p212, %p213
      %p215 = scmp.ne.s32.totalorder %s207, %s209
      %p216 = scmp.eq.s32.totalorder %s31, 1
      %p217 = por %p215, %p216
      %p218 = scmp.ne.s32.totalorder %s209, %s210
      %p219 = scmp.eq.s32.totalorder %s31, 0
      %p220 = por %p218, %p219
      %p221 = scmp.ne.s32.totalorder %s209, %s210
      %p222 = scmp.eq.s32.totalorder %s32, 1
      %p223 = por %p221, %p222
      %p225 = scmp.ne.s32.totalorder %s210, %s224
      %p226 = scmp.eq.s32.totalorder %s32, 0
      %p227 = por %p225, %p226
      %s229 = sadd.s32 %s228, 1
      %p232 = scmp.eq.s32.totalorder %s26, 1
      %p233 = scmp.ne.s32.totalorder %s228, %s230
      %p234 = scmp.eq.s32.totalorder %s26, 0
      %p235 = por %p233, %p234
      %p236 = scmp.ne.s32.totalorder %s228, %s230
      %p237 = scmp.eq.s32.totalorder %s31, 1
      %p238 = por %p236, %p237
      %p239 = scmp.ne.s32.totalorder %s230, %s231
      %p240 = scmp.eq.s32.totalorder %s31, 0
      %p241 = por %p239, %p240
      %p242 = scmp.ne.s32.totalorder %s230, %s231
      %p243 = scmp.eq.s32.totalorder %s32, 1
      %p244 = por %p242, %p243
      %p246 = scmp.ne.s32.totalorder %s231, %s245
      %p247 = scmp.eq.s32.totalorder %s32, 0
      %p248 = por %p246, %p247
      %s250 = sadd.s32 %s249, 1
      %p253 = scmp.eq.s32.totalorder %s26, 1
      %p254 = scmp.ne.s32.totalorder %s249, %s251
      %p255 = scmp.eq.s32.totalorder %s26, 0
      %p256 = por %p254, %p255
      %p257 = scmp.ne.s32.totalorder %s249, %s251
      %p258 = scmp.eq.s32.totalorder %s31, 1
      %p259 = por %p257, %p258
      %p260 = scmp.ne.s32.totalorder %s251, %s252
      %p261 = scmp.eq.s32.totalorder %s31, 0
      %p262 = por %p260, %p261
      %p263 = scmp.ne.s32.totalorder %s251, %s252
      %p264 = scmp.eq.s32.totalorder %s32, 1
      %p265 = por %p263, %p264
      %p267 = scmp.ne.s32.totalorder %s252, %s266
      %p268 = scmp.eq.s32.totalorder %s32, 0
      %p269 = por %p267, %p268
      %s271 = sadd.s32 %s270, 1
      %p274 = scmp.eq.s32.totalorder %s26, 1
      %p275 = scmp.ne.s32.totalorder %s270, %s272
      %p276 = scmp.eq.s32.totalorder %s26, 0
      %p277 = por %p275, %p276
      %p278 = scmp.ne.s32.totalorder %s270, %s272
      %p279 = scmp.eq.s32.totalorder %s31, 1
      %p280 = por %p278, %p279
      %p281 = scmp.ne.s32.totalorder %s272, %s273
      %p282 = scmp.eq.s32.totalorder %s31, 0
      %p283 = por %p281, %p282
      %p284 = scmp.ne.s32.totalorder %s272, %s273
      %p285 = scmp.eq.s32.totalorder %s32, 1
      %p286 = por %p284, %p285
      %p288 = scmp.ne.s32.totalorder %s273, %s287
      %p289 = scmp.eq.s32.totalorder %s32, 0
      %p290 = por %p288, %p289
      %s292 = sadd.s32 %s291, 1
      %p295 = scmp.eq.s32.totalorder %s26, 1
      %p296 = scmp.ne.s32.totalorder %s291, %s293
      %p297 = scmp.eq.s32.totalorder %s26, 0
      %p298 = por %p296, %p297
      %p299 = scmp.ne.s32.totalorder %s291, %s293
      %p300 = scmp.eq.s32.totalorder %s31, 1
      %p301 = por %p299, %p300
      %p302 = scmp.ne.s32.totalorder %s293, %s294
      %p303 = scmp.eq.s32.totalorder %s31, 0
      %p304 = por %p302, %p303
      %p305 = scmp.ne.s32.totalorder %s293, %s294
      %p306 = scmp.eq.s32.totalorder %s32, 1
      %p307 = por %p305, %p306
      %p309 = scmp.ne.s32.totalorder %s294, %s308
      %p310 = scmp.eq.s32.totalorder %s32, 0
      %p311 = por %p309, %p310
      %s313 = sadd.s32 %s312, 1
      %p316 = scmp.eq.s32.totalorder %s26, 1
      %p317 = scmp.ne.s32.totalorder %s312, %s314
      %p318 = scmp.eq.s32.totalorder %s26, 0
      %p319 = por %p317, %p318
      %p320 = scmp.ne.s32.totalorder %s312, %s314
      %p321 = scmp.eq.s32.totalorder %s31, 1
      %p322 = por %p320, %p321
      %p323 = scmp.ne.s32.totalorder %s314, %s315
      %p324 = scmp.eq.s32.totalorder %s31, 0
      %p325 = por %p323, %p324
      %p326 = scmp.ne.s32.totalorder %s314, %s315
      %p327 = scmp.eq.s32.totalorder %s32, 1
      %p328 = por %p326, %p327
      %p330 = scmp.ne.s32.totalorder %s315, %s329
      %p331 = scmp.eq.s32.totalorder %s32, 0
      %p332 = por %p330, %p331
      %s334 = sadd.s32 %s333, 1
      %p337 = scmp.eq.s32.totalorder %s26, 1
      %p338 = scmp.ne.s32.totalorder %s333, %s335
      %p339 = scmp.eq.s32.totalorder %s26, 0
      %p340 = por %p338, %p339
      %p341 = scmp.ne.s32.totalorder %s333, %s335
      %p342 = scmp.eq.s32.totalorder %s31, 1
      %p343 = por %p341, %p342
      %p344 = scmp.ne.s32.totalorder %s335, %s336
      %p345 = scmp.eq.s32.totalorder %s31, 0
      %p346 = por %p344, %p345
      %p347 = scmp.ne.s32.totalorder %s335, %s336
      %p348 = scmp.eq.s32.totalorder %s32, 1
      %p349 = por %p347, %p348
      %p351 = scmp.ne.s32.totalorder %s336, %s350
      %p352 = scmp.eq.s32.totalorder %s32, 0
      %p353 = por %p351, %p352
      %s355 = sadd.s32 %s354, 1
      %p358 = scmp.eq.s32.totalorder %s26, 1
      %p359 = scmp.ne.s32.totalorder %s354, %s356
      %p360 = scmp.eq.s32.totalorder %s26, 0
      %p361 = por %p359, %p360
      %p362 = scmp.ne.s32.totalorder %s354, %s356
      %p363 = scmp.eq.s32.totalorder %s31, 1
      %p364 = por %p362, %p363
      %p365 = scmp.ne.s32.totalorder %s356, %s357
      %p366 = scmp.eq.s32.totalorder %s31, 0
      %p367 = por %p365, %p366
      %p368 = scmp.ne.s32.totalorder %s356, %s357
      %p369 = scmp.eq.s32.totalorder %s32, 1
      %p370 = por %p368, %p369
      %p372 = scmp.ne.s32.totalorder %s357, %s371
      %p373 = scmp.eq.s32.totalorder %s32, 0
      %p374 = por %p372, %p373
      %s376 = sadd.s32 %s375, 1
      %p379 = scmp.eq.s32.totalorder %s26, 1
      %p380 = scmp.ne.s32.totalorder %s375, %s377
      %p381 = scmp.eq.s32.totalorder %s26, 0
      %p382 = por %p380, %p381
      %p383 = scmp.ne.s32.totalorder %s375, %s377
      %p384 = scmp.eq.s32.totalorder %s31, 1
      %p385 = por %p383, %p384
      %p386 = scmp.ne.s32.totalorder %s377, %s378
      %p387 = scmp.eq.s32.totalorder %s31, 0
      %p388 = por %p386, %p387
      %p389 = scmp.ne.s32.totalorder %s377, %s378
      %p390 = scmp.eq.s32.totalorder %s32, 1
      %p391 = por %p389, %p390
      %p393 = scmp.ne.s32.totalorder %s378, %s392
      %p394 = scmp.eq.s32.totalorder %s32, 0
      %p395 = por %p393, %p394
      %s397 = sadd.s32 %s396, 1
      %p400 = scmp.eq.s32.totalorder %s26, 1
      %p401 = scmp.ne.s32.totalorder %s396, %s398
      %p402 = scmp.eq.s32.totalorder %s26, 0
      %p403 = por %p401, %p402
      %p404 = scmp.ne.s32.totalorder %s396, %s398
      %p405 = scmp.eq.s32.totalorder %s31, 1
      %p406 = por %p404, %p405
      %p407 = scmp.ne.s32.totalorder %s398, %s399
      %p408 = scmp.eq.s32.totalorder %s31, 0
      %p409 = por %p407, %p408
      %p410 = scmp.ne.s32.totalorder %s398, %s399
      %p411 = scmp.eq.s32.totalorder %s32, 1
      %p412 = por %p410, %p411
      %p414 = scmp.ne.s32.totalorder %s399, %s413
      %p415 = scmp.eq.s32.totalorder %s32, 0
      %p416 = por %p414, %p415
      %s418 = sadd.s32 %s417, 1
      %p421 = scmp.eq.s32.totalorder %s26, 1
      %p422 = scmp.ne.s32.totalorder %s417, %s419
      %p423 = scmp.eq.s32.totalorder %s26, 0
      %p424 = por %p422, %p423
      %p425 = scmp.ne.s32.totalorder %s417, %s419
      %p426 = scmp.eq.s32.totalorder %s31, 1
      %p427 = por %p425, %p426
      %p428 = scmp.ne.s32.totalorder %s419, %s420
      %p429 = scmp.eq.s32.totalorder %s31, 0
      %p430 = por %p428, %p429
      %p431 = scmp.ne.s32.totalorder %s419, %s420
      %p432 = scmp.eq.s32.totalorder %s32, 1
      %p433 = por %p431, %p432
      %p435 = scmp.ne.s32.totalorder %s420, %s434
      %p436 = scmp.eq.s32.totalorder %s32, 0
      %p437 = por %p435, %p436
      %s438 = ssub.s32 %s26, %s33
      %p439 = scmp.eq.s32.totalorder %s438, 0
      %s441 = sadd.s32 %s440, 1
      %s442 = scalar_select %p439, %s440, %s441
      %p445 = pneg %p439
      %p446 = scmp.eq.s32.totalorder %s26, 1
      %p447 = por %p445, %p446
      %p448 = scmp.ne.s32.totalorder %s440, %s443
      %p449 = scmp.eq.s32.totalorder %s26, 0
      %p450 = por %p448, %p449
      %p451 = scmp.ne.s32.totalorder %s440, %s443
      %p452 = scmp.eq.s32.totalorder %s31, 1
      %p453 = por %p451, %p452
      %p454 = scmp.ne.s32.totalorder %s443, %s444
      %p455 = scmp.eq.s32.totalorder %s31, 0
      %p456 = por %p454, %p455
      %p457 = scmp.ne.s32.totalorder %s443, %s444
      %p458 = scmp.eq.s32.totalorder %s32, 1
      %p459 = por %p457, %p458
      %p461 = scmp.ne.s32.totalorder %s444, %s460
      %p462 = scmp.eq.s32.totalorder %s32, 0
      %p463 = por %p461, %p462
      %p464 = scmp.le.s32.totalorder 1, %s26
      %p465 = scmp.lt.s32.totalorder %s26, 3
      %p466 = pnand %p464, %p465
      %p467 = pneg %p466
      // Predicated region
      $region9: #{model_forward.1} parent=5 // pred_check
        _
      $region10: #{model_forward.1} parent=5 // pred_check_branch
        %469 = sbr.rel (%p466) target = $region12
      $region11: #{model_forward.1} parent=5 // pred_region
        %s470 = ssub.s32 %s26, 1
        // Predicated region
        $region13: #{model_forward.1} parent=11 // pred_check
          %p471 = pneg %p73
        $region14: #{model_forward.1} parent=11 // pred_check_branch
          %473 = sbr.rel (%p471) target = $region16
        $region15: #{model_forward.1} parent=11 // pred_region
          _
        $region16: #{model_forward.1} parent=11 // pred_fallthru
          _
        // Predicated region
        $region17: #{model_forward.1} parent=11 // pred_check
          %p474 = pneg %p94
        $region18: #{model_forward.1} parent=11 // pred_check_branch
          %476 = sbr.rel (%p474) target = $region20
        $region19: #{model_forward.1} parent=11 // pred_region
          _
        $region20: #{model_forward.1} parent=11 // pred_fallthru
          _
        // Predicated region
        $region21: #{model_forward.1} parent=11 // pred_check
          %p477 = pneg %p115
        $region22: #{model_forward.1} parent=11 // pred_check_branch
          %479 = sbr.rel (%p477) target = $region24
        $region23: #{model_forward.1} parent=11 // pred_region
          %481 = vsyncadd [#allocation5], 0
          %s482 = sshll.u32 %s3, 4
          %s483 = int_to_ptr.hbm [resolvable:$true] %s482
          %s484 = sshll.u32 [#allocation4], 4
          %s485 = int_to_ptr.vmem [resolvable:$true] %s484
          %490 = dma.hbm_to_vmem [thread:$0]  %s483, 12800, %s485, [#allocation5], 128, 128, 8
        $region24: #{model_forward.1} parent=11 // pred_fallthru
          _
        // Predicated region
        $region25: #{model_forward.1} parent=11 // pred_check
          %p491 = pneg %p136
        $region26: #{model_forward.1} parent=11 // pred_check_branch
          %493 = sbr.rel (%p491) target = $region28
        $region27: #{model_forward.1} parent=11 // pred_region
          _
        $region28: #{model_forward.1} parent=11 // pred_fallthru
          _
        // Predicated region
        $region29: #{model_forward.1} parent=11 // pred_check
          %p494 = pneg %p157
        $region30: #{model_forward.1} parent=11 // pred_check_branch
          %496 = sbr.rel (%p494) target = $region32
        $region31: #{model_forward.1} parent=11 // pred_region
          _
        $region32: #{model_forward.1} parent=11 // pred_fallthru
          _
        // Predicated region
        $region33: #{model_forward.1} parent=11 // pred_check
          %p497 = pneg %p178
        $region34: #{model_forward.1} parent=11 // pred_check_branch
          %499 = sbr.rel (%p497) target = $region36
        $region35: #{model_forward.1} parent=11 // pred_region
          _
        $region36: #{model_forward.1} parent=11 // pred_fallthru
          _
        // Predicated region
        $region37: #{model_forward.1} parent=11 // pred_check
          %p500 = pneg %p199
        $region38: #{model_forward.1} parent=11 // pred_check_branch
          %502 = sbr.rel (%p500) target = $region40
        $region39: #{model_forward.1} parent=11 // pred_region
          _
        $region40: #{model_forward.1} parent=11 // pred_fallthru
          _
        // Predicated region
        $region41: #{model_forward.1} parent=11 // pred_check
          %p503 = pneg %p220
        $region42: #{model_forward.1} parent=11 // pred_check_branch
          %505 = sbr.rel (%p503) target = $region44
        $region43: #{model_forward.1} parent=11 // pred_region
          _
        $region44: #{model_forward.1} parent=11 // pred_fallthru
          _
        // Predicated region
        $region45: #{model_forward.1} parent=11 // pred_check
          %p506 = pneg %p241
        $region46: #{model_forward.1} parent=11 // pred_check_branch
          %508 = sbr.rel (%p506) target = $region48
        $region47: #{model_forward.1} parent=11 // pred_region
          _
        $region48: #{model_forward.1} parent=11 // pred_fallthru
          _
        // Predicated region
        $region49: #{model_forward.1} parent=11 // pred_check
          %p509 = pneg %p262
        $region50: #{model_forward.1} parent=11 // pred_check_branch
          %511 = sbr.rel (%p509) target = $region52
        $region51: #{model_forward.1} parent=11 // pred_region
          _
        $region52: #{model_forward.1} parent=11 // pred_fallthru
          _
        // Predicated region
        $region53: #{model_forward.1} parent=11 // pred_check
          %p512 = pneg %p283
        $region54: #{model_forward.1} parent=11 // pred_check_branch
          %514 = sbr.rel (%p512) target = $region56
        $region55: #{model_forward.1} parent=11 // pred_region
          _
        $region56: #{model_forward.1} parent=11 // pred_fallthru
          _
        // Predicated region
        $region57: #{model_forward.1} parent=11 // pred_check
          %p515 = pneg %p304
        $region58: #{model_forward.1} parent=11 // pred_check_branch
          %517 = sbr.rel (%p515) target = $region60
        $region59: #{model_forward.1} parent=11 // pred_region
          _
        $region60: #{model_forward.1} parent=11 // pred_fallthru
          _
        // Predicated region
        $region61: #{model_forward.1} parent=11 // pred_check
          %p518 = pneg %p325
        $region62: #{model_forward.1} parent=11 // pred_check_branch
          %520 = sbr.rel (%p518) target = $region64
        $region63: #{model_forward.1} parent=11 // pred_region
          _
        $region64: #{model_forward.1} parent=11 // pred_fallthru
          _
        // Predicated region
        $region65: #{model_forward.1} parent=11 // pred_check
          %p521 = pneg %p346
        $region66: #{model_forward.1} parent=11 // pred_check_branch
          %523 = sbr.rel (%p521) target = $region68
        $region67: #{model_forward.1} parent=11 // pred_region
          _
        $region68: #{model_forward.1} parent=11 // pred_fallthru
          _
        // Predicated region
        $region69: #{model_forward.1} parent=11 // pred_check
          %p524 = pneg %p367
        $region70: #{model_forward.1} parent=11 // pred_check_branch
          %526 = sbr.rel (%p524) target = $region72
        $region71: #{model_forward.1} parent=11 // pred_region
          _
        $region72: #{model_forward.1} parent=11 // pred_fallthru
          _
        // Predicated region
        $region73: #{model_forward.1} parent=11 // pred_check
          %p527 = pneg %p388
        $region74: #{model_forward.1} parent=11 // pred_check_branch
          %529 = sbr.rel (%p527) target = $region76
        $region75: #{model_forward.1} parent=11 // pred_region
          _
        $region76: #{model_forward.1} parent=11 // pred_fallthru
          _
        // Predicated region
        $region77: #{model_forward.1} parent=11 // pred_check
          %p530 = pneg %p409
        $region78: #{model_forward.1} parent=11 // pred_check_branch
          %532 = sbr.rel (%p530) target = $region80
        $region79: #{model_forward.1} parent=11 // pred_region
          _
        $region80: #{model_forward.1} parent=11 // pred_fallthru
          _
        // Predicated region
        $region81: #{model_forward.1} parent=11 // pred_check
          %p533 = pneg %p430
        $region82: #{model_forward.1} parent=11 // pred_check_branch
          %535 = sbr.rel (%p533) target = $region84
        $region83: #{model_forward.1} parent=11 // pred_region
          _
        $region84: #{model_forward.1} parent=11 // pred_fallthru
          _
      $region12: #{model_forward.1} parent=5 // pred_fallthru
        _
      %p536 = scmp.lt.s32.totalorder %s26, 2
      // Predicated region
      $region85: #{model_forward.1} parent=5 // pred_check
        %p537 = pneg %p536
      $region86: #{model_forward.1} parent=5 // pred_check_branch
        %539 = sbr.rel (%p537) target = $region88
      $region87: #{model_forward.1} parent=5 // pred_region
        // Predicated region
        $region89: #{model_forward.1} parent=87 // pred_check
          %p540 = pneg %p46
        $region90: #{model_forward.1} parent=87 // pred_check_branch
          %542 = sbr.rel (%p540) target = $region92
        $region91: #{model_forward.1} parent=87 // pred_region
          %p543 = scmp.lt.s32.totalorder %s26, 1
          %s544 = scalar_select %p543, %s26, 1
          %s545 = smul.addr %s544, 2
          %s546 = smul.addr %s545, 2
          %s547 = scalar_lea.vmem %s0, %s546
        $region92: #{model_forward.1} parent=87 // pred_fallthru
          _
      $region88: #{model_forward.1} parent=5 // pred_fallthru
        _
      %p548 = scmp.le.s32.totalorder 1, %s26
      %p549 = scmp.lt.s32.totalorder %s26, 3
      %p550 = pnand %p548, %p549
      %p551 = pneg %p550
      // Predicated region
      $region93: #{model_forward.1} parent=5 // pred_check
        _
      $region94: #{model_forward.1} parent=5 // pred_check_branch
        %553 = sbr.rel (%p550) target = $region96
      $region95: #{model_forward.1} parent=5 // pred_region
        %s554 = ssub.s32 %s26, 1
        // Predicated region
        $region97: #{model_forward.1} parent=95 // pred_check
          %p555 = pneg %p115
        $region98: #{model_forward.1} parent=95 // pred_check_branch
          %557 = sbr.rel (%p555) target = $region100
        $region99: #{model_forward.1} parent=95 // pred_region
          %559 = dma.done [#allocation5], 12800
        $region100: #{model_forward.1} parent=95 // pred_fallthru
          _
        %p560 = scmp.lt.s32.totalorder %s31, 1
        %s561 = scalar_select %p560, %s31, 1
        %s562 = smul.addr %s561, 2
        %s563 = smul.addr %s562, 2
        %s564 = scalar_lea.vmem %s0, %s563
        %p565 = pneg %p52
        %p566 = pneg %p49
        %p567 = pneg %p73
        %p568 = pneg %p70
        %p569 = pneg %p94
        %p570 = pneg %p91
        %p571 = pneg %p115
        %p572 = pneg %p112
        %p573 = pneg %p136
        %p574 = pneg %p133
        %p575 = pneg %p157
        %p576 = pneg %p154
        %p577 = pneg %p178
        %p578 = pneg %p175
        %p579 = pneg %p199
        %p580 = pneg %p196
        %p581 = pneg %p220
        %p582 = pneg %p217
        %p583 = pneg %p241
        %p584 = pneg %p238
        %p585 = pneg %p262
        %p586 = pneg %p259
        %p587 = pneg %p283
        %p588 = pneg %p280
        %p589 = pneg %p304
        %p590 = pneg %p301
        %p591 = pneg %p325
        %p592 = pneg %p322
        %p593 = pneg %p346
        %p594 = pneg %p343
        %p595 = pneg %p367
        %p596 = pneg %p364
        %p597 = pneg %p388
        %p598 = pneg %p385
        %p599 = pneg %p409
        %p600 = pneg %p406
        %p601 = pneg %p430
        %p602 = pneg %p427
        %p603 = pneg %p456
        %p604 = pneg %p453
        %p605 = scmp.lt.s32.totalorder %s31, 1
        %s606 = scalar_select %p605, %s31, 1
        %s607 = smul.addr %s606, 2
        %s608 = smul.addr %s607, 4
        %s609 = scalar_lea.vmem %s19, %s608
        %p610 = scmp.lt.s32.totalorder %s31, 1
        %s611 = scalar_select %p610, %s31, 1
        %s612 = smul.addr %s611, 2
        %s613 = smul.addr %s612, 2
        %s614 = scalar_lea.vmem %s0, %s613
        %p615 = scmp.lt.s32.totalorder %s31, 1
        %s616 = scalar_select %p615, %s31, 1
        %s617 = smul.addr %s616, 2
        %s618 = smul.addr %s617, 4
        %s619 = scalar_lea.vmem %s19, %s618
        %v620 = vld [vmem:[%s614] sm:$0xf]
        %v621 = vld [vmem:[%s1] sm:$0xff]
        %v622 = vld [vmem:[%s1 + $0x8] sm:$0xff]
        %v623 = vld [vmem:[%s1 + $0x10] sm:$0xff]
        %v624 = vld [vmem:[%s1 + $0x18] sm:$0xff]
        %v625 = vld [vmem:[%s1 + $0x20] sm:$0x3f]
        %v626 = vld [vmem:[%s2] sm:$0xff]
        %v627 = vld [vmem:[%s2 + $0x8] sm:$0xff]
        %v628 = vld [vmem:[%s2 + $0x10] sm:$0xff]
        %v629 = vld [vmem:[%s2 + $0x18] sm:$0xff]
        %v630 = vld [vmem:[%s2 + $0x20] sm:$0x3f]
        %632 = vset.pattern.permute.xlu0 0
        %633 = vperm.xlu0 %632, %v626
        %v634 = vpop.permute.xlu0 %633
        %637 = vset.pattern.permute.xlu0 0
        %638 = vperm.xlu0 %637, %v627
        %v639 = vpop.permute.xlu0 %638
        %642 = vset.pattern.permute.xlu0 0
        %643 = vperm.xlu0 %642, %v628
        %v644 = vpop.permute.xlu0 %643
        %647 = vset.pattern.permute.xlu0 0
        %648 = vperm.xlu0 %647, %v629
        %v649 = vpop.permute.xlu0 %648
        %652 = vset.pattern.permute.xlu0 0
        %653 = vperm.xlu0 %652, %v630
        %v654 = vpop.permute.xlu0 %653
        %657 = vst [vmem:[#allocation1] ss:$4 sm:$0xff] %v620
        %v658 = vld.sshfl [vmem:[#allocation1] sm:$0xff pattern:$0x73625140]
        %v659 = vld.sshfl [vmem:[#allocation1 + $0x8] sm:$0xff pattern:$0x73625140]
        %vm660 = vcmask 15360
        %v662 = vsel %vm660, %v621, 0
        %v665 = vsel %vm660, %v622, 0
        %v668 = vsel %vm660, %v623, 0
        %v671 = vsel %vm660, %v624, 0
        %v674 = vsel %vm660, %v625, 0
        %vm676 = vcmask 1041408
        %v677 = vsel %vm676, %v658, 0
        %v679 = vsel %vm676, %v659, 0
        %681 = vmatpush.msra.mxu0 0.0
        %682 = vmatpush.msra.mxu0 0.0
        %683 = vmatpush.msra.mxu0 0.0
        %684 = vmatpush.msra.mxu0 0.0
        %685 = vmatpush.msra.mxu0 0.0
        %686 = vmatpush.msra.mxu0 0.0
        %687 = vmatpush.msra.mxu0 0.0
        %688 = vmatpush.msra.mxu0 0.0
        %689 = vmatpush.msra.mxu0 0.0
        %690 = vmatpush.msra.mxu0 0.0
        %691 = vmatpush.msra.mxu0 0.0
        %692 = vmatpush.msra.mxu0 0.0
        %693 = vmatpush.msra.mxu0 0.0
        %694 = vmatpush.msra.mxu0 0.0
        %695 = vmatpush.msra.mxu0 0.0
        %696 = vmatpush.msra.mxu0 %v677
        %697 = vmatmul.f32.gmra.mxu0 %v662
        %v698 = vpop.f32.mrf.mxu0
        %v699 = vadd.f32 %v634, %v698
        %700 = vmatmul.f32.gmra.mxu0 %v665
        %v701 = vpop.f32.mrf.mxu0
        %v702 = vadd.f32 %v639, %v701
        %703 = vmatmul.f32.gmra.mxu0 %v668
        %v704 = vpop.f32.mrf.mxu0
        %v705 = vadd.f32 %v644, %v704
        %706 = vmatmul.f32.gmra.mxu0 %v671
        %v707 = vpop.f32.mrf.mxu0
        %v708 = vadd.f32 %v649, %v707
        %709 = vmatmul.f32.gmra.mxu0 %v674
        %v710 = vpop.f32.mrf.mxu0
        %v711 = vadd.f32 %v654, %v710
        %712 = vdwg.mxu0
        %713 = vmatpush.msra.mxu0 0.0
        %714 = vmatpush.msra.mxu0 0.0
        %715 = vmatpush.msra.mxu0 0.0
        %716 = vmatpush.msra.mxu0 0.0
        %717 = vmatpush.msra.mxu0 0.0
        %718 = vmatpush.msra.mxu0 0.0
        %719 = vmatpush.msra.mxu0 0.0
        %720 = vmatpush.msra.mxu0 0.0
        %721 = vmatpush.msra.mxu0 0.0
        %722 = vmatpush.msra.mxu0 0.0
        %723 = vmatpush.msra.mxu0 0.0
        %724 = vmatpush.msra.mxu0 0.0
        %725 = vmatpush.msra.mxu0 0.0
        %726 = vmatpush.msra.mxu0 0.0
        %727 = vmatpush.msra.mxu0 0.0
        %728 = vmatpush.msra.mxu0 %v679
        %729 = vmatmul.f32.gmra.mxu0 %v662
        %v730 = vpop.f32.mrf.mxu0
        %v731 = vadd.f32 %v634, %v730
        %732 = vmatmul.f32.gmra.mxu0 %v665
        %v733 = vpop.f32.mrf.mxu0
        %v734 = vadd.f32 %v639, %v733
        %735 = vmatmul.f32.gmra.mxu0 %v668
        %v736 = vpop.f32.mrf.mxu0
        %v737 = vadd.f32 %v644, %v736
        %738 = vmatmul.f32.gmra.mxu0 %v671
        %v739 = vpop.f32.mrf.mxu0
        %v740 = vadd.f32 %v649, %v739
        %741 = vmatmul.f32.gmra.mxu0 %v674
        %v742 = vpop.f32.mrf.mxu0
        %v743 = vadd.f32 %v654, %v742
        %744 = vdwg.mxu0
        %v745 = vmul.f32 %v699, 0.5
        %v746 = vmul.f32 %v731, 0.5
        %v747 = vmul.f32 %v702, 0.5
        %v748 = vmul.f32 %v734, 0.5
        %v749 = vmul.f32 %v705, 0.5
        %v750 = vmul.f32 %v737, 0.5
        %v751 = vmul.f32 %v708, 0.5
        %v752 = vmul.f32 %v740, 0.5
        %v753 = vmul.f32 %v711, 0.5
        %v754 = vmul.f32 %v743, 0.5
        %v755 = vmul.f32 %v699, 0.70710677
        %v756 = vmul.f32 %v731, 0.70710677
        %v757 = vmul.f32 %v702, 0.70710677
        %v758 = vmul.f32 %v734, 0.70710677
        %v759 = vmul.f32 %v705, 0.70710677
        %v760 = vmul.f32 %v737, 0.70710677
        %v761 = vmul.f32 %v708, 0.70710677
        %v762 = vmul.f32 %v740, 0.70710677
        %v763 = vmul.f32 %v711, 0.70710677
        %v764 = vmul.f32 %v743, 0.70710677
        %v765 = vmul.f32 %v755, %v755
        %v766 = vmin.f32 16.0, %v765
        %v767 = vmul.f32 %v766, 2.1237322e-06
        %v768 = vadd.f32 %v767, 0.00028619796
        %v769 = vmul.f32 %v766, %v768
        %v770 = vadd.f32 %v769, 0.0036580483
        %v771 = vmul.f32 %v766, %v770
        %v772 = vadd.f32 %v771, 0.05243302
        %v773 = vmul.f32 %v766, %v772
        %v774 = vadd.f32 %v773, 0.18741608
        %v775 = vmul.f32 %v766, %v774
        %v776 = vadd.f32 %v775, 1.1283791
        %v777 = vmul.f32 %v755, %v776
        %v778 = vmul.f32 %v766, 3.8918573e-05
        %v779 = vadd.f32 %v778, 0.001143296
        %v780 = vmul.f32 %v766, %v779
        %v781 = vadd.f32 %v780, 0.014752088
        %v782 = vmul.f32 %v766, %v781
        %v783 = vadd.f32 %v782, 0.112945676
        %v784 = vmul.f32 %v766, %v783
        %v785 = vadd.f32 %v784, 0.4994258
        %v786 = vmul.f32 %v766, %v785
        %v787 = vadd.f32 %v786, 1.0
        %v788 = vrcp.pop %v787
        %v789 = vmul.f32 %v787, %v788
        %v790 = vsub.f32 1.0, %v789
        %v791 = vmul.f32 %v788, %v790
        %v792 = vadd.f32 %v788, %v791
        %vm793 = vweird.f32 %v787
        %vm794 = vweird.f32 %v788
        %vm795 = vmor %vm793, %vm794
        %v796 = vsel %vm795, %v788, %v792
        %v797 = vand.u32 2147483647, %v787
        %vm798 = vcmp.eq.f32.partialorder %v797, 8.507059e+37
        %v799 = vand.u32 %v787, 2147483648
        %v800 = vor.u32 1.1754944e-38, %v799
        %v801 = vsel %vm798, %v800, %v796
        %v802 = vmul.f32 %v777, %v801
        %v803 = vmin.f32 %v802, 1.0
        %v804 = vmax.f32 %v803, -1.0
        %v805 = vmul.f32 %v756, %v756
        %v806 = vmin.f32 16.0, %v805
        %v807 = vmul.f32 %v806, 2.1237322e-06
        %v808 = vadd.f32 %v807, 0.00028619796
        %v809 = vmul.f32 %v806, %v808
        %v810 = vadd.f32 %v809, 0.0036580483
        %v811 = vmul.f32 %v806, %v810
        %v812 = vadd.f32 %v811, 0.05243302
        %v813 = vmul.f32 %v806, %v812
        %v814 = vadd.f32 %v813, 0.18741608
        %v815 = vmul.f32 %v806, %v814
        %v816 = vadd.f32 %v815, 1.1283791
        %v817 = vmul.f32 %v756, %v816
        %v818 = vmul.f32 %v806, 3.8918573e-05
        %v819 = vadd.f32 %v818, 0.001143296
        %v820 = vmul.f32 %v806, %v819
        %v821 = vadd.f32 %v820, 0.014752088
        %v822 = vmul.f32 %v806, %v821
        %v823 = vadd.f32 %v822, 0.112945676
        %v824 = vmul.f32 %v806, %v823
        %v825 = vadd.f32 %v824, 0.4994258
        %v826 = vmul.f32 %v806, %v825
        %v827 = vadd.f32 %v826, 1.0
        %v828 = vrcp.pop %v827
        %v829 = vmul.f32 %v827, %v828
        %v830 = vsub.f32 1.0, %v829
        %v831 = vmul.f32 %v828, %v830
        %v832 = vadd.f32 %v828, %v831
        %vm833 = vweird.f32 %v827
        %vm834 = vweird.f32 %v828
        %vm835 = vmor %vm833, %vm834
        %v836 = vsel %vm835, %v828, %v832
        %v837 = vand.u32 2147483647, %v827
        %vm838 = vcmp.eq.f32.partialorder %v837, 8.507059e+37
        %v839 = vand.u32 %v827, 2147483648
        %v840 = vor.u32 1.1754944e-38, %v839
        %v841 = vsel %vm838, %v840, %v836
        %v842 = vmul.f32 %v817, %v841
        %v843 = vmin.f32 %v842, 1.0
        %v844 = vmax.f32 %v843, -1.0
        %v845 = vmul.f32 %v757, %v757
        %v846 = vmin.f32 16.0, %v845
        %v847 = vmul.f32 %v846, 2.1237322e-06
        %v848 = vadd.f32 %v847, 0.00028619796
        %v849 = vmul.f32 %v846, %v848
        %v850 = vadd.f32 %v849, 0.0036580483
        %v851 = vmul.f32 %v846, %v850
        %v852 = vadd.f32 %v851, 0.05243302
        %v853 = vmul.f32 %v846, %v852
        %v854 = vadd.f32 %v853, 0.18741608
        %v855 = vmul.f32 %v846, %v854
        %v856 = vadd.f32 %v855, 1.1283791
        %v857 = vmul.f32 %v757, %v856
        %v858 = vmul.f32 %v846, 3.8918573e-05
        %v859 = vadd.f32 %v858, 0.001143296
        %v860 = vmul.f32 %v846, %v859
        %v861 = vadd.f32 %v860, 0.014752088
        %v862 = vmul.f32 %v846, %v861
        %v863 = vadd.f32 %v862, 0.112945676
        %v864 = vmul.f32 %v846, %v863
        %v865 = vadd.f32 %v864, 0.4994258
        %v866 = vmul.f32 %v846, %v865
        %v867 = vadd.f32 %v866, 1.0
        %v868 = vrcp.pop %v867
        %v869 = vmul.f32 %v867, %v868
        %v870 = vsub.f32 1.0, %v869
        %v871 = vmul.f32 %v868, %v870
        %v872 = vadd.f32 %v868, %v871
        %vm873 = vweird.f32 %v867
        %vm874 = vweird.f32 %v868
        %vm875 = vmor %vm873, %vm874
        %v876 = vsel %vm875, %v868, %v872
        %v877 = vand.u32 2147483647, %v867
        %vm878 = vcmp.eq.f32.partialorder %v877, 8.507059e+37
        %v879 = vand.u32 %v867, 2147483648
        %v880 = vor.u32 1.1754944e-38, %v879
        %v881 = vsel %vm878, %v880, %v876
        %v882 = vmul.f32 %v857, %v881
        %v883 = vmin.f32 %v882, 1.0
        %v884 = vmax.f32 %v883, -1.0
        %v885 = vmul.f32 %v758, %v758
        %v886 = vmin.f32 16.0, %v885
        %v887 = vmul.f32 %v886, 2.1237322e-06
        %v888 = vadd.f32 %v887, 0.00028619796
        %v889 = vmul.f32 %v886, %v888
        %v890 = vadd.f32 %v889, 0.0036580483
        %v891 = vmul.f32 %v886, %v890
        %v892 = vadd.f32 %v891, 0.05243302
        %v893 = vmul.f32 %v886, %v892
        %v894 = vadd.f32 %v893, 0.18741608
        %v895 = vmul.f32 %v886, %v894
        %v896 = vadd.f32 %v895, 1.1283791
        %v897 = vmul.f32 %v758, %v896
        %v898 = vmul.f32 %v886, 3.8918573e-05
        %v899 = vadd.f32 %v898, 0.001143296
        %v900 = vmul.f32 %v886, %v899
        %v901 = vadd.f32 %v900, 0.014752088
        %v902 = vmul.f32 %v886, %v901
        %v903 = vadd.f32 %v902, 0.112945676
        %v904 = vmul.f32 %v886, %v903
        %v905 = vadd.f32 %v904, 0.4994258
        %v906 = vmul.f32 %v886, %v905
        %v907 = vadd.f32 %v906, 1.0
        %v908 = vrcp.pop %v907
        %v909 = vmul.f32 %v907, %v908
        %v910 = vsub.f32 1.0, %v909
        %v911 = vmul.f32 %v908, %v910
        %v912 = vadd.f32 %v908, %v911
        %vm913 = vweird.f32 %v907
        %vm914 = vweird.f32 %v908
        %vm915 = vmor %vm913, %vm914
        %v916 = vsel %vm915, %v908, %v912
        %v917 = vand.u32 2147483647, %v907
        %vm918 = vcmp.eq.f32.partialorder %v917, 8.507059e+37
        %v919 = vand.u32 %v907, 2147483648
        %v920 = vor.u32 1.1754944e-38, %v919
        %v921 = vsel %vm918, %v920, %v916
        %v922 = vmul.f32 %v897, %v921
        %v923 = vmin.f32 %v922, 1.0
        %v924 = vmax.f32 %v923, -1.0
        %v925 = vmul.f32 %v759, %v759
        %v926 = vmin.f32 16.0, %v925
        %v927 = vmul.f32 %v926, 2.1237322e-06
        %v928 = vadd.f32 %v927, 0.00028619796
        %v929 = vmul.f32 %v926, %v928
        %v930 = vadd.f32 %v929, 0.0036580483
        %v931 = vmul.f32 %v926, %v930
        %v932 = vadd.f32 %v931, 0.05243302
        %v933 = vmul.f32 %v926, %v932
        %v934 = vadd.f32 %v933, 0.18741608
        %v935 = vmul.f32 %v926, %v934
        %v936 = vadd.f32 %v935, 1.1283791
        %v937 = vmul.f32 %v759, %v936
        %v938 = vmul.f32 %v926, 3.8918573e-05
        %v939 = vadd.f32 %v938, 0.001143296
        %v940 = vmul.f32 %v926, %v939
        %v941 = vadd.f32 %v940, 0.014752088
        %v942 = vmul.f32 %v926, %v941
        %v943 = vadd.f32 %v942, 0.112945676
        %v944 = vmul.f32 %v926, %v943
        %v945 = vadd.f32 %v944, 0.4994258
        %v946 = vmul.f32 %v926, %v945
        %v947 = vadd.f32 %v946, 1.0
        %v948 = vrcp.pop %v947
        %v949 = vmul.f32 %v947, %v948
        %v950 = vsub.f32 1.0, %v949
        %v951 = vmul.f32 %v948, %v950
        %v952 = vadd.f32 %v948, %v951
        %vm953 = vweird.f32 %v947
        %vm954 = vweird.f32 %v948
        %vm955 = vmor %vm953, %vm954
        %v956 = vsel %vm955, %v948, %v952
        %v957 = vand.u32 2147483647, %v947
        %vm958 = vcmp.eq.f32.partialorder %v957, 8.507059e+37
        %v959 = vand.u32 %v947, 2147483648
        %v960 = vor.u32 1.1754944e-38, %v959
        %v961 = vsel %vm958, %v960, %v956
        %v962 = vmul.f32 %v937, %v961
        %v963 = vmin.f32 %v962, 1.0
        %v964 = vmax.f32 %v963, -1.0
        %v965 = vmul.f32 %v760, %v760
        %v966 = vmin.f32 16.0, %v965
        %v967 = vmul.f32 %v966, 2.1237322e-06
        %v968 = vadd.f32 %v967, 0.00028619796
        %v969 = vmul.f32 %v966, %v968
        %v970 = vadd.f32 %v969, 0.0036580483
        %v971 = vmul.f32 %v966, %v970
        %v972 = vadd.f32 %v971, 0.05243302
        %v973 = vmul.f32 %v966, %v972
        %v974 = vadd.f32 %v973, 0.18741608
        %v975 = vmul.f32 %v966, %v974
        %v976 = vadd.f32 %v975, 1.1283791
        %v977 = vmul.f32 %v760, %v976
        %v978 = vmul.f32 %v966, 3.8918573e-05
        %v979 = vadd.f32 %v978, 0.001143296
        %v980 = vmul.f32 %v966, %v979
        %v981 = vadd.f32 %v980, 0.014752088
        %v982 = vmul.f32 %v966, %v981
        %v983 = vadd.f32 %v982, 0.112945676
        %v984 = vmul.f32 %v966, %v983
        %v985 = vadd.f32 %v984, 0.4994258
        %v986 = vmul.f32 %v966, %v985
        %v987 = vadd.f32 %v986, 1.0
        %v988 = vrcp.pop %v987
        %v989 = vmul.f32 %v987, %v988
        %v990 = vsub.f32 1.0, %v989
        %v991 = vmul.f32 %v988, %v990
        %v992 = vadd.f32 %v988, %v991
        %vm993 = vweird.f32 %v987
        %vm994 = vweird.f32 %v988
        %vm995 = vmor %vm993, %vm994
        %v996 = vsel %vm995, %v988, %v992
        %v997 = vand.u32 2147483647, %v987
        %vm998 = vcmp.eq.f32.partialorder %v997, 8.507059e+37
        %v999 = vand.u32 %v987, 2147483648
        %v1000 = vor.u32 1.1754944e-38, %v999
        %v1001 = vsel %vm998, %v1000, %v996
        %v1002 = vmul.f32 %v977, %v1001
        %v1003 = vmin.f32 %v1002, 1.0
        %v1004 = vmax.f32 %v1003, -1.0
        %v1005 = vmul.f32 %v761, %v761
        %v1006 = vmin.f32 16.0, %v1005
        %v1007 = vmul.f32 %v1006, 2.1237322e-06
        %v1008 = vadd.f32 %v1007, 0.00028619796
        %v1009 = vmul.f32 %v1006, %v1008
        %v1010 = vadd.f32 %v1009, 0.0036580483
        %v1011 = vmul.f32 %v1006, %v1010
        %v1012 = vadd.f32 %v1011, 0.05243302
        %v1013 = vmul.f32 %v1006, %v1012
        %v1014 = vadd.f32 %v1013, 0.18741608
        %v1015 = vmul.f32 %v1006, %v1014
        %v1016 = vadd.f32 %v1015, 1.1283791
        %v1017 = vmul.f32 %v761, %v1016
        %v1018 = vmul.f32 %v1006, 3.8918573e-05
        %v1019 = vadd.f32 %v1018, 0.001143296
        %v1020 = vmul.f32 %v1006, %v1019
        %v1021 = vadd.f32 %v1020, 0.014752088
        %v1022 = vmul.f32 %v1006, %v1021
        %v1023 = vadd.f32 %v1022, 0.112945676
        %v1024 = vmul.f32 %v1006, %v1023
        %v1025 = vadd.f32 %v1024, 0.4994258
        %v1026 = vmul.f32 %v1006, %v1025
        %v1027 = vadd.f32 %v1026, 1.0
        %v1028 = vrcp.pop %v1027
        %v1029 = vmul.f32 %v1027, %v1028
        %v1030 = vsub.f32 1.0, %v1029
        %v1031 = vmul.f32 %v1028, %v1030
        %v1032 = vadd.f32 %v1028, %v1031
        %vm1033 = vweird.f32 %v1027
        %vm1034 = vweird.f32 %v1028
        %vm1035 = vmor %vm1033, %vm1034
        %v1036 = vsel %vm1035, %v1028, %v1032
        %v1037 = vand.u32 2147483647, %v1027
        %vm1038 = vcmp.eq.f32.partialorder %v1037, 8.507059e+37
        %v1039 = vand.u32 %v1027, 2147483648
        %v1040 = vor.u32 1.1754944e-38, %v1039
        %v1041 = vsel %vm1038, %v1040, %v1036
        %v1042 = vmul.f32 %v1017, %v1041
        %v1043 = vmin.f32 %v1042, 1.0
        %v1044 = vmax.f32 %v1043, -1.0
        %v1045 = vmul.f32 %v762, %v762
        %v1046 = vmin.f32 16.0, %v1045
        %v1047 = vmul.f32 %v1046, 2.1237322e-06
        %v1048 = vadd.f32 %v1047, 0.00028619796
        %v1049 = vmul.f32 %v1046, %v1048
        %v1050 = vadd.f32 %v1049, 0.0036580483
        %v1051 = vmul.f32 %v1046, %v1050
        %v1052 = vadd.f32 %v1051, 0.05243302
        %v1053 = vmul.f32 %v1046, %v1052
        %v1054 = vadd.f32 %v1053, 0.18741608
        %v1055 = vmul.f32 %v1046, %v1054
        %v1056 = vadd.f32 %v1055, 1.1283791
        %v1057 = vmul.f32 %v762, %v1056
        %v1058 = vmul.f32 %v1046, 3.8918573e-05
        %v1059 = vadd.f32 %v1058, 0.001143296
        %v1060 = vmul.f32 %v1046, %v1059
        %v1061 = vadd.f32 %v1060, 0.014752088
        %v1062 = vmul.f32 %v1046, %v1061
        %v1063 = vadd.f32 %v1062, 0.112945676
        %v1064 = vmul.f32 %v1046, %v1063
        %v1065 = vadd.f32 %v1064, 0.4994258
        %v1066 = vmul.f32 %v1046, %v1065
        %v1067 = vadd.f32 %v1066, 1.0
        %v1068 = vrcp.pop %v1067
        %v1069 = vmul.f32 %v1067, %v1068
        %v1070 = vsub.f32 1.0, %v1069
        %v1071 = vmul.f32 %v1068, %v1070
        %v1072 = vadd.f32 %v1068, %v1071
        %vm1073 = vweird.f32 %v1067
        %vm1074 = vweird.f32 %v1068
        %vm1075 = vmor %vm1073, %vm1074
        %v1076 = vsel %vm1075, %v1068, %v1072
        %v1077 = vand.u32 2147483647, %v1067
        %vm1078 = vcmp.eq.f32.partialorder %v1077, 8.507059e+37
        %v1079 = vand.u32 %v1067, 2147483648
        %v1080 = vor.u32 1.1754944e-38, %v1079
        %v1081 = vsel %vm1078, %v1080, %v1076
        %v1082 = vmul.f32 %v1057, %v1081
        %v1083 = vmin.f32 %v1082, 1.0
        %v1084 = vmax.f32 %v1083, -1.0
        %v1085 = vmul.f32 %v763, %v763
        %v1086 = vmin.f32 16.0, %v1085
        %v1087 = vmul.f32 %v1086, 2.1237322e-06
        %v1088 = vadd.f32 %v1087, 0.00028619796
        %v1089 = vmul.f32 %v1086, %v1088
        %v1090 = vadd.f32 %v1089, 0.0036580483
        %v1091 = vmul.f32 %v1086, %v1090
        %v1092 = vadd.f32 %v1091, 0.05243302
        %v1093 = vmul.f32 %v1086, %v1092
        %v1094 = vadd.f32 %v1093, 0.18741608
        %v1095 = vmul.f32 %v1086, %v1094
        %v1096 = vadd.f32 %v1095, 1.1283791
        %v1097 = vmul.f32 %v763, %v1096
        %v1098 = vmul.f32 %v1086, 3.8918573e-05
        %v1099 = vadd.f32 %v1098, 0.001143296
        %v1100 = vmul.f32 %v1086, %v1099
        %v1101 = vadd.f32 %v1100, 0.014752088
        %v1102 = vmul.f32 %v1086, %v1101
        %v1103 = vadd.f32 %v1102, 0.112945676
        %v1104 = vmul.f32 %v1086, %v1103
        %v1105 = vadd.f32 %v1104, 0.4994258
        %v1106 = vmul.f32 %v1086, %v1105
        %v1107 = vadd.f32 %v1106, 1.0
        %v1108 = vrcp.pop %v1107
        %v1109 = vmul.f32 %v1107, %v1108
        %v1110 = vsub.f32 1.0, %v1109
        %v1111 = vmul.f32 %v1108, %v1110
        %v1112 = vadd.f32 %v1108, %v1111
        %vm1113 = vweird.f32 %v1107
        %vm1114 = vweird.f32 %v1108
        %vm1115 = vmor %vm1113, %vm1114
        %v1116 = vsel %vm1115, %v1108, %v1112
        %v1117 = vand.u32 2147483647, %v1107
        %vm1118 = vcmp.eq.f32.partialorder %v1117, 8.507059e+37
        %v1119 = vand.u32 %v1107, 2147483648
        %v1120 = vor.u32 1.1754944e-38, %v1119
        %v1121 = vsel %vm1118, %v1120, %v1116
        %v1122 = vmul.f32 %v1097, %v1121
        %v1123 = vmin.f32 %v1122, 1.0
        %v1124 = vmax.f32 %v1123, -1.0
        %v1125 = vmul.f32 %v764, %v764
        %v1126 = vmin.f32 16.0, %v1125
        %v1127 = vmul.f32 %v1126, 2.1237322e-06
        %v1128 = vadd.f32 %v1127, 0.00028619796
        %v1129 = vmul.f32 %v1126, %v1128
        %v1130 = vadd.f32 %v1129, 0.0036580483
        %v1131 = vmul.f32 %v1126, %v1130
        %v1132 = vadd.f32 %v1131, 0.05243302
        %v1133 = vmul.f32 %v1126, %v1132
        %v1134 = vadd.f32 %v1133, 0.18741608
        %v1135 = vmul.f32 %v1126, %v1134
        %v1136 = vadd.f32 %v1135, 1.1283791
        %v1137 = vmul.f32 %v764, %v1136
        %v1138 = vmul.f32 %v1126, 3.8918573e-05
        %v1139 = vadd.f32 %v1138, 0.001143296
        %v1140 = vmul.f32 %v1126, %v1139
        %v1141 = vadd.f32 %v1140, 0.014752088
        %v1142 = vmul.f32 %v1126, %v1141
        %v1143 = vadd.f32 %v1142, 0.112945676
        %v1144 = vmul.f32 %v1126, %v1143
        %v1145 = vadd.f32 %v1144, 0.4994258
        %v1146 = vmul.f32 %v1126, %v1145
        %v1147 = vadd.f32 %v1146, 1.0
        %v1148 = vrcp.pop %v1147
        %v1149 = vmul.f32 %v1147, %v1148
        %v1150 = vsub.f32 1.0, %v1149
        %v1151 = vmul.f32 %v1148, %v1150
        %v1152 = vadd.f32 %v1148, %v1151
        %vm1153 = vweird.f32 %v1147
        %vm1154 = vweird.f32 %v1148
        %vm1155 = vmor %vm1153, %vm1154
        %v1156 = vsel %vm1155, %v1148, %v1152
        %v1157 = vand.u32 2147483647, %v1147
        %vm1158 = vcmp.eq.f32.partialorder %v1157, 8.507059e+37
        %v1159 = vand.u32 %v1147, 2147483648
        %v1160 = vor.u32 1.1754944e-38, %v1159
        %v1161 = vsel %vm1158, %v1160, %v1156
        %v1162 = vmul.f32 %v1137, %v1161
        %v1163 = vmin.f32 %v1162, 1.0
        %v1164 = vmax.f32 %v1163, -1.0
        %v1165 = vadd.f32 %v804, 1.0
        %v1166 = vadd.f32 %v844, 1.0
        %v1167 = vadd.f32 %v884, 1.0
        %v1168 = vadd.f32 %v924, 1.0
        %v1169 = vadd.f32 %v964, 1.0
        %v1170 = vadd.f32 %v1004, 1.0
        %v1171 = vadd.f32 %v1044, 1.0
        %v1172 = vadd.f32 %v1084, 1.0
        %v1173 = vadd.f32 %v1124, 1.0
        %v1174 = vadd.f32 %v1164, 1.0
        %v1175 = vmul.f32 %v745, %v1165
        %v1176 = vmul.f32 %v746, %v1166
        %v1177 = vmul.f32 %v747, %v1167
        %v1178 = vmul.f32 %v748, %v1168
        %v1179 = vmul.f32 %v749, %v1169
        %v1180 = vmul.f32 %v750, %v1170
        %v1181 = vmul.f32 %v751, %v1171
        %v1182 = vmul.f32 %v752, %v1172
        %v1183 = vmul.f32 %v753, %v1173
        %v1184 = vmul.f32 %v754, %v1174
        %1185 = vst [vmem:[#allocation2] sm:$0xff] 0.0
        %1186 = vst [vmem:[#allocation2 + $0x20] sm:$0xff] 0.0
        %1187 = vst [vmem:[#allocation2 + $0x40] sm:$0xff] 0.0
        %1188 = vst [vmem:[#allocation2 + $0x60] sm:$0xff] 0.0
        %1189 = vst [vmem:[#allocation2 + $0x80] sm:$0x3f] 0.0
        %1190 = vst [vmem:[#allocation2 + $0x18] sm:$0xff] 0.0
        %1191 = vst [vmem:[#allocation2 + $0x38] sm:$0xff] 0.0
        %1192 = vst [vmem:[#allocation2 + $0x58] sm:$0xff] 0.0
        %1193 = vst [vmem:[#allocation2 + $0x78] sm:$0xff] 0.0
        %1194 = vst [vmem:[#allocation2 + $0x98] sm:$0x3f] 0.0
        %1195 = vst [vmem:[#allocation2 + $0x8] sm:$0xff] %v1175
        %1196 = vst [vmem:[#allocation2 + $0x10] sm:$0xff] %v1176
        %1197 = vst [vmem:[#allocation2 + $0x28] sm:$0xff] %v1177
        %1198 = vst [vmem:[#allocation2 + $0x30] sm:$0xff] %v1178
        %1199 = vst [vmem:[#allocation2 + $0x48] sm:$0xff] %v1179
        %1200 = vst [vmem:[#allocation2 + $0x50] sm:$0xff] %v1180
        %1201 = vst [vmem:[#allocation2 + $0x68] sm:$0xff] %v1181
        %1202 = vst [vmem:[#allocation2 + $0x70] sm:$0xff] %v1182
        %1203 = vst [vmem:[#allocation2 + $0x88] sm:$0x3f] %v1183
        %1204 = vst [vmem:[#allocation2 + $0x90] sm:$0x3f] %v1184
        %v1205 = vlaneseq
        %v1206 = vand.u32 %v1205, 127
        %v1207 = vadd.s32 %v1206, 128
        %vm1208 = vcmp.lt.s32.totalorder %v1206, 0
        %v1209 = vsub.s32 0, %v1206
        %v1210 = vsel %vm1208, %v1209, %v1206
        %v1211 = vshrl.u32 %v1210, 4
        %v1212 = vand.u32 %v1210, 15
        %v1213 = vsub.s32 0, %v1212
        %v1214 = vsel %vm1208, %v1213, %v1212
        %vm1215 = vcmp.lt.s32.totalorder %v1207, 0
        %v1216 = vsub.s32 0, %v1207
        %v1217 = vsel %vm1215, %v1216, %v1207
        %v1218 = vshrl.u32 %v1217, 4
        %v1219 = vand.u32 %v1217, 15
        %v1220 = vsub.s32 0, %v1219
        %v1221 = vsel %vm1215, %v1220, %v1219
        %vm1222 = vcmp.ne.s32.totalorder %v1214, 0
        %vm1223 = vcmp.ne.s32.totalorder %v1221, 0
        %vm1224 = vcmp.lt.s32.totalorder %v1214, 0
        %vm1225 = vcmp.lt.s32.totalorder %v1221, 0
        %vm1226 = vmand %vm1224, %vm1222
        %vm1227 = vmand %vm1225, %vm1223
        %v1228 = vadd.s32 %v1214, 16
        %v1229 = vadd.s32 %v1221, 16
        %v1230 = vsel %vm1226, %v1228, %v1214
        %v1231 = vsel %vm1227, %v1229, %v1221
        %v1232 = vadd.s32 %v1230, 4294967294
        %v1233 = vadd.s32 %v1231, 4294967294
        %vm1234 = vcmp.ge.s32.totalorder %v1232, 0
        %vm1235 = vcmp.ge.s32.totalorder %v1233, 0
        %vm1236 = vcmp.lt.s32.totalorder %v1232, 16
        %vm1237 = vcmp.lt.s32.totalorder %v1233, 16
        %vm1238 = vmand %vm1234, %vm1236
        %vm1239 = vmand %vm1235, %vm1237
        %v1240 = vadd.s32 %v1230, 4294967295
        %v1241 = vadd.s32 %v1231, 4294967295
        %vm1242 = vcmp.ge.s32.totalorder %v1240, 0
        %vm1243 = vcmp.ge.s32.totalorder %v1241, 0
        %vm1244 = vcmp.lt.s32.totalorder %v1240, 16
        %vm1245 = vcmp.lt.s32.totalorder %v1241, 16
        %vm1246 = vmand %vm1242, %vm1244
        %vm1247 = vmand %vm1243, %vm1245
        %v1248 = vadd.s32 %v1230, 1
        %v1249 = vadd.s32 %v1231, 1
        %vm1250 = vcmp.ge.s32.totalorder %v1248, 0
        %vm1251 = vcmp.ge.s32.totalorder %v1249, 0
        %vm1252 = vcmp.lt.s32.totalorder %v1248, 16
        %vm1253 = vcmp.lt.s32.totalorder %v1249, 16
        %vm1254 = vmand %vm1250, %vm1252
        %vm1255 = vmand %vm1251, %vm1253
        %v1256 = vadd.s32 %v1230, 2
        %v1257 = vadd.s32 %v1231, 2
        %vm1258 = vcmp.ge.s32.totalorder %v1256, 0
        %vm1259 = vcmp.ge.s32.totalorder %v1257, 0
        %vm1260 = vcmp.lt.s32.totalorder %v1256, 16
        %vm1261 = vcmp.lt.s32.totalorder %v1257, 16
        %vm1262 = vmand %vm1258, %vm1260
        %vm1263 = vmand %vm1259, %vm1261
        %v1264 = vld [vmem:[#allocation2] sm:$0xff]
        %v1265 = vld [vmem:[#allocation2 + $0x8] sm:$0xff]
        %v1266 = vld [vmem:[#allocation2 + $0x10] sm:$0xff]
        %v1267 = vld [vmem:[#allocation2 + $0x20] sm:$0xff]
        %v1268 = vld [vmem:[#allocation2 + $0x28] sm:$0xff]
        %v1269 = vld [vmem:[#allocation2 + $0x30] sm:$0xff]
        %v1270 = vld [vmem:[#allocation2 + $0x40] sm:$0xff]
        %v1271 = vld [vmem:[#allocation2 + $0x48] sm:$0xff]
        %v1272 = vld [vmem:[#allocation2 + $0x50] sm:$0xff]
        %v1273 = vld [vmem:[#allocation2 + $0x60] sm:$0xff]
        %v1274 = vld [vmem:[#allocation2 + $0x68] sm:$0xff]
        %v1275 = vld [vmem:[#allocation2 + $0x70] sm:$0xff]
        %v1276 = vld [vmem:[#allocation2 + $0x80] sm:$0x3f]
        %v1277 = vld [vmem:[#allocation2 + $0x88] sm:$0x3f]
        %v1278 = vld [vmem:[#allocation2 + $0x90] sm:$0x3f]
        %v1279 = vsel %vm1238, 1, 0
        %v1280 = vsel %vm1239, 1, 0
        %vm1281 = vcmp.eq.s32.totalorder %v1279, 1
        %vm1282 = vcmp.eq.s32.totalorder %v1280, 1
        %1298 = vrot.lane.b32.xlu0 %v1264, 34
        %v1299 = vpop.permute.xlu0 %1298
        %1300 = vrot.lane.b32.xlu0 %v1265, 34
        %v1301 = vpop.permute.xlu0 %1300
        %1302 = vrot.lane.b32.xlu0 %v1266, 34
        %v1303 = vpop.permute.xlu0 %1302
        %1304 = vrot.lane.b32.xlu0 %v1267, 34
        %v1305 = vpop.permute.xlu0 %1304
        %1306 = vrot.lane.b32.xlu0 %v1268, 34
        %v1307 = vpop.permute.xlu0 %1306
        %1308 = vrot.lane.b32.xlu0 %v1269, 34
        %v1309 = vpop.permute.xlu0 %1308
        %1310 = vrot.lane.b32.xlu0 %v1270, 34
        %v1311 = vpop.permute.xlu0 %1310
        %1312 = vrot.lane.b32.xlu0 %v1271, 34
        %v1313 = vpop.permute.xlu0 %1312
        %1314 = vrot.lane.b32.xlu0 %v1272, 34
        %v1315 = vpop.permute.xlu0 %1314
        %1316 = vrot.lane.b32.xlu0 %v1273, 34
        %v1317 = vpop.permute.xlu0 %1316
        %1318 = vrot.lane.b32.xlu0 %v1274, 34
        %v1319 = vpop.permute.xlu0 %1318
        %1320 = vrot.lane.b32.xlu0 %v1275, 34
        %v1321 = vpop.permute.xlu0 %1320
        %1322 = vrot.lane.b32.xlu0 %v1276, 34
        %v1323 = vpop.permute.xlu0 %1322
        %1324 = vrot.lane.b32.xlu0 %v1277, 34
        %v1325 = vpop.permute.xlu0 %1324
        %1326 = vrot.lane.b32.xlu0 %v1278, 34
        %v1327 = vpop.permute.xlu0 %1326
        %vm1328 = vcmask 277504
        %v1329 = vsel %vm1328, %v1299, %v1301
        %v1330 = vsel %vm1328, %v1301, %v1303
        %v1331 = vsel %vm1328, %v1305, %v1307
        %v1332 = vsel %vm1328, %v1307, %v1309
        %v1333 = vsel %vm1328, %v1311, %v1313
        %v1334 = vsel %vm1328, %v1313, %v1315
        %v1335 = vsel %vm1328, %v1317, %v1319
        %v1336 = vsel %vm1328, %v1319, %v1321
        %v1337 = vsel %vm1328, %v1323, %v1325
        %v1338 = vsel %vm1328, %v1325, %v1327
        %v1349 = vsel %vm1281, %v1329, 0.0
        %v1350 = vsel %vm1282, %v1330, 0.0
        %v1351 = vsel %vm1281, %v1331, 0.0
        %v1352 = vsel %vm1282, %v1332, 0.0
        %v1353 = vsel %vm1281, %v1333, 0.0
        %v1354 = vsel %vm1282, %v1334, 0.0
        %v1355 = vsel %vm1281, %v1335, 0.0
        %v1356 = vsel %vm1282, %v1336, 0.0
        %v1357 = vsel %vm1281, %v1337, 0.0
        %v1358 = vsel %vm1282, %v1338, 0.0
        %v1359 = vld [vmem:[#allocation4] sm:$0xff]
        %v1360 = vld [vmem:[#allocation4 + $0x8] sm:$0xff]
        %v1361 = vld [vmem:[#allocation4 + $0x10] sm:$0xff]
        %v1362 = vld [vmem:[#allocation4 + $0x18] sm:$0x1f]
        %v1363 = vsel %vm1246, 1, 0
        %v1364 = vsel %vm1247, 1, 0
        %vm1365 = vcmp.eq.s32.totalorder %v1363, 1
        %vm1366 = vcmp.eq.s32.totalorder %v1364, 1
        %1367 = vrot.lane.b32.xlu0 %v1264, 33
        %v1368 = vpop.permute.xlu0 %1367
        %1369 = vrot.lane.b32.xlu0 %v1265, 33
        %v1370 = vpop.permute.xlu0 %1369
        %1371 = vrot.lane.b32.xlu0 %v1266, 33
        %v1372 = vpop.permute.xlu0 %1371
        %1373 = vrot.lane.b32.xlu0 %v1267, 33
        %v1374 = vpop.permute.xlu0 %1373
        %1375 = vrot.lane.b32.xlu0 %v1268, 33
        %v1376 = vpop.permute.xlu0 %1375
        %1377 = vrot.lane.b32.xlu0 %v1269, 33
        %v1378 = vpop.permute.xlu0 %1377
        %1379 = vrot.lane.b32.xlu0 %v1270, 33
        %v1380 = vpop.permute.xlu0 %1379
        %1381 = vrot.lane.b32.xlu0 %v1271, 33
        %v1382 = vpop.permute.xlu0 %1381
        %1383 = vrot.lane.b32.xlu0 %v1272, 33
        %v1384 = vpop.permute.xlu0 %1383
        %1385 = vrot.lane.b32.xlu0 %v1273, 33
        %v1386 = vpop.permute.xlu0 %1385
        %1387 = vrot.lane.b32.xlu0 %v1274, 33
        %v1388 = vpop.permute.xlu0 %1387
        %1389 = vrot.lane.b32.xlu0 %v1275, 33
        %v1390 = vpop.permute.xlu0 %1389
        %1391 = vrot.lane.b32.xlu0 %v1276, 33
        %v1392 = vpop.permute.xlu0 %1391
        %1393 = vrot.lane.b32.xlu0 %v1277, 33
        %v1394 = vpop.permute.xlu0 %1393
        %1395 = vrot.lane.b32.xlu0 %v1278, 33
        %v1396 = vpop.permute.xlu0 %1395
        %vm1397 = vcmask 269312
        %v1398 = vsel %vm1397, %v1368, %v1370
        %v1399 = vsel %vm1397, %v1370, %v1372
        %v1400 = vsel %vm1397, %v1374, %v1376
        %v1401 = vsel %vm1397, %v1376, %v1378
        %v1402 = vsel %vm1397, %v1380, %v1382
        %v1403 = vsel %vm1397, %v1382, %v1384
        %v1404 = vsel %vm1397, %v1386, %v1388
        %v1405 = vsel %vm1397, %v1388, %v1390
        %v1406 = vsel %vm1397, %v1392, %v1394
        %v1407 = vsel %vm1397, %v1394, %v1396
        %v1418 = vsel %vm1365, %v1398, 0.0
        %v1419 = vsel %vm1366, %v1399, 0.0
        %v1420 = vsel %vm1365, %v1400, 0.0
        %v1421 = vsel %vm1366, %v1401, 0.0
        %v1422 = vsel %vm1365, %v1402, 0.0
        %v1423 = vsel %vm1366, %v1403, 0.0
        %v1424 = vsel %vm1365, %v1404, 0.0
        %v1425 = vsel %vm1366, %v1405, 0.0
        %v1426 = vsel %vm1365, %v1406, 0.0
        %v1427 = vsel %vm1366, %v1407, 0.0
        %s1428 = scalar_lea.vmem [#allocation4], 32
        %v1429 = vld [vmem:[%s1428] sm:$0xff]
        %v1430 = vld [vmem:[%s1428 + $0x8] sm:$0xff]
        %v1431 = vld [vmem:[%s1428 + $0x10] sm:$0xff]
        %v1432 = vld [vmem:[%s1428 + $0x18] sm:$0x1f]
        %vm1433 = vcmask 310272
        %v1435 = vsel %vm1433, %v1429, 0
        %v1438 = vsel %vm1433, %v1430, 0
        %v1441 = vsel %vm1433, %v1431, 0
        %v1444 = vsel %vm1433, %v1432, 0
        %vm1446 = vcmask 1045504
        %v1448 = vsel %vm1446, %v1426, 0
        %v1451 = vsel %vm1446, %v1427, 0
        %1453 = vmatpush.msra.mxu0 0.0
        %1454 = vmatpush.msra.mxu0 0.0
        %1455 = vmatpush.msra.mxu0 0.0
        %1456 = vmatpush.msra.mxu0 0.0
        %1457 = vmatpush.msra.mxu0 0.0
        %1458 = vmatpush.msra.mxu0 0.0
        %1459 = vmatpush.msra.mxu0 0.0
        %1460 = vmatpush.msra.mxu0 0.0
        %1461 = vmatpush.msra.mxu0 0.0
        %1462 = vmatpush.msra.mxu0 0.0
        %1463 = vmatpush.msra.mxu0 0.0
        %1464 = vmatpush.msra.mxu0 %v1448
        %1465 = vmatpush.msra.mxu0 %v1424
        %1466 = vmatpush.msra.mxu0 %v1422
        %1467 = vmatpush.msra.mxu0 %v1420
        %1468 = vmatpush.msra.mxu0 %v1418
        %1469 = vmatmul.f32.gmra.mxu0 %v1435
        %v1470 = vpop.f32.mrf.mxu0
        %v1471 = vadd.f32 0.0, %v1470
        %1472 = vmatmul.f32.gmra.mxu0 %v1438
        %v1473 = vpop.f32.mrf.mxu0
        %v1474 = vadd.f32 0.0, %v1473
        %1475 = vmatmul.f32.gmra.mxu0 %v1441
        %v1476 = vpop.f32.mrf.mxu0
        %v1477 = vadd.f32 0.0, %v1476
        %1478 = vmatmul.f32.gmra.mxu0 %v1444
        %v1479 = vpop.f32.mrf.mxu0
        %v1480 = vadd.f32 0.0, %v1479
        %1481 = vdwg.mxu0
        %1482 = vmatpush.msra.mxu0 0.0
        %1483 = vmatpush.msra.mxu0 0.0
        %1484 = vmatpush.msra.mxu0 0.0
        %1485 = vmatpush.msra.mxu0 0.0
        %1486 = vmatpush.msra.mxu0 0.0
        %1487 = vmatpush.msra.mxu0 0.0
        %1488 = vmatpush.msra.mxu0 0.0
        %1489 = vmatpush.msra.mxu0 0.0
        %1490 = vmatpush.msra.mxu0 0.0
        %1491 = vmatpush.msra.mxu0 0.0
        %1492 = vmatpush.msra.mxu0 0.0
        %1493 = vmatpush.msra.mxu0 %v1451
        %1494 = vmatpush.msra.mxu0 %v1425
        %1495 = vmatpush.msra.mxu0 %v1423
        %1496 = vmatpush.msra.mxu0 %v1421
        %1497 = vmatpush.msra.mxu0 %v1419
        %1498 = vmatmul.f32.gmra.mxu0 %v1435
        %v1499 = vpop.f32.mrf.mxu0
        %v1500 = vadd.f32 0.0, %v1499
        %1501 = vmatmul.f32.gmra.mxu0 %v1438
        %v1502 = vpop.f32.mrf.mxu0
        %v1503 = vadd.f32 0.0, %v1502
        %1504 = vmatmul.f32.gmra.mxu0 %v1441
        %v1505 = vpop.f32.mrf.mxu0
        %v1506 = vadd.f32 0.0, %v1505
        %1507 = vmatmul.f32.gmra.mxu0 %v1444
        %v1508 = vpop.f32.mrf.mxu0
        %v1509 = vadd.f32 0.0, %v1508
        %1510 = vdwg.mxu0
        %v1512 = vsel %vm1433, %v1359, 0
        %v1515 = vsel %vm1433, %v1360, 0
        %v1518 = vsel %vm1433, %v1361, 0
        %v1521 = vsel %vm1433, %v1362, 0
        %v1524 = vsel %vm1446, %v1357, 0
        %v1527 = vsel %vm1446, %v1358, 0
        %1529 = vmatpush.msra.mxu0 0.0
        %1530 = vmatpush.msra.mxu0 0.0
        %1531 = vmatpush.msra.mxu0 0.0
        %1532 = vmatpush.msra.mxu0 0.0
        %1533 = vmatpush.msra.mxu0 0.0
        %1534 = vmatpush.msra.mxu0 0.0
        %1535 = vmatpush.msra.mxu0 0.0
        %1536 = vmatpush.msra.mxu0 0.0
        %1537 = vmatpush.msra.mxu0 0.0
        %1538 = vmatpush.msra.mxu0 0.0
        %1539 = vmatpush.msra.mxu0 0.0
        %1540 = vmatpush.msra.mxu0 %v1524
        %1541 = vmatpush.msra.mxu0 %v1355
        %1542 = vmatpush.msra.mxu0 %v1353
        %1543 = vmatpush.msra.mxu0 %v1351
        %1544 = vmatpush.msra.mxu0 %v1349
        %1545 = vmatmul.f32.gmra.mxu0 %v1512
        %v1546 = vpop.f32.mrf.mxu0
        %v1547 = vadd.f32 %v1471, %v1546
        %1548 = vmatmul.f32.gmra.mxu0 %v1515
        %v1549 = vpop.f32.mrf.mxu0
        %v1550 = vadd.f32 %v1474, %v1549
        %1551 = vmatmul.f32.gmra.mxu0 %v1518
        %v1552 = vpop.f32.mrf.mxu0
        %v1553 = vadd.f32 %v1477, %v1552
        %1554 = vmatmul.f32.gmra.mxu0 %v1521
        %v1555 = vpop.f32.mrf.mxu0
        %v1556 = vadd.f32 %v1480, %v1555
        %1557 = vdwg.mxu0
        %1558 = vmatpush.msra.mxu0 0.0
        %1559 = vmatpush.msra.mxu0 0.0
        %1560 = vmatpush.msra.mxu0 0.0
        %1561 = vmatpush.msra.mxu0 0.0
        %1562 = vmatpush.msra.mxu0 0.0
        %1563 = vmatpush.msra.mxu0 0.0
        %1564 = vmatpush.msra.mxu0 0.0
        %1565 = vmatpush.msra.mxu0 0.0
        %1566 = vmatpush.msra.mxu0 0.0
        %1567 = vmatpush.msra.mxu0 0.0
        %1568 = vmatpush.msra.mxu0 0.0
        %1569 = vmatpush.msra.mxu0 %v1527
        %1570 = vmatpush.msra.mxu0 %v1356
        %1571 = vmatpush.msra.mxu0 %v1354
        %1572 = vmatpush.msra.mxu0 %v1352
        %1573 = vmatpush.msra.mxu0 %v1350
        %1574 = vmatmul.f32.gmra.mxu0 %v1512
        %v1575 = vpop.f32.mrf.mxu0
        %v1576 = vadd.f32 %v1500, %v1575
        %1577 = vmatmul.f32.gmra.mxu0 %v1515
        %v1578 = vpop.f32.mrf.mxu0
        %v1579 = vadd.f32 %v1503, %v1578
        %1580 = vmatmul.f32.gmra.mxu0 %v1518
        %v1581 = vpop.f32.mrf.mxu0
        %v1582 = vadd.f32 %v1506, %v1581
        %1583 = vmatmul.f32.gmra.mxu0 %v1521
        %v1584 = vpop.f32.mrf.mxu0
        %v1585 = vadd.f32 %v1509, %v1584
        %1586 = vdwg.mxu0
        %s1587 = scalar_lea.vmem [#allocation4], 64
        %v1588 = vld [vmem:[%s1587] sm:$0xff]
        %v1589 = vld [vmem:[%s1587 + $0x8] sm:$0xff]
        %v1590 = vld [vmem:[%s1587 + $0x10] sm:$0xff]
        %v1591 = vld [vmem:[%s1587 + $0x18] sm:$0x1f]
        %1592 = vrot.lane.b32.xlu0 %v1264, 32
        %v1593 = vpop.permute.xlu0 %1592
        %1594 = vrot.lane.b32.xlu0 %v1265, 32
        %v1595 = vpop.permute.xlu0 %1594
        %1596 = vrot.lane.b32.xlu0 %v1266, 32
        %v1597 = vpop.permute.xlu0 %1596
        %1598 = vrot.lane.b32.xlu0 %v1267, 32
        %v1599 = vpop.permute.xlu0 %1598
        %1600 = vrot.lane.b32.xlu0 %v1268, 32
        %v1601 = vpop.permute.xlu0 %1600
        %1602 = vrot.lane.b32.xlu0 %v1269, 32
        %v1603 = vpop.permute.xlu0 %1602
        %1604 = vrot.lane.b32.xlu0 %v1270, 32
        %v1605 = vpop.permute.xlu0 %1604
        %1606 = vrot.lane.b32.xlu0 %v1271, 32
        %v1607 = vpop.permute.xlu0 %1606
        %1608 = vrot.lane.b32.xlu0 %v1272, 32
        %v1609 = vpop.permute.xlu0 %1608
        %1610 = vrot.lane.b32.xlu0 %v1273, 32
        %v1611 = vpop.permute.xlu0 %1610
        %1612 = vrot.lane.b32.xlu0 %v1274, 32
        %v1613 = vpop.permute.xlu0 %1612
        %1614 = vrot.lane.b32.xlu0 %v1275, 32
        %v1615 = vpop.permute.xlu0 %1614
        %1616 = vrot.lane.b32.xlu0 %v1276, 32
        %v1617 = vpop.permute.xlu0 %1616
        %1618 = vrot.lane.b32.xlu0 %v1277, 32
        %v1619 = vpop.permute.xlu0 %1618
        %1620 = vrot.lane.b32.xlu0 %v1278, 32
        %v1621 = vpop.permute.xlu0 %1620
        %vm1622 = vcmask 261120
        %v1623 = vsel %vm1622, %v1593, %v1595
        %v1624 = vsel %vm1622, %v1595, %v1597
        %v1625 = vsel %vm1622, %v1599, %v1601
        %v1626 = vsel %vm1622, %v1601, %v1603
        %v1627 = vsel %vm1622, %v1605, %v1607
        %v1628 = vsel %vm1622, %v1607, %v1609
        %v1629 = vsel %vm1622, %v1611, %v1613
        %v1630 = vsel %vm1622, %v1613, %v1615
        %v1631 = vsel %vm1622, %v1617, %v1619
        %v1632 = vsel %vm1622, %v1619, %v1621
        %v1642 = vsel %vm1433, %v1588, 0
        %v1645 = vsel %vm1433, %v1589, 0
        %v1648 = vsel %vm1433, %v1590, 0
        %v1651 = vsel %vm1433, %v1591, 0
        %v1653 = vsel %vm1446, %v1631, 0
        %v1655 = vsel %vm1446, %v1632, 0
        %1657 = vmatpush.msra.mxu0 0.0
        %1658 = vmatpush.msra.mxu0 0.0
        %1659 = vmatpush.msra.mxu0 0.0
        %1660 = vmatpush.msra.mxu0 0.0
        %1661 = vmatpush.msra.mxu0 0.0
        %1662 = vmatpush.msra.mxu0 0.0
        %1663 = vmatpush.msra.mxu0 0.0
        %1664 = vmatpush.msra.mxu0 0.0
        %1665 = vmatpush.msra.mxu0 0.0
        %1666 = vmatpush.msra.mxu0 0.0
        %1667 = vmatpush.msra.mxu0 0.0
        %1668 = vmatpush.msra.mxu0 %v1653
        %1669 = vmatpush.msra.mxu0 %v1629
        %1670 = vmatpush.msra.mxu0 %v1627
        %1671 = vmatpush.msra.mxu0 %v1625
        %1672 = vmatpush.msra.mxu0 %v1623
        %1673 = vmatmul.f32.gmra.mxu0 %v1642
        %v1674 = vpop.f32.mrf.mxu0
        %v1675 = vadd.f32 0.0, %v1674
        %1676 = vmatmul.f32.gmra.mxu0 %v1645
        %v1677 = vpop.f32.mrf.mxu0
        %v1678 = vadd.f32 0.0, %v1677
        %1679 = vmatmul.f32.gmra.mxu0 %v1648
        %v1680 = vpop.f32.mrf.mxu0
        %v1681 = vadd.f32 0.0, %v1680
        %1682 = vmatmul.f32.gmra.mxu0 %v1651
        %v1683 = vpop.f32.mrf.mxu0
        %v1684 = vadd.f32 0.0, %v1683
        %1685 = vdwg.mxu0
        %1686 = vmatpush.msra.mxu0 0.0
        %1687 = vmatpush.msra.mxu0 0.0
        %1688 = vmatpush.msra.mxu0 0.0
        %1689 = vmatpush.msra.mxu0 0.0
        %1690 = vmatpush.msra.mxu0 0.0
        %1691 = vmatpush.msra.mxu0 0.0
        %1692 = vmatpush.msra.mxu0 0.0
        %1693 = vmatpush.msra.mxu0 0.0
        %1694 = vmatpush.msra.mxu0 0.0
        %1695 = vmatpush.msra.mxu0 0.0
        %1696 = vmatpush.msra.mxu0 0.0
        %1697 = vmatpush.msra.mxu0 %v1655
        %1698 = vmatpush.msra.mxu0 %v1630
        %1699 = vmatpush.msra.mxu0 %v1628
        %1700 = vmatpush.msra.mxu0 %v1626
        %1701 = vmatpush.msra.mxu0 %v1624
        %1702 = vmatmul.f32.gmra.mxu0 %v1642
        %v1703 = vpop.f32.mrf.mxu0
        %v1704 = vadd.f32 0.0, %v1703
        %1705 = vmatmul.f32.gmra.mxu0 %v1645
        %v1706 = vpop.f32.mrf.mxu0
        %v1707 = vadd.f32 0.0, %v1706
        %1708 = vmatmul.f32.gmra.mxu0 %v1648
        %v1709 = vpop.f32.mrf.mxu0
        %v1710 = vadd.f32 0.0, %v1709
        %1711 = vmatmul.f32.gmra.mxu0 %v1651
        %v1712 = vpop.f32.mrf.mxu0
        %v1713 = vadd.f32 0.0, %v1712
        %1714 = vdwg.mxu0
        %v1715 = vadd.f32 %v1547, %v1675
        %v1716 = vadd.f32 %v1576, %v1704
        %v1717 = vadd.f32 %v1550, %v1678
        %v1718 = vadd.f32 %v1579, %v1707
        %v1719 = vadd.f32 %v1553, %v1681
        %v1720 = vadd.f32 %v1582, %v1710
        %v1721 = vadd.f32 %v1556, %v1684
        %v1722 = vadd.f32 %v1585, %v1713
        %v1723 = vsel %vm1254, 1, 0
        %v1724 = vsel %vm1255, 1, 0
        %vm1725 = vcmp.eq.s32.totalorder %v1723, 1
        %vm1726 = vcmp.eq.s32.totalorder %v1724, 1
        %1727 = vrot.lane.b32.xlu0 %v1264, 31
        %v1728 = vpop.permute.xlu0 %1727
        %1729 = vrot.lane.b32.xlu0 %v1265, 31
        %v1730 = vpop.permute.xlu0 %1729
        %1731 = vrot.lane.b32.xlu0 %v1266, 31
        %v1732 = vpop.permute.xlu0 %1731
        %1733 = vrot.lane.b32.xlu0 %v1267, 31
        %v1734 = vpop.permute.xlu0 %1733
        %1735 = vrot.lane.b32.xlu0 %v1268, 31
        %v1736 = vpop.permute.xlu0 %1735
        %1737 = vrot.lane.b32.xlu0 %v1269, 31
        %v1738 = vpop.permute.xlu0 %1737
        %1739 = vrot.lane.b32.xlu0 %v1270, 31
        %v1740 = vpop.permute.xlu0 %1739
        %1741 = vrot.lane.b32.xlu0 %v1271, 31
        %v1742 = vpop.permute.xlu0 %1741
        %1743 = vrot.lane.b32.xlu0 %v1272, 31
        %v1744 = vpop.permute.xlu0 %1743
        %1745 = vrot.lane.b32.xlu0 %v1273, 31
        %v1746 = vpop.permute.xlu0 %1745
        %1747 = vrot.lane.b32.xlu0 %v1274, 31
        %v1748 = vpop.permute.xlu0 %1747
        %1749 = vrot.lane.b32.xlu0 %v1275, 31
        %v1750 = vpop.permute.xlu0 %1749
        %1751 = vrot.lane.b32.xlu0 %v1276, 31
        %v1752 = vpop.permute.xlu0 %1751
        %1753 = vrot.lane.b32.xlu0 %v1277, 31
        %v1754 = vpop.permute.xlu0 %1753
        %1755 = vrot.lane.b32.xlu0 %v1278, 31
        %v1756 = vpop.permute.xlu0 %1755
        %vm1757 = vcmask 252928
        %v1758 = vsel %vm1757, %v1728, %v1730
        %v1759 = vsel %vm1757, %v1730, %v1732
        %v1760 = vsel %vm1757, %v1734, %v1736
        %v1761 = vsel %vm1757, %v1736, %v1738
        %v1762 = vsel %vm1757, %v1740, %v1742
        %v1763 = vsel %vm1757, %v1742, %v1744
        %v1764 = vsel %vm1757, %v1746, %v1748
        %v1765 = vsel %vm1757, %v1748, %v1750
        %v1766 = vsel %vm1757, %v1752, %v1754
        %v1767 = vsel %vm1757, %v1754, %v1756
        %v1778 = vsel %vm1725, %v1758, 0.0
        %v1779 = vsel %vm1726, %v1759, 0.0
        %v1780 = vsel %vm1725, %v1760, 0.0
        %v1781 = vsel %vm1726, %v1761, 0.0
        %v1782 = vsel %vm1725, %v1762, 0.0
        %v1783 = vsel %vm1726, %v1763, 0.0
        %v1784 = vsel %vm1725, %v1764, 0.0
        %v1785 = vsel %vm1726, %v1765, 0.0
        %v1786 = vsel %vm1725, %v1766, 0.0
        %v1787 = vsel %vm1726, %v1767, 0.0
        %s1788 = scalar_lea.vmem [#allocation4], 96
        %v1789 = vld [vmem:[%s1788] sm:$0xff]
        %v1790 = vld [vmem:[%s1788 + $0x8] sm:$0xff]
        %v1791 = vld [vmem:[%s1788 + $0x10] sm:$0xff]
        %v1792 = vld [vmem:[%s1788 + $0x18] sm:$0x1f]
        %v1794 = vsel %vm1433, %v1789, 0
        %v1797 = vsel %vm1433, %v1790, 0
        %v1800 = vsel %vm1433, %v1791, 0
        %v1803 = vsel %vm1433, %v1792, 0
        %v1806 = vsel %vm1446, %v1786, 0
        %v1809 = vsel %vm1446, %v1787, 0
        %1811 = vmatpush.msra.mxu0 0.0
        %1812 = vmatpush.msra.mxu0 0.0
        %1813 = vmatpush.msra.mxu0 0.0
        %1814 = vmatpush.msra.mxu0 0.0
        %1815 = vmatpush.msra.mxu0 0.0
        %1816 = vmatpush.msra.mxu0 0.0
        %1817 = vmatpush.msra.mxu0 0.0
        %1818 = vmatpush.msra.mxu0 0.0
        %1819 = vmatpush.msra.mxu0 0.0
        %1820 = vmatpush.msra.mxu0 0.0
        %1821 = vmatpush.msra.mxu0 0.0
        %1822 = vmatpush.msra.mxu0 %v1806
        %1823 = vmatpush.msra.mxu0 %v1784
        %1824 = vmatpush.msra.mxu0 %v1782
        %1825 = vmatpush.msra.mxu0 %v1780
        %1826 = vmatpush.msra.mxu0 %v1778
        %1827 = vmatmul.f32.gmra.mxu0 %v1794
        %v1828 = vpop.f32.mrf.mxu0
        %v1829 = vadd.f32 0.0, %v1828
        %1830 = vmatmul.f32.gmra.mxu0 %v1797
        %v1831 = vpop.f32.mrf.mxu0
        %v1832 = vadd.f32 0.0, %v1831
        %1833 = vmatmul.f32.gmra.mxu0 %v1800
        %v1834 = vpop.f32.mrf.mxu0
        %v1835 = vadd.f32 0.0, %v1834
        %1836 = vmatmul.f32.gmra.mxu0 %v1803
        %v1837 = vpop.f32.mrf.mxu0
        %v1838 = vadd.f32 0.0, %v1837
        %1839 = vdwg.mxu0
        %1840 = vmatpush.msra.mxu0 0.0
        %1841 = vmatpush.msra.mxu0 0.0
        %1842 = vmatpush.msra.mxu0 0.0
        %1843 = vmatpush.msra.mxu0 0.0
        %1844 = vmatpush.msra.mxu0 0.0
        %1845 = vmatpush.msra.mxu0 0.0
        %1846 = vmatpush.msra.mxu0 0.0
        %1847 = vmatpush.msra.mxu0 0.0
        %1848 = vmatpush.msra.mxu0 0.0
        %1849 = vmatpush.msra.mxu0 0.0
        %1850 = vmatpush.msra.mxu0 0.0
        %1851 = vmatpush.msra.mxu0 %v1809
        %1852 = vmatpush.msra.mxu0 %v1785
        %1853 = vmatpush.msra.mxu0 %v1783
        %1854 = vmatpush.msra.mxu0 %v1781
        %1855 = vmatpush.msra.mxu0 %v1779
        %1856 = vmatmul.f32.gmra.mxu0 %v1794
        %v1857 = vpop.f32.mrf.mxu0
        %v1858 = vadd.f32 0.0, %v1857
        %1859 = vmatmul.f32.gmra.mxu0 %v1797
        %v1860 = vpop.f32.mrf.mxu0
        %v1861 = vadd.f32 0.0, %v1860
        %1862 = vmatmul.f32.gmra.mxu0 %v1800
        %v1863 = vpop.f32.mrf.mxu0
        %v1864 = vadd.f32 0.0, %v1863
        %1865 = vmatmul.f32.gmra.mxu0 %v1803
        %v1866 = vpop.f32.mrf.mxu0
        %v1867 = vadd.f32 0.0, %v1866
        %1868 = vdwg.mxu0
        %v1869 = vadd.f32 %v1715, %v1829
        %v1870 = vadd.f32 %v1716, %v1858
        %v1871 = vadd.f32 %v1717, %v1832
        %v1872 = vadd.f32 %v1718, %v1861
        %v1873 = vadd.f32 %v1719, %v1835
        %v1874 = vadd.f32 %v1720, %v1864
        %v1875 = vadd.f32 %v1721, %v1838
        %v1876 = vadd.f32 %v1722, %v1867
        %v1877 = vsel %vm1262, 1, 0
        %v1878 = vsel %vm1263, 1, 0
        %vm1879 = vcmp.eq.s32.totalorder %v1877, 1
        %vm1880 = vcmp.eq.s32.totalorder %v1878, 1
        %1881 = vrot.lane.b32.xlu0 %v1264, 30
        %v1882 = vpop.permute.xlu0 %1881
        %1883 = vrot.lane.b32.xlu0 %v1265, 30
        %v1884 = vpop.permute.xlu0 %1883
        %1885 = vrot.lane.b32.xlu0 %v1266, 30
        %v1886 = vpop.permute.xlu0 %1885
        %1887 = vrot.lane.b32.xlu0 %v1267, 30
        %v1888 = vpop.permute.xlu0 %1887
        %1889 = vrot.lane.b32.xlu0 %v1268, 30
        %v1890 = vpop.permute.xlu0 %1889
        %1891 = vrot.lane.b32.xlu0 %v1269, 30
        %v1892 = vpop.permute.xlu0 %1891
        %1893 = vrot.lane.b32.xlu0 %v1270, 30
        %v1894 = vpop.permute.xlu0 %1893
        %1895 = vrot.lane.b32.xlu0 %v1271, 30
        %v1896 = vpop.permute.xlu0 %1895
        %1897 = vrot.lane.b32.xlu0 %v1272, 30
        %v1898 = vpop.permute.xlu0 %1897
        %1899 = vrot.lane.b32.xlu0 %v1273, 30
        %v1900 = vpop.permute.xlu0 %1899
        %1901 = vrot.lane.b32.xlu0 %v1274, 30
        %v1902 = vpop.permute.xlu0 %1901
        %1903 = vrot.lane.b32.xlu0 %v1275, 30
        %v1904 = vpop.permute.xlu0 %1903
        %1905 = vrot.lane.b32.xlu0 %v1276, 30
        %v1906 = vpop.permute.xlu0 %1905
        %1907 = vrot.lane.b32.xlu0 %v1277, 30
        %v1908 = vpop.permute.xlu0 %1907
        %1909 = vrot.lane.b32.xlu0 %v1278, 30
        %v1910 = vpop.permute.xlu0 %1909
        %vm1911 = vcmask 244736
        %v1912 = vsel %vm1911, %v1882, %v1884
        %v1913 = vsel %vm1911, %v1884, %v1886
        %v1914 = vsel %vm1911, %v1888, %v1890
        %v1915 = vsel %vm1911, %v1890, %v1892
        %v1916 = vsel %vm1911, %v1894, %v1896
        %v1917 = vsel %vm1911, %v1896, %v1898
        %v1918 = vsel %vm1911, %v1900, %v1902
        %v1919 = vsel %vm1911, %v1902, %v1904
        %v1920 = vsel %vm1911, %v1906, %v1908
        %v1921 = vsel %vm1911, %v1908, %v1910
        %v1932 = vsel %vm1879, %v1912, 0.0
        %v1933 = vsel %vm1880, %v1913, 0.0
        %v1934 = vsel %vm1879, %v1914, 0.0
        %v1935 = vsel %vm1880, %v1915, 0.0
        %v1936 = vsel %vm1879, %v1916, 0.0
        %v1937 = vsel %vm1880, %v1917, 0.0
        %v1938 = vsel %vm1879, %v1918, 0.0
        %v1939 = vsel %vm1880, %v1919, 0.0
        %v1940 = vsel %vm1879, %v1920, 0.0
        %v1941 = vsel %vm1880, %v1921, 0.0
        %s1942 = scalar_lea.vmem [#allocation4], 128
        %v1943 = vld [vmem:[%s1942] sm:$0xff]
        %v1944 = vld [vmem:[%s1942 + $0x8] sm:$0xff]
        %v1945 = vld [vmem:[%s1942 + $0x10] sm:$0xff]
        %v1946 = vld [vmem:[%s1942 + $0x18] sm:$0x1f]
        %v1948 = vsel %vm1433, %v1943, 0
        %v1951 = vsel %vm1433, %v1944, 0
        %v1954 = vsel %vm1433, %v1945, 0
        %v1957 = vsel %vm1433, %v1946, 0
        %v1960 = vsel %vm1446, %v1940, 0
        %v1963 = vsel %vm1446, %v1941, 0
        %1965 = vmatpush.msra.mxu0 0.0
        %1966 = vmatpush.msra.mxu0 0.0
        %1967 = vmatpush.msra.mxu0 0.0
        %1968 = vmatpush.msra.mxu0 0.0
        %1969 = vmatpush.msra.mxu0 0.0
        %1970 = vmatpush.msra.mxu0 0.0
        %1971 = vmatpush.msra.mxu0 0.0
        %1972 = vmatpush.msra.mxu0 0.0
        %1973 = vmatpush.msra.mxu0 0.0
        %1974 = vmatpush.msra.mxu0 0.0
        %1975 = vmatpush.msra.mxu0 0.0
        %1976 = vmatpush.msra.mxu0 %v1960
        %1977 = vmatpush.msra.mxu0 %v1938
        %1978 = vmatpush.msra.mxu0 %v1936
        %1979 = vmatpush.msra.mxu0 %v1934
        %1980 = vmatpush.msra.mxu0 %v1932
        %1981 = vmatmul.f32.gmra.mxu0 %v1948
        %v1982 = vpop.f32.mrf.mxu0
        %v1983 = vadd.f32 0.0, %v1982
        %1984 = vmatmul.f32.gmra.mxu0 %v1951
        %v1985 = vpop.f32.mrf.mxu0
        %v1986 = vadd.f32 0.0, %v1985
        %1987 = vmatmul.f32.gmra.mxu0 %v1954
        %v1988 = vpop.f32.mrf.mxu0
        %v1989 = vadd.f32 0.0, %v1988
        %1990 = vmatmul.f32.gmra.mxu0 %v1957
        %v1991 = vpop.f32.mrf.mxu0
        %v1992 = vadd.f32 0.0, %v1991
        %1993 = vdwg.mxu0
        %1994 = vmatpush.msra.mxu0 0.0
        %1995 = vmatpush.msra.mxu0 0.0
        %1996 = vmatpush.msra.mxu0 0.0
        %1997 = vmatpush.msra.mxu0 0.0
        %1998 = vmatpush.msra.mxu0 0.0
        %1999 = vmatpush.msra.mxu0 0.0
        %2000 = vmatpush.msra.mxu0 0.0
        %2001 = vmatpush.msra.mxu0 0.0
        %2002 = vmatpush.msra.mxu0 0.0
        %2003 = vmatpush.msra.mxu0 0.0
        %2004 = vmatpush.msra.mxu0 0.0
        %2005 = vmatpush.msra.mxu0 %v1963
        %2006 = vmatpush.msra.mxu0 %v1939
        %2007 = vmatpush.msra.mxu0 %v1937
        %2008 = vmatpush.msra.mxu0 %v1935
        %2009 = vmatpush.msra.mxu0 %v1933
        %2010 = vmatmul.f32.gmra.mxu0 %v1948
        %v2011 = vpop.f32.mrf.mxu0
        %v2012 = vadd.f32 0.0, %v2011
        %2013 = vmatmul.f32.gmra.mxu0 %v1951
        %v2014 = vpop.f32.mrf.mxu0
        %v2015 = vadd.f32 0.0, %v2014
        %2016 = vmatmul.f32.gmra.mxu0 %v1954
        %v2017 = vpop.f32.mrf.mxu0
        %v2018 = vadd.f32 0.0, %v2017
        %2019 = vmatmul.f32.gmra.mxu0 %v1957
        %v2020 = vpop.f32.mrf.mxu0
        %v2021 = vadd.f32 0.0, %v2020
        %2022 = vdwg.mxu0
        %v2023 = vadd.f32 %v1869, %v1983
        %v2024 = vadd.f32 %v1870, %v2012
        %v2025 = vadd.f32 %v1871, %v1986
        %v2026 = vadd.f32 %v1872, %v2015
        %v2027 = vadd.f32 %v1873, %v1989
        %v2028 = vadd.f32 %v1874, %v2018
        %v2029 = vadd.f32 %v1875, %v1992
        %v2030 = vadd.f32 %v1876, %v2021
        %2031 = vrot.lane.b32.xlu0 %v1264, 18
        %v2032 = vpop.permute.xlu0 %2031
        %2033 = vrot.lane.b32.xlu0 %v1265, 18
        %v2034 = vpop.permute.xlu0 %2033
        %2035 = vrot.lane.b32.xlu0 %v1266, 18
        %v2036 = vpop.permute.xlu0 %2035
        %2037 = vrot.lane.b32.xlu0 %v1267, 18
        %v2038 = vpop.permute.xlu0 %2037
        %2039 = vrot.lane.b32.xlu0 %v1268, 18
        %v2040 = vpop.permute.xlu0 %2039
        %2041 = vrot.lane.b32.xlu0 %v1269, 18
        %v2042 = vpop.permute.xlu0 %2041
        %2043 = vrot.lane.b32.xlu0 %v1270, 18
        %v2044 = vpop.permute.xlu0 %2043
        %2045 = vrot.lane.b32.xlu0 %v1271, 18
        %v2046 = vpop.permute.xlu0 %2045
        %2047 = vrot.lane.b32.xlu0 %v1272, 18
        %v2048 = vpop.permute.xlu0 %2047
        %2049 = vrot.lane.b32.xlu0 %v1273, 18
        %v2050 = vpop.permute.xlu0 %2049
        %2051 = vrot.lane.b32.xlu0 %v1274, 18
        %v2052 = vpop.permute.xlu0 %2051
        %2053 = vrot.lane.b32.xlu0 %v1275, 18
        %v2054 = vpop.permute.xlu0 %2053
        %2055 = vrot.lane.b32.xlu0 %v1276, 18
        %v2056 = vpop.permute.xlu0 %2055
        %2057 = vrot.lane.b32.xlu0 %v1277, 18
        %v2058 = vpop.permute.xlu0 %2057
        %2059 = vrot.lane.b32.xlu0 %v1278, 18
        %v2060 = vpop.permute.xlu0 %2059
        %vm2061 = vcmask 146432
        %v2062 = vsel %vm2061, %v2032, %v2034
        %v2063 = vsel %vm2061, %v2034, %v2036
        %v2064 = vsel %vm2061, %v2038, %v2040
        %v2065 = vsel %vm2061, %v2040, %v2042
        %v2066 = vsel %vm2061, %v2044, %v2046
        %v2067 = vsel %vm2061, %v2046, %v2048
        %v2068 = vsel %vm2061, %v2050, %v2052
        %v2069 = vsel %vm2061, %v2052, %v2054
        %v2070 = vsel %vm2061, %v2056, %v2058
        %v2071 = vsel %vm2061, %v2058, %v2060
        %v2082 = vsel %vm1281, %v2062, 0.0
        %v2083 = vsel %vm1282, %v2063, 0.0
        %v2084 = vsel %vm1281, %v2064, 0.0
        %v2085 = vsel %vm1282, %v2065, 0.0
        %v2086 = vsel %vm1281, %v2066, 0.0
        %v2087 = vsel %vm1282, %v2067, 0.0
        %v2088 = vsel %vm1281, %v2068, 0.0
        %v2089 = vsel %vm1282, %v2069, 0.0
        %v2090 = vsel %vm1281, %v2070, 0.0
        %v2091 = vsel %vm1282, %v2071, 0.0
        %s2092 = scalar_lea.vmem [#allocation4], 160
        %v2093 = vld [vmem:[%s2092] sm:$0xff]
        %v2094 = vld [vmem:[%s2092 + $0x8] sm:$0xff]
        %v2095 = vld [vmem:[%s2092 + $0x10] sm:$0xff]
        %v2096 = vld [vmem:[%s2092 + $0x18] sm:$0x1f]
        %v2098 = vsel %vm1433, %v2093, 0
        %v2101 = vsel %vm1433, %v2094, 0
        %v2104 = vsel %vm1433, %v2095, 0
        %v2107 = vsel %vm1433, %v2096, 0
        %v2110 = vsel %vm1446, %v2090, 0
        %v2113 = vsel %vm1446, %v2091, 0
        %2115 = vmatpush.msra.mxu0 0.0
        %2116 = vmatpush.msra.mxu0 0.0
        %2117 = vmatpush.msra.mxu0 0.0
        %2118 = vmatpush.msra.mxu0 0.0
        %2119 = vmatpush.msra.mxu0 0.0
        %2120 = vmatpush.msra.mxu0 0.0
        %2121 = vmatpush.msra.mxu0 0.0
        %2122 = vmatpush.msra.mxu0 0.0
        %2123 = vmatpush.msra.mxu0 0.0
        %2124 = vmatpush.msra.mxu0 0.0
        %2125 = vmatpush.msra.mxu0 0.0
        %2126 = vmatpush.msra.mxu0 %v2110
        %2127 = vmatpush.msra.mxu0 %v2088
        %2128 = vmatpush.msra.mxu0 %v2086
        %2129 = vmatpush.msra.mxu0 %v2084
        %2130 = vmatpush.msra.mxu0 %v2082
        %2131 = vmatmul.f32.gmra.mxu0 %v2098
        %v2132 = vpop.f32.mrf.mxu0
        %v2133 = vadd.f32 0.0, %v2132
        %2134 = vmatmul.f32.gmra.mxu0 %v2101
        %v2135 = vpop.f32.mrf.mxu0
        %v2136 = vadd.f32 0.0, %v2135
        %2137 = vmatmul.f32.gmra.mxu0 %v2104
        %v2138 = vpop.f32.mrf.mxu0
        %v2139 = vadd.f32 0.0, %v2138
        %2140 = vmatmul.f32.gmra.mxu0 %v2107
        %v2141 = vpop.f32.mrf.mxu0
        %v2142 = vadd.f32 0.0, %v2141
        %2143 = vdwg.mxu0
        %2144 = vmatpush.msra.mxu0 0.0
        %2145 = vmatpush.msra.mxu0 0.0
        %2146 = vmatpush.msra.mxu0 0.0
        %2147 = vmatpush.msra.mxu0 0.0
        %2148 = vmatpush.msra.mxu0 0.0
        %2149 = vmatpush.msra.mxu0 0.0
        %2150 = vmatpush.msra.mxu0 0.0
        %2151 = vmatpush.msra.mxu0 0.0
        %2152 = vmatpush.msra.mxu0 0.0
        %2153 = vmatpush.msra.mxu0 0.0
        %2154 = vmatpush.msra.mxu0 0.0
        %2155 = vmatpush.msra.mxu0 %v2113
        %2156 = vmatpush.msra.mxu0 %v2089
        %2157 = vmatpush.msra.mxu0 %v2087
        %2158 = vmatpush.msra.mxu0 %v2085
        %2159 = vmatpush.msra.mxu0 %v2083
        %2160 = vmatmul.f32.gmra.mxu0 %v2098
        %v2161 = vpop.f32.mrf.mxu0
        %v2162 = vadd.f32 0.0, %v2161
        %2163 = vmatmul.f32.gmra.mxu0 %v2101
        %v2164 = vpop.f32.mrf.mxu0
        %v2165 = vadd.f32 0.0, %v2164
        %2166 = vmatmul.f32.gmra.mxu0 %v2104
        %v2167 = vpop.f32.mrf.mxu0
        %v2168 = vadd.f32 0.0, %v2167
        %2169 = vmatmul.f32.gmra.mxu0 %v2107
        %v2170 = vpop.f32.mrf.mxu0
        %v2171 = vadd.f32 0.0, %v2170
        %2172 = vdwg.mxu0
        %v2173 = vadd.f32 %v2023, %v2133
        %v2174 = vadd.f32 %v2024, %v2162
        %v2175 = vadd.f32 %v2025, %v2136
        %v2176 = vadd.f32 %v2026, %v2165
        %v2177 = vadd.f32 %v2027, %v2139
        %v2178 = vadd.f32 %v2028, %v2168
        %v2179 = vadd.f32 %v2029, %v2142
        %v2180 = vadd.f32 %v2030, %v2171
        %2181 = vrot.lane.b32.xlu0 %v1264, 17
        %v2182 = vpop.permute.xlu0 %2181
        %2183 = vrot.lane.b32.xlu0 %v1265, 17
        %v2184 = vpop.permute.xlu0 %2183
        %2185 = vrot.lane.b32.xlu0 %v1266, 17
        %v2186 = vpop.permute.xlu0 %2185
        %2187 = vrot.lane.b32.xlu0 %v1267, 17
        %v2188 = vpop.permute.xlu0 %2187
        %2189 = vrot.lane.b32.xlu0 %v1268, 17
        %v2190 = vpop.permute.xlu0 %2189
        %2191 = vrot.lane.b32.xlu0 %v1269, 17
        %v2192 = vpop.permute.xlu0 %2191
        %2193 = vrot.lane.b32.xlu0 %v1270, 17
        %v2194 = vpop.permute.xlu0 %2193
        %2195 = vrot.lane.b32.xlu0 %v1271, 17
        %v2196 = vpop.permute.xlu0 %2195
        %2197 = vrot.lane.b32.xlu0 %v1272, 17
        %v2198 = vpop.permute.xlu0 %2197
        %2199 = vrot.lane.b32.xlu0 %v1273, 17
        %v2200 = vpop.permute.xlu0 %2199
        %2201 = vrot.lane.b32.xlu0 %v1274, 17
        %v2202 = vpop.permute.xlu0 %2201
        %2203 = vrot.lane.b32.xlu0 %v1275, 17
        %v2204 = vpop.permute.xlu0 %2203
        %2205 = vrot.lane.b32.xlu0 %v1276, 17
        %v2206 = vpop.permute.xlu0 %2205
        %2207 = vrot.lane.b32.xlu0 %v1277, 17
        %v2208 = vpop.permute.xlu0 %2207
        %2209 = vrot.lane.b32.xlu0 %v1278, 17
        %v2210 = vpop.permute.xlu0 %2209
        %vm2211 = vcmask 138240
        %v2212 = vsel %vm2211, %v2182, %v2184
        %v2213 = vsel %vm2211, %v2184, %v2186
        %v2214 = vsel %vm2211, %v2188, %v2190
        %v2215 = vsel %vm2211, %v2190, %v2192
        %v2216 = vsel %vm2211, %v2194, %v2196
        %v2217 = vsel %vm2211, %v2196, %v2198
        %v2218 = vsel %vm2211, %v2200, %v2202
        %v2219 = vsel %vm2211, %v2202, %v2204
        %v2220 = vsel %vm2211, %v2206, %v2208
        %v2221 = vsel %vm2211, %v2208, %v2210
        %v2232 = vsel %vm1365, %v2212, 0.0
        %v2233 = vsel %vm1366, %v2213, 0.0
        %v2234 = vsel %vm1365, %v2214, 0.0
        %v2235 = vsel %vm1366, %v2215, 0.0
        %v2236 = vsel %vm1365, %v2216, 0.0
        %v2237 = vsel %vm1366, %v2217, 0.0
        %v2238 = vsel %vm1365, %v2218, 0.0
        %v2239 = vsel %vm1366, %v2219, 0.0
        %v2240 = vsel %vm1365, %v2220, 0.0
        %v2241 = vsel %vm1366, %v2221, 0.0
        %s2242 = scalar_lea.vmem [#allocation4], 192
        %v2243 = vld [vmem:[%s2242] sm:$0xff]
        %v2244 = vld [vmem:[%s2242 + $0x8] sm:$0xff]
        %v2245 = vld [vmem:[%s2242 + $0x10] sm:$0xff]
        %v2246 = vld [vmem:[%s2242 + $0x18] sm:$0x1f]
        %v2248 = vsel %vm1433, %v2243, 0
        %v2251 = vsel %vm1433, %v2244, 0
        %v2254 = vsel %vm1433, %v2245, 0
        %v2257 = vsel %vm1433, %v2246, 0
        %v2260 = vsel %vm1446, %v2240, 0
        %v2263 = vsel %vm1446, %v2241, 0
        %2265 = vmatpush.msra.mxu0 0.0
        %2266 = vmatpush.msra.mxu0 0.0
        %2267 = vmatpush.msra.mxu0 0.0
        %2268 = vmatpush.msra.mxu0 0.0
        %2269 = vmatpush.msra.mxu0 0.0
        %2270 = vmatpush.msra.mxu0 0.0
        %2271 = vmatpush.msra.mxu0 0.0
        %2272 = vmatpush.msra.mxu0 0.0
        %2273 = vmatpush.msra.mxu0 0.0
        %2274 = vmatpush.msra.mxu0 0.0
        %2275 = vmatpush.msra.mxu0 0.0
        %2276 = vmatpush.msra.mxu0 %v2260
        %2277 = vmatpush.msra.mxu0 %v2238
        %2278 = vmatpush.msra.mxu0 %v2236
        %2279 = vmatpush.msra.mxu0 %v2234
        %2280 = vmatpush.msra.mxu0 %v2232
        %2281 = vmatmul.f32.gmra.mxu0 %v2248
        %v2282 = vpop.f32.mrf.mxu0
        %v2283 = vadd.f32 0.0, %v2282
        %2284 = vmatmul.f32.gmra.mxu0 %v2251
        %v2285 = vpop.f32.mrf.mxu0
        %v2286 = vadd.f32 0.0, %v2285
        %2287 = vmatmul.f32.gmra.mxu0 %v2254
        %v2288 = vpop.f32.mrf.mxu0
        %v2289 = vadd.f32 0.0, %v2288
        %2290 = vmatmul.f32.gmra.mxu0 %v2257
        %v2291 = vpop.f32.mrf.mxu0
        %v2292 = vadd.f32 0.0, %v2291
        %2293 = vdwg.mxu0
        %2294 = vmatpush.msra.mxu0 0.0
        %2295 = vmatpush.msra.mxu0 0.0
        %2296 = vmatpush.msra.mxu0 0.0
        %2297 = vmatpush.msra.mxu0 0.0
        %2298 = vmatpush.msra.mxu0 0.0
        %2299 = vmatpush.msra.mxu0 0.0
        %2300 = vmatpush.msra.mxu0 0.0
        %2301 = vmatpush.msra.mxu0 0.0
        %2302 = vmatpush.msra.mxu0 0.0
        %2303 = vmatpush.msra.mxu0 0.0
        %2304 = vmatpush.msra.mxu0 0.0
        %2305 = vmatpush.msra.mxu0 %v2263
        %2306 = vmatpush.msra.mxu0 %v2239
        %2307 = vmatpush.msra.mxu0 %v2237
        %2308 = vmatpush.msra.mxu0 %v2235
        %2309 = vmatpush.msra.mxu0 %v2233
        %2310 = vmatmul.f32.gmra.mxu0 %v2248
        %v2311 = vpop.f32.mrf.mxu0
        %v2312 = vadd.f32 0.0, %v2311
        %2313 = vmatmul.f32.gmra.mxu0 %v2251
        %v2314 = vpop.f32.mrf.mxu0
        %v2315 = vadd.f32 0.0, %v2314
        %2316 = vmatmul.f32.gmra.mxu0 %v2254
        %v2317 = vpop.f32.mrf.mxu0
        %v2318 = vadd.f32 0.0, %v2317
        %2319 = vmatmul.f32.gmra.mxu0 %v2257
        %v2320 = vpop.f32.mrf.mxu0
        %v2321 = vadd.f32 0.0, %v2320
        %2322 = vdwg.mxu0
        %v2323 = vadd.f32 %v2173, %v2283
        %v2324 = vadd.f32 %v2174, %v2312
        %v2325 = vadd.f32 %v2175, %v2286
        %v2326 = vadd.f32 %v2176, %v2315
        %v2327 = vadd.f32 %v2177, %v2289
        %v2328 = vadd.f32 %v2178, %v2318
        %v2329 = vadd.f32 %v2179, %v2292
        %v2330 = vadd.f32 %v2180, %v2321
        %s2331 = scalar_lea.vmem [#allocation4], 224
        %v2332 = vld [vmem:[%s2331] sm:$0xff]
        %v2333 = vld [vmem:[%s2331 + $0x8] sm:$0xff]
        %v2334 = vld [vmem:[%s2331 + $0x10] sm:$0xff]
        %v2335 = vld [vmem:[%s2331 + $0x18] sm:$0x1f]
        %2336 = vrot.lane.b32.xlu0 %v1264, 16
        %v2337 = vpop.permute.xlu0 %2336
        %2338 = vrot.lane.b32.xlu0 %v1265, 16
        %v2339 = vpop.permute.xlu0 %2338
        %2340 = vrot.lane.b32.xlu0 %v1266, 16
        %v2341 = vpop.permute.xlu0 %2340
        %2342 = vrot.lane.b32.xlu0 %v1267, 16
        %v2343 = vpop.permute.xlu0 %2342
        %2344 = vrot.lane.b32.xlu0 %v1268, 16
        %v2345 = vpop.permute.xlu0 %2344
        %2346 = vrot.lane.b32.xlu0 %v1269, 16
        %v2347 = vpop.permute.xlu0 %2346
        %2348 = vrot.lane.b32.xlu0 %v1270, 16
        %v2349 = vpop.permute.xlu0 %2348
        %2350 = vrot.lane.b32.xlu0 %v1271, 16
        %v2351 = vpop.permute.xlu0 %2350
        %2352 = vrot.lane.b32.xlu0 %v1272, 16
        %v2353 = vpop.permute.xlu0 %2352
        %2354 = vrot.lane.b32.xlu0 %v1273, 16
        %v2355 = vpop.permute.xlu0 %2354
        %2356 = vrot.lane.b32.xlu0 %v1274, 16
        %v2357 = vpop.permute.xlu0 %2356
        %2358 = vrot.lane.b32.xlu0 %v1275, 16
        %v2359 = vpop.permute.xlu0 %2358
        %2360 = vrot.lane.b32.xlu0 %v1276, 16
        %v2361 = vpop.permute.xlu0 %2360
        %2362 = vrot.lane.b32.xlu0 %v1277, 16
        %v2363 = vpop.permute.xlu0 %2362
        %2364 = vrot.lane.b32.xlu0 %v1278, 16
        %v2365 = vpop.permute.xlu0 %2364
        %vm2366 = vcmask 130048
        %v2367 = vsel %vm2366, %v2337, %v2339
        %v2368 = vsel %vm2366, %v2339, %v2341
        %v2369 = vsel %vm2366, %v2343, %v2345
        %v2370 = vsel %vm2366, %v2345, %v2347
        %v2371 = vsel %vm2366, %v2349, %v2351
        %v2372 = vsel %vm2366, %v2351, %v2353
        %v2373 = vsel %vm2366, %v2355, %v2357
        %v2374 = vsel %vm2366, %v2357, %v2359
        %v2375 = vsel %vm2366, %v2361, %v2363
        %v2376 = vsel %vm2366, %v2363, %v2365
        %v2386 = vsel %vm1433, %v2332, 0
        %v2389 = vsel %vm1433, %v2333, 0
        %v2392 = vsel %vm1433, %v2334, 0
        %v2395 = vsel %vm1433, %v2335, 0
        %v2397 = vsel %vm1446, %v2375, 0
        %v2399 = vsel %vm1446, %v2376, 0
        %2401 = vmatpush.msra.mxu0 0.0
        %2402 = vmatpush.msra.mxu0 0.0
        %2403 = vmatpush.msra.mxu0 0.0
        %2404 = vmatpush.msra.mxu0 0.0
        %2405 = vmatpush.msra.mxu0 0.0
        %2406 = vmatpush.msra.mxu0 0.0
        %2407 = vmatpush.msra.mxu0 0.0
        %2408 = vmatpush.msra.mxu0 0.0
        %2409 = vmatpush.msra.mxu0 0.0
        %2410 = vmatpush.msra.mxu0 0.0
        %2411 = vmatpush.msra.mxu0 0.0
        %2412 = vmatpush.msra.mxu0 %v2397
        %2413 = vmatpush.msra.mxu0 %v2373
        %2414 = vmatpush.msra.mxu0 %v2371
        %2415 = vmatpush.msra.mxu0 %v2369
        %2416 = vmatpush.msra.mxu0 %v2367
        %2417 = vmatmul.f32.gmra.mxu0 %v2386
        %v2418 = vpop.f32.mrf.mxu0
        %v2419 = vadd.f32 0.0, %v2418
        %2420 = vmatmul.f32.gmra.mxu0 %v2389
        %v2421 = vpop.f32.mrf.mxu0
        %v2422 = vadd.f32 0.0, %v2421
        %2423 = vmatmul.f32.gmra.mxu0 %v2392
        %v2424 = vpop.f32.mrf.mxu0
        %v2425 = vadd.f32 0.0, %v2424
        %2426 = vmatmul.f32.gmra.mxu0 %v2395
        %v2427 = vpop.f32.mrf.mxu0
        %v2428 = vadd.f32 0.0, %v2427
        %2429 = vdwg.mxu0
        %2430 = vmatpush.msra.mxu0 0.0
        %2431 = vmatpush.msra.mxu0 0.0
        %2432 = vmatpush.msra.mxu0 0.0
        %2433 = vmatpush.msra.mxu0 0.0
        %2434 = vmatpush.msra.mxu0 0.0
        %2435 = vmatpush.msra.mxu0 0.0
        %2436 = vmatpush.msra.mxu0 0.0
        %2437 = vmatpush.msra.mxu0 0.0
        %2438 = vmatpush.msra.mxu0 0.0
        %2439 = vmatpush.msra.mxu0 0.0
        %2440 = vmatpush.msra.mxu0 0.0
        %2441 = vmatpush.msra.mxu0 %v2399
        %2442 = vmatpush.msra.mxu0 %v2374
        %2443 = vmatpush.msra.mxu0 %v2372
        %2444 = vmatpush.msra.mxu0 %v2370
        %2445 = vmatpush.msra.mxu0 %v2368
        %2446 = vmatmul.f32.gmra.mxu0 %v2386
        %v2447 = vpop.f32.mrf.mxu0
        %v2448 = vadd.f32 0.0, %v2447
        %2449 = vmatmul.f32.gmra.mxu0 %v2389
        %v2450 = vpop.f32.mrf.mxu0
        %v2451 = vadd.f32 0.0, %v2450
        %2452 = vmatmul.f32.gmra.mxu0 %v2392
        %v2453 = vpop.f32.mrf.mxu0
        %v2454 = vadd.f32 0.0, %v2453
        %2455 = vmatmul.f32.gmra.mxu0 %v2395
        %v2456 = vpop.f32.mrf.mxu0
        %v2457 = vadd.f32 0.0, %v2456
        %2458 = vdwg.mxu0
        %v2459 = vadd.f32 %v2323, %v2419
        %v2460 = vadd.f32 %v2324, %v2448
        %v2461 = vadd.f32 %v2325, %v2422
        %v2462 = vadd.f32 %v2326, %v2451
        %v2463 = vadd.f32 %v2327, %v2425
        %v2464 = vadd.f32 %v2328, %v2454
        %v2465 = vadd.f32 %v2329, %v2428
        %v2466 = vadd.f32 %v2330, %v2457
        %2467 = vrot.lane.b32.xlu0 %v1264, 15
        %v2468 = vpop.permute.xlu0 %2467
        %2469 = vrot.lane.b32.xlu0 %v1265, 15
        %v2470 = vpop.permute.xlu0 %2469
        %2471 = vrot.lane.b32.xlu0 %v1266, 15
        %v2472 = vpop.permute.xlu0 %2471
        %2473 = vrot.lane.b32.xlu0 %v1267, 15
        %v2474 = vpop.permute.xlu0 %2473
        %2475 = vrot.lane.b32.xlu0 %v1268, 15
        %v2476 = vpop.permute.xlu0 %2475
        %2477 = vrot.lane.b32.xlu0 %v1269, 15
        %v2478 = vpop.permute.xlu0 %2477
        %2479 = vrot.lane.b32.xlu0 %v1270, 15
        %v2480 = vpop.permute.xlu0 %2479
        %2481 = vrot.lane.b32.xlu0 %v1271, 15
        %v2482 = vpop.permute.xlu0 %2481
        %2483 = vrot.lane.b32.xlu0 %v1272, 15
        %v2484 = vpop.permute.xlu0 %2483
        %2485 = vrot.lane.b32.xlu0 %v1273, 15
        %v2486 = vpop.permute.xlu0 %2485
        %2487 = vrot.lane.b32.xlu0 %v1274, 15
        %v2488 = vpop.permute.xlu0 %2487
        %2489 = vrot.lane.b32.xlu0 %v1275, 15
        %v2490 = vpop.permute.xlu0 %2489
        %2491 = vrot.lane.b32.xlu0 %v1276, 15
        %v2492 = vpop.permute.xlu0 %2491
        %2493 = vrot.lane.b32.xlu0 %v1277, 15
        %v2494 = vpop.permute.xlu0 %2493
        %2495 = vrot.lane.b32.xlu0 %v1278, 15
        %v2496 = vpop.permute.xlu0 %2495
        %vm2497 = vcmask 121856
        %v2498 = vsel %vm2497, %v2468, %v2470
        %v2499 = vsel %vm2497, %v2470, %v2472
        %v2500 = vsel %vm2497, %v2474, %v2476
        %v2501 = vsel %vm2497, %v2476, %v2478
        %v2502 = vsel %vm2497, %v2480, %v2482
        %v2503 = vsel %vm2497, %v2482, %v2484
        %v2504 = vsel %vm2497, %v2486, %v2488
        %v2505 = vsel %vm2497, %v2488, %v2490
        %v2506 = vsel %vm2497, %v2492, %v2494
        %v2507 = vsel %vm2497, %v2494, %v2496
        %v2518 = vsel %vm1725, %v2498, 0.0
        %v2519 = vsel %vm1726, %v2499, 0.0
        %v2520 = vsel %vm1725, %v2500, 0.0
        %v2521 = vsel %vm1726, %v2501, 0.0
        %v2522 = vsel %vm1725, %v2502, 0.0
        %v2523 = vsel %vm1726, %v2503, 0.0
        %v2524 = vsel %vm1725, %v2504, 0.0
        %v2525 = vsel %vm1726, %v2505, 0.0
        %v2526 = vsel %vm1725, %v2506, 0.0
        %v2527 = vsel %vm1726, %v2507, 0.0
        %s2528 = scalar_lea.vmem [#allocation4], 256
        %v2529 = vld [vmem:[%s2528] sm:$0xff]
        %v2530 = vld [vmem:[%s2528 + $0x8] sm:$0xff]
        %v2531 = vld [vmem:[%s2528 + $0x10] sm:$0xff]
        %v2532 = vld [vmem:[%s2528 + $0x18] sm:$0x1f]
        %v2534 = vsel %vm1433, %v2529, 0
        %v2537 = vsel %vm1433, %v2530, 0
        %v2540 = vsel %vm1433, %v2531, 0
        %v2543 = vsel %vm1433, %v2532, 0
        %v2546 = vsel %vm1446, %v2526, 0
        %v2549 = vsel %vm1446, %v2527, 0
        %2551 = vmatpush.msra.mxu0 0.0
        %2552 = vmatpush.msra.mxu0 0.0
        %2553 = vmatpush.msra.mxu0 0.0
        %2554 = vmatpush.msra.mxu0 0.0
        %2555 = vmatpush.msra.mxu0 0.0
        %2556 = vmatpush.msra.mxu0 0.0
        %2557 = vmatpush.msra.mxu0 0.0
        %2558 = vmatpush.msra.mxu0 0.0
        %2559 = vmatpush.msra.mxu0 0.0
        %2560 = vmatpush.msra.mxu0 0.0
        %2561 = vmatpush.msra.mxu0 0.0
        %2562 = vmatpush.msra.mxu0 %v2546
        %2563 = vmatpush.msra.mxu0 %v2524
        %2564 = vmatpush.msra.mxu0 %v2522
        %2565 = vmatpush.msra.mxu0 %v2520
        %2566 = vmatpush.msra.mxu0 %v2518
        %2567 = vmatmul.f32.gmra.mxu0 %v2534
        %v2568 = vpop.f32.mrf.mxu0
        %v2569 = vadd.f32 0.0, %v2568
        %2570 = vmatmul.f32.gmra.mxu0 %v2537
        %v2571 = vpop.f32.mrf.mxu0
        %v2572 = vadd.f32 0.0, %v2571
        %2573 = vmatmul.f32.gmra.mxu0 %v2540
        %v2574 = vpop.f32.mrf.mxu0
        %v2575 = vadd.f32 0.0, %v2574
        %2576 = vmatmul.f32.gmra.mxu0 %v2543
        %v2577 = vpop.f32.mrf.mxu0
        %v2578 = vadd.f32 0.0, %v2577
        %2579 = vdwg.mxu0
        %2580 = vmatpush.msra.mxu0 0.0
        %2581 = vmatpush.msra.mxu0 0.0
        %2582 = vmatpush.msra.mxu0 0.0
        %2583 = vmatpush.msra.mxu0 0.0
        %2584 = vmatpush.msra.mxu0 0.0
        %2585 = vmatpush.msra.mxu0 0.0
        %2586 = vmatpush.msra.mxu0 0.0
        %2587 = vmatpush.msra.mxu0 0.0
        %2588 = vmatpush.msra.mxu0 0.0
        %2589 = vmatpush.msra.mxu0 0.0
        %2590 = vmatpush.msra.mxu0 0.0
        %2591 = vmatpush.msra.mxu0 %v2549
        %2592 = vmatpush.msra.mxu0 %v2525
        %2593 = vmatpush.msra.mxu0 %v2523
        %2594 = vmatpush.msra.mxu0 %v2521
        %2595 = vmatpush.msra.mxu0 %v2519
        %2596 = vmatmul.f32.gmra.mxu0 %v2534
        %v2597 = vpop.f32.mrf.mxu0
        %v2598 = vadd.f32 0.0, %v2597
        %2599 = vmatmul.f32.gmra.mxu0 %v2537
        %v2600 = vpop.f32.mrf.mxu0
        %v2601 = vadd.f32 0.0, %v2600
        %2602 = vmatmul.f32.gmra.mxu0 %v2540
        %v2603 = vpop.f32.mrf.mxu0
        %v2604 = vadd.f32 0.0, %v2603
        %2605 = vmatmul.f32.gmra.mxu0 %v2543
        %v2606 = vpop.f32.mrf.mxu0
        %v2607 = vadd.f32 0.0, %v2606
        %2608 = vdwg.mxu0
        %v2609 = vadd.f32 %v2459, %v2569
        %v2610 = vadd.f32 %v2460, %v2598
        %v2611 = vadd.f32 %v2461, %v2572
        %v2612 = vadd.f32 %v2462, %v2601
        %v2613 = vadd.f32 %v2463, %v2575
        %v2614 = vadd.f32 %v2464, %v2604
        %v2615 = vadd.f32 %v2465, %v2578
        %v2616 = vadd.f32 %v2466, %v2607
        %2617 = vrot.lane.b32.xlu0 %v1264, 14
        %v2618 = vpop.permute.xlu0 %2617
        %2619 = vrot.lane.b32.xlu0 %v1265, 14
        %v2620 = vpop.permute.xlu0 %2619
        %2621 = vrot.lane.b32.xlu0 %v1266, 14
        %v2622 = vpop.permute.xlu0 %2621
        %2623 = vrot.lane.b32.xlu0 %v1267, 14
        %v2624 = vpop.permute.xlu0 %2623
        %2625 = vrot.lane.b32.xlu0 %v1268, 14
        %v2626 = vpop.permute.xlu0 %2625
        %2627 = vrot.lane.b32.xlu0 %v1269, 14
        %v2628 = vpop.permute.xlu0 %2627
        %2629 = vrot.lane.b32.xlu0 %v1270, 14
        %v2630 = vpop.permute.xlu0 %2629
        %2631 = vrot.lane.b32.xlu0 %v1271, 14
        %v2632 = vpop.permute.xlu0 %2631
        %2633 = vrot.lane.b32.xlu0 %v1272, 14
        %v2634 = vpop.permute.xlu0 %2633
        %2635 = vrot.lane.b32.xlu0 %v1273, 14
        %v2636 = vpop.permute.xlu0 %2635
        %2637 = vrot.lane.b32.xlu0 %v1274, 14
        %v2638 = vpop.permute.xlu0 %2637
        %2639 = vrot.lane.b32.xlu0 %v1275, 14
        %v2640 = vpop.permute.xlu0 %2639
        %2641 = vrot.lane.b32.xlu0 %v1276, 14
        %v2642 = vpop.permute.xlu0 %2641
        %2643 = vrot.lane.b32.xlu0 %v1277, 14
        %v2644 = vpop.permute.xlu0 %2643
        %2645 = vrot.lane.b32.xlu0 %v1278, 14
        %v2646 = vpop.permute.xlu0 %2645
        %vm2647 = vcmask 113664
        %v2648 = vsel %vm2647, %v2618, %v2620
        %v2649 = vsel %vm2647, %v2620, %v2622
        %v2650 = vsel %vm2647, %v2624, %v2626
        %v2651 = vsel %vm2647, %v2626, %v2628
        %v2652 = vsel %vm2647, %v2630, %v2632
        %v2653 = vsel %vm2647, %v2632, %v2634
        %v2654 = vsel %vm2647, %v2636, %v2638
        %v2655 = vsel %vm2647, %v2638, %v2640
        %v2656 = vsel %vm2647, %v2642, %v2644
        %v2657 = vsel %vm2647, %v2644, %v2646
        %v2668 = vsel %vm1879, %v2648, 0.0
        %v2669 = vsel %vm1880, %v2649, 0.0
        %v2670 = vsel %vm1879, %v2650, 0.0
        %v2671 = vsel %vm1880, %v2651, 0.0
        %v2672 = vsel %vm1879, %v2652, 0.0
        %v2673 = vsel %vm1880, %v2653, 0.0
        %v2674 = vsel %vm1879, %v2654, 0.0
        %v2675 = vsel %vm1880, %v2655, 0.0
        %v2676 = vsel %vm1879, %v2656, 0.0
        %v2677 = vsel %vm1880, %v2657, 0.0
        %s2678 = scalar_lea.vmem [#allocation4], 288
        %v2679 = vld [vmem:[%s2678] sm:$0xff]
        %v2680 = vld [vmem:[%s2678 + $0x8] sm:$0xff]
        %v2681 = vld [vmem:[%s2678 + $0x10] sm:$0xff]
        %v2682 = vld [vmem:[%s2678 + $0x18] sm:$0x1f]
        %v2684 = vsel %vm1433, %v2679, 0
        %v2687 = vsel %vm1433, %v2680, 0
        %v2690 = vsel %vm1433, %v2681, 0
        %v2693 = vsel %vm1433, %v2682, 0
        %v2696 = vsel %vm1446, %v2676, 0
        %v2699 = vsel %vm1446, %v2677, 0
        %2701 = vmatpush.msra.mxu0 0.0
        %2702 = vmatpush.msra.mxu0 0.0
        %2703 = vmatpush.msra.mxu0 0.0
        %2704 = vmatpush.msra.mxu0 0.0
        %2705 = vmatpush.msra.mxu0 0.0
        %2706 = vmatpush.msra.mxu0 0.0
        %2707 = vmatpush.msra.mxu0 0.0
        %2708 = vmatpush.msra.mxu0 0.0
        %2709 = vmatpush.msra.mxu0 0.0
        %2710 = vmatpush.msra.mxu0 0.0
        %2711 = vmatpush.msra.mxu0 0.0
        %2712 = vmatpush.msra.mxu0 %v2696
        %2713 = vmatpush.msra.mxu0 %v2674
        %2714 = vmatpush.msra.mxu0 %v2672
        %2715 = vmatpush.msra.mxu0 %v2670
        %2716 = vmatpush.msra.mxu0 %v2668
        %2717 = vmatmul.f32.gmra.mxu0 %v2684
        %v2718 = vpop.f32.mrf.mxu0
        %v2719 = vadd.f32 0.0, %v2718
        %2720 = vmatmul.f32.gmra.mxu0 %v2687
        %v2721 = vpop.f32.mrf.mxu0
        %v2722 = vadd.f32 0.0, %v2721
        %2723 = vmatmul.f32.gmra.mxu0 %v2690
        %v2724 = vpop.f32.mrf.mxu0
        %v2725 = vadd.f32 0.0, %v2724
        %2726 = vmatmul.f32.gmra.mxu0 %v2693
        %v2727 = vpop.f32.mrf.mxu0
        %v2728 = vadd.f32 0.0, %v2727
        %2729 = vdwg.mxu0
        %2730 = vmatpush.msra.mxu0 0.0
        %2731 = vmatpush.msra.mxu0 0.0
        %2732 = vmatpush.msra.mxu0 0.0
        %2733 = vmatpush.msra.mxu0 0.0
        %2734 = vmatpush.msra.mxu0 0.0
        %2735 = vmatpush.msra.mxu0 0.0
        %2736 = vmatpush.msra.mxu0 0.0
        %2737 = vmatpush.msra.mxu0 0.0
        %2738 = vmatpush.msra.mxu0 0.0
        %2739 = vmatpush.msra.mxu0 0.0
        %2740 = vmatpush.msra.mxu0 0.0
        %2741 = vmatpush.msra.mxu0 %v2699
        %2742 = vmatpush.msra.mxu0 %v2675
        %2743 = vmatpush.msra.mxu0 %v2673
        %2744 = vmatpush.msra.mxu0 %v2671
        %2745 = vmatpush.msra.mxu0 %v2669
        %2746 = vmatmul.f32.gmra.mxu0 %v2684
        %v2747 = vpop.f32.mrf.mxu0
        %v2748 = vadd.f32 0.0, %v2747
        %2749 = vmatmul.f32.gmra.mxu0 %v2687
        %v2750 = vpop.f32.mrf.mxu0
        %v2751 = vadd.f32 0.0, %v2750
        %2752 = vmatmul.f32.gmra.mxu0 %v2690
        %v2753 = vpop.f32.mrf.mxu0
        %v2754 = vadd.f32 0.0, %v2753
        %2755 = vmatmul.f32.gmra.mxu0 %v2693
        %v2756 = vpop.f32.mrf.mxu0
        %v2757 = vadd.f32 0.0, %v2756
        %2758 = vdwg.mxu0
        %v2759 = vadd.f32 %v2609, %v2719
        %v2760 = vadd.f32 %v2610, %v2748
        %v2761 = vadd.f32 %v2611, %v2722
        %v2762 = vadd.f32 %v2612, %v2751
        %v2763 = vadd.f32 %v2613, %v2725
        %v2764 = vadd.f32 %v2614, %v2754
        %v2765 = vadd.f32 %v2615, %v2728
        %v2766 = vadd.f32 %v2616, %v2757
        %2767 = vrot.lane.b32.xlu0 %v1264, 2
        %v2768 = vpop.permute.xlu0 %2767
        %2769 = vrot.lane.b32.xlu0 %v1265, 2
        %v2770 = vpop.permute.xlu0 %2769
        %2771 = vrot.lane.b32.xlu0 %v1266, 2
        %v2772 = vpop.permute.xlu0 %2771
        %2773 = vrot.lane.b32.xlu0 %v1267, 2
        %v2774 = vpop.permute.xlu0 %2773
        %2775 = vrot.lane.b32.xlu0 %v1268, 2
        %v2776 = vpop.permute.xlu0 %2775
        %2777 = vrot.lane.b32.xlu0 %v1269, 2
        %v2778 = vpop.permute.xlu0 %2777
        %2779 = vrot.lane.b32.xlu0 %v1270, 2
        %v2780 = vpop.permute.xlu0 %2779
        %2781 = vrot.lane.b32.xlu0 %v1271, 2
        %v2782 = vpop.permute.xlu0 %2781
        %2783 = vrot.lane.b32.xlu0 %v1272, 2
        %v2784 = vpop.permute.xlu0 %2783
        %2785 = vrot.lane.b32.xlu0 %v1273, 2
        %v2786 = vpop.permute.xlu0 %2785
        %2787 = vrot.lane.b32.xlu0 %v1274, 2
        %v2788 = vpop.permute.xlu0 %2787
        %2789 = vrot.lane.b32.xlu0 %v1275, 2
        %v2790 = vpop.permute.xlu0 %2789
        %2791 = vrot.lane.b32.xlu0 %v1276, 2
        %v2792 = vpop.permute.xlu0 %2791
        %2793 = vrot.lane.b32.xlu0 %v1277, 2
        %v2794 = vpop.permute.xlu0 %2793
        %2795 = vrot.lane.b32.xlu0 %v1278, 2
        %v2796 = vpop.permute.xlu0 %2795
        %v2797 = vsel %vm660, %v2768, %v2770
        %v2798 = vsel %vm660, %v2770, %v2772
        %v2799 = vsel %vm660, %v2774, %v2776
        %v2800 = vsel %vm660, %v2776, %v2778
        %v2801 = vsel %vm660, %v2780, %v2782
        %v2802 = vsel %vm660, %v2782, %v2784
        %v2803 = vsel %vm660, %v2786, %v2788
        %v2804 = vsel %vm660, %v2788, %v2790
        %v2805 = vsel %vm660, %v2792, %v2794
        %v2806 = vsel %vm660, %v2794, %v2796
        %v2817 = vsel %vm1281, %v2797, 0.0
        %v2818 = vsel %vm1282, %v2798, 0.0
        %v2819 = vsel %vm1281, %v2799, 0.0
        %v2820 = vsel %vm1282, %v2800, 0.0
        %v2821 = vsel %vm1281, %v2801, 0.0
        %v2822 = vsel %vm1282, %v2802, 0.0
        %v2823 = vsel %vm1281, %v2803, 0.0
        %v2824 = vsel %vm1282, %v2804, 0.0
        %v2825 = vsel %vm1281, %v2805, 0.0
        %v2826 = vsel %vm1282, %v2806, 0.0
        %s2827 = scalar_lea.vmem [#allocation4], 320
        %v2828 = vld [vmem:[%s2827] sm:$0xff]
        %v2829 = vld [vmem:[%s2827 + $0x8] sm:$0xff]
        %v2830 = vld [vmem:[%s2827 + $0x10] sm:$0xff]
        %v2831 = vld [vmem:[%s2827 + $0x18] sm:$0x1f]
        %v2833 = vsel %vm1433, %v2828, 0
        %v2836 = vsel %vm1433, %v2829, 0
        %v2839 = vsel %vm1433, %v2830, 0
        %v2842 = vsel %vm1433, %v2831, 0
        %v2845 = vsel %vm1446, %v2825, 0
        %v2848 = vsel %vm1446, %v2826, 0
        %2850 = vmatpush.msra.mxu0 0.0
        %2851 = vmatpush.msra.mxu0 0.0
        %2852 = vmatpush.msra.mxu0 0.0
        %2853 = vmatpush.msra.mxu0 0.0
        %2854 = vmatpush.msra.mxu0 0.0
        %2855 = vmatpush.msra.mxu0 0.0
        %2856 = vmatpush.msra.mxu0 0.0
        %2857 = vmatpush.msra.mxu0 0.0
        %2858 = vmatpush.msra.mxu0 0.0
        %2859 = vmatpush.msra.mxu0 0.0
        %2860 = vmatpush.msra.mxu0 0.0
        %2861 = vmatpush.msra.mxu0 %v2845
        %2862 = vmatpush.msra.mxu0 %v2823
        %2863 = vmatpush.msra.mxu0 %v2821
        %2864 = vmatpush.msra.mxu0 %v2819
        %2865 = vmatpush.msra.mxu0 %v2817
        %2866 = vmatmul.f32.gmra.mxu0 %v2833
        %v2867 = vpop.f32.mrf.mxu0
        %v2868 = vadd.f32 0.0, %v2867
        %2869 = vmatmul.f32.gmra.mxu0 %v2836
        %v2870 = vpop.f32.mrf.mxu0
        %v2871 = vadd.f32 0.0, %v2870
        %2872 = vmatmul.f32.gmra.mxu0 %v2839
        %v2873 = vpop.f32.mrf.mxu0
        %v2874 = vadd.f32 0.0, %v2873
        %2875 = vmatmul.f32.gmra.mxu0 %v2842
        %v2876 = vpop.f32.mrf.mxu0
        %v2877 = vadd.f32 0.0, %v2876
        %2878 = vdwg.mxu0
        %2879 = vmatpush.msra.mxu0 0.0
        %2880 = vmatpush.msra.mxu0 0.0
        %2881 = vmatpush.msra.mxu0 0.0
        %2882 = vmatpush.msra.mxu0 0.0
        %2883 = vmatpush.msra.mxu0 0.0
        %2884 = vmatpush.msra.mxu0 0.0
        %2885 = vmatpush.msra.mxu0 0.0
        %2886 = vmatpush.msra.mxu0 0.0
        %2887 = vmatpush.msra.mxu0 0.0
        %2888 = vmatpush.msra.mxu0 0.0
        %2889 = vmatpush.msra.mxu0 0.0
        %2890 = vmatpush.msra.mxu0 %v2848
        %2891 = vmatpush.msra.mxu0 %v2824
        %2892 = vmatpush.msra.mxu0 %v2822
        %2893 = vmatpush.msra.mxu0 %v2820
        %2894 = vmatpush.msra.mxu0 %v2818
        %2895 = vmatmul.f32.gmra.mxu0 %v2833
        %v2896 = vpop.f32.mrf.mxu0
        %v2897 = vadd.f32 0.0, %v2896
        %2898 = vmatmul.f32.gmra.mxu0 %v2836
        %v2899 = vpop.f32.mrf.mxu0
        %v2900 = vadd.f32 0.0, %v2899
        %2901 = vmatmul.f32.gmra.mxu0 %v2839
        %v2902 = vpop.f32.mrf.mxu0
        %v2903 = vadd.f32 0.0, %v2902
        %2904 = vmatmul.f32.gmra.mxu0 %v2842
        %v2905 = vpop.f32.mrf.mxu0
        %v2906 = vadd.f32 0.0, %v2905
        %2907 = vdwg.mxu0
        %v2908 = vadd.f32 %v2759, %v2868
        %v2909 = vadd.f32 %v2760, %v2897
        %v2910 = vadd.f32 %v2761, %v2871
        %v2911 = vadd.f32 %v2762, %v2900
        %v2912 = vadd.f32 %v2763, %v2874
        %v2913 = vadd.f32 %v2764, %v2903
        %v2914 = vadd.f32 %v2765, %v2877
        %v2915 = vadd.f32 %v2766, %v2906
        %2916 = vrot.lane.b32.xlu0 %v1264, 1
        %v2917 = vpop.permute.xlu0 %2916
        %2918 = vrot.lane.b32.xlu0 %v1265, 1
        %v2919 = vpop.permute.xlu0 %2918
        %2920 = vrot.lane.b32.xlu0 %v1266, 1
        %v2921 = vpop.permute.xlu0 %2920
        %2922 = vrot.lane.b32.xlu0 %v1267, 1
        %v2923 = vpop.permute.xlu0 %2922
        %2924 = vrot.lane.b32.xlu0 %v1268, 1
        %v2925 = vpop.permute.xlu0 %2924
        %2926 = vrot.lane.b32.xlu0 %v1269, 1
        %v2927 = vpop.permute.xlu0 %2926
        %2928 = vrot.lane.b32.xlu0 %v1270, 1
        %v2929 = vpop.permute.xlu0 %2928
        %2930 = vrot.lane.b32.xlu0 %v1271, 1
        %v2931 = vpop.permute.xlu0 %2930
        %2932 = vrot.lane.b32.xlu0 %v1272, 1
        %v2933 = vpop.permute.xlu0 %2932
        %2934 = vrot.lane.b32.xlu0 %v1273, 1
        %v2935 = vpop.permute.xlu0 %2934
        %2936 = vrot.lane.b32.xlu0 %v1274, 1
        %v2937 = vpop.permute.xlu0 %2936
        %2938 = vrot.lane.b32.xlu0 %v1275, 1
        %v2939 = vpop.permute.xlu0 %2938
        %2940 = vrot.lane.b32.xlu0 %v1276, 1
        %v2941 = vpop.permute.xlu0 %2940
        %2942 = vrot.lane.b32.xlu0 %v1277, 1
        %v2943 = vpop.permute.xlu0 %2942
        %2944 = vrot.lane.b32.xlu0 %v1278, 1
        %v2945 = vpop.permute.xlu0 %2944
        %vm2946 = vcmask 7168
        %v2947 = vsel %vm2946, %v2917, %v2919
        %v2948 = vsel %vm2946, %v2919, %v2921
        %v2949 = vsel %vm2946, %v2923, %v2925
        %v2950 = vsel %vm2946, %v2925, %v2927
        %v2951 = vsel %vm2946, %v2929, %v2931
        %v2952 = vsel %vm2946, %v2931, %v2933
        %v2953 = vsel %vm2946, %v2935, %v2937
        %v2954 = vsel %vm2946, %v2937, %v2939
        %v2955 = vsel %vm2946, %v2941, %v2943
        %v2956 = vsel %vm2946, %v2943, %v2945
        %v2967 = vsel %vm1365, %v2947, 0.0
        %v2968 = vsel %vm1366, %v2948, 0.0
        %v2969 = vsel %vm1365, %v2949, 0.0
        %v2970 = vsel %vm1366, %v2950, 0.0
        %v2971 = vsel %vm1365, %v2951, 0.0
        %v2972 = vsel %vm1366, %v2952, 0.0
        %v2973 = vsel %vm1365, %v2953, 0.0
        %v2974 = vsel %vm1366, %v2954, 0.0
        %v2975 = vsel %vm1365, %v2955, 0.0
        %v2976 = vsel %vm1366, %v2956, 0.0
        %s2977 = scalar_lea.vmem [#allocation4], 352
        %v2978 = vld [vmem:[%s2977] sm:$0xff]
        %v2979 = vld [vmem:[%s2977 + $0x8] sm:$0xff]
        %v2980 = vld [vmem:[%s2977 + $0x10] sm:$0xff]
        %v2981 = vld [vmem:[%s2977 + $0x18] sm:$0x1f]
        %v2983 = vsel %vm1433, %v2978, 0
        %v2986 = vsel %vm1433, %v2979, 0
        %v2989 = vsel %vm1433, %v2980, 0
        %v2992 = vsel %vm1433, %v2981, 0
        %v2995 = vsel %vm1446, %v2975, 0
        %v2998 = vsel %vm1446, %v2976, 0
        %3000 = vmatpush.msra.mxu0 0.0
        %3001 = vmatpush.msra.mxu0 0.0
        %3002 = vmatpush.msra.mxu0 0.0
        %3003 = vmatpush.msra.mxu0 0.0
        %3004 = vmatpush.msra.mxu0 0.0
        %3005 = vmatpush.msra.mxu0 0.0
        %3006 = vmatpush.msra.mxu0 0.0
        %3007 = vmatpush.msra.mxu0 0.0
        %3008 = vmatpush.msra.mxu0 0.0
        %3009 = vmatpush.msra.mxu0 0.0
        %3010 = vmatpush.msra.mxu0 0.0
        %3011 = vmatpush.msra.mxu0 %v2995
        %3012 = vmatpush.msra.mxu0 %v2973
        %3013 = vmatpush.msra.mxu0 %v2971
        %3014 = vmatpush.msra.mxu0 %v2969
        %3015 = vmatpush.msra.mxu0 %v2967
        %3016 = vmatmul.f32.gmra.mxu0 %v2983
        %v3017 = vpop.f32.mrf.mxu0
        %v3018 = vadd.f32 0.0, %v3017
        %3019 = vmatmul.f32.gmra.mxu0 %v2986
        %v3020 = vpop.f32.mrf.mxu0
        %v3021 = vadd.f32 0.0, %v3020
        %3022 = vmatmul.f32.gmra.mxu0 %v2989
        %v3023 = vpop.f32.mrf.mxu0
        %v3024 = vadd.f32 0.0, %v3023
        %3025 = vmatmul.f32.gmra.mxu0 %v2992
        %v3026 = vpop.f32.mrf.mxu0
        %v3027 = vadd.f32 0.0, %v3026
        %3028 = vdwg.mxu0
        %3029 = vmatpush.msra.mxu0 0.0
        %3030 = vmatpush.msra.mxu0 0.0
        %3031 = vmatpush.msra.mxu0 0.0
        %3032 = vmatpush.msra.mxu0 0.0
        %3033 = vmatpush.msra.mxu0 0.0
        %3034 = vmatpush.msra.mxu0 0.0
        %3035 = vmatpush.msra.mxu0 0.0
        %3036 = vmatpush.msra.mxu0 0.0
        %3037 = vmatpush.msra.mxu0 0.0
        %3038 = vmatpush.msra.mxu0 0.0
        %3039 = vmatpush.msra.mxu0 0.0
        %3040 = vmatpush.msra.mxu0 %v2998
        %3041 = vmatpush.msra.mxu0 %v2974
        %3042 = vmatpush.msra.mxu0 %v2972
        %3043 = vmatpush.msra.mxu0 %v2970
        %3044 = vmatpush.msra.mxu0 %v2968
        %3045 = vmatmul.f32.gmra.mxu0 %v2983
        %v3046 = vpop.f32.mrf.mxu0
        %v3047 = vadd.f32 0.0, %v3046
        %3048 = vmatmul.f32.gmra.mxu0 %v2986
        %v3049 = vpop.f32.mrf.mxu0
        %v3050 = vadd.f32 0.0, %v3049
        %3051 = vmatmul.f32.gmra.mxu0 %v2989
        %v3052 = vpop.f32.mrf.mxu0
        %v3053 = vadd.f32 0.0, %v3052
        %3054 = vmatmul.f32.gmra.mxu0 %v2992
        %v3055 = vpop.f32.mrf.mxu0
        %v3056 = vadd.f32 0.0, %v3055
        %3057 = vdwg.mxu0
        %v3058 = vadd.f32 %v2908, %v3018
        %v3059 = vadd.f32 %v2909, %v3047
        %v3060 = vadd.f32 %v2910, %v3021
        %v3061 = vadd.f32 %v2911, %v3050
        %v3062 = vadd.f32 %v2912, %v3024
        %v3063 = vadd.f32 %v2913, %v3053
        %v3064 = vadd.f32 %v2914, %v3027
        %v3065 = vadd.f32 %v2915, %v3056
        %s3066 = scalar_lea.vmem [#allocation4], 384
        %v3067 = vld [vmem:[%s3066] sm:$0xff]
        %v3068 = vld [vmem:[%s3066 + $0x8] sm:$0xff]
        %v3069 = vld [vmem:[%s3066 + $0x10] sm:$0xff]
        %v3070 = vld [vmem:[%s3066 + $0x18] sm:$0x1f]
        %v3072 = vsel %vm1433, %v3067, 0
        %v3075 = vsel %vm1433, %v3068, 0
        %v3078 = vsel %vm1433, %v3069, 0
        %v3081 = vsel %vm1433, %v3070, 0
        %v3083 = vsel %vm1446, %v1277, 0
        %v3085 = vsel %vm1446, %v1278, 0
        %3087 = vmatpush.msra.mxu0 0.0
        %3088 = vmatpush.msra.mxu0 0.0
        %3089 = vmatpush.msra.mxu0 0.0
        %3090 = vmatpush.msra.mxu0 0.0
        %3091 = vmatpush.msra.mxu0 0.0
        %3092 = vmatpush.msra.mxu0 0.0
        %3093 = vmatpush.msra.mxu0 0.0
        %3094 = vmatpush.msra.mxu0 0.0
        %3095 = vmatpush.msra.mxu0 0.0
        %3096 = vmatpush.msra.mxu0 0.0
        %3097 = vmatpush.msra.mxu0 0.0
        %3098 = vmatpush.msra.mxu0 %v3083
        %3099 = vmatpush.msra.mxu0 %v1274
        %3100 = vmatpush.msra.mxu0 %v1271
        %3101 = vmatpush.msra.mxu0 %v1268
        %3102 = vmatpush.msra.mxu0 %v1265
        %3103 = vmatmul.f32.gmra.mxu0 %v3072
        %v3104 = vpop.f32.mrf.mxu0
        %v3105 = vadd.f32 0.0, %v3104
        %3106 = vmatmul.f32.gmra.mxu0 %v3075
        %v3107 = vpop.f32.mrf.mxu0
        %v3108 = vadd.f32 0.0, %v3107
        %3109 = vmatmul.f32.gmra.mxu0 %v3078
        %v3110 = vpop.f32.mrf.mxu0
        %v3111 = vadd.f32 0.0, %v3110
        %3112 = vmatmul.f32.gmra.mxu0 %v3081
        %v3113 = vpop.f32.mrf.mxu0
        %v3114 = vadd.f32 0.0, %v3113
        %3115 = vdwg.mxu0
        %3116 = vmatpush.msra.mxu0 0.0
        %3117 = vmatpush.msra.mxu0 0.0
        %3118 = vmatpush.msra.mxu0 0.0
        %3119 = vmatpush.msra.mxu0 0.0
        %3120 = vmatpush.msra.mxu0 0.0
        %3121 = vmatpush.msra.mxu0 0.0
        %3122 = vmatpush.msra.mxu0 0.0
        %3123 = vmatpush.msra.mxu0 0.0
        %3124 = vmatpush.msra.mxu0 0.0
        %3125 = vmatpush.msra.mxu0 0.0
        %3126 = vmatpush.msra.mxu0 0.0
        %3127 = vmatpush.msra.mxu0 %v3085
        %3128 = vmatpush.msra.mxu0 %v1275
        %3129 = vmatpush.msra.mxu0 %v1272
        %3130 = vmatpush.msra.mxu0 %v1269
        %3131 = vmatpush.msra.mxu0 %v1266
        %3132 = vmatmul.f32.gmra.mxu0 %v3072
        %v3133 = vpop.f32.mrf.mxu0
        %v3134 = vadd.f32 0.0, %v3133
        %3135 = vmatmul.f32.gmra.mxu0 %v3075
        %v3136 = vpop.f32.mrf.mxu0
        %v3137 = vadd.f32 0.0, %v3136
        %3138 = vmatmul.f32.gmra.mxu0 %v3078
        %v3139 = vpop.f32.mrf.mxu0
        %v3140 = vadd.f32 0.0, %v3139
        %3141 = vmatmul.f32.gmra.mxu0 %v3081
        %v3142 = vpop.f32.mrf.mxu0
        %v3143 = vadd.f32 0.0, %v3142
        %3144 = vdwg.mxu0
        %v3145 = vadd.f32 %v3058, %v3105
        %v3146 = vadd.f32 %v3059, %v3134
        %v3147 = vadd.f32 %v3060, %v3108
        %v3148 = vadd.f32 %v3061, %v3137
        %v3149 = vadd.f32 %v3062, %v3111
        %v3150 = vadd.f32 %v3063, %v3140
        %v3151 = vadd.f32 %v3064, %v3114
        %v3152 = vadd.f32 %v3065, %v3143
        %v3153 = vld [vmem:[#allocation2 + $0x8] sm:$0xff]
        %v3154 = vld [vmem:[#allocation2 + $0x10] sm:$0xff]
        %v3155 = vld [vmem:[#allocation2 + $0x18] sm:$0xff]
        %v3156 = vld [vmem:[#allocation2 + $0x28] sm:$0xff]
        %v3157 = vld [vmem:[#allocation2 + $0x30] sm:$0xff]
        %v3158 = vld [vmem:[#allocation2 + $0x38] sm:$0xff]
        %v3159 = vld [vmem:[#allocation2 + $0x48] sm:$0xff]
        %v3160 = vld [vmem:[#allocation2 + $0x50] sm:$0xff]
        %v3161 = vld [vmem:[#allocation2 + $0x58] sm:$0xff]
        %v3162 = vld [vmem:[#allocation2 + $0x68] sm:$0xff]
        %v3163 = vld [vmem:[#allocation2 + $0x70] sm:$0xff]
        %v3164 = vld [vmem:[#allocation2 + $0x78] sm:$0xff]
        %v3165 = vld [vmem:[#allocation2 + $0x88] sm:$0x3f]
        %v3166 = vld [vmem:[#allocation2 + $0x90] sm:$0x3f]
        %v3167 = vld [vmem:[#allocation2 + $0x98] sm:$0x3f]
        %3183 = vrot.lane.b32.xlu0 %v3153, 127
        %v3184 = vpop.permute.xlu0 %3183
        %3185 = vrot.lane.b32.xlu0 %v3154, 127
        %v3186 = vpop.permute.xlu0 %3185
        %3187 = vrot.lane.b32.xlu0 %v3155, 127
        %v3188 = vpop.permute.xlu0 %3187
        %3189 = vrot.lane.b32.xlu0 %v3156, 127
        %v3190 = vpop.permute.xlu0 %3189
        %3191 = vrot.lane.b32.xlu0 %v3157, 127
        %v3192 = vpop.permute.xlu0 %3191
        %3193 = vrot.lane.b32.xlu0 %v3158, 127
        %v3194 = vpop.permute.xlu0 %3193
        %3195 = vrot.lane.b32.xlu0 %v3159, 127
        %v3196 = vpop.permute.xlu0 %3195
        %3197 = vrot.lane.b32.xlu0 %v3160, 127
        %v3198 = vpop.permute.xlu0 %3197
        %3199 = vrot.lane.b32.xlu0 %v3161, 127
        %v3200 = vpop.permute.xlu0 %3199
        %3201 = vrot.lane.b32.xlu0 %v3162, 127
        %v3202 = vpop.permute.xlu0 %3201
        %3203 = vrot.lane.b32.xlu0 %v3163, 127
        %v3204 = vpop.permute.xlu0 %3203
        %3205 = vrot.lane.b32.xlu0 %v3164, 127
        %v3206 = vpop.permute.xlu0 %3205
        %3207 = vrot.lane.b32.xlu0 %v3165, 127
        %v3208 = vpop.permute.xlu0 %3207
        %3209 = vrot.lane.b32.xlu0 %v3166, 127
        %v3210 = vpop.permute.xlu0 %3209
        %3211 = vrot.lane.b32.xlu0 %v3167, 127
        %v3212 = vpop.permute.xlu0 %3211
        %vm3213 = vcmask 1039360
        %v3214 = vsel %vm3213, %v3184, %v3186
        %v3215 = vsel %vm3213, %v3186, %v3188
        %v3216 = vsel %vm3213, %v3190, %v3192
        %v3217 = vsel %vm3213, %v3192, %v3194
        %v3218 = vsel %vm3213, %v3196, %v3198
        %v3219 = vsel %vm3213, %v3198, %v3200
        %v3220 = vsel %vm3213, %v3202, %v3204
        %v3221 = vsel %vm3213, %v3204, %v3206
        %v3222 = vsel %vm3213, %v3208, %v3210
        %v3223 = vsel %vm3213, %v3210, %v3212
        %v3234 = vsel %vm1725, %v3214, 0.0
        %v3235 = vsel %vm1726, %v3215, 0.0
        %v3236 = vsel %vm1725, %v3216, 0.0
        %v3237 = vsel %vm1726, %v3217, 0.0
        %v3238 = vsel %vm1725, %v3218, 0.0
        %v3239 = vsel %vm1726, %v3219, 0.0
        %v3240 = vsel %vm1725, %v3220, 0.0
        %v3241 = vsel %vm1726, %v3221, 0.0
        %v3242 = vsel %vm1725, %v3222, 0.0
        %v3243 = vsel %vm1726, %v3223, 0.0
        %s3244 = scalar_lea.vmem [#allocation4], 416
        %v3245 = vld [vmem:[%s3244] sm:$0xff]
        %v3246 = vld [vmem:[%s3244 + $0x8] sm:$0xff]
        %v3247 = vld [vmem:[%s3244 + $0x10] sm:$0xff]
        %v3248 = vld [vmem:[%s3244 + $0x18] sm:$0x1f]
        %v3250 = vsel %vm1433, %v3245, 0
        %v3253 = vsel %vm1433, %v3246, 0
        %v3256 = vsel %vm1433, %v3247, 0
        %v3259 = vsel %vm1433, %v3248, 0
        %v3262 = vsel %vm1446, %v3242, 0
        %v3265 = vsel %vm1446, %v3243, 0
        %3267 = vmatpush.msra.mxu0 0.0
        %3268 = vmatpush.msra.mxu0 0.0
        %3269 = vmatpush.msra.mxu0 0.0
        %3270 = vmatpush.msra.mxu0 0.0
        %3271 = vmatpush.msra.mxu0 0.0
        %3272 = vmatpush.msra.mxu0 0.0
        %3273 = vmatpush.msra.mxu0 0.0
        %3274 = vmatpush.msra.mxu0 0.0
        %3275 = vmatpush.msra.mxu0 0.0
        %3276 = vmatpush.msra.mxu0 0.0
        %3277 = vmatpush.msra.mxu0 0.0
        %3278 = vmatpush.msra.mxu0 %v3262
        %3279 = vmatpush.msra.mxu0 %v3240
        %3280 = vmatpush.msra.mxu0 %v3238
        %3281 = vmatpush.msra.mxu0 %v3236
        %3282 = vmatpush.msra.mxu0 %v3234
        %3283 = vmatmul.f32.gmra.mxu0 %v3250
        %v3284 = vpop.f32.mrf.mxu0
        %v3285 = vadd.f32 0.0, %v3284
        %3286 = vmatmul.f32.gmra.mxu0 %v3253
        %v3287 = vpop.f32.mrf.mxu0
        %v3288 = vadd.f32 0.0, %v3287
        %3289 = vmatmul.f32.gmra.mxu0 %v3256
        %v3290 = vpop.f32.mrf.mxu0
        %v3291 = vadd.f32 0.0, %v3290
        %3292 = vmatmul.f32.gmra.mxu0 %v3259
        %v3293 = vpop.f32.mrf.mxu0
        %v3294 = vadd.f32 0.0, %v3293
        %3295 = vdwg.mxu0
        %3296 = vmatpush.msra.mxu0 0.0
        %3297 = vmatpush.msra.mxu0 0.0
        %3298 = vmatpush.msra.mxu0 0.0
        %3299 = vmatpush.msra.mxu0 0.0
        %3300 = vmatpush.msra.mxu0 0.0
        %3301 = vmatpush.msra.mxu0 0.0
        %3302 = vmatpush.msra.mxu0 0.0
        %3303 = vmatpush.msra.mxu0 0.0
        %3304 = vmatpush.msra.mxu0 0.0
        %3305 = vmatpush.msra.mxu0 0.0
        %3306 = vmatpush.msra.mxu0 0.0
        %3307 = vmatpush.msra.mxu0 %v3265
        %3308 = vmatpush.msra.mxu0 %v3241
        %3309 = vmatpush.msra.mxu0 %v3239
        %3310 = vmatpush.msra.mxu0 %v3237
        %3311 = vmatpush.msra.mxu0 %v3235
        %3312 = vmatmul.f32.gmra.mxu0 %v3250
        %v3313 = vpop.f32.mrf.mxu0
        %v3314 = vadd.f32 0.0, %v3313
        %3315 = vmatmul.f32.gmra.mxu0 %v3253
        %v3316 = vpop.f32.mrf.mxu0
        %v3317 = vadd.f32 0.0, %v3316
        %3318 = vmatmul.f32.gmra.mxu0 %v3256
        %v3319 = vpop.f32.mrf.mxu0
        %v3320 = vadd.f32 0.0, %v3319
        %3321 = vmatmul.f32.gmra.mxu0 %v3259
        %v3322 = vpop.f32.mrf.mxu0
        %v3323 = vadd.f32 0.0, %v3322
        %3324 = vdwg.mxu0
        %v3325 = vadd.f32 %v3145, %v3285
        %v3326 = vadd.f32 %v3146, %v3314
        %v3327 = vadd.f32 %v3147, %v3288
        %v3328 = vadd.f32 %v3148, %v3317
        %v3329 = vadd.f32 %v3149, %v3291
        %v3330 = vadd.f32 %v3150, %v3320
        %v3331 = vadd.f32 %v3151, %v3294
        %v3332 = vadd.f32 %v3152, %v3323
        %3333 = vrot.lane.b32.xlu0 %v3153, 126
        %v3334 = vpop.permute.xlu0 %3333
        %3335 = vrot.lane.b32.xlu0 %v3154, 126
        %v3336 = vpop.permute.xlu0 %3335
        %3337 = vrot.lane.b32.xlu0 %v3155, 126
        %v3338 = vpop.permute.xlu0 %3337
        %3339 = vrot.lane.b32.xlu0 %v3156, 126
        %v3340 = vpop.permute.xlu0 %3339
        %3341 = vrot.lane.b32.xlu0 %v3157, 126
        %v3342 = vpop.permute.xlu0 %3341
        %3343 = vrot.lane.b32.xlu0 %v3158, 126
        %v3344 = vpop.permute.xlu0 %3343
        %3345 = vrot.lane.b32.xlu0 %v3159, 126
        %v3346 = vpop.permute.xlu0 %3345
        %3347 = vrot.lane.b32.xlu0 %v3160, 126
        %v3348 = vpop.permute.xlu0 %3347
        %3349 = vrot.lane.b32.xlu0 %v3161, 126
        %v3350 = vpop.permute.xlu0 %3349
        %3351 = vrot.lane.b32.xlu0 %v3162, 126
        %v3352 = vpop.permute.xlu0 %3351
        %3353 = vrot.lane.b32.xlu0 %v3163, 126
        %v3354 = vpop.permute.xlu0 %3353
        %3355 = vrot.lane.b32.xlu0 %v3164, 126
        %v3356 = vpop.permute.xlu0 %3355
        %3357 = vrot.lane.b32.xlu0 %v3165, 126
        %v3358 = vpop.permute.xlu0 %3357
        %3359 = vrot.lane.b32.xlu0 %v3166, 126
        %v3360 = vpop.permute.xlu0 %3359
        %3361 = vrot.lane.b32.xlu0 %v3167, 126
        %v3362 = vpop.permute.xlu0 %3361
        %vm3363 = vcmask 1031168
        %v3364 = vsel %vm3363, %v3334, %v3336
        %v3365 = vsel %vm3363, %v3336, %v3338
        %v3366 = vsel %vm3363, %v3340, %v3342
        %v3367 = vsel %vm3363, %v3342, %v3344
        %v3368 = vsel %vm3363, %v3346, %v3348
        %v3369 = vsel %vm3363, %v3348, %v3350
        %v3370 = vsel %vm3363, %v3352, %v3354
        %v3371 = vsel %vm3363, %v3354, %v3356
        %v3372 = vsel %vm3363, %v3358, %v3360
        %v3373 = vsel %vm3363, %v3360, %v3362
        %v3384 = vsel %vm1879, %v3364, 0.0
        %v3385 = vsel %vm1880, %v3365, 0.0
        %v3386 = vsel %vm1879, %v3366, 0.0
        %v3387 = vsel %vm1880, %v3367, 0.0
        %v3388 = vsel %vm1879, %v3368, 0.0
        %v3389 = vsel %vm1880, %v3369, 0.0
        %v3390 = vsel %vm1879, %v3370, 0.0
        %v3391 = vsel %vm1880, %v3371, 0.0
        %v3392 = vsel %vm1879, %v3372, 0.0
        %v3393 = vsel %vm1880, %v3373, 0.0
        %s3394 = scalar_lea.vmem [#allocation4], 448
        %v3395 = vld [vmem:[%s3394] sm:$0xff]
        %v3396 = vld [vmem:[%s3394 + $0x8] sm:$0xff]
        %v3397 = vld [vmem:[%s3394 + $0x10] sm:$0xff]
        %v3398 = vld [vmem:[%s3394 + $0x18] sm:$0x1f]
        %v3400 = vsel %vm1433, %v3395, 0
        %v3403 = vsel %vm1433, %v3396, 0
        %v3406 = vsel %vm1433, %v3397, 0
        %v3409 = vsel %vm1433, %v3398, 0
        %v3412 = vsel %vm1446, %v3392, 0
        %v3415 = vsel %vm1446, %v3393, 0
        %3417 = vmatpush.msra.mxu0 0.0
        %3418 = vmatpush.msra.mxu0 0.0
        %3419 = vmatpush.msra.mxu0 0.0
        %3420 = vmatpush.msra.mxu0 0.0
        %3421 = vmatpush.msra.mxu0 0.0
        %3422 = vmatpush.msra.mxu0 0.0
        %3423 = vmatpush.msra.mxu0 0.0
        %3424 = vmatpush.msra.mxu0 0.0
        %3425 = vmatpush.msra.mxu0 0.0
        %3426 = vmatpush.msra.mxu0 0.0
        %3427 = vmatpush.msra.mxu0 0.0
        %3428 = vmatpush.msra.mxu0 %v3412
        %3429 = vmatpush.msra.mxu0 %v3390
        %3430 = vmatpush.msra.mxu0 %v3388
        %3431 = vmatpush.msra.mxu0 %v3386
        %3432 = vmatpush.msra.mxu0 %v3384
        %3433 = vmatmul.f32.gmra.mxu0 %v3400
        %v3434 = vpop.f32.mrf.mxu0
        %v3435 = vadd.f32 0.0, %v3434
        %3436 = vmatmul.f32.gmra.mxu0 %v3403
        %v3437 = vpop.f32.mrf.mxu0
        %v3438 = vadd.f32 0.0, %v3437
        %3439 = vmatmul.f32.gmra.mxu0 %v3406
        %v3440 = vpop.f32.mrf.mxu0
        %v3441 = vadd.f32 0.0, %v3440
        %3442 = vmatmul.f32.gmra.mxu0 %v3409
        %v3443 = vpop.f32.mrf.mxu0
        %v3444 = vadd.f32 0.0, %v3443
        %3445 = vdwg.mxu0
        %3446 = vmatpush.msra.mxu0 0.0
        %3447 = vmatpush.msra.mxu0 0.0
        %3448 = vmatpush.msra.mxu0 0.0
        %3449 = vmatpush.msra.mxu0 0.0
        %3450 = vmatpush.msra.mxu0 0.0
        %3451 = vmatpush.msra.mxu0 0.0
        %3452 = vmatpush.msra.mxu0 0.0
        %3453 = vmatpush.msra.mxu0 0.0
        %3454 = vmatpush.msra.mxu0 0.0
        %3455 = vmatpush.msra.mxu0 0.0
        %3456 = vmatpush.msra.mxu0 0.0
        %3457 = vmatpush.msra.mxu0 %v3415
        %3458 = vmatpush.msra.mxu0 %v3391
        %3459 = vmatpush.msra.mxu0 %v3389
        %3460 = vmatpush.msra.mxu0 %v3387
        %3461 = vmatpush.msra.mxu0 %v3385
        %3462 = vmatmul.f32.gmra.mxu0 %v3400
        %v3463 = vpop.f32.mrf.mxu0
        %v3464 = vadd.f32 0.0, %v3463
        %3465 = vmatmul.f32.gmra.mxu0 %v3403
        %v3466 = vpop.f32.mrf.mxu0
        %v3467 = vadd.f32 0.0, %v3466
        %3468 = vmatmul.f32.gmra.mxu0 %v3406
        %v3469 = vpop.f32.mrf.mxu0
        %v3470 = vadd.f32 0.0, %v3469
        %3471 = vmatmul.f32.gmra.mxu0 %v3409
        %v3472 = vpop.f32.mrf.mxu0
        %v3473 = vadd.f32 0.0, %v3472
        %3474 = vdwg.mxu0
        %v3475 = vadd.f32 %v3325, %v3435
        %v3476 = vadd.f32 %v3326, %v3464
        %v3477 = vadd.f32 %v3327, %v3438
        %v3478 = vadd.f32 %v3328, %v3467
        %v3479 = vadd.f32 %v3329, %v3441
        %v3480 = vadd.f32 %v3330, %v3470
        %v3481 = vadd.f32 %v3331, %v3444
        %v3482 = vadd.f32 %v3332, %v3473
        %3483 = vrot.lane.b32.xlu0 %v3153, 114
        %v3484 = vpop.permute.xlu0 %3483
        %3485 = vrot.lane.b32.xlu0 %v3154, 114
        %v3486 = vpop.permute.xlu0 %3485
        %3487 = vrot.lane.b32.xlu0 %v3155, 114
        %v3488 = vpop.permute.xlu0 %3487
        %3489 = vrot.lane.b32.xlu0 %v3156, 114
        %v3490 = vpop.permute.xlu0 %3489
        %3491 = vrot.lane.b32.xlu0 %v3157, 114
        %v3492 = vpop.permute.xlu0 %3491
        %3493 = vrot.lane.b32.xlu0 %v3158, 114
        %v3494 = vpop.permute.xlu0 %3493
        %3495 = vrot.lane.b32.xlu0 %v3159, 114
        %v3496 = vpop.permute.xlu0 %3495
        %3497 = vrot.lane.b32.xlu0 %v3160, 114
        %v3498 = vpop.permute.xlu0 %3497
        %3499 = vrot.lane.b32.xlu0 %v3161, 114
        %v3500 = vpop.permute.xlu0 %3499
        %3501 = vrot.lane.b32.xlu0 %v3162, 114
        %v3502 = vpop.permute.xlu0 %3501
        %3503 = vrot.lane.b32.xlu0 %v3163, 114
        %v3504 = vpop.permute.xlu0 %3503
        %3505 = vrot.lane.b32.xlu0 %v3164, 114
        %v3506 = vpop.permute.xlu0 %3505
        %3507 = vrot.lane.b32.xlu0 %v3165, 114
        %v3508 = vpop.permute.xlu0 %3507
        %3509 = vrot.lane.b32.xlu0 %v3166, 114
        %v3510 = vpop.permute.xlu0 %3509
        %3511 = vrot.lane.b32.xlu0 %v3167, 114
        %v3512 = vpop.permute.xlu0 %3511
        %vm3513 = vcmask 932864
        %v3514 = vsel %vm3513, %v3484, %v3486
        %v3515 = vsel %vm3513, %v3486, %v3488
        %v3516 = vsel %vm3513, %v3490, %v3492
        %v3517 = vsel %vm3513, %v3492, %v3494
        %v3518 = vsel %vm3513, %v3496, %v3498
        %v3519 = vsel %vm3513, %v3498, %v3500
        %v3520 = vsel %vm3513, %v3502, %v3504
        %v3521 = vsel %vm3513, %v3504, %v3506
        %v3522 = vsel %vm3513, %v3508, %v3510
        %v3523 = vsel %vm3513, %v3510, %v3512
        %v3534 = vsel %vm1281, %v3514, 0.0
        %v3535 = vsel %vm1282, %v3515, 0.0
        %v3536 = vsel %vm1281, %v3516, 0.0
        %v3537 = vsel %vm1282, %v3517, 0.0
        %v3538 = vsel %vm1281, %v3518, 0.0
        %v3539 = vsel %vm1282, %v3519, 0.0
        %v3540 = vsel %vm1281, %v3520, 0.0
        %v3541 = vsel %vm1282, %v3521, 0.0
        %v3542 = vsel %vm1281, %v3522, 0.0
        %v3543 = vsel %vm1282, %v3523, 0.0
        %s3544 = scalar_lea.vmem [#allocation4], 480
        %v3545 = vld [vmem:[%s3544] sm:$0xff]
        %v3546 = vld [vmem:[%s3544 + $0x8] sm:$0xff]
        %v3547 = vld [vmem:[%s3544 + $0x10] sm:$0xff]
        %v3548 = vld [vmem:[%s3544 + $0x18] sm:$0x1f]
        %v3550 = vsel %vm1433, %v3545, 0
        %v3553 = vsel %vm1433, %v3546, 0
        %v3556 = vsel %vm1433, %v3547, 0
        %v3559 = vsel %vm1433, %v3548, 0
        %v3562 = vsel %vm1446, %v3542, 0
        %v3565 = vsel %vm1446, %v3543, 0
        %3567 = vmatpush.msra.mxu0 0.0
        %3568 = vmatpush.msra.mxu0 0.0
        %3569 = vmatpush.msra.mxu0 0.0
        %3570 = vmatpush.msra.mxu0 0.0
        %3571 = vmatpush.msra.mxu0 0.0
        %3572 = vmatpush.msra.mxu0 0.0
        %3573 = vmatpush.msra.mxu0 0.0
        %3574 = vmatpush.msra.mxu0 0.0
        %3575 = vmatpush.msra.mxu0 0.0
        %3576 = vmatpush.msra.mxu0 0.0
        %3577 = vmatpush.msra.mxu0 0.0
        %3578 = vmatpush.msra.mxu0 %v3562
        %3579 = vmatpush.msra.mxu0 %v3540
        %3580 = vmatpush.msra.mxu0 %v3538
        %3581 = vmatpush.msra.mxu0 %v3536
        %3582 = vmatpush.msra.mxu0 %v3534
        %3583 = vmatmul.f32.gmra.mxu0 %v3550
        %v3584 = vpop.f32.mrf.mxu0
        %v3585 = vadd.f32 0.0, %v3584
        %3586 = vmatmul.f32.gmra.mxu0 %v3553
        %v3587 = vpop.f32.mrf.mxu0
        %v3588 = vadd.f32 0.0, %v3587
        %3589 = vmatmul.f32.gmra.mxu0 %v3556
        %v3590 = vpop.f32.mrf.mxu0
        %v3591 = vadd.f32 0.0, %v3590
        %3592 = vmatmul.f32.gmra.mxu0 %v3559
        %v3593 = vpop.f32.mrf.mxu0
        %v3594 = vadd.f32 0.0, %v3593
        %3595 = vdwg.mxu0
        %3596 = vmatpush.msra.mxu0 0.0
        %3597 = vmatpush.msra.mxu0 0.0
        %3598 = vmatpush.msra.mxu0 0.0
        %3599 = vmatpush.msra.mxu0 0.0
        %3600 = vmatpush.msra.mxu0 0.0
        %3601 = vmatpush.msra.mxu0 0.0
        %3602 = vmatpush.msra.mxu0 0.0
        %3603 = vmatpush.msra.mxu0 0.0
        %3604 = vmatpush.msra.mxu0 0.0
        %3605 = vmatpush.msra.mxu0 0.0
        %3606 = vmatpush.msra.mxu0 0.0
        %3607 = vmatpush.msra.mxu0 %v3565
        %3608 = vmatpush.msra.mxu0 %v3541
        %3609 = vmatpush.msra.mxu0 %v3539
        %3610 = vmatpush.msra.mxu0 %v3537
        %3611 = vmatpush.msra.mxu0 %v3535
        %3612 = vmatmul.f32.gmra.mxu0 %v3550
        %v3613 = vpop.f32.mrf.mxu0
        %v3614 = vadd.f32 0.0, %v3613
        %3615 = vmatmul.f32.gmra.mxu0 %v3553
        %v3616 = vpop.f32.mrf.mxu0
        %v3617 = vadd.f32 0.0, %v3616
        %3618 = vmatmul.f32.gmra.mxu0 %v3556
        %v3619 = vpop.f32.mrf.mxu0
        %v3620 = vadd.f32 0.0, %v3619
        %3621 = vmatmul.f32.gmra.mxu0 %v3559
        %v3622 = vpop.f32.mrf.mxu0
        %v3623 = vadd.f32 0.0, %v3622
        %3624 = vdwg.mxu0
        %v3625 = vadd.f32 %v3475, %v3585
        %v3626 = vadd.f32 %v3476, %v3614
        %v3627 = vadd.f32 %v3477, %v3588
        %v3628 = vadd.f32 %v3478, %v3617
        %v3629 = vadd.f32 %v3479, %v3591
        %v3630 = vadd.f32 %v3480, %v3620
        %v3631 = vadd.f32 %v3481, %v3594
        %v3632 = vadd.f32 %v3482, %v3623
        %3633 = vrot.lane.b32.xlu0 %v3153, 113
        %v3634 = vpop.permute.xlu0 %3633
        %3635 = vrot.lane.b32.xlu0 %v3154, 113
        %v3636 = vpop.permute.xlu0 %3635
        %3637 = vrot.lane.b32.xlu0 %v3155, 113
        %v3638 = vpop.permute.xlu0 %3637
        %3639 = vrot.lane.b32.xlu0 %v3156, 113
        %v3640 = vpop.permute.xlu0 %3639
        %3641 = vrot.lane.b32.xlu0 %v3157, 113
        %v3642 = vpop.permute.xlu0 %3641
        %3643 = vrot.lane.b32.xlu0 %v3158, 113
        %v3644 = vpop.permute.xlu0 %3643
        %3645 = vrot.lane.b32.xlu0 %v3159, 113
        %v3646 = vpop.permute.xlu0 %3645
        %3647 = vrot.lane.b32.xlu0 %v3160, 113
        %v3648 = vpop.permute.xlu0 %3647
        %3649 = vrot.lane.b32.xlu0 %v3161, 113
        %v3650 = vpop.permute.xlu0 %3649
        %3651 = vrot.lane.b32.xlu0 %v3162, 113
        %v3652 = vpop.permute.xlu0 %3651
        %3653 = vrot.lane.b32.xlu0 %v3163, 113
        %v3654 = vpop.permute.xlu0 %3653
        %3655 = vrot.lane.b32.xlu0 %v3164, 113
        %v3656 = vpop.permute.xlu0 %3655
        %3657 = vrot.lane.b32.xlu0 %v3165, 113
        %v3658 = vpop.permute.xlu0 %3657
        %3659 = vrot.lane.b32.xlu0 %v3166, 113
        %v3660 = vpop.permute.xlu0 %3659
        %3661 = vrot.lane.b32.xlu0 %v3167, 113
        %v3662 = vpop.permute.xlu0 %3661
        %vm3663 = vcmask 924672
        %v3664 = vsel %vm3663, %v3634, %v3636
        %v3665 = vsel %vm3663, %v3636, %v3638
        %v3666 = vsel %vm3663, %v3640, %v3642
        %v3667 = vsel %vm3663, %v3642, %v3644
        %v3668 = vsel %vm3663, %v3646, %v3648
        %v3669 = vsel %vm3663, %v3648, %v3650
        %v3670 = vsel %vm3663, %v3652, %v3654
        %v3671 = vsel %vm3663, %v3654, %v3656
        %v3672 = vsel %vm3663, %v3658, %v3660
        %v3673 = vsel %vm3663, %v3660, %v3662
        %v3684 = vsel %vm1365, %v3664, 0.0
        %v3685 = vsel %vm1366, %v3665, 0.0
        %v3686 = vsel %vm1365, %v3666, 0.0
        %v3687 = vsel %vm1366, %v3667, 0.0
        %v3688 = vsel %vm1365, %v3668, 0.0
        %v3689 = vsel %vm1366, %v3669, 0.0
        %v3690 = vsel %vm1365, %v3670, 0.0
        %v3691 = vsel %vm1366, %v3671, 0.0
        %v3692 = vsel %vm1365, %v3672, 0.0
        %v3693 = vsel %vm1366, %v3673, 0.0
        %s3694 = scalar_lea.vmem [#allocation4], 512
        %v3695 = vld [vmem:[%s3694] sm:$0xff]
        %v3696 = vld [vmem:[%s3694 + $0x8] sm:$0xff]
        %v3697 = vld [vmem:[%s3694 + $0x10] sm:$0xff]
        %v3698 = vld [vmem:[%s3694 + $0x18] sm:$0x1f]
        %v3700 = vsel %vm1433, %v3695, 0
        %v3703 = vsel %vm1433, %v3696, 0
        %v3706 = vsel %vm1433, %v3697, 0
        %v3709 = vsel %vm1433, %v3698, 0
        %v3712 = vsel %vm1446, %v3692, 0
        %v3715 = vsel %vm1446, %v3693, 0
        %3717 = vmatpush.msra.mxu0 0.0
        %3718 = vmatpush.msra.mxu0 0.0
        %3719 = vmatpush.msra.mxu0 0.0
        %3720 = vmatpush.msra.mxu0 0.0
        %3721 = vmatpush.msra.mxu0 0.0
        %3722 = vmatpush.msra.mxu0 0.0
        %3723 = vmatpush.msra.mxu0 0.0
        %3724 = vmatpush.msra.mxu0 0.0
        %3725 = vmatpush.msra.mxu0 0.0
        %3726 = vmatpush.msra.mxu0 0.0
        %3727 = vmatpush.msra.mxu0 0.0
        %3728 = vmatpush.msra.mxu0 %v3712
        %3729 = vmatpush.msra.mxu0 %v3690
        %3730 = vmatpush.msra.mxu0 %v3688
        %3731 = vmatpush.msra.mxu0 %v3686
        %3732 = vmatpush.msra.mxu0 %v3684
        %3733 = vmatmul.f32.gmra.mxu0 %v3700
        %v3734 = vpop.f32.mrf.mxu0
        %v3735 = vadd.f32 0.0, %v3734
        %3736 = vmatmul.f32.gmra.mxu0 %v3703
        %v3737 = vpop.f32.mrf.mxu0
        %v3738 = vadd.f32 0.0, %v3737
        %3739 = vmatmul.f32.gmra.mxu0 %v3706
        %v3740 = vpop.f32.mrf.mxu0
        %v3741 = vadd.f32 0.0, %v3740
        %3742 = vmatmul.f32.gmra.mxu0 %v3709
        %v3743 = vpop.f32.mrf.mxu0
        %v3744 = vadd.f32 0.0, %v3743
        %3745 = vdwg.mxu0
        %3746 = vmatpush.msra.mxu0 0.0
        %3747 = vmatpush.msra.mxu0 0.0
        %3748 = vmatpush.msra.mxu0 0.0
        %3749 = vmatpush.msra.mxu0 0.0
        %3750 = vmatpush.msra.mxu0 0.0
        %3751 = vmatpush.msra.mxu0 0.0
        %3752 = vmatpush.msra.mxu0 0.0
        %3753 = vmatpush.msra.mxu0 0.0
        %3754 = vmatpush.msra.mxu0 0.0
        %3755 = vmatpush.msra.mxu0 0.0
        %3756 = vmatpush.msra.mxu0 0.0
        %3757 = vmatpush.msra.mxu0 %v3715
        %3758 = vmatpush.msra.mxu0 %v3691
        %3759 = vmatpush.msra.mxu0 %v3689
        %3760 = vmatpush.msra.mxu0 %v3687
        %3761 = vmatpush.msra.mxu0 %v3685
        %3762 = vmatmul.f32.gmra.mxu0 %v3700
        %v3763 = vpop.f32.mrf.mxu0
        %v3764 = vadd.f32 0.0, %v3763
        %3765 = vmatmul.f32.gmra.mxu0 %v3703
        %v3766 = vpop.f32.mrf.mxu0
        %v3767 = vadd.f32 0.0, %v3766
        %3768 = vmatmul.f32.gmra.mxu0 %v3706
        %v3769 = vpop.f32.mrf.mxu0
        %v3770 = vadd.f32 0.0, %v3769
        %3771 = vmatmul.f32.gmra.mxu0 %v3709
        %v3772 = vpop.f32.mrf.mxu0
        %v3773 = vadd.f32 0.0, %v3772
        %3774 = vdwg.mxu0
        %v3775 = vadd.f32 %v3625, %v3735
        %v3776 = vadd.f32 %v3626, %v3764
        %v3777 = vadd.f32 %v3627, %v3738
        %v3778 = vadd.f32 %v3628, %v3767
        %v3779 = vadd.f32 %v3629, %v3741
        %v3780 = vadd.f32 %v3630, %v3770
        %v3781 = vadd.f32 %v3631, %v3744
        %v3782 = vadd.f32 %v3632, %v3773
        %s3783 = scalar_lea.vmem [#allocation4], 544
        %v3784 = vld [vmem:[%s3783] sm:$0xff]
        %v3785 = vld [vmem:[%s3783 + $0x8] sm:$0xff]
        %v3786 = vld [vmem:[%s3783 + $0x10] sm:$0xff]
        %v3787 = vld [vmem:[%s3783 + $0x18] sm:$0x1f]
        %3788 = vrot.lane.b32.xlu0 %v3153, 112
        %v3789 = vpop.permute.xlu0 %3788
        %3790 = vrot.lane.b32.xlu0 %v3154, 112
        %v3791 = vpop.permute.xlu0 %3790
        %3792 = vrot.lane.b32.xlu0 %v3155, 112
        %v3793 = vpop.permute.xlu0 %3792
        %3794 = vrot.lane.b32.xlu0 %v3156, 112
        %v3795 = vpop.permute.xlu0 %3794
        %3796 = vrot.lane.b32.xlu0 %v3157, 112
        %v3797 = vpop.permute.xlu0 %3796
        %3798 = vrot.lane.b32.xlu0 %v3158, 112
        %v3799 = vpop.permute.xlu0 %3798
        %3800 = vrot.lane.b32.xlu0 %v3159, 112
        %v3801 = vpop.permute.xlu0 %3800
        %3802 = vrot.lane.b32.xlu0 %v3160, 112
        %v3803 = vpop.permute.xlu0 %3802
        %3804 = vrot.lane.b32.xlu0 %v3161, 112
        %v3805 = vpop.permute.xlu0 %3804
        %3806 = vrot.lane.b32.xlu0 %v3162, 112
        %v3807 = vpop.permute.xlu0 %3806
        %3808 = vrot.lane.b32.xlu0 %v3163, 112
        %v3809 = vpop.permute.xlu0 %3808
        %3810 = vrot.lane.b32.xlu0 %v3164, 112
        %v3811 = vpop.permute.xlu0 %3810
        %3812 = vrot.lane.b32.xlu0 %v3165, 112
        %v3813 = vpop.permute.xlu0 %3812
        %3814 = vrot.lane.b32.xlu0 %v3166, 112
        %v3815 = vpop.permute.xlu0 %3814
        %3816 = vrot.lane.b32.xlu0 %v3167, 112
        %v3817 = vpop.permute.xlu0 %3816
        %vm3818 = vcmask 916480
        %v3819 = vsel %vm3818, %v3789, %v3791
        %v3820 = vsel %vm3818, %v3791, %v3793
        %v3821 = vsel %vm3818, %v3795, %v3797
        %v3822 = vsel %vm3818, %v3797, %v3799
        %v3823 = vsel %vm3818, %v3801, %v3803
        %v3824 = vsel %vm3818, %v3803, %v3805
        %v3825 = vsel %vm3818, %v3807, %v3809
        %v3826 = vsel %vm3818, %v3809, %v3811
        %v3827 = vsel %vm3818, %v3813, %v3815
        %v3828 = vsel %vm3818, %v3815, %v3817
        %v3838 = vsel %vm1433, %v3784, 0
        %v3841 = vsel %vm1433, %v3785, 0
        %v3844 = vsel %vm1433, %v3786, 0
        %v3847 = vsel %vm1433, %v3787, 0
        %v3849 = vsel %vm1446, %v3827, 0
        %v3851 = vsel %vm1446, %v3828, 0
        %3853 = vmatpush.msra.mxu0 0.0
        %3854 = vmatpush.msra.mxu0 0.0
        %3855 = vmatpush.msra.mxu0 0.0
        %3856 = vmatpush.msra.mxu0 0.0
        %3857 = vmatpush.msra.mxu0 0.0
        %3858 = vmatpush.msra.mxu0 0.0
        %3859 = vmatpush.msra.mxu0 0.0
        %3860 = vmatpush.msra.mxu0 0.0
        %3861 = vmatpush.msra.mxu0 0.0
        %3862 = vmatpush.msra.mxu0 0.0
        %3863 = vmatpush.msra.mxu0 0.0
        %3864 = vmatpush.msra.mxu0 %v3849
        %3865 = vmatpush.msra.mxu0 %v3825
        %3866 = vmatpush.msra.mxu0 %v3823
        %3867 = vmatpush.msra.mxu0 %v3821
        %3868 = vmatpush.msra.mxu0 %v3819
        %3869 = vmatmul.f32.gmra.mxu0 %v3838
        %v3870 = vpop.f32.mrf.mxu0
        %v3871 = vadd.f32 0.0, %v3870
        %3872 = vmatmul.f32.gmra.mxu0 %v3841
        %v3873 = vpop.f32.mrf.mxu0
        %v3874 = vadd.f32 0.0, %v3873
        %3875 = vmatmul.f32.gmra.mxu0 %v3844
        %v3876 = vpop.f32.mrf.mxu0
        %v3877 = vadd.f32 0.0, %v3876
        %3878 = vmatmul.f32.gmra.mxu0 %v3847
        %v3879 = vpop.f32.mrf.mxu0
        %v3880 = vadd.f32 0.0, %v3879
        %3881 = vdwg.mxu0
        %3882 = vmatpush.msra.mxu0 0.0
        %3883 = vmatpush.msra.mxu0 0.0
        %3884 = vmatpush.msra.mxu0 0.0
        %3885 = vmatpush.msra.mxu0 0.0
        %3886 = vmatpush.msra.mxu0 0.0
        %3887 = vmatpush.msra.mxu0 0.0
        %3888 = vmatpush.msra.mxu0 0.0
        %3889 = vmatpush.msra.mxu0 0.0
        %3890 = vmatpush.msra.mxu0 0.0
        %3891 = vmatpush.msra.mxu0 0.0
        %3892 = vmatpush.msra.mxu0 0.0
        %3893 = vmatpush.msra.mxu0 %v3851
        %3894 = vmatpush.msra.mxu0 %v3826
        %3895 = vmatpush.msra.mxu0 %v3824
        %3896 = vmatpush.msra.mxu0 %v3822
        %3897 = vmatpush.msra.mxu0 %v3820
        %3898 = vmatmul.f32.gmra.mxu0 %v3838
        %v3899 = vpop.f32.mrf.mxu0
        %v3900 = vadd.f32 0.0, %v3899
        %3901 = vmatmul.f32.gmra.mxu0 %v3841
        %v3902 = vpop.f32.mrf.mxu0
        %v3903 = vadd.f32 0.0, %v3902
        %3904 = vmatmul.f32.gmra.mxu0 %v3844
        %v3905 = vpop.f32.mrf.mxu0
        %v3906 = vadd.f32 0.0, %v3905
        %3907 = vmatmul.f32.gmra.mxu0 %v3847
        %v3908 = vpop.f32.mrf.mxu0
        %v3909 = vadd.f32 0.0, %v3908
        %3910 = vdwg.mxu0
        %v3911 = vadd.f32 %v3775, %v3871
        %v3912 = vadd.f32 %v3776, %v3900
        %v3913 = vadd.f32 %v3777, %v3874
        %v3914 = vadd.f32 %v3778, %v3903
        %v3915 = vadd.f32 %v3779, %v3877
        %v3916 = vadd.f32 %v3780, %v3906
        %v3917 = vadd.f32 %v3781, %v3880
        %v3918 = vadd.f32 %v3782, %v3909
        %3919 = vrot.lane.b32.xlu0 %v3153, 111
        %v3920 = vpop.permute.xlu0 %3919
        %3921 = vrot.lane.b32.xlu0 %v3154, 111
        %v3922 = vpop.permute.xlu0 %3921
        %3923 = vrot.lane.b32.xlu0 %v3155, 111
        %v3924 = vpop.permute.xlu0 %3923
        %3925 = vrot.lane.b32.xlu0 %v3156, 111
        %v3926 = vpop.permute.xlu0 %3925
        %3927 = vrot.lane.b32.xlu0 %v3157, 111
        %v3928 = vpop.permute.xlu0 %3927
        %3929 = vrot.lane.b32.xlu0 %v3158, 111
        %v3930 = vpop.permute.xlu0 %3929
        %3931 = vrot.lane.b32.xlu0 %v3159, 111
        %v3932 = vpop.permute.xlu0 %3931
        %3933 = vrot.lane.b32.xlu0 %v3160, 111
        %v3934 = vpop.permute.xlu0 %3933
        %3935 = vrot.lane.b32.xlu0 %v3161, 111
        %v3936 = vpop.permute.xlu0 %3935
        %3937 = vrot.lane.b32.xlu0 %v3162, 111
        %v3938 = vpop.permute.xlu0 %3937
        %3939 = vrot.lane.b32.xlu0 %v3163, 111
        %v3940 = vpop.permute.xlu0 %3939
        %3941 = vrot.lane.b32.xlu0 %v3164, 111
        %v3942 = vpop.permute.xlu0 %3941
        %3943 = vrot.lane.b32.xlu0 %v3165, 111
        %v3944 = vpop.permute.xlu0 %3943
        %3945 = vrot.lane.b32.xlu0 %v3166, 111
        %v3946 = vpop.permute.xlu0 %3945
        %3947 = vrot.lane.b32.xlu0 %v3167, 111
        %v3948 = vpop.permute.xlu0 %3947
        %vm3949 = vcmask 908288
        %v3950 = vsel %vm3949, %v3920, %v3922
        %v3951 = vsel %vm3949, %v3922, %v3924
        %v3952 = vsel %vm3949, %v3926, %v3928
        %v3953 = vsel %vm3949, %v3928, %v3930
        %v3954 = vsel %vm3949, %v3932, %v3934
        %v3955 = vsel %vm3949, %v3934, %v3936
        %v3956 = vsel %vm3949, %v3938, %v3940
        %v3957 = vsel %vm3949, %v3940, %v3942
        %v3958 = vsel %vm3949, %v3944, %v3946
        %v3959 = vsel %vm3949, %v3946, %v3948
        %v3970 = vsel %vm1725, %v3950, 0.0
        %v3971 = vsel %vm1726, %v3951, 0.0
        %v3972 = vsel %vm1725, %v3952, 0.0
        %v3973 = vsel %vm1726, %v3953, 0.0
        %v3974 = vsel %vm1725, %v3954, 0.0
        %v3975 = vsel %vm1726, %v3955, 0.0
        %v3976 = vsel %vm1725, %v3956, 0.0
        %v3977 = vsel %vm1726, %v3957, 0.0
        %v3978 = vsel %vm1725, %v3958, 0.0
        %v3979 = vsel %vm1726, %v3959, 0.0
        %s3980 = scalar_lea.vmem [#allocation4], 576
        %v3981 = vld [vmem:[%s3980] sm:$0xff]
        %v3982 = vld [vmem:[%s3980 + $0x8] sm:$0xff]
        %v3983 = vld [vmem:[%s3980 + $0x10] sm:$0xff]
        %v3984 = vld [vmem:[%s3980 + $0x18] sm:$0x1f]
        %v3986 = vsel %vm1433, %v3981, 0
        %v3989 = vsel %vm1433, %v3982, 0
        %v3992 = vsel %vm1433, %v3983, 0
        %v3995 = vsel %vm1433, %v3984, 0
        %v3998 = vsel %vm1446, %v3978, 0
        %v4001 = vsel %vm1446, %v3979, 0
        %4003 = vmatpush.msra.mxu0 0.0
        %4004 = vmatpush.msra.mxu0 0.0
        %4005 = vmatpush.msra.mxu0 0.0
        %4006 = vmatpush.msra.mxu0 0.0
        %4007 = vmatpush.msra.mxu0 0.0
        %4008 = vmatpush.msra.mxu0 0.0
        %4009 = vmatpush.msra.mxu0 0.0
        %4010 = vmatpush.msra.mxu0 0.0
        %4011 = vmatpush.msra.mxu0 0.0
        %4012 = vmatpush.msra.mxu0 0.0
        %4013 = vmatpush.msra.mxu0 0.0
        %4014 = vmatpush.msra.mxu0 %v3998
        %4015 = vmatpush.msra.mxu0 %v3976
        %4016 = vmatpush.msra.mxu0 %v3974
        %4017 = vmatpush.msra.mxu0 %v3972
        %4018 = vmatpush.msra.mxu0 %v3970
        %4019 = vmatmul.f32.gmra.mxu0 %v3986
        %v4020 = vpop.f32.mrf.mxu0
        %v4021 = vadd.f32 0.0, %v4020
        %4022 = vmatmul.f32.gmra.mxu0 %v3989
        %v4023 = vpop.f32.mrf.mxu0
        %v4024 = vadd.f32 0.0, %v4023
        %4025 = vmatmul.f32.gmra.mxu0 %v3992
        %v4026 = vpop.f32.mrf.mxu0
        %v4027 = vadd.f32 0.0, %v4026
        %4028 = vmatmul.f32.gmra.mxu0 %v3995
        %v4029 = vpop.f32.mrf.mxu0
        %v4030 = vadd.f32 0.0, %v4029
        %4031 = vdwg.mxu0
        %4032 = vmatpush.msra.mxu0 0.0
        %4033 = vmatpush.msra.mxu0 0.0
        %4034 = vmatpush.msra.mxu0 0.0
        %4035 = vmatpush.msra.mxu0 0.0
        %4036 = vmatpush.msra.mxu0 0.0
        %4037 = vmatpush.msra.mxu0 0.0
        %4038 = vmatpush.msra.mxu0 0.0
        %4039 = vmatpush.msra.mxu0 0.0
        %4040 = vmatpush.msra.mxu0 0.0
        %4041 = vmatpush.msra.mxu0 0.0
        %4042 = vmatpush.msra.mxu0 0.0
        %4043 = vmatpush.msra.mxu0 %v4001
        %4044 = vmatpush.msra.mxu0 %v3977
        %4045 = vmatpush.msra.mxu0 %v3975
        %4046 = vmatpush.msra.mxu0 %v3973
        %4047 = vmatpush.msra.mxu0 %v3971
        %4048 = vmatmul.f32.gmra.mxu0 %v3986
        %v4049 = vpop.f32.mrf.mxu0
        %v4050 = vadd.f32 0.0, %v4049
        %4051 = vmatmul.f32.gmra.mxu0 %v3989
        %v4052 = vpop.f32.mrf.mxu0
        %v4053 = vadd.f32 0.0, %v4052
        %4054 = vmatmul.f32.gmra.mxu0 %v3992
        %v4055 = vpop.f32.mrf.mxu0
        %v4056 = vadd.f32 0.0, %v4055
        %4057 = vmatmul.f32.gmra.mxu0 %v3995
        %v4058 = vpop.f32.mrf.mxu0
        %v4059 = vadd.f32 0.0, %v4058
        %4060 = vdwg.mxu0
        %v4061 = vadd.f32 %v3911, %v4021
        %v4062 = vadd.f32 %v3912, %v4050
        %v4063 = vadd.f32 %v3913, %v4024
        %v4064 = vadd.f32 %v3914, %v4053
        %v4065 = vadd.f32 %v3915, %v4027
        %v4066 = vadd.f32 %v3916, %v4056
        %v4067 = vadd.f32 %v3917, %v4030
        %v4068 = vadd.f32 %v3918, %v4059
        %4069 = vrot.lane.b32.xlu0 %v3153, 110
        %v4070 = vpop.permute.xlu0 %4069
        %4071 = vrot.lane.b32.xlu0 %v3154, 110
        %v4072 = vpop.permute.xlu0 %4071
        %4073 = vrot.lane.b32.xlu0 %v3155, 110
        %v4074 = vpop.permute.xlu0 %4073
        %4075 = vrot.lane.b32.xlu0 %v3156, 110
        %v4076 = vpop.permute.xlu0 %4075
        %4077 = vrot.lane.b32.xlu0 %v3157, 110
        %v4078 = vpop.permute.xlu0 %4077
        %4079 = vrot.lane.b32.xlu0 %v3158, 110
        %v4080 = vpop.permute.xlu0 %4079
        %4081 = vrot.lane.b32.xlu0 %v3159, 110
        %v4082 = vpop.permute.xlu0 %4081
        %4083 = vrot.lane.b32.xlu0 %v3160, 110
        %v4084 = vpop.permute.xlu0 %4083
        %4085 = vrot.lane.b32.xlu0 %v3161, 110
        %v4086 = vpop.permute.xlu0 %4085
        %4087 = vrot.lane.b32.xlu0 %v3162, 110
        %v4088 = vpop.permute.xlu0 %4087
        %4089 = vrot.lane.b32.xlu0 %v3163, 110
        %v4090 = vpop.permute.xlu0 %4089
        %4091 = vrot.lane.b32.xlu0 %v3164, 110
        %v4092 = vpop.permute.xlu0 %4091
        %4093 = vrot.lane.b32.xlu0 %v3165, 110
        %v4094 = vpop.permute.xlu0 %4093
        %4095 = vrot.lane.b32.xlu0 %v3166, 110
        %v4096 = vpop.permute.xlu0 %4095
        %4097 = vrot.lane.b32.xlu0 %v3167, 110
        %v4098 = vpop.permute.xlu0 %4097
        %vm4099 = vcmask 900096
        %v4100 = vsel %vm4099, %v4070, %v4072
        %v4101 = vsel %vm4099, %v4072, %v4074
        %v4102 = vsel %vm4099, %v4076, %v4078
        %v4103 = vsel %vm4099, %v4078, %v4080
        %v4104 = vsel %vm4099, %v4082, %v4084
        %v4105 = vsel %vm4099, %v4084, %v4086
        %v4106 = vsel %vm4099, %v4088, %v4090
        %v4107 = vsel %vm4099, %v4090, %v4092
        %v4108 = vsel %vm4099, %v4094, %v4096
        %v4109 = vsel %vm4099, %v4096, %v4098
        %v4120 = vsel %vm1879, %v4100, 0.0
        %v4121 = vsel %vm1880, %v4101, 0.0
        %v4122 = vsel %vm1879, %v4102, 0.0
        %v4123 = vsel %vm1880, %v4103, 0.0
        %v4124 = vsel %vm1879, %v4104, 0.0
        %v4125 = vsel %vm1880, %v4105, 0.0
        %v4126 = vsel %vm1879, %v4106, 0.0
        %v4127 = vsel %vm1880, %v4107, 0.0
        %v4128 = vsel %vm1879, %v4108, 0.0
        %v4129 = vsel %vm1880, %v4109, 0.0
        %s4130 = scalar_lea.vmem [#allocation4], 608
        %v4131 = vld [vmem:[%s4130] sm:$0xff]
        %v4132 = vld [vmem:[%s4130 + $0x8] sm:$0xff]
        %v4133 = vld [vmem:[%s4130 + $0x10] sm:$0xff]
        %v4134 = vld [vmem:[%s4130 + $0x18] sm:$0x1f]
        %v4136 = vsel %vm1433, %v4131, 0
        %v4139 = vsel %vm1433, %v4132, 0
        %v4142 = vsel %vm1433, %v4133, 0
        %v4145 = vsel %vm1433, %v4134, 0
        %v4148 = vsel %vm1446, %v4128, 0
        %v4151 = vsel %vm1446, %v4129, 0
        %4153 = vmatpush.msra.mxu0 0.0
        %4154 = vmatpush.msra.mxu0 0.0
        %4155 = vmatpush.msra.mxu0 0.0
        %4156 = vmatpush.msra.mxu0 0.0
        %4157 = vmatpush.msra.mxu0 0.0
        %4158 = vmatpush.msra.mxu0 0.0
        %4159 = vmatpush.msra.mxu0 0.0
        %4160 = vmatpush.msra.mxu0 0.0
        %4161 = vmatpush.msra.mxu0 0.0
        %4162 = vmatpush.msra.mxu0 0.0
        %4163 = vmatpush.msra.mxu0 0.0
        %4164 = vmatpush.msra.mxu0 %v4148
        %4165 = vmatpush.msra.mxu0 %v4126
        %4166 = vmatpush.msra.mxu0 %v4124
        %4167 = vmatpush.msra.mxu0 %v4122
        %4168 = vmatpush.msra.mxu0 %v4120
        %4169 = vmatmul.f32.gmra.mxu0 %v4136
        %v4170 = vpop.f32.mrf.mxu0
        %v4171 = vadd.f32 0.0, %v4170
        %4172 = vmatmul.f32.gmra.mxu0 %v4139
        %v4173 = vpop.f32.mrf.mxu0
        %v4174 = vadd.f32 0.0, %v4173
        %4175 = vmatmul.f32.gmra.mxu0 %v4142
        %v4176 = vpop.f32.mrf.mxu0
        %v4177 = vadd.f32 0.0, %v4176
        %4178 = vmatmul.f32.gmra.mxu0 %v4145
        %v4179 = vpop.f32.mrf.mxu0
        %v4180 = vadd.f32 0.0, %v4179
        %4181 = vdwg.mxu0
        %4182 = vmatpush.msra.mxu0 0.0
        %4183 = vmatpush.msra.mxu0 0.0
        %4184 = vmatpush.msra.mxu0 0.0
        %4185 = vmatpush.msra.mxu0 0.0
        %4186 = vmatpush.msra.mxu0 0.0
        %4187 = vmatpush.msra.mxu0 0.0
        %4188 = vmatpush.msra.mxu0 0.0
        %4189 = vmatpush.msra.mxu0 0.0
        %4190 = vmatpush.msra.mxu0 0.0
        %4191 = vmatpush.msra.mxu0 0.0
        %4192 = vmatpush.msra.mxu0 0.0
        %4193 = vmatpush.msra.mxu0 %v4151
        %4194 = vmatpush.msra.mxu0 %v4127
        %4195 = vmatpush.msra.mxu0 %v4125
        %4196 = vmatpush.msra.mxu0 %v4123
        %4197 = vmatpush.msra.mxu0 %v4121
        %4198 = vmatmul.f32.gmra.mxu0 %v4136
        %v4199 = vpop.f32.mrf.mxu0
        %v4200 = vadd.f32 0.0, %v4199
        %4201 = vmatmul.f32.gmra.mxu0 %v4139
        %v4202 = vpop.f32.mrf.mxu0
        %v4203 = vadd.f32 0.0, %v4202
        %4204 = vmatmul.f32.gmra.mxu0 %v4142
        %v4205 = vpop.f32.mrf.mxu0
        %v4206 = vadd.f32 0.0, %v4205
        %4207 = vmatmul.f32.gmra.mxu0 %v4145
        %v4208 = vpop.f32.mrf.mxu0
        %v4209 = vadd.f32 0.0, %v4208
        %4210 = vdwg.mxu0
        %v4211 = vadd.f32 %v4061, %v4171
        %v4212 = vadd.f32 %v4062, %v4200
        %v4213 = vadd.f32 %v4063, %v4174
        %v4214 = vadd.f32 %v4064, %v4203
        %v4215 = vadd.f32 %v4065, %v4177
        %v4216 = vadd.f32 %v4066, %v4206
        %v4217 = vadd.f32 %v4067, %v4180
        %v4218 = vadd.f32 %v4068, %v4209
        %4219 = vrot.lane.b32.xlu0 %v3153, 98
        %v4220 = vpop.permute.xlu0 %4219
        %4221 = vrot.lane.b32.xlu0 %v3154, 98
        %v4222 = vpop.permute.xlu0 %4221
        %4223 = vrot.lane.b32.xlu0 %v3155, 98
        %v4224 = vpop.permute.xlu0 %4223
        %4225 = vrot.lane.b32.xlu0 %v3156, 98
        %v4226 = vpop.permute.xlu0 %4225
        %4227 = vrot.lane.b32.xlu0 %v3157, 98
        %v4228 = vpop.permute.xlu0 %4227
        %4229 = vrot.lane.b32.xlu0 %v3158, 98
        %v4230 = vpop.permute.xlu0 %4229
        %4231 = vrot.lane.b32.xlu0 %v3159, 98
        %v4232 = vpop.permute.xlu0 %4231
        %4233 = vrot.lane.b32.xlu0 %v3160, 98
        %v4234 = vpop.permute.xlu0 %4233
        %4235 = vrot.lane.b32.xlu0 %v3161, 98
        %v4236 = vpop.permute.xlu0 %4235
        %4237 = vrot.lane.b32.xlu0 %v3162, 98
        %v4238 = vpop.permute.xlu0 %4237
        %4239 = vrot.lane.b32.xlu0 %v3163, 98
        %v4240 = vpop.permute.xlu0 %4239
        %4241 = vrot.lane.b32.xlu0 %v3164, 98
        %v4242 = vpop.permute.xlu0 %4241
        %4243 = vrot.lane.b32.xlu0 %v3165, 98
        %v4244 = vpop.permute.xlu0 %4243
        %4245 = vrot.lane.b32.xlu0 %v3166, 98
        %v4246 = vpop.permute.xlu0 %4245
        %4247 = vrot.lane.b32.xlu0 %v3167, 98
        %v4248 = vpop.permute.xlu0 %4247
        %vm4249 = vcmask 801792
        %v4250 = vsel %vm4249, %v4220, %v4222
        %v4251 = vsel %vm4249, %v4222, %v4224
        %v4252 = vsel %vm4249, %v4226, %v4228
        %v4253 = vsel %vm4249, %v4228, %v4230
        %v4254 = vsel %vm4249, %v4232, %v4234
        %v4255 = vsel %vm4249, %v4234, %v4236
        %v4256 = vsel %vm4249, %v4238, %v4240
        %v4257 = vsel %vm4249, %v4240, %v4242
        %v4258 = vsel %vm4249, %v4244, %v4246
        %v4259 = vsel %vm4249, %v4246, %v4248
        %v4270 = vsel %vm1281, %v4250, 0.0
        %v4271 = vsel %vm1282, %v4251, 0.0
        %v4272 = vsel %vm1281, %v4252, 0.0
        %v4273 = vsel %vm1282, %v4253, 0.0
        %v4274 = vsel %vm1281, %v4254, 0.0
        %v4275 = vsel %vm1282, %v4255, 0.0
        %v4276 = vsel %vm1281, %v4256, 0.0
        %v4277 = vsel %vm1282, %v4257, 0.0
        %v4278 = vsel %vm1281, %v4258, 0.0
        %v4279 = vsel %vm1282, %v4259, 0.0
        %s4280 = scalar_lea.vmem [#allocation4], 640
        %v4281 = vld [vmem:[%s4280] sm:$0xff]
        %v4282 = vld [vmem:[%s4280 + $0x8] sm:$0xff]
        %v4283 = vld [vmem:[%s4280 + $0x10] sm:$0xff]
        %v4284 = vld [vmem:[%s4280 + $0x18] sm:$0x1f]
        %v4286 = vsel %vm1433, %v4281, 0
        %v4289 = vsel %vm1433, %v4282, 0
        %v4292 = vsel %vm1433, %v4283, 0
        %v4295 = vsel %vm1433, %v4284, 0
        %v4298 = vsel %vm1446, %v4278, 0
        %v4301 = vsel %vm1446, %v4279, 0
        %4303 = vmatpush.msra.mxu0 0.0
        %4304 = vmatpush.msra.mxu0 0.0
        %4305 = vmatpush.msra.mxu0 0.0
        %4306 = vmatpush.msra.mxu0 0.0
        %4307 = vmatpush.msra.mxu0 0.0
        %4308 = vmatpush.msra.mxu0 0.0
        %4309 = vmatpush.msra.mxu0 0.0
        %4310 = vmatpush.msra.mxu0 0.0
        %4311 = vmatpush.msra.mxu0 0.0
        %4312 = vmatpush.msra.mxu0 0.0
        %4313 = vmatpush.msra.mxu0 0.0
        %4314 = vmatpush.msra.mxu0 %v4298
        %4315 = vmatpush.msra.mxu0 %v4276
        %4316 = vmatpush.msra.mxu0 %v4274
        %4317 = vmatpush.msra.mxu0 %v4272
        %4318 = vmatpush.msra.mxu0 %v4270
        %4319 = vmatmul.f32.gmra.mxu0 %v4286
        %v4320 = vpop.f32.mrf.mxu0
        %v4321 = vadd.f32 0.0, %v4320
        %4322 = vmatmul.f32.gmra.mxu0 %v4289
        %v4323 = vpop.f32.mrf.mxu0
        %v4324 = vadd.f32 0.0, %v4323
        %4325 = vmatmul.f32.gmra.mxu0 %v4292
        %v4326 = vpop.f32.mrf.mxu0
        %v4327 = vadd.f32 0.0, %v4326
        %4328 = vmatmul.f32.gmra.mxu0 %v4295
        %v4329 = vpop.f32.mrf.mxu0
        %v4330 = vadd.f32 0.0, %v4329
        %4331 = vdwg.mxu0
        %4332 = vmatpush.msra.mxu0 0.0
        %4333 = vmatpush.msra.mxu0 0.0
        %4334 = vmatpush.msra.mxu0 0.0
        %4335 = vmatpush.msra.mxu0 0.0
        %4336 = vmatpush.msra.mxu0 0.0
        %4337 = vmatpush.msra.mxu0 0.0
        %4338 = vmatpush.msra.mxu0 0.0
        %4339 = vmatpush.msra.mxu0 0.0
        %4340 = vmatpush.msra.mxu0 0.0
        %4341 = vmatpush.msra.mxu0 0.0
        %4342 = vmatpush.msra.mxu0 0.0
        %4343 = vmatpush.msra.mxu0 %v4301
        %4344 = vmatpush.msra.mxu0 %v4277
        %4345 = vmatpush.msra.mxu0 %v4275
        %4346 = vmatpush.msra.mxu0 %v4273
        %4347 = vmatpush.msra.mxu0 %v4271
        %4348 = vmatmul.f32.gmra.mxu0 %v4286
        %v4349 = vpop.f32.mrf.mxu0
        %v4350 = vadd.f32 0.0, %v4349
        %4351 = vmatmul.f32.gmra.mxu0 %v4289
        %v4352 = vpop.f32.mrf.mxu0
        %v4353 = vadd.f32 0.0, %v4352
        %4354 = vmatmul.f32.gmra.mxu0 %v4292
        %v4355 = vpop.f32.mrf.mxu0
        %v4356 = vadd.f32 0.0, %v4355
        %4357 = vmatmul.f32.gmra.mxu0 %v4295
        %v4358 = vpop.f32.mrf.mxu0
        %v4359 = vadd.f32 0.0, %v4358
        %4360 = vdwg.mxu0
        %v4361 = vadd.f32 %v4211, %v4321
        %v4362 = vadd.f32 %v4212, %v4350
        %v4363 = vadd.f32 %v4213, %v4324
        %v4364 = vadd.f32 %v4214, %v4353
        %v4365 = vadd.f32 %v4215, %v4327
        %v4366 = vadd.f32 %v4216, %v4356
        %v4367 = vadd.f32 %v4217, %v4330
        %v4368 = vadd.f32 %v4218, %v4359
        %4369 = vrot.lane.b32.xlu0 %v3153, 97
        %v4370 = vpop.permute.xlu0 %4369
        %4371 = vrot.lane.b32.xlu0 %v3154, 97
        %v4372 = vpop.permute.xlu0 %4371
        %4373 = vrot.lane.b32.xlu0 %v3155, 97
        %v4374 = vpop.permute.xlu0 %4373
        %4375 = vrot.lane.b32.xlu0 %v3156, 97
        %v4376 = vpop.permute.xlu0 %4375
        %4377 = vrot.lane.b32.xlu0 %v3157, 97
        %v4378 = vpop.permute.xlu0 %4377
        %4379 = vrot.lane.b32.xlu0 %v3158, 97
        %v4380 = vpop.permute.xlu0 %4379
        %4381 = vrot.lane.b32.xlu0 %v3159, 97
        %v4382 = vpop.permute.xlu0 %4381
        %4383 = vrot.lane.b32.xlu0 %v3160, 97
        %v4384 = vpop.permute.xlu0 %4383
        %4385 = vrot.lane.b32.xlu0 %v3161, 97
        %v4386 = vpop.permute.xlu0 %4385
        %4387 = vrot.lane.b32.xlu0 %v3162, 97
        %v4388 = vpop.permute.xlu0 %4387
        %4389 = vrot.lane.b32.xlu0 %v3163, 97
        %v4390 = vpop.permute.xlu0 %4389
        %4391 = vrot.lane.b32.xlu0 %v3164, 97
        %v4392 = vpop.permute.xlu0 %4391
        %4393 = vrot.lane.b32.xlu0 %v3165, 97
        %v4394 = vpop.permute.xlu0 %4393
        %4395 = vrot.lane.b32.xlu0 %v3166, 97
        %v4396 = vpop.permute.xlu0 %4395
        %4397 = vrot.lane.b32.xlu0 %v3167, 97
        %v4398 = vpop.permute.xlu0 %4397
        %vm4399 = vcmask 793600
        %v4400 = vsel %vm4399, %v4370, %v4372
        %v4401 = vsel %vm4399, %v4372, %v4374
        %v4402 = vsel %vm4399, %v4376, %v4378
        %v4403 = vsel %vm4399, %v4378, %v4380
        %v4404 = vsel %vm4399, %v4382, %v4384
        %v4405 = vsel %vm4399, %v4384, %v4386
        %v4406 = vsel %vm4399, %v4388, %v4390
        %v4407 = vsel %vm4399, %v4390, %v4392
        %v4408 = vsel %vm4399, %v4394, %v4396
        %v4409 = vsel %vm4399, %v4396, %v4398
        %v4420 = vsel %vm1365, %v4400, 0.0
        %v4421 = vsel %vm1366, %v4401, 0.0
        %v4422 = vsel %vm1365, %v4402, 0.0
        %v4423 = vsel %vm1366, %v4403, 0.0
        %v4424 = vsel %vm1365, %v4404, 0.0
        %v4425 = vsel %vm1366, %v4405, 0.0
        %v4426 = vsel %vm1365, %v4406, 0.0
        %v4427 = vsel %vm1366, %v4407, 0.0
        %v4428 = vsel %vm1365, %v4408, 0.0
        %v4429 = vsel %vm1366, %v4409, 0.0
        %s4430 = scalar_lea.vmem [#allocation4], 672
        %v4431 = vld [vmem:[%s4430] sm:$0xff]
        %v4432 = vld [vmem:[%s4430 + $0x8] sm:$0xff]
        %v4433 = vld [vmem:[%s4430 + $0x10] sm:$0xff]
        %v4434 = vld [vmem:[%s4430 + $0x18] sm:$0x1f]
        %v4436 = vsel %vm1433, %v4431, 0
        %v4439 = vsel %vm1433, %v4432, 0
        %v4442 = vsel %vm1433, %v4433, 0
        %v4445 = vsel %vm1433, %v4434, 0
        %v4448 = vsel %vm1446, %v4428, 0
        %v4451 = vsel %vm1446, %v4429, 0
        %4453 = vmatpush.msra.mxu0 0.0
        %4454 = vmatpush.msra.mxu0 0.0
        %4455 = vmatpush.msra.mxu0 0.0
        %4456 = vmatpush.msra.mxu0 0.0
        %4457 = vmatpush.msra.mxu0 0.0
        %4458 = vmatpush.msra.mxu0 0.0
        %4459 = vmatpush.msra.mxu0 0.0
        %4460 = vmatpush.msra.mxu0 0.0
        %4461 = vmatpush.msra.mxu0 0.0
        %4462 = vmatpush.msra.mxu0 0.0
        %4463 = vmatpush.msra.mxu0 0.0
        %4464 = vmatpush.msra.mxu0 %v4448
        %4465 = vmatpush.msra.mxu0 %v4426
        %4466 = vmatpush.msra.mxu0 %v4424
        %4467 = vmatpush.msra.mxu0 %v4422
        %4468 = vmatpush.msra.mxu0 %v4420
        %4469 = vmatmul.f32.gmra.mxu0 %v4436
        %v4470 = vpop.f32.mrf.mxu0
        %v4471 = vadd.f32 0.0, %v4470
        %4472 = vmatmul.f32.gmra.mxu0 %v4439
        %v4473 = vpop.f32.mrf.mxu0
        %v4474 = vadd.f32 0.0, %v4473
        %4475 = vmatmul.f32.gmra.mxu0 %v4442
        %v4476 = vpop.f32.mrf.mxu0
        %v4477 = vadd.f32 0.0, %v4476
        %4478 = vmatmul.f32.gmra.mxu0 %v4445
        %v4479 = vpop.f32.mrf.mxu0
        %v4480 = vadd.f32 0.0, %v4479
        %4481 = vdwg.mxu0
        %4482 = vmatpush.msra.mxu0 0.0
        %4483 = vmatpush.msra.mxu0 0.0
        %4484 = vmatpush.msra.mxu0 0.0
        %4485 = vmatpush.msra.mxu0 0.0
        %4486 = vmatpush.msra.mxu0 0.0
        %4487 = vmatpush.msra.mxu0 0.0
        %4488 = vmatpush.msra.mxu0 0.0
        %4489 = vmatpush.msra.mxu0 0.0
        %4490 = vmatpush.msra.mxu0 0.0
        %4491 = vmatpush.msra.mxu0 0.0
        %4492 = vmatpush.msra.mxu0 0.0
        %4493 = vmatpush.msra.mxu0 %v4451
        %4494 = vmatpush.msra.mxu0 %v4427
        %4495 = vmatpush.msra.mxu0 %v4425
        %4496 = vmatpush.msra.mxu0 %v4423
        %4497 = vmatpush.msra.mxu0 %v4421
        %4498 = vmatmul.f32.gmra.mxu0 %v4436
        %v4499 = vpop.f32.mrf.mxu0
        %v4500 = vadd.f32 0.0, %v4499
        %4501 = vmatmul.f32.gmra.mxu0 %v4439
        %v4502 = vpop.f32.mrf.mxu0
        %v4503 = vadd.f32 0.0, %v4502
        %4504 = vmatmul.f32.gmra.mxu0 %v4442
        %v4505 = vpop.f32.mrf.mxu0
        %v4506 = vadd.f32 0.0, %v4505
        %4507 = vmatmul.f32.gmra.mxu0 %v4445
        %v4508 = vpop.f32.mrf.mxu0
        %v4509 = vadd.f32 0.0, %v4508
        %4510 = vdwg.mxu0
        %v4511 = vadd.f32 %v4361, %v4471
        %v4512 = vadd.f32 %v4362, %v4500
        %v4513 = vadd.f32 %v4363, %v4474
        %v4514 = vadd.f32 %v4364, %v4503
        %v4515 = vadd.f32 %v4365, %v4477
        %v4516 = vadd.f32 %v4366, %v4506
        %v4517 = vadd.f32 %v4367, %v4480
        %v4518 = vadd.f32 %v4368, %v4509
        %s4519 = scalar_lea.vmem [#allocation4], 704
        %v4520 = vld [vmem:[%s4519] sm:$0xff]
        %v4521 = vld [vmem:[%s4519 + $0x8] sm:$0xff]
        %v4522 = vld [vmem:[%s4519 + $0x10] sm:$0xff]
        %v4523 = vld [vmem:[%s4519 + $0x18] sm:$0x1f]
        %4524 = vrot.lane.b32.xlu0 %v3153, 96
        %v4525 = vpop.permute.xlu0 %4524
        %4526 = vrot.lane.b32.xlu0 %v3154, 96
        %v4527 = vpop.permute.xlu0 %4526
        %4528 = vrot.lane.b32.xlu0 %v3155, 96
        %v4529 = vpop.permute.xlu0 %4528
        %4530 = vrot.lane.b32.xlu0 %v3156, 96
        %v4531 = vpop.permute.xlu0 %4530
        %4532 = vrot.lane.b32.xlu0 %v3157, 96
        %v4533 = vpop.permute.xlu0 %4532
        %4534 = vrot.lane.b32.xlu0 %v3158, 96
        %v4535 = vpop.permute.xlu0 %4534
        %4536 = vrot.lane.b32.xlu0 %v3159, 96
        %v4537 = vpop.permute.xlu0 %4536
        %4538 = vrot.lane.b32.xlu0 %v3160, 96
        %v4539 = vpop.permute.xlu0 %4538
        %4540 = vrot.lane.b32.xlu0 %v3161, 96
        %v4541 = vpop.permute.xlu0 %4540
        %4542 = vrot.lane.b32.xlu0 %v3162, 96
        %v4543 = vpop.permute.xlu0 %4542
        %4544 = vrot.lane.b32.xlu0 %v3163, 96
        %v4545 = vpop.permute.xlu0 %4544
        %4546 = vrot.lane.b32.xlu0 %v3164, 96
        %v4547 = vpop.permute.xlu0 %4546
        %4548 = vrot.lane.b32.xlu0 %v3165, 96
        %v4549 = vpop.permute.xlu0 %4548
        %4550 = vrot.lane.b32.xlu0 %v3166, 96
        %v4551 = vpop.permute.xlu0 %4550
        %4552 = vrot.lane.b32.xlu0 %v3167, 96
        %v4553 = vpop.permute.xlu0 %4552
        %vm4554 = vcmask 785408
        %v4555 = vsel %vm4554, %v4525, %v4527
        %v4556 = vsel %vm4554, %v4527, %v4529
        %v4557 = vsel %vm4554, %v4531, %v4533
        %v4558 = vsel %vm4554, %v4533, %v4535
        %v4559 = vsel %vm4554, %v4537, %v4539
        %v4560 = vsel %vm4554, %v4539, %v4541
        %v4561 = vsel %vm4554, %v4543, %v4545
        %v4562 = vsel %vm4554, %v4545, %v4547
        %v4563 = vsel %vm4554, %v4549, %v4551
        %v4564 = vsel %vm4554, %v4551, %v4553
        %v4574 = vsel %vm1433, %v4520, 0
        %v4577 = vsel %vm1433, %v4521, 0
        %v4580 = vsel %vm1433, %v4522, 0
        %v4583 = vsel %vm1433, %v4523, 0
        %v4585 = vsel %vm1446, %v4563, 0
        %v4587 = vsel %vm1446, %v4564, 0
        %4589 = vmatpush.msra.mxu0 0.0
        %4590 = vmatpush.msra.mxu0 0.0
        %4591 = vmatpush.msra.mxu0 0.0
        %4592 = vmatpush.msra.mxu0 0.0
        %4593 = vmatpush.msra.mxu0 0.0
        %4594 = vmatpush.msra.mxu0 0.0
        %4595 = vmatpush.msra.mxu0 0.0
        %4596 = vmatpush.msra.mxu0 0.0
        %4597 = vmatpush.msra.mxu0 0.0
        %4598 = vmatpush.msra.mxu0 0.0
        %4599 = vmatpush.msra.mxu0 0.0
        %4600 = vmatpush.msra.mxu0 %v4585
        %4601 = vmatpush.msra.mxu0 %v4561
        %4602 = vmatpush.msra.mxu0 %v4559
        %4603 = vmatpush.msra.mxu0 %v4557
        %4604 = vmatpush.msra.mxu0 %v4555
        %4605 = vmatmul.f32.gmra.mxu0 %v4574
        %v4606 = vpop.f32.mrf.mxu0
        %v4607 = vadd.f32 0.0, %v4606
        %4608 = vmatmul.f32.gmra.mxu0 %v4577
        %v4609 = vpop.f32.mrf.mxu0
        %v4610 = vadd.f32 0.0, %v4609
        %4611 = vmatmul.f32.gmra.mxu0 %v4580
        %v4612 = vpop.f32.mrf.mxu0
        %v4613 = vadd.f32 0.0, %v4612
        %4614 = vmatmul.f32.gmra.mxu0 %v4583
        %v4615 = vpop.f32.mrf.mxu0
        %v4616 = vadd.f32 0.0, %v4615
        %4617 = vdwg.mxu0
        %4618 = vmatpush.msra.mxu0 0.0
        %4619 = vmatpush.msra.mxu0 0.0
        %4620 = vmatpush.msra.mxu0 0.0
        %4621 = vmatpush.msra.mxu0 0.0
        %4622 = vmatpush.msra.mxu0 0.0
        %4623 = vmatpush.msra.mxu0 0.0
        %4624 = vmatpush.msra.mxu0 0.0
        %4625 = vmatpush.msra.mxu0 0.0
        %4626 = vmatpush.msra.mxu0 0.0
        %4627 = vmatpush.msra.mxu0 0.0
        %4628 = vmatpush.msra.mxu0 0.0
        %4629 = vmatpush.msra.mxu0 %v4587
        %4630 = vmatpush.msra.mxu0 %v4562
        %4631 = vmatpush.msra.mxu0 %v4560
        %4632 = vmatpush.msra.mxu0 %v4558
        %4633 = vmatpush.msra.mxu0 %v4556
        %4634 = vmatmul.f32.gmra.mxu0 %v4574
        %v4635 = vpop.f32.mrf.mxu0
        %v4636 = vadd.f32 0.0, %v4635
        %4637 = vmatmul.f32.gmra.mxu0 %v4577
        %v4638 = vpop.f32.mrf.mxu0
        %v4639 = vadd.f32 0.0, %v4638
        %4640 = vmatmul.f32.gmra.mxu0 %v4580
        %v4641 = vpop.f32.mrf.mxu0
        %v4642 = vadd.f32 0.0, %v4641
        %4643 = vmatmul.f32.gmra.mxu0 %v4583
        %v4644 = vpop.f32.mrf.mxu0
        %v4645 = vadd.f32 0.0, %v4644
        %4646 = vdwg.mxu0
        %v4647 = vadd.f32 %v4511, %v4607
        %v4648 = vadd.f32 %v4512, %v4636
        %v4649 = vadd.f32 %v4513, %v4610
        %v4650 = vadd.f32 %v4514, %v4639
        %v4651 = vadd.f32 %v4515, %v4613
        %v4652 = vadd.f32 %v4516, %v4642
        %v4653 = vadd.f32 %v4517, %v4616
        %v4654 = vadd.f32 %v4518, %v4645
        %4655 = vrot.lane.b32.xlu0 %v3153, 95
        %v4656 = vpop.permute.xlu0 %4655
        %4657 = vrot.lane.b32.xlu0 %v3154, 95
        %v4658 = vpop.permute.xlu0 %4657
        %4659 = vrot.lane.b32.xlu0 %v3155, 95
        %v4660 = vpop.permute.xlu0 %4659
        %4661 = vrot.lane.b32.xlu0 %v3156, 95
        %v4662 = vpop.permute.xlu0 %4661
        %4663 = vrot.lane.b32.xlu0 %v3157, 95
        %v4664 = vpop.permute.xlu0 %4663
        %4665 = vrot.lane.b32.xlu0 %v3158, 95
        %v4666 = vpop.permute.xlu0 %4665
        %4667 = vrot.lane.b32.xlu0 %v3159, 95
        %v4668 = vpop.permute.xlu0 %4667
        %4669 = vrot.lane.b32.xlu0 %v3160, 95
        %v4670 = vpop.permute.xlu0 %4669
        %4671 = vrot.lane.b32.xlu0 %v3161, 95
        %v4672 = vpop.permute.xlu0 %4671
        %4673 = vrot.lane.b32.xlu0 %v3162, 95
        %v4674 = vpop.permute.xlu0 %4673
        %4675 = vrot.lane.b32.xlu0 %v3163, 95
        %v4676 = vpop.permute.xlu0 %4675
        %4677 = vrot.lane.b32.xlu0 %v3164, 95
        %v4678 = vpop.permute.xlu0 %4677
        %4679 = vrot.lane.b32.xlu0 %v3165, 95
        %v4680 = vpop.permute.xlu0 %4679
        %4681 = vrot.lane.b32.xlu0 %v3166, 95
        %v4682 = vpop.permute.xlu0 %4681
        %4683 = vrot.lane.b32.xlu0 %v3167, 95
        %v4684 = vpop.permute.xlu0 %4683
        %vm4685 = vcmask 777216
        %v4686 = vsel %vm4685, %v4656, %v4658
        %v4687 = vsel %vm4685, %v4658, %v4660
        %v4688 = vsel %vm4685, %v4662, %v4664
        %v4689 = vsel %vm4685, %v4664, %v4666
        %v4690 = vsel %vm4685, %v4668, %v4670
        %v4691 = vsel %vm4685, %v4670, %v4672
        %v4692 = vsel %vm4685, %v4674, %v4676
        %v4693 = vsel %vm4685, %v4676, %v4678
        %v4694 = vsel %vm4685, %v4680, %v4682
        %v4695 = vsel %vm4685, %v4682, %v4684
        %v4706 = vsel %vm1725, %v4686, 0.0
        %v4707 = vsel %vm1726, %v4687, 0.0
        %v4708 = vsel %vm1725, %v4688, 0.0
        %v4709 = vsel %vm1726, %v4689, 0.0
        %v4710 = vsel %vm1725, %v4690, 0.0
        %v4711 = vsel %vm1726, %v4691, 0.0
        %v4712 = vsel %vm1725, %v4692, 0.0
        %v4713 = vsel %vm1726, %v4693, 0.0
        %v4714 = vsel %vm1725, %v4694, 0.0
        %v4715 = vsel %vm1726, %v4695, 0.0
        %s4716 = scalar_lea.vmem [#allocation4], 736
        %v4717 = vld [vmem:[%s4716] sm:$0xff]
        %v4718 = vld [vmem:[%s4716 + $0x8] sm:$0xff]
        %v4719 = vld [vmem:[%s4716 + $0x10] sm:$0xff]
        %v4720 = vld [vmem:[%s4716 + $0x18] sm:$0x1f]
        %v4722 = vsel %vm1433, %v4717, 0
        %v4725 = vsel %vm1433, %v4718, 0
        %v4728 = vsel %vm1433, %v4719, 0
        %v4731 = vsel %vm1433, %v4720, 0
        %v4734 = vsel %vm1446, %v4714, 0
        %v4737 = vsel %vm1446, %v4715, 0
        %4739 = vmatpush.msra.mxu0 0.0
        %4740 = vmatpush.msra.mxu0 0.0
        %4741 = vmatpush.msra.mxu0 0.0
        %4742 = vmatpush.msra.mxu0 0.0
        %4743 = vmatpush.msra.mxu0 0.0
        %4744 = vmatpush.msra.mxu0 0.0
        %4745 = vmatpush.msra.mxu0 0.0
        %4746 = vmatpush.msra.mxu0 0.0
        %4747 = vmatpush.msra.mxu0 0.0
        %4748 = vmatpush.msra.mxu0 0.0
        %4749 = vmatpush.msra.mxu0 0.0
        %4750 = vmatpush.msra.mxu0 %v4734
        %4751 = vmatpush.msra.mxu0 %v4712
        %4752 = vmatpush.msra.mxu0 %v4710
        %4753 = vmatpush.msra.mxu0 %v4708
        %4754 = vmatpush.msra.mxu0 %v4706
        %4755 = vmatmul.f32.gmra.mxu0 %v4722
        %v4756 = vpop.f32.mrf.mxu0
        %v4757 = vadd.f32 0.0, %v4756
        %4758 = vmatmul.f32.gmra.mxu0 %v4725
        %v4759 = vpop.f32.mrf.mxu0
        %v4760 = vadd.f32 0.0, %v4759
        %4761 = vmatmul.f32.gmra.mxu0 %v4728
        %v4762 = vpop.f32.mrf.mxu0
        %v4763 = vadd.f32 0.0, %v4762
        %4764 = vmatmul.f32.gmra.mxu0 %v4731
        %v4765 = vpop.f32.mrf.mxu0
        %v4766 = vadd.f32 0.0, %v4765
        %4767 = vdwg.mxu0
        %4768 = vmatpush.msra.mxu0 0.0
        %4769 = vmatpush.msra.mxu0 0.0
        %4770 = vmatpush.msra.mxu0 0.0
        %4771 = vmatpush.msra.mxu0 0.0
        %4772 = vmatpush.msra.mxu0 0.0
        %4773 = vmatpush.msra.mxu0 0.0
        %4774 = vmatpush.msra.mxu0 0.0
        %4775 = vmatpush.msra.mxu0 0.0
        %4776 = vmatpush.msra.mxu0 0.0
        %4777 = vmatpush.msra.mxu0 0.0
        %4778 = vmatpush.msra.mxu0 0.0
        %4779 = vmatpush.msra.mxu0 %v4737
        %4780 = vmatpush.msra.mxu0 %v4713
        %4781 = vmatpush.msra.mxu0 %v4711
        %4782 = vmatpush.msra.mxu0 %v4709
        %4783 = vmatpush.msra.mxu0 %v4707
        %4784 = vmatmul.f32.gmra.mxu0 %v4722
        %v4785 = vpop.f32.mrf.mxu0
        %v4786 = vadd.f32 0.0, %v4785
        %4787 = vmatmul.f32.gmra.mxu0 %v4725
        %v4788 = vpop.f32.mrf.mxu0
        %v4789 = vadd.f32 0.0, %v4788
        %4790 = vmatmul.f32.gmra.mxu0 %v4728
        %v4791 = vpop.f32.mrf.mxu0
        %v4792 = vadd.f32 0.0, %v4791
        %4793 = vmatmul.f32.gmra.mxu0 %v4731
        %v4794 = vpop.f32.mrf.mxu0
        %v4795 = vadd.f32 0.0, %v4794
        %4796 = vdwg.mxu0
        %v4797 = vadd.f32 %v4647, %v4757
        %v4798 = vadd.f32 %v4648, %v4786
        %v4799 = vadd.f32 %v4649, %v4760
        %v4800 = vadd.f32 %v4650, %v4789
        %v4801 = vadd.f32 %v4651, %v4763
        %v4802 = vadd.f32 %v4652, %v4792
        %v4803 = vadd.f32 %v4653, %v4766
        %v4804 = vadd.f32 %v4654, %v4795
        %4805 = vrot.lane.b32.xlu0 %v3153, 94
        %v4806 = vpop.permute.xlu0 %4805
        %4807 = vrot.lane.b32.xlu0 %v3154, 94
        %v4808 = vpop.permute.xlu0 %4807
        %4809 = vrot.lane.b32.xlu0 %v3155, 94
        %v4810 = vpop.permute.xlu0 %4809
        %4811 = vrot.lane.b32.xlu0 %v3156, 94
        %v4812 = vpop.permute.xlu0 %4811
        %4813 = vrot.lane.b32.xlu0 %v3157, 94
        %v4814 = vpop.permute.xlu0 %4813
        %4815 = vrot.lane.b32.xlu0 %v3158, 94
        %v4816 = vpop.permute.xlu0 %4815
        %4817 = vrot.lane.b32.xlu0 %v3159, 94
        %v4818 = vpop.permute.xlu0 %4817
        %4819 = vrot.lane.b32.xlu0 %v3160, 94
        %v4820 = vpop.permute.xlu0 %4819
        %4821 = vrot.lane.b32.xlu0 %v3161, 94
        %v4822 = vpop.permute.xlu0 %4821
        %4823 = vrot.lane.b32.xlu0 %v3162, 94
        %v4824 = vpop.permute.xlu0 %4823
        %4825 = vrot.lane.b32.xlu0 %v3163, 94
        %v4826 = vpop.permute.xlu0 %4825
        %4827 = vrot.lane.b32.xlu0 %v3164, 94
        %v4828 = vpop.permute.xlu0 %4827
        %4829 = vrot.lane.b32.xlu0 %v3165, 94
        %v4830 = vpop.permute.xlu0 %4829
        %4831 = vrot.lane.b32.xlu0 %v3166, 94
        %v4832 = vpop.permute.xlu0 %4831
        %4833 = vrot.lane.b32.xlu0 %v3167, 94
        %v4834 = vpop.permute.xlu0 %4833
        %vm4835 = vcmask 769024
        %v4836 = vsel %vm4835, %v4806, %v4808
        %v4837 = vsel %vm4835, %v4808, %v4810
        %v4838 = vsel %vm4835, %v4812, %v4814
        %v4839 = vsel %vm4835, %v4814, %v4816
        %v4840 = vsel %vm4835, %v4818, %v4820
        %v4841 = vsel %vm4835, %v4820, %v4822
        %v4842 = vsel %vm4835, %v4824, %v4826
        %v4843 = vsel %vm4835, %v4826, %v4828
        %v4844 = vsel %vm4835, %v4830, %v4832
        %v4845 = vsel %vm4835, %v4832, %v4834
        %v4856 = vsel %vm1879, %v4836, 0.0
        %v4857 = vsel %vm1880, %v4837, 0.0
        %v4858 = vsel %vm1879, %v4838, 0.0
        %v4859 = vsel %vm1880, %v4839, 0.0
        %v4860 = vsel %vm1879, %v4840, 0.0
        %v4861 = vsel %vm1880, %v4841, 0.0
        %v4862 = vsel %vm1879, %v4842, 0.0
        %v4863 = vsel %vm1880, %v4843, 0.0
        %v4864 = vsel %vm1879, %v4844, 0.0
        %v4865 = vsel %vm1880, %v4845, 0.0
        %s4866 = scalar_lea.vmem [#allocation4], 768
        %v4867 = vld [vmem:[%s4866] sm:$0xff]
        %v4868 = vld [vmem:[%s4866 + $0x8] sm:$0xff]
        %v4869 = vld [vmem:[%s4866 + $0x10] sm:$0xff]
        %v4870 = vld [vmem:[%s4866 + $0x18] sm:$0x1f]
        %v4872 = vsel %vm1433, %v4867, 0
        %v4875 = vsel %vm1433, %v4868, 0
        %v4878 = vsel %vm1433, %v4869, 0
        %v4881 = vsel %vm1433, %v4870, 0
        %v4884 = vsel %vm1446, %v4864, 0
        %v4887 = vsel %vm1446, %v4865, 0
        %4889 = vmatpush.msra.mxu0 0.0
        %4890 = vmatpush.msra.mxu0 0.0
        %4891 = vmatpush.msra.mxu0 0.0
        %4892 = vmatpush.msra.mxu0 0.0
        %4893 = vmatpush.msra.mxu0 0.0
        %4894 = vmatpush.msra.mxu0 0.0
        %4895 = vmatpush.msra.mxu0 0.0
        %4896 = vmatpush.msra.mxu0 0.0
        %4897 = vmatpush.msra.mxu0 0.0
        %4898 = vmatpush.msra.mxu0 0.0
        %4899 = vmatpush.msra.mxu0 0.0
        %4900 = vmatpush.msra.mxu0 %v4884
        %4901 = vmatpush.msra.mxu0 %v4862
        %4902 = vmatpush.msra.mxu0 %v4860
        %4903 = vmatpush.msra.mxu0 %v4858
        %4904 = vmatpush.msra.mxu0 %v4856
        %4905 = vmatmul.f32.gmra.mxu0 %v4872
        %v4906 = vpop.f32.mrf.mxu0
        %v4907 = vadd.f32 0.0, %v4906
        %4908 = vmatmul.f32.gmra.mxu0 %v4875
        %v4909 = vpop.f32.mrf.mxu0
        %v4910 = vadd.f32 0.0, %v4909
        %4911 = vmatmul.f32.gmra.mxu0 %v4878
        %v4912 = vpop.f32.mrf.mxu0
        %v4913 = vadd.f32 0.0, %v4912
        %4914 = vmatmul.f32.gmra.mxu0 %v4881
        %v4915 = vpop.f32.mrf.mxu0
        %v4916 = vadd.f32 0.0, %v4915
        %4917 = vdwg.mxu0
        %4918 = vmatpush.msra.mxu0 0.0
        %4919 = vmatpush.msra.mxu0 0.0
        %4920 = vmatpush.msra.mxu0 0.0
        %4921 = vmatpush.msra.mxu0 0.0
        %4922 = vmatpush.msra.mxu0 0.0
        %4923 = vmatpush.msra.mxu0 0.0
        %4924 = vmatpush.msra.mxu0 0.0
        %4925 = vmatpush.msra.mxu0 0.0
        %4926 = vmatpush.msra.mxu0 0.0
        %4927 = vmatpush.msra.mxu0 0.0
        %4928 = vmatpush.msra.mxu0 0.0
        %4929 = vmatpush.msra.mxu0 %v4887
        %4930 = vmatpush.msra.mxu0 %v4863
        %4931 = vmatpush.msra.mxu0 %v4861
        %4932 = vmatpush.msra.mxu0 %v4859
        %4933 = vmatpush.msra.mxu0 %v4857
        %4934 = vmatmul.f32.gmra.mxu0 %v4872
        %v4935 = vpop.f32.mrf.mxu0
        %v4936 = vadd.f32 0.0, %v4935
        %4937 = vmatmul.f32.gmra.mxu0 %v4875
        %v4938 = vpop.f32.mrf.mxu0
        %v4939 = vadd.f32 0.0, %v4938
        %4940 = vmatmul.f32.gmra.mxu0 %v4878
        %v4941 = vpop.f32.mrf.mxu0
        %v4942 = vadd.f32 0.0, %v4941
        %4943 = vmatmul.f32.gmra.mxu0 %v4881
        %v4944 = vpop.f32.mrf.mxu0
        %v4945 = vadd.f32 0.0, %v4944
        %4946 = vdwg.mxu0
        %v4947 = vadd.f32 %v4797, %v4907
        %v4948 = vadd.f32 %v4798, %v4936
        %v4949 = vadd.f32 %v4799, %v4910
        %v4950 = vadd.f32 %v4800, %v4939
        %v4951 = vadd.f32 %v4801, %v4913
        %v4952 = vadd.f32 %v4802, %v4942
        %v4953 = vadd.f32 %v4803, %v4916
        %v4954 = vadd.f32 %v4804, %v4945
        %v4955 = vld [vmem:[%s4] sm:$0xff]
        %v4956 = vld [vmem:[%s4 + $0x8] sm:$0xff]
        %v4957 = vld [vmem:[%s4 + $0x10] sm:$0xff]
        %v4958 = vld [vmem:[%s4 + $0x18] sm:$0x1f]
        %4960 = vset.pattern.permute.xlu0 0
        %4961 = vperm.xlu0 %4960, %v4955
        %v4962 = vpop.permute.xlu0 %4961
        %4965 = vset.pattern.permute.xlu0 0
        %4966 = vperm.xlu0 %4965, %v4956
        %v4967 = vpop.permute.xlu0 %4966
        %4970 = vset.pattern.permute.xlu0 0
        %4971 = vperm.xlu0 %4970, %v4957
        %v4972 = vpop.permute.xlu0 %4971
        %4975 = vset.pattern.permute.xlu0 0
        %4976 = vperm.xlu0 %4975, %v4958
        %v4977 = vpop.permute.xlu0 %4976
        %v4979 = vadd.f32 %v4947, %v4962
        %v4980 = vadd.f32 %v4948, %v4962
        %v4981 = vadd.f32 %v4949, %v4967
        %v4982 = vadd.f32 %v4950, %v4967
        %v4983 = vadd.f32 %v4951, %v4972
        %v4984 = vadd.f32 %v4952, %v4972
        %v4985 = vadd.f32 %v4953, %v4977
        %v4986 = vadd.f32 %v4954, %v4977
        %v4987 = vmul.f32 %v4979, 0.5
        %v4988 = vmul.f32 %v4980, 0.5
        %v4989 = vmul.f32 %v4981, 0.5
        %v4990 = vmul.f32 %v4982, 0.5
        %v4991 = vmul.f32 %v4983, 0.5
        %v4992 = vmul.f32 %v4984, 0.5
        %v4993 = vmul.f32 %v4985, 0.5
        %v4994 = vmul.f32 %v4986, 0.5
        %v4995 = vmul.f32 %v4979, 0.70710677
        %v4996 = vmul.f32 %v4980, 0.70710677
        %v4997 = vmul.f32 %v4981, 0.70710677
        %v4998 = vmul.f32 %v4982, 0.70710677
        %v4999 = vmul.f32 %v4983, 0.70710677
        %v5000 = vmul.f32 %v4984, 0.70710677
        %v5001 = vmul.f32 %v4985, 0.70710677
        %v5002 = vmul.f32 %v4986, 0.70710677
        %v5003 = vmul.f32 %v4995, %v4995
        %v5004 = vmin.f32 16.0, %v5003
        %v5005 = vmul.f32 %v5004, 2.1237322e-06
        %v5006 = vadd.f32 %v5005, 0.00028619796
        %v5007 = vmul.f32 %v5004, %v5006
        %v5008 = vadd.f32 %v5007, 0.0036580483
        %v5009 = vmul.f32 %v5004, %v5008
        %v5010 = vadd.f32 %v5009, 0.05243302
        %v5011 = vmul.f32 %v5004, %v5010
        %v5012 = vadd.f32 %v5011, 0.18741608
        %v5013 = vmul.f32 %v5004, %v5012
        %v5014 = vadd.f32 %v5013, 1.1283791
        %v5015 = vmul.f32 %v4995, %v5014
        %v5016 = vmul.f32 %v5004, 3.8918573e-05
        %v5017 = vadd.f32 %v5016, 0.001143296
        %v5018 = vmul.f32 %v5004, %v5017
        %v5019 = vadd.f32 %v5018, 0.014752088
        %v5020 = vmul.f32 %v5004, %v5019
        %v5021 = vadd.f32 %v5020, 0.112945676
        %v5022 = vmul.f32 %v5004, %v5021
        %v5023 = vadd.f32 %v5022, 0.4994258
        %v5024 = vmul.f32 %v5004, %v5023
        %v5025 = vadd.f32 %v5024, 1.0
        %v5026 = vrcp.pop %v5025
        %v5027 = vmul.f32 %v5025, %v5026
        %v5028 = vsub.f32 1.0, %v5027
        %v5029 = vmul.f32 %v5026, %v5028
        %v5030 = vadd.f32 %v5026, %v5029
        %vm5031 = vweird.f32 %v5025
        %vm5032 = vweird.f32 %v5026
        %vm5033 = vmor %vm5031, %vm5032
        %v5034 = vsel %vm5033, %v5026, %v5030
        %v5035 = vand.u32 2147483647, %v5025
        %vm5036 = vcmp.eq.f32.partialorder %v5035, 8.507059e+37
        %v5037 = vand.u32 %v5025, 2147483648
        %v5038 = vor.u32 1.1754944e-38, %v5037
        %v5039 = vsel %vm5036, %v5038, %v5034
        %v5040 = vmul.f32 %v5015, %v5039
        %v5041 = vmin.f32 %v5040, 1.0
        %v5042 = vmax.f32 %v5041, -1.0
        %v5043 = vmul.f32 %v4996, %v4996
        %v5044 = vmin.f32 16.0, %v5043
        %v5045 = vmul.f32 %v5044, 2.1237322e-06
        %v5046 = vadd.f32 %v5045, 0.00028619796
        %v5047 = vmul.f32 %v5044, %v5046
        %v5048 = vadd.f32 %v5047, 0.0036580483
        %v5049 = vmul.f32 %v5044, %v5048
        %v5050 = vadd.f32 %v5049, 0.05243302
        %v5051 = vmul.f32 %v5044, %v5050
        %v5052 = vadd.f32 %v5051, 0.18741608
        %v5053 = vmul.f32 %v5044, %v5052
        %v5054 = vadd.f32 %v5053, 1.1283791
        %v5055 = vmul.f32 %v4996, %v5054
        %v5056 = vmul.f32 %v5044, 3.8918573e-05
        %v5057 = vadd.f32 %v5056, 0.001143296
        %v5058 = vmul.f32 %v5044, %v5057
        %v5059 = vadd.f32 %v5058, 0.014752088
        %v5060 = vmul.f32 %v5044, %v5059
        %v5061 = vadd.f32 %v5060, 0.112945676
        %v5062 = vmul.f32 %v5044, %v5061
        %v5063 = vadd.f32 %v5062, 0.4994258
        %v5064 = vmul.f32 %v5044, %v5063
        %v5065 = vadd.f32 %v5064, 1.0
        %v5066 = vrcp.pop %v5065
        %v5067 = vmul.f32 %v5065, %v5066
        %v5068 = vsub.f32 1.0, %v5067
        %v5069 = vmul.f32 %v5066, %v5068
        %v5070 = vadd.f32 %v5066, %v5069
        %vm5071 = vweird.f32 %v5065
        %vm5072 = vweird.f32 %v5066
        %vm5073 = vmor %vm5071, %vm5072
        %v5074 = vsel %vm5073, %v5066, %v5070
        %v5075 = vand.u32 2147483647, %v5065
        %vm5076 = vcmp.eq.f32.partialorder %v5075, 8.507059e+37
        %v5077 = vand.u32 %v5065, 2147483648
        %v5078 = vor.u32 1.1754944e-38, %v5077
        %v5079 = vsel %vm5076, %v5078, %v5074
        %v5080 = vmul.f32 %v5055, %v5079
        %v5081 = vmin.f32 %v5080, 1.0
        %v5082 = vmax.f32 %v5081, -1.0
        %v5083 = vmul.f32 %v4997, %v4997
        %v5084 = vmin.f32 16.0, %v5083
        %v5085 = vmul.f32 %v5084, 2.1237322e-06
        %v5086 = vadd.f32 %v5085, 0.00028619796
        %v5087 = vmul.f32 %v5084, %v5086
        %v5088 = vadd.f32 %v5087, 0.0036580483
        %v5089 = vmul.f32 %v5084, %v5088
        %v5090 = vadd.f32 %v5089, 0.05243302
        %v5091 = vmul.f32 %v5084, %v5090
        %v5092 = vadd.f32 %v5091, 0.18741608
        %v5093 = vmul.f32 %v5084, %v5092
        %v5094 = vadd.f32 %v5093, 1.1283791
        %v5095 = vmul.f32 %v4997, %v5094
        %v5096 = vmul.f32 %v5084, 3.8918573e-05
        %v5097 = vadd.f32 %v5096, 0.001143296
        %v5098 = vmul.f32 %v5084, %v5097
        %v5099 = vadd.f32 %v5098, 0.014752088
        %v5100 = vmul.f32 %v5084, %v5099
        %v5101 = vadd.f32 %v5100, 0.112945676
        %v5102 = vmul.f32 %v5084, %v5101
        %v5103 = vadd.f32 %v5102, 0.4994258
        %v5104 = vmul.f32 %v5084, %v5103
        %v5105 = vadd.f32 %v5104, 1.0
        %v5106 = vrcp.pop %v5105
        %v5107 = vmul.f32 %v5105, %v5106
        %v5108 = vsub.f32 1.0, %v5107
        %v5109 = vmul.f32 %v5106, %v5108
        %v5110 = vadd.f32 %v5106, %v5109
        %vm5111 = vweird.f32 %v5105
        %vm5112 = vweird.f32 %v5106
        %vm5113 = vmor %vm5111, %vm5112
        %v5114 = vsel %vm5113, %v5106, %v5110
        %v5115 = vand.u32 2147483647, %v5105
        %vm5116 = vcmp.eq.f32.partialorder %v5115, 8.507059e+37
        %v5117 = vand.u32 %v5105, 2147483648
        %v5118 = vor.u32 1.1754944e-38, %v5117
        %v5119 = vsel %vm5116, %v5118, %v5114
        %v5120 = vmul.f32 %v5095, %v5119
        %v5121 = vmin.f32 %v5120, 1.0
        %v5122 = vmax.f32 %v5121, -1.0
        %v5123 = vmul.f32 %v4998, %v4998
        %v5124 = vmin.f32 16.0, %v5123
        %v5125 = vmul.f32 %v5124, 2.1237322e-06
        %v5126 = vadd.f32 %v5125, 0.00028619796
        %v5127 = vmul.f32 %v5124, %v5126
        %v5128 = vadd.f32 %v5127, 0.0036580483
        %v5129 = vmul.f32 %v5124, %v5128
        %v5130 = vadd.f32 %v5129, 0.05243302
        %v5131 = vmul.f32 %v5124, %v5130
        %v5132 = vadd.f32 %v5131, 0.18741608
        %v5133 = vmul.f32 %v5124, %v5132
        %v5134 = vadd.f32 %v5133, 1.1283791
        %v5135 = vmul.f32 %v4998, %v5134
        %v5136 = vmul.f32 %v5124, 3.8918573e-05
        %v5137 = vadd.f32 %v5136, 0.001143296
        %v5138 = vmul.f32 %v5124, %v5137
        %v5139 = vadd.f32 %v5138, 0.014752088
        %v5140 = vmul.f32 %v5124, %v5139
        %v5141 = vadd.f32 %v5140, 0.112945676
        %v5142 = vmul.f32 %v5124, %v5141
        %v5143 = vadd.f32 %v5142, 0.4994258
        %v5144 = vmul.f32 %v5124, %v5143
        %v5145 = vadd.f32 %v5144, 1.0
        %v5146 = vrcp.pop %v5145
        %v5147 = vmul.f32 %v5145, %v5146
        %v5148 = vsub.f32 1.0, %v5147
        %v5149 = vmul.f32 %v5146, %v5148
        %v5150 = vadd.f32 %v5146, %v5149
        %vm5151 = vweird.f32 %v5145
        %vm5152 = vweird.f32 %v5146
        %vm5153 = vmor %vm5151, %vm5152
        %v5154 = vsel %vm5153, %v5146, %v5150
        %v5155 = vand.u32 2147483647, %v5145
        %vm5156 = vcmp.eq.f32.partialorder %v5155, 8.507059e+37
        %v5157 = vand.u32 %v5145, 2147483648
        %v5158 = vor.u32 1.1754944e-38, %v5157
        %v5159 = vsel %vm5156, %v5158, %v5154
        %v5160 = vmul.f32 %v5135, %v5159
        %v5161 = vmin.f32 %v5160, 1.0
        %v5162 = vmax.f32 %v5161, -1.0
        %v5163 = vmul.f32 %v4999, %v4999
        %v5164 = vmin.f32 16.0, %v5163
        %v5165 = vmul.f32 %v5164, 2.1237322e-06
        %v5166 = vadd.f32 %v5165, 0.00028619796
        %v5167 = vmul.f32 %v5164, %v5166
        %v5168 = vadd.f32 %v5167, 0.0036580483
        %v5169 = vmul.f32 %v5164, %v5168
        %v5170 = vadd.f32 %v5169, 0.05243302
        %v5171 = vmul.f32 %v5164, %v5170
        %v5172 = vadd.f32 %v5171, 0.18741608
        %v5173 = vmul.f32 %v5164, %v5172
        %v5174 = vadd.f32 %v5173, 1.1283791
        %v5175 = vmul.f32 %v4999, %v5174
        %v5176 = vmul.f32 %v5164, 3.8918573e-05
        %v5177 = vadd.f32 %v5176, 0.001143296
        %v5178 = vmul.f32 %v5164, %v5177
        %v5179 = vadd.f32 %v5178, 0.014752088
        %v5180 = vmul.f32 %v5164, %v5179
        %v5181 = vadd.f32 %v5180, 0.112945676
        %v5182 = vmul.f32 %v5164, %v5181
        %v5183 = vadd.f32 %v5182, 0.4994258
        %v5184 = vmul.f32 %v5164, %v5183
        %v5185 = vadd.f32 %v5184, 1.0
        %v5186 = vrcp.pop %v5185
        %v5187 = vmul.f32 %v5185, %v5186
        %v5188 = vsub.f32 1.0, %v5187
        %v5189 = vmul.f32 %v5186, %v5188
        %v5190 = vadd.f32 %v5186, %v5189
        %vm5191 = vweird.f32 %v5185
        %vm5192 = vweird.f32 %v5186
        %vm5193 = vmor %vm5191, %vm5192
        %v5194 = vsel %vm5193, %v5186, %v5190
        %v5195 = vand.u32 2147483647, %v5185
        %vm5196 = vcmp.eq.f32.partialorder %v5195, 8.507059e+37
        %v5197 = vand.u32 %v5185, 2147483648
        %v5198 = vor.u32 1.1754944e-38, %v5197
        %v5199 = vsel %vm5196, %v5198, %v5194
        %v5200 = vmul.f32 %v5175, %v5199
        %v5201 = vmin.f32 %v5200, 1.0
        %v5202 = vmax.f32 %v5201, -1.0
        %v5203 = vmul.f32 %v5000, %v5000
        %v5204 = vmin.f32 16.0, %v5203
        %v5205 = vmul.f32 %v5204, 2.1237322e-06
        %v5206 = vadd.f32 %v5205, 0.00028619796
        %v5207 = vmul.f32 %v5204, %v5206
        %v5208 = vadd.f32 %v5207, 0.0036580483
        %v5209 = vmul.f32 %v5204, %v5208
        %v5210 = vadd.f32 %v5209, 0.05243302
        %v5211 = vmul.f32 %v5204, %v5210
        %v5212 = vadd.f32 %v5211, 0.18741608
        %v5213 = vmul.f32 %v5204, %v5212
        %v5214 = vadd.f32 %v5213, 1.1283791
        %v5215 = vmul.f32 %v5000, %v5214
        %v5216 = vmul.f32 %v5204, 3.8918573e-05
        %v5217 = vadd.f32 %v5216, 0.001143296
        %v5218 = vmul.f32 %v5204, %v5217
        %v5219 = vadd.f32 %v5218, 0.014752088
        %v5220 = vmul.f32 %v5204, %v5219
        %v5221 = vadd.f32 %v5220, 0.112945676
        %v5222 = vmul.f32 %v5204, %v5221
        %v5223 = vadd.f32 %v5222, 0.4994258
        %v5224 = vmul.f32 %v5204, %v5223
        %v5225 = vadd.f32 %v5224, 1.0
        %v5226 = vrcp.pop %v5225
        %v5227 = vmul.f32 %v5225, %v5226
        %v5228 = vsub.f32 1.0, %v5227
        %v5229 = vmul.f32 %v5226, %v5228
        %v5230 = vadd.f32 %v5226, %v5229
        %vm5231 = vweird.f32 %v5225
        %vm5232 = vweird.f32 %v5226
        %vm5233 = vmor %vm5231, %vm5232
        %v5234 = vsel %vm5233, %v5226, %v5230
        %v5235 = vand.u32 2147483647, %v5225
        %vm5236 = vcmp.eq.f32.partialorder %v5235, 8.507059e+37
        %v5237 = vand.u32 %v5225, 2147483648
        %v5238 = vor.u32 1.1754944e-38, %v5237
        %v5239 = vsel %vm5236, %v5238, %v5234
        %v5240 = vmul.f32 %v5215, %v5239
        %v5241 = vmin.f32 %v5240, 1.0
        %v5242 = vmax.f32 %v5241, -1.0
        %v5243 = vmul.f32 %v5001, %v5001
        %v5244 = vmin.f32 16.0, %v5243
        %v5245 = vmul.f32 %v5244, 2.1237322e-06
        %v5246 = vadd.f32 %v5245, 0.00028619796
        %v5247 = vmul.f32 %v5244, %v5246
        %v5248 = vadd.f32 %v5247, 0.0036580483
        %v5249 = vmul.f32 %v5244, %v5248
        %v5250 = vadd.f32 %v5249, 0.05243302
        %v5251 = vmul.f32 %v5244, %v5250
        %v5252 = vadd.f32 %v5251, 0.18741608
        %v5253 = vmul.f32 %v5244, %v5252
        %v5254 = vadd.f32 %v5253, 1.1283791
        %v5255 = vmul.f32 %v5001, %v5254
        %v5256 = vmul.f32 %v5244, 3.8918573e-05
        %v5257 = vadd.f32 %v5256, 0.001143296
        %v5258 = vmul.f32 %v5244, %v5257
        %v5259 = vadd.f32 %v5258, 0.014752088
        %v5260 = vmul.f32 %v5244, %v5259
        %v5261 = vadd.f32 %v5260, 0.112945676
        %v5262 = vmul.f32 %v5244, %v5261
        %v5263 = vadd.f32 %v5262, 0.4994258
        %v5264 = vmul.f32 %v5244, %v5263
        %v5265 = vadd.f32 %v5264, 1.0
        %v5266 = vrcp.pop %v5265
        %v5267 = vmul.f32 %v5265, %v5266
        %v5268 = vsub.f32 1.0, %v5267
        %v5269 = vmul.f32 %v5266, %v5268
        %v5270 = vadd.f32 %v5266, %v5269
        %vm5271 = vweird.f32 %v5265
        %vm5272 = vweird.f32 %v5266
        %vm5273 = vmor %vm5271, %vm5272
        %v5274 = vsel %vm5273, %v5266, %v5270
        %v5275 = vand.u32 2147483647, %v5265
        %vm5276 = vcmp.eq.f32.partialorder %v5275, 8.507059e+37
        %v5277 = vand.u32 %v5265, 2147483648
        %v5278 = vor.u32 1.1754944e-38, %v5277
        %v5279 = vsel %vm5276, %v5278, %v5274
        %v5280 = vmul.f32 %v5255, %v5279
        %v5281 = vmin.f32 %v5280, 1.0
        %v5282 = vmax.f32 %v5281, -1.0
        %v5283 = vmul.f32 %v5002, %v5002
        %v5284 = vmin.f32 16.0, %v5283
        %v5285 = vmul.f32 %v5284, 2.1237322e-06
        %v5286 = vadd.f32 %v5285, 0.00028619796
        %v5287 = vmul.f32 %v5284, %v5286
        %v5288 = vadd.f32 %v5287, 0.0036580483
        %v5289 = vmul.f32 %v5284, %v5288
        %v5290 = vadd.f32 %v5289, 0.05243302
        %v5291 = vmul.f32 %v5284, %v5290
        %v5292 = vadd.f32 %v5291, 0.18741608
        %v5293 = vmul.f32 %v5284, %v5292
        %v5294 = vadd.f32 %v5293, 1.1283791
        %v5295 = vmul.f32 %v5002, %v5294
        %v5296 = vmul.f32 %v5284, 3.8918573e-05
        %v5297 = vadd.f32 %v5296, 0.001143296
        %v5298 = vmul.f32 %v5284, %v5297
        %v5299 = vadd.f32 %v5298, 0.014752088
        %v5300 = vmul.f32 %v5284, %v5299
        %v5301 = vadd.f32 %v5300, 0.112945676
        %v5302 = vmul.f32 %v5284, %v5301
        %v5303 = vadd.f32 %v5302, 0.4994258
        %v5304 = vmul.f32 %v5284, %v5303
        %v5305 = vadd.f32 %v5304, 1.0
        %v5306 = vrcp.pop %v5305
        %v5307 = vmul.f32 %v5305, %v5306
        %v5308 = vsub.f32 1.0, %v5307
        %v5309 = vmul.f32 %v5306, %v5308
        %v5310 = vadd.f32 %v5306, %v5309
        %vm5311 = vweird.f32 %v5305
        %vm5312 = vweird.f32 %v5306
        %vm5313 = vmor %vm5311, %vm5312
        %v5314 = vsel %vm5313, %v5306, %v5310
        %v5315 = vand.u32 2147483647, %v5305
        %vm5316 = vcmp.eq.f32.partialorder %v5315, 8.507059e+37
        %v5317 = vand.u32 %v5305, 2147483648
        %v5318 = vor.u32 1.1754944e-38, %v5317
        %v5319 = vsel %vm5316, %v5318, %v5314
        %v5320 = vmul.f32 %v5295, %v5319
        %v5321 = vmin.f32 %v5320, 1.0
        %v5322 = vmax.f32 %v5321, -1.0
        %v5323 = vadd.f32 %v5042, 1.0
        %v5324 = vadd.f32 %v5082, 1.0
        %v5325 = vadd.f32 %v5122, 1.0
        %v5326 = vadd.f32 %v5162, 1.0
        %v5327 = vadd.f32 %v5202, 1.0
        %v5328 = vadd.f32 %v5242, 1.0
        %v5329 = vadd.f32 %v5282, 1.0
        %v5330 = vadd.f32 %v5322, 1.0
        %v5331 = vmul.f32 %v4987, %v5323
        %v5332 = vmul.f32 %v4988, %v5324
        %v5333 = vmul.f32 %v4989, %v5325
        %v5334 = vmul.f32 %v4990, %v5326
        %v5335 = vmul.f32 %v4991, %v5327
        %v5336 = vmul.f32 %v4992, %v5328
        %v5337 = vmul.f32 %v4993, %v5329
        %v5338 = vmul.f32 %v4994, %v5330
        %v5339 = vld [vmem:[%s5] sm:$0xff]
        %v5340 = vld [vmem:[%s5 + $0x8] sm:$0xff]
        %v5341 = vld [vmem:[%s5 + $0x10] sm:$0x7f]
        %v5342 = vld [vmem:[%s6] sm:$0xff]
        %v5343 = vld [vmem:[%s6 + $0x8] sm:$0xff]
        %v5344 = vld [vmem:[%s6 + $0x10] sm:$0x7f]
        %5346 = vset.pattern.permute.xlu0 0
        %5347 = vperm.xlu0 %5346, %v5342
        %v5348 = vpop.permute.xlu0 %5347
        %5351 = vset.pattern.permute.xlu0 0
        %5352 = vperm.xlu0 %5351, %v5343
        %v5353 = vpop.permute.xlu0 %5352
        %5356 = vset.pattern.permute.xlu0 0
        %5357 = vperm.xlu0 %5356, %v5344
        %v5358 = vpop.permute.xlu0 %5357
        %vm5360 = vcmask 236544
        %v5362 = vsel %vm5360, %v5339, 0
        %v5365 = vsel %vm5360, %v5340, 0
        %v5368 = vsel %vm5360, %v5341, 0
        %vm5370 = vcmask 1044480
        %v5372 = vsel %vm5370, %v5337, 0
        %v5375 = vsel %vm5370, %v5338, 0
        %5377 = vmatpush.msra.mxu0 0.0
        %5378 = vmatpush.msra.mxu0 0.0
        %5379 = vmatpush.msra.mxu0 0.0
        %5380 = vmatpush.msra.mxu0 0.0
        %5381 = vmatpush.msra.mxu0 0.0
        %5382 = vmatpush.msra.mxu0 0.0
        %5383 = vmatpush.msra.mxu0 0.0
        %5384 = vmatpush.msra.mxu0 0.0
        %5385 = vmatpush.msra.mxu0 0.0
        %5386 = vmatpush.msra.mxu0 0.0
        %5387 = vmatpush.msra.mxu0 0.0
        %5388 = vmatpush.msra.mxu0 0.0
        %5389 = vmatpush.msra.mxu0 %v5372
        %5390 = vmatpush.msra.mxu0 %v5335
        %5391 = vmatpush.msra.mxu0 %v5333
        %5392 = vmatpush.msra.mxu0 %v5331
        %5393 = vmatmul.f32.gmra.mxu0 %v5362
        %v5394 = vpop.f32.mrf.mxu0
        %v5395 = vadd.f32 %v5348, %v5394
        %5396 = vmatmul.f32.gmra.mxu0 %v5365
        %v5397 = vpop.f32.mrf.mxu0
        %v5398 = vadd.f32 %v5353, %v5397
        %5399 = vmatmul.f32.gmra.mxu0 %v5368
        %v5400 = vpop.f32.mrf.mxu0
        %v5401 = vadd.f32 %v5358, %v5400
        %5402 = vdwg.mxu0
        %5403 = vmatpush.msra.mxu0 0.0
        %5404 = vmatpush.msra.mxu0 0.0
        %5405 = vmatpush.msra.mxu0 0.0
        %5406 = vmatpush.msra.mxu0 0.0
        %5407 = vmatpush.msra.mxu0 0.0
        %5408 = vmatpush.msra.mxu0 0.0
        %5409 = vmatpush.msra.mxu0 0.0
        %5410 = vmatpush.msra.mxu0 0.0
        %5411 = vmatpush.msra.mxu0 0.0
        %5412 = vmatpush.msra.mxu0 0.0
        %5413 = vmatpush.msra.mxu0 0.0
        %5414 = vmatpush.msra.mxu0 0.0
        %5415 = vmatpush.msra.mxu0 %v5375
        %5416 = vmatpush.msra.mxu0 %v5336
        %5417 = vmatpush.msra.mxu0 %v5334
        %5418 = vmatpush.msra.mxu0 %v5332
        %5419 = vmatmul.f32.gmra.mxu0 %v5362
        %v5420 = vpop.f32.mrf.mxu0
        %v5421 = vadd.f32 %v5348, %v5420
        %5422 = vmatmul.f32.gmra.mxu0 %v5365
        %v5423 = vpop.f32.mrf.mxu0
        %v5424 = vadd.f32 %v5353, %v5423
        %5425 = vmatmul.f32.gmra.mxu0 %v5368
        %v5426 = vpop.f32.mrf.mxu0
        %v5427 = vadd.f32 %v5358, %v5426
        %5428 = vdwg.mxu0
        %v5429 = vmul.f32 %v5395, 0.5
        %v5430 = vmul.f32 %v5421, 0.5
        %v5431 = vmul.f32 %v5398, 0.5
        %v5432 = vmul.f32 %v5424, 0.5
        %v5433 = vmul.f32 %v5401, 0.5
        %v5434 = vmul.f32 %v5427, 0.5
        %v5435 = vmul.f32 %v5395, 0.70710677
        %v5436 = vmul.f32 %v5421, 0.70710677
        %v5437 = vmul.f32 %v5398, 0.70710677
        %v5438 = vmul.f32 %v5424, 0.70710677
        %v5439 = vmul.f32 %v5401, 0.70710677
        %v5440 = vmul.f32 %v5427, 0.70710677
        %v5441 = vmul.f32 %v5435, %v5435
        %v5442 = vmin.f32 16.0, %v5441
        %v5443 = vmul.f32 %v5442, 2.1237322e-06
        %v5444 = vadd.f32 %v5443, 0.00028619796
        %v5445 = vmul.f32 %v5442, %v5444
        %v5446 = vadd.f32 %v5445, 0.0036580483
        %v5447 = vmul.f32 %v5442, %v5446
        %v5448 = vadd.f32 %v5447, 0.05243302
        %v5449 = vmul.f32 %v5442, %v5448
        %v5450 = vadd.f32 %v5449, 0.18741608
        %v5451 = vmul.f32 %v5442, %v5450
        %v5452 = vadd.f32 %v5451, 1.1283791
        %v5453 = vmul.f32 %v5435, %v5452
        %v5454 = vmul.f32 %v5442, 3.8918573e-05
        %v5455 = vadd.f32 %v5454, 0.001143296
        %v5456 = vmul.f32 %v5442, %v5455
        %v5457 = vadd.f32 %v5456, 0.014752088
        %v5458 = vmul.f32 %v5442, %v5457
        %v5459 = vadd.f32 %v5458, 0.112945676
        %v5460 = vmul.f32 %v5442, %v5459
        %v5461 = vadd.f32 %v5460, 0.4994258
        %v5462 = vmul.f32 %v5442, %v5461
        %v5463 = vadd.f32 %v5462, 1.0
        %v5464 = vrcp.pop %v5463
        %v5465 = vmul.f32 %v5463, %v5464
        %v5466 = vsub.f32 1.0, %v5465
        %v5467 = vmul.f32 %v5464, %v5466
        %v5468 = vadd.f32 %v5464, %v5467
        %vm5469 = vweird.f32 %v5463
        %vm5470 = vweird.f32 %v5464
        %vm5471 = vmor %vm5469, %vm5470
        %v5472 = vsel %vm5471, %v5464, %v5468
        %v5473 = vand.u32 2147483647, %v5463
        %vm5474 = vcmp.eq.f32.partialorder %v5473, 8.507059e+37
        %v5475 = vand.u32 %v5463, 2147483648
        %v5476 = vor.u32 1.1754944e-38, %v5475
        %v5477 = vsel %vm5474, %v5476, %v5472
        %v5478 = vmul.f32 %v5453, %v5477
        %v5479 = vmin.f32 %v5478, 1.0
        %v5480 = vmax.f32 %v5479, -1.0
        %v5481 = vmul.f32 %v5436, %v5436
        %v5482 = vmin.f32 16.0, %v5481
        %v5483 = vmul.f32 %v5482, 2.1237322e-06
        %v5484 = vadd.f32 %v5483, 0.00028619796
        %v5485 = vmul.f32 %v5482, %v5484
        %v5486 = vadd.f32 %v5485, 0.0036580483
        %v5487 = vmul.f32 %v5482, %v5486
        %v5488 = vadd.f32 %v5487, 0.05243302
        %v5489 = vmul.f32 %v5482, %v5488
        %v5490 = vadd.f32 %v5489, 0.18741608
        %v5491 = vmul.f32 %v5482, %v5490
        %v5492 = vadd.f32 %v5491, 1.1283791
        %v5493 = vmul.f32 %v5436, %v5492
        %v5494 = vmul.f32 %v5482, 3.8918573e-05
        %v5495 = vadd.f32 %v5494, 0.001143296
        %v5496 = vmul.f32 %v5482, %v5495
        %v5497 = vadd.f32 %v5496, 0.014752088
        %v5498 = vmul.f32 %v5482, %v5497
        %v5499 = vadd.f32 %v5498, 0.112945676
        %v5500 = vmul.f32 %v5482, %v5499
        %v5501 = vadd.f32 %v5500, 0.4994258
        %v5502 = vmul.f32 %v5482, %v5501
        %v5503 = vadd.f32 %v5502, 1.0
        %v5504 = vrcp.pop %v5503
        %v5505 = vmul.f32 %v5503, %v5504
        %v5506 = vsub.f32 1.0, %v5505
        %v5507 = vmul.f32 %v5504, %v5506
        %v5508 = vadd.f32 %v5504, %v5507
        %vm5509 = vweird.f32 %v5503
        %vm5510 = vweird.f32 %v5504
        %vm5511 = vmor %vm5509, %vm5510
        %v5512 = vsel %vm5511, %v5504, %v5508
        %v5513 = vand.u32 2147483647, %v5503
        %vm5514 = vcmp.eq.f32.partialorder %v5513, 8.507059e+37
        %v5515 = vand.u32 %v5503, 2147483648
        %v5516 = vor.u32 1.1754944e-38, %v5515
        %v5517 = vsel %vm5514, %v5516, %v5512
        %v5518 = vmul.f32 %v5493, %v5517
        %v5519 = vmin.f32 %v5518, 1.0
        %v5520 = vmax.f32 %v5519, -1.0
        %v5521 = vmul.f32 %v5437, %v5437
        %v5522 = vmin.f32 16.0, %v5521
        %v5523 = vmul.f32 %v5522, 2.1237322e-06
        %v5524 = vadd.f32 %v5523, 0.00028619796
        %v5525 = vmul.f32 %v5522, %v5524
        %v5526 = vadd.f32 %v5525, 0.0036580483
        %v5527 = vmul.f32 %v5522, %v5526
        %v5528 = vadd.f32 %v5527, 0.05243302
        %v5529 = vmul.f32 %v5522, %v5528
        %v5530 = vadd.f32 %v5529, 0.18741608
        %v5531 = vmul.f32 %v5522, %v5530
        %v5532 = vadd.f32 %v5531, 1.1283791
        %v5533 = vmul.f32 %v5437, %v5532
        %v5534 = vmul.f32 %v5522, 3.8918573e-05
        %v5535 = vadd.f32 %v5534, 0.001143296
        %v5536 = vmul.f32 %v5522, %v5535
        %v5537 = vadd.f32 %v5536, 0.014752088
        %v5538 = vmul.f32 %v5522, %v5537
        %v5539 = vadd.f32 %v5538, 0.112945676
        %v5540 = vmul.f32 %v5522, %v5539
        %v5541 = vadd.f32 %v5540, 0.4994258
        %v5542 = vmul.f32 %v5522, %v5541
        %v5543 = vadd.f32 %v5542, 1.0
        %v5544 = vrcp.pop %v5543
        %v5545 = vmul.f32 %v5543, %v5544
        %v5546 = vsub.f32 1.0, %v5545
        %v5547 = vmul.f32 %v5544, %v5546
        %v5548 = vadd.f32 %v5544, %v5547
        %vm5549 = vweird.f32 %v5543
        %vm5550 = vweird.f32 %v5544
        %vm5551 = vmor %vm5549, %vm5550
        %v5552 = vsel %vm5551, %v5544, %v5548
        %v5553 = vand.u32 2147483647, %v5543
        %vm5554 = vcmp.eq.f32.partialorder %v5553, 8.507059e+37
        %v5555 = vand.u32 %v5543, 2147483648
        %v5556 = vor.u32 1.1754944e-38, %v5555
        %v5557 = vsel %vm5554, %v5556, %v5552
        %v5558 = vmul.f32 %v5533, %v5557
        %v5559 = vmin.f32 %v5558, 1.0
        %v5560 = vmax.f32 %v5559, -1.0
        %v5561 = vmul.f32 %v5438, %v5438
        %v5562 = vmin.f32 16.0, %v5561
        %v5563 = vmul.f32 %v5562, 2.1237322e-06
        %v5564 = vadd.f32 %v5563, 0.00028619796
        %v5565 = vmul.f32 %v5562, %v5564
        %v5566 = vadd.f32 %v5565, 0.0036580483
        %v5567 = vmul.f32 %v5562, %v5566
        %v5568 = vadd.f32 %v5567, 0.05243302
        %v5569 = vmul.f32 %v5562, %v5568
        %v5570 = vadd.f32 %v5569, 0.18741608
        %v5571 = vmul.f32 %v5562, %v5570
        %v5572 = vadd.f32 %v5571, 1.1283791
        %v5573 = vmul.f32 %v5438, %v5572
        %v5574 = vmul.f32 %v5562, 3.8918573e-05
        %v5575 = vadd.f32 %v5574, 0.001143296
        %v5576 = vmul.f32 %v5562, %v5575
        %v5577 = vadd.f32 %v5576, 0.014752088
        %v5578 = vmul.f32 %v5562, %v5577
        %v5579 = vadd.f32 %v5578, 0.112945676
        %v5580 = vmul.f32 %v5562, %v5579
        %v5581 = vadd.f32 %v5580, 0.4994258
        %v5582 = vmul.f32 %v5562, %v5581
        %v5583 = vadd.f32 %v5582, 1.0
        %v5584 = vrcp.pop %v5583
        %v5585 = vmul.f32 %v5583, %v5584
        %v5586 = vsub.f32 1.0, %v5585
        %v5587 = vmul.f32 %v5584, %v5586
        %v5588 = vadd.f32 %v5584, %v5587
        %vm5589 = vweird.f32 %v5583
        %vm5590 = vweird.f32 %v5584
        %vm5591 = vmor %vm5589, %vm5590
        %v5592 = vsel %vm5591, %v5584, %v5588
        %v5593 = vand.u32 2147483647, %v5583
        %vm5594 = vcmp.eq.f32.partialorder %v5593, 8.507059e+37
        %v5595 = vand.u32 %v5583, 2147483648
        %v5596 = vor.u32 1.1754944e-38, %v5595
        %v5597 = vsel %vm5594, %v5596, %v5592
        %v5598 = vmul.f32 %v5573, %v5597
        %v5599 = vmin.f32 %v5598, 1.0
        %v5600 = vmax.f32 %v5599, -1.0
        %v5601 = vmul.f32 %v5439, %v5439
        %v5602 = vmin.f32 16.0, %v5601
        %v5603 = vmul.f32 %v5602, 2.1237322e-06
        %v5604 = vadd.f32 %v5603, 0.00028619796
        %v5605 = vmul.f32 %v5602, %v5604
        %v5606 = vadd.f32 %v5605, 0.0036580483
        %v5607 = vmul.f32 %v5602, %v5606
        %v5608 = vadd.f32 %v5607, 0.05243302
        %v5609 = vmul.f32 %v5602, %v5608
        %v5610 = vadd.f32 %v5609, 0.18741608
        %v5611 = vmul.f32 %v5602, %v5610
        %v5612 = vadd.f32 %v5611, 1.1283791
        %v5613 = vmul.f32 %v5439, %v5612
        %v5614 = vmul.f32 %v5602, 3.8918573e-05
        %v5615 = vadd.f32 %v5614, 0.001143296
        %v5616 = vmul.f32 %v5602, %v5615
        %v5617 = vadd.f32 %v5616, 0.014752088
        %v5618 = vmul.f32 %v5602, %v5617
        %v5619 = vadd.f32 %v5618, 0.112945676
        %v5620 = vmul.f32 %v5602, %v5619
        %v5621 = vadd.f32 %v5620, 0.4994258
        %v5622 = vmul.f32 %v5602, %v5621
        %v5623 = vadd.f32 %v5622, 1.0
        %v5624 = vrcp.pop %v5623
        %v5625 = vmul.f32 %v5623, %v5624
        %v5626 = vsub.f32 1.0, %v5625
        %v5627 = vmul.f32 %v5624, %v5626
        %v5628 = vadd.f32 %v5624, %v5627
        %vm5629 = vweird.f32 %v5623
        %vm5630 = vweird.f32 %v5624
        %vm5631 = vmor %vm5629, %vm5630
        %v5632 = vsel %vm5631, %v5624, %v5628
        %v5633 = vand.u32 2147483647, %v5623
        %vm5634 = vcmp.eq.f32.partialorder %v5633, 8.507059e+37
        %v5635 = vand.u32 %v5623, 2147483648
        %v5636 = vor.u32 1.1754944e-38, %v5635
        %v5637 = vsel %vm5634, %v5636, %v5632
        %v5638 = vmul.f32 %v5613, %v5637
        %v5639 = vmin.f32 %v5638, 1.0
        %v5640 = vmax.f32 %v5639, -1.0
        %v5641 = vmul.f32 %v5440, %v5440
        %v5642 = vmin.f32 16.0, %v5641
        %v5643 = vmul.f32 %v5642, 2.1237322e-06
        %v5644 = vadd.f32 %v5643, 0.00028619796
        %v5645 = vmul.f32 %v5642, %v5644
        %v5646 = vadd.f32 %v5645, 0.0036580483
        %v5647 = vmul.f32 %v5642, %v5646
        %v5648 = vadd.f32 %v5647, 0.05243302
        %v5649 = vmul.f32 %v5642, %v5648
        %v5650 = vadd.f32 %v5649, 0.18741608
        %v5651 = vmul.f32 %v5642, %v5650
        %v5652 = vadd.f32 %v5651, 1.1283791
        %v5653 = vmul.f32 %v5440, %v5652
        %v5654 = vmul.f32 %v5642, 3.8918573e-05
        %v5655 = vadd.f32 %v5654, 0.001143296
        %v5656 = vmul.f32 %v5642, %v5655
        %v5657 = vadd.f32 %v5656, 0.014752088
        %v5658 = vmul.f32 %v5642, %v5657
        %v5659 = vadd.f32 %v5658, 0.112945676
        %v5660 = vmul.f32 %v5642, %v5659
        %v5661 = vadd.f32 %v5660, 0.4994258
        %v5662 = vmul.f32 %v5642, %v5661
        %v5663 = vadd.f32 %v5662, 1.0
        %v5664 = vrcp.pop %v5663
        %v5665 = vmul.f32 %v5663, %v5664
        %v5666 = vsub.f32 1.0, %v5665
        %v5667 = vmul.f32 %v5664, %v5666
        %v5668 = vadd.f32 %v5664, %v5667
        %vm5669 = vweird.f32 %v5663
        %vm5670 = vweird.f32 %v5664
        %vm5671 = vmor %vm5669, %vm5670
        %v5672 = vsel %vm5671, %v5664, %v5668
        %v5673 = vand.u32 2147483647, %v5663
        %vm5674 = vcmp.eq.f32.partialorder %v5673, 8.507059e+37
        %v5675 = vand.u32 %v5663, 2147483648
        %v5676 = vor.u32 1.1754944e-38, %v5675
        %v5677 = vsel %vm5674, %v5676, %v5672
        %v5678 = vmul.f32 %v5653, %v5677
        %v5679 = vmin.f32 %v5678, 1.0
        %v5680 = vmax.f32 %v5679, -1.0
        %v5681 = vadd.f32 %v5480, 1.0
        %v5682 = vadd.f32 %v5520, 1.0
        %v5683 = vadd.f32 %v5560, 1.0
        %v5684 = vadd.f32 %v5600, 1.0
        %v5685 = vadd.f32 %v5640, 1.0
        %v5686 = vadd.f32 %v5680, 1.0
        %v5687 = vmul.f32 %v5429, %v5681
        %v5688 = vmul.f32 %v5430, %v5682
        %v5689 = vmul.f32 %v5431, %v5683
        %v5690 = vmul.f32 %v5432, %v5684
        %v5691 = vmul.f32 %v5433, %v5685
        %v5692 = vmul.f32 %v5434, %v5686
        %v5693 = vld [vmem:[%s7] sm:$0x3]
        %v5694 = vld [vmem:[%s8] sm:$0x3]
        %5696 = vset.pattern.permute.xlu0 0
        %5697 = vperm.xlu0 %5696, %v5694
        %v5698 = vpop.permute.xlu0 %5697
        %vm5700 = vcmask 187392
        %v5702 = vsel %vm5700, %v5693, 0
        %vm5704 = vcmask 1046528
        %v5706 = vsel %vm5704, %v5691, 0
        %v5709 = vsel %vm5704, %v5692, 0
        %5711 = vmatpush.msra.mxu0 0.0
        %5712 = vmatpush.msra.mxu0 0.0
        %5713 = vmatpush.msra.mxu0 0.0
        %5714 = vmatpush.msra.mxu0 0.0
        %5715 = vmatpush.msra.mxu0 0.0
        %5716 = vmatpush.msra.mxu0 0.0
        %5717 = vmatpush.msra.mxu0 0.0
        %5718 = vmatpush.msra.mxu0 0.0
        %5719 = vmatpush.msra.mxu0 0.0
        %5720 = vmatpush.msra.mxu0 0.0
        %5721 = vmatpush.msra.mxu0 0.0
        %5722 = vmatpush.msra.mxu0 0.0
        %5723 = vmatpush.msra.mxu0 0.0
        %5724 = vmatpush.msra.mxu0 %v5706
        %5725 = vmatpush.msra.mxu0 %v5689
        %5726 = vmatpush.msra.mxu0 %v5687
        %5727 = vmatmul.f32.gmra.mxu0 %v5702
        %v5728 = vpop.f32.mrf.mxu0
        %v5729 = vadd.f32 %v5698, %v5728
        %5730 = vdwg.mxu0
        %5731 = vmatpush.msra.mxu0 0.0
        %5732 = vmatpush.msra.mxu0 0.0
        %5733 = vmatpush.msra.mxu0 0.0
        %5734 = vmatpush.msra.mxu0 0.0
        %5735 = vmatpush.msra.mxu0 0.0
        %5736 = vmatpush.msra.mxu0 0.0
        %5737 = vmatpush.msra.mxu0 0.0
        %5738 = vmatpush.msra.mxu0 0.0
        %5739 = vmatpush.msra.mxu0 0.0
        %5740 = vmatpush.msra.mxu0 0.0
        %5741 = vmatpush.msra.mxu0 0.0
        %5742 = vmatpush.msra.mxu0 0.0
        %5743 = vmatpush.msra.mxu0 0.0
        %5744 = vmatpush.msra.mxu0 %v5709
        %5745 = vmatpush.msra.mxu0 %v5690
        %5746 = vmatpush.msra.mxu0 %v5688
        %5747 = vmatmul.f32.gmra.mxu0 %v5702
        %v5748 = vpop.f32.mrf.mxu0
        %v5749 = vadd.f32 %v5698, %v5748
        %5750 = vdwg.mxu0
        %v5751 = vmul.f32 %v5729, 0.5
        %v5752 = vmul.f32 %v5749, 0.5
        %v5753 = vmul.f32 %v5729, 0.70710677
        %v5754 = vmul.f32 %v5749, 0.70710677
        %v5755 = vmul.f32 %v5753, %v5753
        %v5756 = vmin.f32 16.0, %v5755
        %v5757 = vmul.f32 %v5756, 2.1237322e-06
        %v5758 = vadd.f32 %v5757, 0.00028619796
        %v5759 = vmul.f32 %v5756, %v5758
        %v5760 = vadd.f32 %v5759, 0.0036580483
        %v5761 = vmul.f32 %v5756, %v5760
        %v5762 = vadd.f32 %v5761, 0.05243302
        %v5763 = vmul.f32 %v5756, %v5762
        %v5764 = vadd.f32 %v5763, 0.18741608
        %v5765 = vmul.f32 %v5756, %v5764
        %v5766 = vadd.f32 %v5765, 1.1283791
        %v5767 = vmul.f32 %v5753, %v5766
        %v5768 = vmul.f32 %v5756, 3.8918573e-05
        %v5769 = vadd.f32 %v5768, 0.001143296
        %v5770 = vmul.f32 %v5756, %v5769
        %v5771 = vadd.f32 %v5770, 0.014752088
        %v5772 = vmul.f32 %v5756, %v5771
        %v5773 = vadd.f32 %v5772, 0.112945676
        %v5774 = vmul.f32 %v5756, %v5773
        %v5775 = vadd.f32 %v5774, 0.4994258
        %v5776 = vmul.f32 %v5756, %v5775
        %v5777 = vadd.f32 %v5776, 1.0
        %v5778 = vrcp.pop %v5777
        %v5779 = vmul.f32 %v5777, %v5778
        %v5780 = vsub.f32 1.0, %v5779
        %v5781 = vmul.f32 %v5778, %v5780
        %v5782 = vadd.f32 %v5778, %v5781
        %vm5783 = vweird.f32 %v5777
        %vm5784 = vweird.f32 %v5778
        %vm5785 = vmor %vm5783, %vm5784
        %v5786 = vsel %vm5785, %v5778, %v5782
        %v5787 = vand.u32 2147483647, %v5777
        %vm5788 = vcmp.eq.f32.partialorder %v5787, 8.507059e+37
        %v5789 = vand.u32 %v5777, 2147483648
        %v5790 = vor.u32 1.1754944e-38, %v5789
        %v5791 = vsel %vm5788, %v5790, %v5786
        %v5792 = vmul.f32 %v5767, %v5791
        %v5793 = vmin.f32 %v5792, 1.0
        %v5794 = vmax.f32 %v5793, -1.0
        %v5795 = vmul.f32 %v5754, %v5754
        %v5796 = vmin.f32 16.0, %v5795
        %v5797 = vmul.f32 %v5796, 2.1237322e-06
        %v5798 = vadd.f32 %v5797, 0.00028619796
        %v5799 = vmul.f32 %v5796, %v5798
        %v5800 = vadd.f32 %v5799, 0.0036580483
        %v5801 = vmul.f32 %v5796, %v5800
        %v5802 = vadd.f32 %v5801, 0.05243302
        %v5803 = vmul.f32 %v5796, %v5802
        %v5804 = vadd.f32 %v5803, 0.18741608
        %v5805 = vmul.f32 %v5796, %v5804
        %v5806 = vadd.f32 %v5805, 1.1283791
        %v5807 = vmul.f32 %v5754, %v5806
        %v5808 = vmul.f32 %v5796, 3.8918573e-05
        %v5809 = vadd.f32 %v5808, 0.001143296
        %v5810 = vmul.f32 %v5796, %v5809
        %v5811 = vadd.f32 %v5810, 0.014752088
        %v5812 = vmul.f32 %v5796, %v5811
        %v5813 = vadd.f32 %v5812, 0.112945676
        %v5814 = vmul.f32 %v5796, %v5813
        %v5815 = vadd.f32 %v5814, 0.4994258
        %v5816 = vmul.f32 %v5796, %v5815
        %v5817 = vadd.f32 %v5816, 1.0
        %v5818 = vrcp.pop %v5817
        %v5819 = vmul.f32 %v5817, %v5818
        %v5820 = vsub.f32 1.0, %v5819
        %v5821 = vmul.f32 %v5818, %v5820
        %v5822 = vadd.f32 %v5818, %v5821
        %vm5823 = vweird.f32 %v5817
        %vm5824 = vweird.f32 %v5818
        %vm5825 = vmor %vm5823, %vm5824
        %v5826 = vsel %vm5825, %v5818, %v5822
        %v5827 = vand.u32 2147483647, %v5817
        %vm5828 = vcmp.eq.f32.partialorder %v5827, 8.507059e+37
        %v5829 = vand.u32 %v5817, 2147483648
        %v5830 = vor.u32 1.1754944e-38, %v5829
        %v5831 = vsel %vm5828, %v5830, %v5826
        %v5832 = vmul.f32 %v5807, %v5831
        %v5833 = vmin.f32 %v5832, 1.0
        %v5834 = vmax.f32 %v5833, -1.0
        %v5835 = vadd.f32 %v5794, 1.0
        %v5836 = vadd.f32 %v5834, 1.0
        %v5837 = vmul.f32 %v5751, %v5835
        %v5838 = vmul.f32 %v5752, %v5836
        %v5839 = vand.u32 2147483647, %v5837
        %v5840 = vand.u32 2147483647, %v5838
        %v5843 = vrot.slane %v5840, 6
        %v5844 = vsel %vm676, %v5839, %v5843
        %5846 = vst [vmem:[#allocation3] sm:$0xf] %v5844
        %5847 = vst [vmem:[#allocation3 + $0x4] sm:$0x3] 0.0
        %v5848 = vld [vmem:[%s9] sm:$0xff]
        %v5849 = vld [vmem:[%s9 + $0x8] sm:$0xff]
        %v5850 = vld [vmem:[%s9 + $0x10] sm:$0xff]
        %v5851 = vld [vmem:[%s9 + $0x18] sm:$0xff]
        %v5852 = vld [vmem:[%s9 + $0x20] sm:$0x1f]
        %v5853 = vld [vmem:[#allocation3] sm:$0xf]
        %s5854 = scalar_lea.vmem %s9, 40
        %v5855 = vld [vmem:[%s5854] sm:$0xff]
        %v5856 = vld [vmem:[%s5854 + $0x8] sm:$0xff]
        %v5857 = vld [vmem:[%s5854 + $0x10] sm:$0xff]
        %v5858 = vld [vmem:[%s5854 + $0x18] sm:$0xff]
        %v5859 = vld [vmem:[%s5854 + $0x20] sm:$0x1f]
        %v5860 = vld [vmem:[#allocation3] sm:$0x3f]
        %5862 = vst [vmem:[#allocation1] ss:$4 sm:$0xff] %v5860
        %v5863 = vld.sshfl [vmem:[#allocation1] sm:$0xff pattern:$0x73625140]
        %v5864 = vld.sshfl [vmem:[#allocation1 + $0x8] sm:$0xff pattern:$0x73625140]
        %v5865 = vld.sshfl [vmem:[#allocation1 + $0x10] sm:$0xff pattern:$0x73625140]
        %5866 = vrot.lane.b32.xlu0 %v5863, 127
        %v5867 = vpop.permute.xlu0 %5866
        %5868 = vrot.lane.b32.xlu0 %v5864, 127
        %v5869 = vpop.permute.xlu0 %5868
        %5870 = vrot.lane.b32.xlu0 %v5865, 127
        %v5871 = vpop.permute.xlu0 %5870
        %v5872 = vsel %vm3213, %v5867, %v5869
        %v5873 = vsel %vm3213, %v5869, %v5871
        %v5875 = vsel %vm660, %v5855, 0
        %v5878 = vsel %vm660, %v5856, 0
        %v5881 = vsel %vm660, %v5857, 0
        %v5884 = vsel %vm660, %v5858, 0
        %v5887 = vsel %vm660, %v5859, 0
        %v5889 = vsel %vm676, %v5872, 0
        %v5891 = vsel %vm676, %v5873, 0
        %5893 = vmatpush.msra.mxu0 0.0
        %5894 = vmatpush.msra.mxu0 0.0
        %5895 = vmatpush.msra.mxu0 0.0
        %5896 = vmatpush.msra.mxu0 0.0
        %5897 = vmatpush.msra.mxu0 0.0
        %5898 = vmatpush.msra.mxu0 0.0
        %5899 = vmatpush.msra.mxu0 0.0
        %5900 = vmatpush.msra.mxu0 0.0
        %5901 = vmatpush.msra.mxu0 0.0
        %5902 = vmatpush.msra.mxu0 0.0
        %5903 = vmatpush.msra.mxu0 0.0
        %5904 = vmatpush.msra.mxu0 0.0
        %5905 = vmatpush.msra.mxu0 0.0
        %5906 = vmatpush.msra.mxu0 0.0
        %5907 = vmatpush.msra.mxu0 0.0
        %5908 = vmatpush.msra.mxu0 %v5889
        %5909 = vmatmul.f32.gmra.mxu0 %v5875
        %v5910 = vpop.f32.mrf.mxu0
        %v5911 = vadd.f32 0.0, %v5910
        %5912 = vmatmul.f32.gmra.mxu0 %v5878
        %v5913 = vpop.f32.mrf.mxu0
        %v5914 = vadd.f32 0.0, %v5913
        %5915 = vmatmul.f32.gmra.mxu0 %v5881
        %v5916 = vpop.f32.mrf.mxu0
        %v5917 = vadd.f32 0.0, %v5916
        %5918 = vmatmul.f32.gmra.mxu0 %v5884
        %v5919 = vpop.f32.mrf.mxu0
        %v5920 = vadd.f32 0.0, %v5919
        %5921 = vmatmul.f32.gmra.mxu0 %v5887
        %v5922 = vpop.f32.mrf.mxu0
        %v5923 = vadd.f32 0.0, %v5922
        %5924 = vdwg.mxu0
        %5925 = vmatpush.msra.mxu0 0.0
        %5926 = vmatpush.msra.mxu0 0.0
        %5927 = vmatpush.msra.mxu0 0.0
        %5928 = vmatpush.msra.mxu0 0.0
        %5929 = vmatpush.msra.mxu0 0.0
        %5930 = vmatpush.msra.mxu0 0.0
        %5931 = vmatpush.msra.mxu0 0.0
        %5932 = vmatpush.msra.mxu0 0.0
        %5933 = vmatpush.msra.mxu0 0.0
        %5934 = vmatpush.msra.mxu0 0.0
        %5935 = vmatpush.msra.mxu0 0.0
        %5936 = vmatpush.msra.mxu0 0.0
        %5937 = vmatpush.msra.mxu0 0.0
        %5938 = vmatpush.msra.mxu0 0.0
        %5939 = vmatpush.msra.mxu0 0.0
        %5940 = vmatpush.msra.mxu0 %v5891
        %5941 = vmatmul.f32.gmra.mxu0 %v5875
        %v5942 = vpop.f32.mrf.mxu0
        %v5943 = vadd.f32 0.0, %v5942
        %5944 = vmatmul.f32.gmra.mxu0 %v5878
        %v5945 = vpop.f32.mrf.mxu0
        %v5946 = vadd.f32 0.0, %v5945
        %5947 = vmatmul.f32.gmra.mxu0 %v5881
        %v5948 = vpop.f32.mrf.mxu0
        %v5949 = vadd.f32 0.0, %v5948
        %5950 = vmatmul.f32.gmra.mxu0 %v5884
        %v5951 = vpop.f32.mrf.mxu0
        %v5952 = vadd.f32 0.0, %v5951
        %5953 = vmatmul.f32.gmra.mxu0 %v5887
        %v5954 = vpop.f32.mrf.mxu0
        %v5955 = vadd.f32 0.0, %v5954
        %5956 = vdwg.mxu0
        %5958 = vst [vmem:[#allocation1] ss:$4 sm:$0xff] %v5853
        %v5959 = vld.sshfl [vmem:[#allocation1] sm:$0xff pattern:$0x73625140]
        %v5960 = vld.sshfl [vmem:[#allocation1 + $0x8] sm:$0xff pattern:$0x73625140]
        %v5962 = vsel %vm660, %v5848, 0
        %v5965 = vsel %vm660, %v5849, 0
        %v5968 = vsel %vm660, %v5850, 0
        %v5971 = vsel %vm660, %v5851, 0
        %v5974 = vsel %vm660, %v5852, 0
        %v5976 = vsel %vm676, %v5959, 0
        %v5978 = vsel %vm676, %v5960, 0
        %5980 = vmatpush.msra.mxu0 0.0
        %5981 = vmatpush.msra.mxu0 0.0
        %5982 = vmatpush.msra.mxu0 0.0
        %5983 = vmatpush.msra.mxu0 0.0
        %5984 = vmatpush.msra.mxu0 0.0
        %5985 = vmatpush.msra.mxu0 0.0
        %5986 = vmatpush.msra.mxu0 0.0
        %5987 = vmatpush.msra.mxu0 0.0
        %5988 = vmatpush.msra.mxu0 0.0
        %5989 = vmatpush.msra.mxu0 0.0
        %5990 = vmatpush.msra.mxu0 0.0
        %5991 = vmatpush.msra.mxu0 0.0
        %5992 = vmatpush.msra.mxu0 0.0
        %5993 = vmatpush.msra.mxu0 0.0
        %5994 = vmatpush.msra.mxu0 0.0
        %5995 = vmatpush.msra.mxu0 %v5976
        %5996 = vmatmul.f32.gmra.mxu0 %v5962
        %v5997 = vpop.f32.mrf.mxu0
        %v5998 = vadd.f32 %v5911, %v5997
        %5999 = vmatmul.f32.gmra.mxu0 %v5965
        %v6000 = vpop.f32.mrf.mxu0
        %v6001 = vadd.f32 %v5914, %v6000
        %6002 = vmatmul.f32.gmra.mxu0 %v5968
        %v6003 = vpop.f32.mrf.mxu0
        %v6004 = vadd.f32 %v5917, %v6003
        %6005 = vmatmul.f32.gmra.mxu0 %v5971
        %v6006 = vpop.f32.mrf.mxu0
        %v6007 = vadd.f32 %v5920, %v6006
        %6008 = vmatmul.f32.gmra.mxu0 %v5974
        %v6009 = vpop.f32.mrf.mxu0
        %v6010 = vadd.f32 %v5923, %v6009
        %6011 = vdwg.mxu0
        %6012 = vmatpush.msra.mxu0 0.0
        %6013 = vmatpush.msra.mxu0 0.0
        %6014 = vmatpush.msra.mxu0 0.0
        %6015 = vmatpush.msra.mxu0 0.0
        %6016 = vmatpush.msra.mxu0 0.0
        %6017 = vmatpush.msra.mxu0 0.0
        %6018 = vmatpush.msra.mxu0 0.0
        %6019 = vmatpush.msra.mxu0 0.0
        %6020 = vmatpush.msra.mxu0 0.0
        %6021 = vmatpush.msra.mxu0 0.0
        %6022 = vmatpush.msra.mxu0 0.0
        %6023 = vmatpush.msra.mxu0 0.0
        %6024 = vmatpush.msra.mxu0 0.0
        %6025 = vmatpush.msra.mxu0 0.0
        %6026 = vmatpush.msra.mxu0 0.0
        %6027 = vmatpush.msra.mxu0 %v5978
        %6028 = vmatmul.f32.gmra.mxu0 %v5962
        %v6029 = vpop.f32.mrf.mxu0
        %v6030 = vadd.f32 %v5943, %v6029
        %6031 = vmatmul.f32.gmra.mxu0 %v5965
        %v6032 = vpop.f32.mrf.mxu0
        %v6033 = vadd.f32 %v5946, %v6032
        %6034 = vmatmul.f32.gmra.mxu0 %v5968
        %v6035 = vpop.f32.mrf.mxu0
        %v6036 = vadd.f32 %v5949, %v6035
        %6037 = vmatmul.f32.gmra.mxu0 %v5971
        %v6038 = vpop.f32.mrf.mxu0
        %v6039 = vadd.f32 %v5952, %v6038
        %6040 = vmatmul.f32.gmra.mxu0 %v5974
        %v6041 = vpop.f32.mrf.mxu0
        %v6042 = vadd.f32 %v5955, %v6041
        %6043 = vdwg.mxu0
        %s6044 = scalar_lea.vmem %s9, 80
        %v6045 = vld [vmem:[%s6044] sm:$0xff]
        %v6046 = vld [vmem:[%s6044 + $0x8] sm:$0xff]
        %v6047 = vld [vmem:[%s6044 + $0x10] sm:$0xff]
        %v6048 = vld [vmem:[%s6044 + $0x18] sm:$0xff]
        %v6049 = vld [vmem:[%s6044 + $0x20] sm:$0x1f]
        %v6050 = vld [vmem:[#allocation3] sm:$0x3f]
        %6052 = vst [vmem:[#allocation1] ss:$4 sm:$0xff] %v6050
        %v6053 = vld.sshfl [vmem:[#allocation1] sm:$0xff pattern:$0x73625140]
        %v6054 = vld.sshfl [vmem:[#allocation1 + $0x8] sm:$0xff pattern:$0x73625140]
        %v6055 = vld.sshfl [vmem:[#allocation1 + $0x10] sm:$0xff pattern:$0x73625140]
        %6056 = vrot.lane.b32.xlu0 %v6053, 112
        %v6057 = vpop.permute.xlu0 %6056
        %6058 = vrot.lane.b32.xlu0 %v6054, 112
        %v6059 = vpop.permute.xlu0 %6058
        %6060 = vrot.lane.b32.xlu0 %v6055, 112
        %v6061 = vpop.permute.xlu0 %6060
        %v6062 = vsel %vm3818, %v6057, %v6059
        %v6063 = vsel %vm3818, %v6059, %v6061
        %v6065 = vsel %vm660, %v6045, 0
        %v6068 = vsel %vm660, %v6046, 0
        %v6071 = vsel %vm660, %v6047, 0
        %v6074 = vsel %vm660, %v6048, 0
        %v6077 = vsel %vm660, %v6049, 0
        %v6079 = vsel %vm676, %v6062, 0
        %v6081 = vsel %vm676, %v6063, 0
        %6083 = vmatpush.msra.mxu0 0.0
        %6084 = vmatpush.msra.mxu0 0.0
        %6085 = vmatpush.msra.mxu0 0.0
        %6086 = vmatpush.msra.mxu0 0.0
        %6087 = vmatpush.msra.mxu0 0.0
        %6088 = vmatpush.msra.mxu0 0.0
        %6089 = vmatpush.msra.mxu0 0.0
        %6090 = vmatpush.msra.mxu0 0.0
        %6091 = vmatpush.msra.mxu0 0.0
        %6092 = vmatpush.msra.mxu0 0.0
        %6093 = vmatpush.msra.mxu0 0.0
        %6094 = vmatpush.msra.mxu0 0.0
        %6095 = vmatpush.msra.mxu0 0.0
        %6096 = vmatpush.msra.mxu0 0.0
        %6097 = vmatpush.msra.mxu0 0.0
        %6098 = vmatpush.msra.mxu0 %v6079
        %6099 = vmatmul.f32.gmra.mxu0 %v6065
        %v6100 = vpop.f32.mrf.mxu0
        %v6101 = vadd.f32 0.0, %v6100
        %6102 = vmatmul.f32.gmra.mxu0 %v6068
        %v6103 = vpop.f32.mrf.mxu0
        %v6104 = vadd.f32 0.0, %v6103
        %6105 = vmatmul.f32.gmra.mxu0 %v6071
        %v6106 = vpop.f32.mrf.mxu0
        %v6107 = vadd.f32 0.0, %v6106
        %6108 = vmatmul.f32.gmra.mxu0 %v6074
        %v6109 = vpop.f32.mrf.mxu0
        %v6110 = vadd.f32 0.0, %v6109
        %6111 = vmatmul.f32.gmra.mxu0 %v6077
        %v6112 = vpop.f32.mrf.mxu0
        %v6113 = vadd.f32 0.0, %v6112
        %6114 = vdwg.mxu0
        %6115 = vmatpush.msra.mxu0 0.0
        %6116 = vmatpush.msra.mxu0 0.0
        %6117 = vmatpush.msra.mxu0 0.0
        %6118 = vmatpush.msra.mxu0 0.0
        %6119 = vmatpush.msra.mxu0 0.0
        %6120 = vmatpush.msra.mxu0 0.0
        %6121 = vmatpush.msra.mxu0 0.0
        %6122 = vmatpush.msra.mxu0 0.0
        %6123 = vmatpush.msra.mxu0 0.0
        %6124 = vmatpush.msra.mxu0 0.0
        %6125 = vmatpush.msra.mxu0 0.0
        %6126 = vmatpush.msra.mxu0 0.0
        %6127 = vmatpush.msra.mxu0 0.0
        %6128 = vmatpush.msra.mxu0 0.0
        %6129 = vmatpush.msra.mxu0 0.0
        %6130 = vmatpush.msra.mxu0 %v6081
        %6131 = vmatmul.f32.gmra.mxu0 %v6065
        %v6132 = vpop.f32.mrf.mxu0
        %v6133 = vadd.f32 0.0, %v6132
        %6134 = vmatmul.f32.gmra.mxu0 %v6068
        %v6135 = vpop.f32.mrf.mxu0
        %v6136 = vadd.f32 0.0, %v6135
        %6137 = vmatmul.f32.gmra.mxu0 %v6071
        %v6138 = vpop.f32.mrf.mxu0
        %v6139 = vadd.f32 0.0, %v6138
        %6140 = vmatmul.f32.gmra.mxu0 %v6074
        %v6141 = vpop.f32.mrf.mxu0
        %v6142 = vadd.f32 0.0, %v6141
        %6143 = vmatmul.f32.gmra.mxu0 %v6077
        %v6144 = vpop.f32.mrf.mxu0
        %v6145 = vadd.f32 0.0, %v6144
        %6146 = vdwg.mxu0
        %v6147 = vadd.f32 %v5998, %v6101
        %v6148 = vadd.f32 %v6030, %v6133
        %v6149 = vadd.f32 %v6001, %v6104
        %v6150 = vadd.f32 %v6033, %v6136
        %v6151 = vadd.f32 %v6004, %v6107
        %v6152 = vadd.f32 %v6036, %v6139
        %v6153 = vadd.f32 %v6007, %v6110
        %v6154 = vadd.f32 %v6039, %v6142
        %v6155 = vadd.f32 %v6010, %v6113
        %v6156 = vadd.f32 %v6042, %v6145
        %s6157 = scalar_lea.vmem %s9, 120
        %v6158 = vld [vmem:[%s6157] sm:$0xff]
        %v6159 = vld [vmem:[%s6157 + $0x8] sm:$0xff]
        %v6160 = vld [vmem:[%s6157 + $0x10] sm:$0xff]
        %v6161 = vld [vmem:[%s6157 + $0x18] sm:$0xff]
        %v6162 = vld [vmem:[%s6157 + $0x20] sm:$0x1f]
        %v6163 = vld [vmem:[#allocation3] sm:$0x3f]
        %6165 = vst [vmem:[#allocation1] ss:$4 sm:$0xff] %v6163
        %v6166 = vld.sshfl [vmem:[#allocation1] sm:$0xff pattern:$0x73625140]
        %v6167 = vld.sshfl [vmem:[#allocation1 + $0x8] sm:$0xff pattern:$0x73625140]
        %v6168 = vld.sshfl [vmem:[#allocation1 + $0x10] sm:$0xff pattern:$0x73625140]
        %6169 = vrot.lane.b32.xlu0 %v6166, 111
        %v6170 = vpop.permute.xlu0 %6169
        %6171 = vrot.lane.b32.xlu0 %v6167, 111
        %v6172 = vpop.permute.xlu0 %6171
        %6173 = vrot.lane.b32.xlu0 %v6168, 111
        %v6174 = vpop.permute.xlu0 %6173
        %v6175 = vsel %vm3949, %v6170, %v6172
        %v6176 = vsel %vm3949, %v6172, %v6174
        %v6178 = vsel %vm660, %v6158, 0
        %v6181 = vsel %vm660, %v6159, 0
        %v6184 = vsel %vm660, %v6160, 0
        %v6187 = vsel %vm660, %v6161, 0
        %v6190 = vsel %vm660, %v6162, 0
        %v6192 = vsel %vm676, %v6175, 0
        %v6194 = vsel %vm676, %v6176, 0
        %6196 = vmatpush.msra.mxu0 0.0
        %6197 = vmatpush.msra.mxu0 0.0
        %6198 = vmatpush.msra.mxu0 0.0
        %6199 = vmatpush.msra.mxu0 0.0
        %6200 = vmatpush.msra.mxu0 0.0
        %6201 = vmatpush.msra.mxu0 0.0
        %6202 = vmatpush.msra.mxu0 0.0
        %6203 = vmatpush.msra.mxu0 0.0
        %6204 = vmatpush.msra.mxu0 0.0
        %6205 = vmatpush.msra.mxu0 0.0
        %6206 = vmatpush.msra.mxu0 0.0
        %6207 = vmatpush.msra.mxu0 0.0
        %6208 = vmatpush.msra.mxu0 0.0
        %6209 = vmatpush.msra.mxu0 0.0
        %6210 = vmatpush.msra.mxu0 0.0
        %6211 = vmatpush.msra.mxu0 %v6192
        %6212 = vmatmul.f32.gmra.mxu0 %v6178
        %v6213 = vpop.f32.mrf.mxu0
        %v6214 = vadd.f32 0.0, %v6213
        %6215 = vmatmul.f32.gmra.mxu0 %v6181
        %v6216 = vpop.f32.mrf.mxu0
        %v6217 = vadd.f32 0.0, %v6216
        %6218 = vmatmul.f32.gmra.mxu0 %v6184
        %v6219 = vpop.f32.mrf.mxu0
        %v6220 = vadd.f32 0.0, %v6219
        %6221 = vmatmul.f32.gmra.mxu0 %v6187
        %v6222 = vpop.f32.mrf.mxu0
        %v6223 = vadd.f32 0.0, %v6222
        %6224 = vmatmul.f32.gmra.mxu0 %v6190
        %v6225 = vpop.f32.mrf.mxu0
        %v6226 = vadd.f32 0.0, %v6225
        %6227 = vdwg.mxu0
        %6228 = vmatpush.msra.mxu0 0.0
        %6229 = vmatpush.msra.mxu0 0.0
        %6230 = vmatpush.msra.mxu0 0.0
        %6231 = vmatpush.msra.mxu0 0.0
        %6232 = vmatpush.msra.mxu0 0.0
        %6233 = vmatpush.msra.mxu0 0.0
        %6234 = vmatpush.msra.mxu0 0.0
        %6235 = vmatpush.msra.mxu0 0.0
        %6236 = vmatpush.msra.mxu0 0.0
        %6237 = vmatpush.msra.mxu0 0.0
        %6238 = vmatpush.msra.mxu0 0.0
        %6239 = vmatpush.msra.mxu0 0.0
        %6240 = vmatpush.msra.mxu0 0.0
        %6241 = vmatpush.msra.mxu0 0.0
        %6242 = vmatpush.msra.mxu0 0.0
        %6243 = vmatpush.msra.mxu0 %v6194
        %6244 = vmatmul.f32.gmra.mxu0 %v6178
        %v6245 = vpop.f32.mrf.mxu0
        %v6246 = vadd.f32 0.0, %v6245
        %6247 = vmatmul.f32.gmra.mxu0 %v6181
        %v6248 = vpop.f32.mrf.mxu0
        %v6249 = vadd.f32 0.0, %v6248
        %6250 = vmatmul.f32.gmra.mxu0 %v6184
        %v6251 = vpop.f32.mrf.mxu0
        %v6252 = vadd.f32 0.0, %v6251
        %6253 = vmatmul.f32.gmra.mxu0 %v6187
        %v6254 = vpop.f32.mrf.mxu0
        %v6255 = vadd.f32 0.0, %v6254
        %6256 = vmatmul.f32.gmra.mxu0 %v6190
        %v6257 = vpop.f32.mrf.mxu0
        %v6258 = vadd.f32 0.0, %v6257
        %6259 = vdwg.mxu0
        %v6260 = vadd.f32 %v6147, %v6214
        %v6261 = vadd.f32 %v6148, %v6246
        %v6262 = vadd.f32 %v6149, %v6217
        %v6263 = vadd.f32 %v6150, %v6249
        %v6264 = vadd.f32 %v6151, %v6220
        %v6265 = vadd.f32 %v6152, %v6252
        %v6266 = vadd.f32 %v6153, %v6223
        %v6267 = vadd.f32 %v6154, %v6255
        %v6268 = vadd.f32 %v6155, %v6226
        %v6269 = vadd.f32 %v6156, %v6258
        %v6270 = vld [vmem:[%s10] sm:$0xff]
        %v6271 = vld [vmem:[%s10 + $0x8] sm:$0xff]
        %v6272 = vld [vmem:[%s10 + $0x10] sm:$0xff]
        %v6273 = vld [vmem:[%s10 + $0x18] sm:$0xff]
        %v6274 = vld [vmem:[%s10 + $0x20] sm:$0x1f]
        %6276 = vset.pattern.permute.xlu0 0
        %6277 = vperm.xlu0 %6276, %v6270
        %v6278 = vpop.permute.xlu0 %6277
        %6281 = vset.pattern.permute.xlu0 0
        %6282 = vperm.xlu0 %6281, %v6271
        %v6283 = vpop.permute.xlu0 %6282
        %6286 = vset.pattern.permute.xlu0 0
        %6287 = vperm.xlu0 %6286, %v6272
        %v6288 = vpop.permute.xlu0 %6287
        %6291 = vset.pattern.permute.xlu0 0
        %6292 = vperm.xlu0 %6291, %v6273
        %v6293 = vpop.permute.xlu0 %6292
        %6296 = vset.pattern.permute.xlu0 0
        %6297 = vperm.xlu0 %6296, %v6274
        %v6298 = vpop.permute.xlu0 %6297
        %v6300 = vadd.f32 %v6260, %v6278
        %v6301 = vadd.f32 %v6261, %v6278
        %v6302 = vadd.f32 %v6262, %v6283
        %v6303 = vadd.f32 %v6263, %v6283
        %v6304 = vadd.f32 %v6264, %v6288
        %v6305 = vadd.f32 %v6265, %v6288
        %v6306 = vadd.f32 %v6266, %v6293
        %v6307 = vadd.f32 %v6267, %v6293
        %v6308 = vadd.f32 %v6268, %v6298
        %v6309 = vadd.f32 %v6269, %v6298
        %v6310 = vmul.f32 %v6300, 0.5
        %v6311 = vmul.f32 %v6301, 0.5
        %v6312 = vmul.f32 %v6302, 0.5
        %v6313 = vmul.f32 %v6303, 0.5
        %v6314 = vmul.f32 %v6304, 0.5
        %v6315 = vmul.f32 %v6305, 0.5
        %v6316 = vmul.f32 %v6306, 0.5
        %v6317 = vmul.f32 %v6307, 0.5
        %v6318 = vmul.f32 %v6308, 0.5
        %v6319 = vmul.f32 %v6309, 0.5
        %v6320 = vmul.f32 %v6300, 0.70710677
        %v6321 = vmul.f32 %v6301, 0.70710677
        %v6322 = vmul.f32 %v6302, 0.70710677
        %v6323 = vmul.f32 %v6303, 0.70710677
        %v6324 = vmul.f32 %v6304, 0.70710677
        %v6325 = vmul.f32 %v6305, 0.70710677
        %v6326 = vmul.f32 %v6306, 0.70710677
        %v6327 = vmul.f32 %v6307, 0.70710677
        %v6328 = vmul.f32 %v6308, 0.70710677
        %v6329 = vmul.f32 %v6309, 0.70710677
        %v6330 = vmul.f32 %v6320, %v6320
        %v6331 = vmin.f32 16.0, %v6330
        %v6332 = vmul.f32 %v6331, 2.1237322e-06
        %v6333 = vadd.f32 %v6332, 0.00028619796
        %v6334 = vmul.f32 %v6331, %v6333
        %v6335 = vadd.f32 %v6334, 0.0036580483
        %v6336 = vmul.f32 %v6331, %v6335
        %v6337 = vadd.f32 %v6336, 0.05243302
        %v6338 = vmul.f32 %v6331, %v6337
        %v6339 = vadd.f32 %v6338, 0.18741608
        %v6340 = vmul.f32 %v6331, %v6339
        %v6341 = vadd.f32 %v6340, 1.1283791
        %v6342 = vmul.f32 %v6320, %v6341
        %v6343 = vmul.f32 %v6331, 3.8918573e-05
        %v6344 = vadd.f32 %v6343, 0.001143296
        %v6345 = vmul.f32 %v6331, %v6344
        %v6346 = vadd.f32 %v6345, 0.014752088
        %v6347 = vmul.f32 %v6331, %v6346
        %v6348 = vadd.f32 %v6347, 0.112945676
        %v6349 = vmul.f32 %v6331, %v6348
        %v6350 = vadd.f32 %v6349, 0.4994258
        %v6351 = vmul.f32 %v6331, %v6350
        %v6352 = vadd.f32 %v6351, 1.0
        %v6353 = vrcp.pop %v6352
        %v6354 = vmul.f32 %v6352, %v6353
        %v6355 = vsub.f32 1.0, %v6354
        %v6356 = vmul.f32 %v6353, %v6355
        %v6357 = vadd.f32 %v6353, %v6356
        %vm6358 = vweird.f32 %v6352
        %vm6359 = vweird.f32 %v6353
        %vm6360 = vmor %vm6358, %vm6359
        %v6361 = vsel %vm6360, %v6353, %v6357
        %v6362 = vand.u32 2147483647, %v6352
        %vm6363 = vcmp.eq.f32.partialorder %v6362, 8.507059e+37
        %v6364 = vand.u32 %v6352, 2147483648
        %v6365 = vor.u32 1.1754944e-38, %v6364
        %v6366 = vsel %vm6363, %v6365, %v6361
        %v6367 = vmul.f32 %v6342, %v6366
        %v6368 = vmin.f32 %v6367, 1.0
        %v6369 = vmax.f32 %v6368, -1.0
        %v6370 = vmul.f32 %v6321, %v6321
        %v6371 = vmin.f32 16.0, %v6370
        %v6372 = vmul.f32 %v6371, 2.1237322e-06
        %v6373 = vadd.f32 %v6372, 0.00028619796
        %v6374 = vmul.f32 %v6371, %v6373
        %v6375 = vadd.f32 %v6374, 0.0036580483
        %v6376 = vmul.f32 %v6371, %v6375
        %v6377 = vadd.f32 %v6376, 0.05243302
        %v6378 = vmul.f32 %v6371, %v6377
        %v6379 = vadd.f32 %v6378, 0.18741608
        %v6380 = vmul.f32 %v6371, %v6379
        %v6381 = vadd.f32 %v6380, 1.1283791
        %v6382 = vmul.f32 %v6321, %v6381
        %v6383 = vmul.f32 %v6371, 3.8918573e-05
        %v6384 = vadd.f32 %v6383, 0.001143296
        %v6385 = vmul.f32 %v6371, %v6384
        %v6386 = vadd.f32 %v6385, 0.014752088
        %v6387 = vmul.f32 %v6371, %v6386
        %v6388 = vadd.f32 %v6387, 0.112945676
        %v6389 = vmul.f32 %v6371, %v6388
        %v6390 = vadd.f32 %v6389, 0.4994258
        %v6391 = vmul.f32 %v6371, %v6390
        %v6392 = vadd.f32 %v6391, 1.0
        %v6393 = vrcp.pop %v6392
        %v6394 = vmul.f32 %v6392, %v6393
        %v6395 = vsub.f32 1.0, %v6394
        %v6396 = vmul.f32 %v6393, %v6395
        %v6397 = vadd.f32 %v6393, %v6396
        %vm6398 = vweird.f32 %v6392
        %vm6399 = vweird.f32 %v6393
        %vm6400 = vmor %vm6398, %vm6399
        %v6401 = vsel %vm6400, %v6393, %v6397
        %v6402 = vand.u32 2147483647, %v6392
        %vm6403 = vcmp.eq.f32.partialorder %v6402, 8.507059e+37
        %v6404 = vand.u32 %v6392, 2147483648
        %v6405 = vor.u32 1.1754944e-38, %v6404
        %v6406 = vsel %vm6403, %v6405, %v6401
        %v6407 = vmul.f32 %v6382, %v6406
        %v6408 = vmin.f32 %v6407, 1.0
        %v6409 = vmax.f32 %v6408, -1.0
        %v6410 = vmul.f32 %v6322, %v6322
        %v6411 = vmin.f32 16.0, %v6410
        %v6412 = vmul.f32 %v6411, 2.1237322e-06
        %v6413 = vadd.f32 %v6412, 0.00028619796
        %v6414 = vmul.f32 %v6411, %v6413
        %v6415 = vadd.f32 %v6414, 0.0036580483
        %v6416 = vmul.f32 %v6411, %v6415
        %v6417 = vadd.f32 %v6416, 0.05243302
        %v6418 = vmul.f32 %v6411, %v6417
        %v6419 = vadd.f32 %v6418, 0.18741608
        %v6420 = vmul.f32 %v6411, %v6419
        %v6421 = vadd.f32 %v6420, 1.1283791
        %v6422 = vmul.f32 %v6322, %v6421
        %v6423 = vmul.f32 %v6411, 3.8918573e-05
        %v6424 = vadd.f32 %v6423, 0.001143296
        %v6425 = vmul.f32 %v6411, %v6424
        %v6426 = vadd.f32 %v6425, 0.014752088
        %v6427 = vmul.f32 %v6411, %v6426
        %v6428 = vadd.f32 %v6427, 0.112945676
        %v6429 = vmul.f32 %v6411, %v6428
        %v6430 = vadd.f32 %v6429, 0.4994258
        %v6431 = vmul.f32 %v6411, %v6430
        %v6432 = vadd.f32 %v6431, 1.0
        %v6433 = vrcp.pop %v6432
        %v6434 = vmul.f32 %v6432, %v6433
        %v6435 = vsub.f32 1.0, %v6434
        %v6436 = vmul.f32 %v6433, %v6435
        %v6437 = vadd.f32 %v6433, %v6436
        %vm6438 = vweird.f32 %v6432
        %vm6439 = vweird.f32 %v6433
        %vm6440 = vmor %vm6438, %vm6439
        %v6441 = vsel %vm6440, %v6433, %v6437
        %v6442 = vand.u32 2147483647, %v6432
        %vm6443 = vcmp.eq.f32.partialorder %v6442, 8.507059e+37
        %v6444 = vand.u32 %v6432, 2147483648
        %v6445 = vor.u32 1.1754944e-38, %v6444
        %v6446 = vsel %vm6443, %v6445, %v6441
        %v6447 = vmul.f32 %v6422, %v6446
        %v6448 = vmin.f32 %v6447, 1.0
        %v6449 = vmax.f32 %v6448, -1.0
        %v6450 = vmul.f32 %v6323, %v6323
        %v6451 = vmin.f32 16.0, %v6450
        %v6452 = vmul.f32 %v6451, 2.1237322e-06
        %v6453 = vadd.f32 %v6452, 0.00028619796
        %v6454 = vmul.f32 %v6451, %v6453
        %v6455 = vadd.f32 %v6454, 0.0036580483
        %v6456 = vmul.f32 %v6451, %v6455
        %v6457 = vadd.f32 %v6456, 0.05243302
        %v6458 = vmul.f32 %v6451, %v6457
        %v6459 = vadd.f32 %v6458, 0.18741608
        %v6460 = vmul.f32 %v6451, %v6459
        %v6461 = vadd.f32 %v6460, 1.1283791
        %v6462 = vmul.f32 %v6323, %v6461
        %v6463 = vmul.f32 %v6451, 3.8918573e-05
        %v6464 = vadd.f32 %v6463, 0.001143296
        %v6465 = vmul.f32 %v6451, %v6464
        %v6466 = vadd.f32 %v6465, 0.014752088
        %v6467 = vmul.f32 %v6451, %v6466
        %v6468 = vadd.f32 %v6467, 0.112945676
        %v6469 = vmul.f32 %v6451, %v6468
        %v6470 = vadd.f32 %v6469, 0.4994258
        %v6471 = vmul.f32 %v6451, %v6470
        %v6472 = vadd.f32 %v6471, 1.0
        %v6473 = vrcp.pop %v6472
        %v6474 = vmul.f32 %v6472, %v6473
        %v6475 = vsub.f32 1.0, %v6474
        %v6476 = vmul.f32 %v6473, %v6475
        %v6477 = vadd.f32 %v6473, %v6476
        %vm6478 = vweird.f32 %v6472
        %vm6479 = vweird.f32 %v6473
        %vm6480 = vmor %vm6478, %vm6479
        %v6481 = vsel %vm6480, %v6473, %v6477
        %v6482 = vand.u32 2147483647, %v6472
        %vm6483 = vcmp.eq.f32.partialorder %v6482, 8.507059e+37
        %v6484 = vand.u32 %v6472, 2147483648
        %v6485 = vor.u32 1.1754944e-38, %v6484
        %v6486 = vsel %vm6483, %v6485, %v6481
        %v6487 = vmul.f32 %v6462, %v6486
        %v6488 = vmin.f32 %v6487, 1.0
        %v6489 = vmax.f32 %v6488, -1.0
        %v6490 = vmul.f32 %v6324, %v6324
        %v6491 = vmin.f32 16.0, %v6490
        %v6492 = vmul.f32 %v6491, 2.1237322e-06
        %v6493 = vadd.f32 %v6492, 0.00028619796
        %v6494 = vmul.f32 %v6491, %v6493
        %v6495 = vadd.f32 %v6494, 0.0036580483
        %v6496 = vmul.f32 %v6491, %v6495
        %v6497 = vadd.f32 %v6496, 0.05243302
        %v6498 = vmul.f32 %v6491, %v6497
        %v6499 = vadd.f32 %v6498, 0.18741608
        %v6500 = vmul.f32 %v6491, %v6499
        %v6501 = vadd.f32 %v6500, 1.1283791
        %v6502 = vmul.f32 %v6324, %v6501
        %v6503 = vmul.f32 %v6491, 3.8918573e-05
        %v6504 = vadd.f32 %v6503, 0.001143296
        %v6505 = vmul.f32 %v6491, %v6504
        %v6506 = vadd.f32 %v6505, 0.014752088
        %v6507 = vmul.f32 %v6491, %v6506
        %v6508 = vadd.f32 %v6507, 0.112945676
        %v6509 = vmul.f32 %v6491, %v6508
        %v6510 = vadd.f32 %v6509, 0.4994258
        %v6511 = vmul.f32 %v6491, %v6510
        %v6512 = vadd.f32 %v6511, 1.0
        %v6513 = vrcp.pop %v6512
        %v6514 = vmul.f32 %v6512, %v6513
        %v6515 = vsub.f32 1.0, %v6514
        %v6516 = vmul.f32 %v6513, %v6515
        %v6517 = vadd.f32 %v6513, %v6516
        %vm6518 = vweird.f32 %v6512
        %vm6519 = vweird.f32 %v6513
        %vm6520 = vmor %vm6518, %vm6519
        %v6521 = vsel %vm6520, %v6513, %v6517
        %v6522 = vand.u32 2147483647, %v6512
        %vm6523 = vcmp.eq.f32.partialorder %v6522, 8.507059e+37
        %v6524 = vand.u32 %v6512, 2147483648
        %v6525 = vor.u32 1.1754944e-38, %v6524
        %v6526 = vsel %vm6523, %v6525, %v6521
        %v6527 = vmul.f32 %v6502, %v6526
        %v6528 = vmin.f32 %v6527, 1.0
        %v6529 = vmax.f32 %v6528, -1.0
        %v6530 = vmul.f32 %v6325, %v6325
        %v6531 = vmin.f32 16.0, %v6530
        %v6532 = vmul.f32 %v6531, 2.1237322e-06
        %v6533 = vadd.f32 %v6532, 0.00028619796
        %v6534 = vmul.f32 %v6531, %v6533
        %v6535 = vadd.f32 %v6534, 0.0036580483
        %v6536 = vmul.f32 %v6531, %v6535
        %v6537 = vadd.f32 %v6536, 0.05243302
        %v6538 = vmul.f32 %v6531, %v6537
        %v6539 = vadd.f32 %v6538, 0.18741608
        %v6540 = vmul.f32 %v6531, %v6539
        %v6541 = vadd.f32 %v6540, 1.1283791
        %v6542 = vmul.f32 %v6325, %v6541
        %v6543 = vmul.f32 %v6531, 3.8918573e-05
        %v6544 = vadd.f32 %v6543, 0.001143296
        %v6545 = vmul.f32 %v6531, %v6544
        %v6546 = vadd.f32 %v6545, 0.014752088
        %v6547 = vmul.f32 %v6531, %v6546
        %v6548 = vadd.f32 %v6547, 0.112945676
        %v6549 = vmul.f32 %v6531, %v6548
        %v6550 = vadd.f32 %v6549, 0.4994258
        %v6551 = vmul.f32 %v6531, %v6550
        %v6552 = vadd.f32 %v6551, 1.0
        %v6553 = vrcp.pop %v6552
        %v6554 = vmul.f32 %v6552, %v6553
        %v6555 = vsub.f32 1.0, %v6554
        %v6556 = vmul.f32 %v6553, %v6555
        %v6557 = vadd.f32 %v6553, %v6556
        %vm6558 = vweird.f32 %v6552
        %vm6559 = vweird.f32 %v6553
        %vm6560 = vmor %vm6558, %vm6559
        %v6561 = vsel %vm6560, %v6553, %v6557
        %v6562 = vand.u32 2147483647, %v6552
        %vm6563 = vcmp.eq.f32.partialorder %v6562, 8.507059e+37
        %v6564 = vand.u32 %v6552, 2147483648
        %v6565 = vor.u32 1.1754944e-38, %v6564
        %v6566 = vsel %vm6563, %v6565, %v6561
        %v6567 = vmul.f32 %v6542, %v6566
        %v6568 = vmin.f32 %v6567, 1.0
        %v6569 = vmax.f32 %v6568, -1.0
        %v6570 = vmul.f32 %v6326, %v6326
        %v6571 = vmin.f32 16.0, %v6570
        %v6572 = vmul.f32 %v6571, 2.1237322e-06
        %v6573 = vadd.f32 %v6572, 0.00028619796
        %v6574 = vmul.f32 %v6571, %v6573
        %v6575 = vadd.f32 %v6574, 0.0036580483
        %v6576 = vmul.f32 %v6571, %v6575
        %v6577 = vadd.f32 %v6576, 0.05243302
        %v6578 = vmul.f32 %v6571, %v6577
        %v6579 = vadd.f32 %v6578, 0.18741608
        %v6580 = vmul.f32 %v6571, %v6579
        %v6581 = vadd.f32 %v6580, 1.1283791
        %v6582 = vmul.f32 %v6326, %v6581
        %v6583 = vmul.f32 %v6571, 3.8918573e-05
        %v6584 = vadd.f32 %v6583, 0.001143296
        %v6585 = vmul.f32 %v6571, %v6584
        %v6586 = vadd.f32 %v6585, 0.014752088
        %v6587 = vmul.f32 %v6571, %v6586
        %v6588 = vadd.f32 %v6587, 0.112945676
        %v6589 = vmul.f32 %v6571, %v6588
        %v6590 = vadd.f32 %v6589, 0.4994258
        %v6591 = vmul.f32 %v6571, %v6590
        %v6592 = vadd.f32 %v6591, 1.0
        %v6593 = vrcp.pop %v6592
        %v6594 = vmul.f32 %v6592, %v6593
        %v6595 = vsub.f32 1.0, %v6594
        %v6596 = vmul.f32 %v6593, %v6595
        %v6597 = vadd.f32 %v6593, %v6596
        %vm6598 = vweird.f32 %v6592
        %vm6599 = vweird.f32 %v6593
        %vm6600 = vmor %vm6598, %vm6599
        %v6601 = vsel %vm6600, %v6593, %v6597
        %v6602 = vand.u32 2147483647, %v6592
        %vm6603 = vcmp.eq.f32.partialorder %v6602, 8.507059e+37
        %v6604 = vand.u32 %v6592, 2147483648
        %v6605 = vor.u32 1.1754944e-38, %v6604
        %v6606 = vsel %vm6603, %v6605, %v6601
        %v6607 = vmul.f32 %v6582, %v6606
        %v6608 = vmin.f32 %v6607, 1.0
        %v6609 = vmax.f32 %v6608, -1.0
        %v6610 = vmul.f32 %v6327, %v6327
        %v6611 = vmin.f32 16.0, %v6610
        %v6612 = vmul.f32 %v6611, 2.1237322e-06
        %v6613 = vadd.f32 %v6612, 0.00028619796
        %v6614 = vmul.f32 %v6611, %v6613
        %v6615 = vadd.f32 %v6614, 0.0036580483
        %v6616 = vmul.f32 %v6611, %v6615
        %v6617 = vadd.f32 %v6616, 0.05243302
        %v6618 = vmul.f32 %v6611, %v6617
        %v6619 = vadd.f32 %v6618, 0.18741608
        %v6620 = vmul.f32 %v6611, %v6619
        %v6621 = vadd.f32 %v6620, 1.1283791
        %v6622 = vmul.f32 %v6327, %v6621
        %v6623 = vmul.f32 %v6611, 3.8918573e-05
        %v6624 = vadd.f32 %v6623, 0.001143296
        %v6625 = vmul.f32 %v6611, %v6624
        %v6626 = vadd.f32 %v6625, 0.014752088
        %v6627 = vmul.f32 %v6611, %v6626
        %v6628 = vadd.f32 %v6627, 0.112945676
        %v6629 = vmul.f32 %v6611, %v6628
        %v6630 = vadd.f32 %v6629, 0.4994258
        %v6631 = vmul.f32 %v6611, %v6630
        %v6632 = vadd.f32 %v6631, 1.0
        %v6633 = vrcp.pop %v6632
        %v6634 = vmul.f32 %v6632, %v6633
        %v6635 = vsub.f32 1.0, %v6634
        %v6636 = vmul.f32 %v6633, %v6635
        %v6637 = vadd.f32 %v6633, %v6636
        %vm6638 = vweird.f32 %v6632
        %vm6639 = vweird.f32 %v6633
        %vm6640 = vmor %vm6638, %vm6639
        %v6641 = vsel %vm6640, %v6633, %v6637
        %v6642 = vand.u32 2147483647, %v6632
        %vm6643 = vcmp.eq.f32.partialorder %v6642, 8.507059e+37
        %v6644 = vand.u32 %v6632, 2147483648
        %v6645 = vor.u32 1.1754944e-38, %v6644
        %v6646 = vsel %vm6643, %v6645, %v6641
        %v6647 = vmul.f32 %v6622, %v6646
        %v6648 = vmin.f32 %v6647, 1.0
        %v6649 = vmax.f32 %v6648, -1.0
        %v6650 = vmul.f32 %v6328, %v6328
        %v6651 = vmin.f32 16.0, %v6650
        %v6652 = vmul.f32 %v6651, 2.1237322e-06
        %v6653 = vadd.f32 %v6652, 0.00028619796
        %v6654 = vmul.f32 %v6651, %v6653
        %v6655 = vadd.f32 %v6654, 0.0036580483
        %v6656 = vmul.f32 %v6651, %v6655
        %v6657 = vadd.f32 %v6656, 0.05243302
        %v6658 = vmul.f32 %v6651, %v6657
        %v6659 = vadd.f32 %v6658, 0.18741608
        %v6660 = vmul.f32 %v6651, %v6659
        %v6661 = vadd.f32 %v6660, 1.1283791
        %v6662 = vmul.f32 %v6328, %v6661
        %v6663 = vmul.f32 %v6651, 3.8918573e-05
        %v6664 = vadd.f32 %v6663, 0.001143296
        %v6665 = vmul.f32 %v6651, %v6664
        %v6666 = vadd.f32 %v6665, 0.014752088
        %v6667 = vmul.f32 %v6651, %v6666
        %v6668 = vadd.f32 %v6667, 0.112945676
        %v6669 = vmul.f32 %v6651, %v6668
        %v6670 = vadd.f32 %v6669, 0.4994258
        %v6671 = vmul.f32 %v6651, %v6670
        %v6672 = vadd.f32 %v6671, 1.0
        %v6673 = vrcp.pop %v6672
        %v6674 = vmul.f32 %v6672, %v6673
        %v6675 = vsub.f32 1.0, %v6674
        %v6676 = vmul.f32 %v6673, %v6675
        %v6677 = vadd.f32 %v6673, %v6676
        %vm6678 = vweird.f32 %v6672
        %vm6679 = vweird.f32 %v6673
        %vm6680 = vmor %vm6678, %vm6679
        %v6681 = vsel %vm6680, %v6673, %v6677
        %v6682 = vand.u32 2147483647, %v6672
        %vm6683 = vcmp.eq.f32.partialorder %v6682, 8.507059e+37
        %v6684 = vand.u32 %v6672, 2147483648
        %v6685 = vor.u32 1.1754944e-38, %v6684
        %v6686 = vsel %vm6683, %v6685, %v6681
        %v6687 = vmul.f32 %v6662, %v6686
        %v6688 = vmin.f32 %v6687, 1.0
        %v6689 = vmax.f32 %v6688, -1.0
        %v6690 = vmul.f32 %v6329, %v6329
        %v6691 = vmin.f32 16.0, %v6690
        %v6692 = vmul.f32 %v6691, 2.1237322e-06
        %v6693 = vadd.f32 %v6692, 0.00028619796
        %v6694 = vmul.f32 %v6691, %v6693
        %v6695 = vadd.f32 %v6694, 0.0036580483
        %v6696 = vmul.f32 %v6691, %v6695
        %v6697 = vadd.f32 %v6696, 0.05243302
        %v6698 = vmul.f32 %v6691, %v6697
        %v6699 = vadd.f32 %v6698, 0.18741608
        %v6700 = vmul.f32 %v6691, %v6699
        %v6701 = vadd.f32 %v6700, 1.1283791
        %v6702 = vmul.f32 %v6329, %v6701
        %v6703 = vmul.f32 %v6691, 3.8918573e-05
        %v6704 = vadd.f32 %v6703, 0.001143296
        %v6705 = vmul.f32 %v6691, %v6704
        %v6706 = vadd.f32 %v6705, 0.014752088
        %v6707 = vmul.f32 %v6691, %v6706
        %v6708 = vadd.f32 %v6707, 0.112945676
        %v6709 = vmul.f32 %v6691, %v6708
        %v6710 = vadd.f32 %v6709, 0.4994258
        %v6711 = vmul.f32 %v6691, %v6710
        %v6712 = vadd.f32 %v6711, 1.0
        %v6713 = vrcp.pop %v6712
        %v6714 = vmul.f32 %v6712, %v6713
        %v6715 = vsub.f32 1.0, %v6714
        %v6716 = vmul.f32 %v6713, %v6715
        %v6717 = vadd.f32 %v6713, %v6716
        %vm6718 = vweird.f32 %v6712
        %vm6719 = vweird.f32 %v6713
        %vm6720 = vmor %vm6718, %vm6719
        %v6721 = vsel %vm6720, %v6713, %v6717
        %v6722 = vand.u32 2147483647, %v6712
        %vm6723 = vcmp.eq.f32.partialorder %v6722, 8.507059e+37
        %v6724 = vand.u32 %v6712, 2147483648
        %v6725 = vor.u32 1.1754944e-38, %v6724
        %v6726 = vsel %vm6723, %v6725, %v6721
        %v6727 = vmul.f32 %v6702, %v6726
        %v6728 = vmin.f32 %v6727, 1.0
        %v6729 = vmax.f32 %v6728, -1.0
        %v6730 = vadd.f32 %v6369, 1.0
        %v6731 = vadd.f32 %v6409, 1.0
        %v6732 = vadd.f32 %v6449, 1.0
        %v6733 = vadd.f32 %v6489, 1.0
        %v6734 = vadd.f32 %v6529, 1.0
        %v6735 = vadd.f32 %v6569, 1.0
        %v6736 = vadd.f32 %v6609, 1.0
        %v6737 = vadd.f32 %v6649, 1.0
        %v6738 = vadd.f32 %v6689, 1.0
        %v6739 = vadd.f32 %v6729, 1.0
        %v6740 = vmul.f32 %v6310, %v6730
        %v6741 = vmul.f32 %v6311, %v6731
        %v6742 = vmul.f32 %v6312, %v6732
        %v6743 = vmul.f32 %v6313, %v6733
        %v6744 = vmul.f32 %v6314, %v6734
        %v6745 = vmul.f32 %v6315, %v6735
        %v6746 = vmul.f32 %v6316, %v6736
        %v6747 = vmul.f32 %v6317, %v6737
        %v6748 = vmul.f32 %v6318, %v6738
        %v6749 = vmul.f32 %v6319, %v6739
        %v6750 = vld [vmem:[%s11] sm:$0xf]
        %v6751 = vld [vmem:[%s12] sm:$0xf]
        %6753 = vset.pattern.permute.xlu0 0
        %6754 = vperm.xlu0 %6753, %v6751
        %v6755 = vpop.permute.xlu0 %6754
        %vm6757 = vcmask 302080
        %v6759 = vsel %vm6757, %v6750, 0
        %v6762 = vsel %vm5370, %v6748, 0
        %v6765 = vsel %vm5370, %v6749, 0
        %6767 = vmatpush.msra.mxu0 0.0
        %6768 = vmatpush.msra.mxu0 0.0
        %6769 = vmatpush.msra.mxu0 0.0
        %6770 = vmatpush.msra.mxu0 0.0
        %6771 = vmatpush.msra.mxu0 0.0
        %6772 = vmatpush.msra.mxu0 0.0
        %6773 = vmatpush.msra.mxu0 0.0
        %6774 = vmatpush.msra.mxu0 0.0
        %6775 = vmatpush.msra.mxu0 0.0
        %6776 = vmatpush.msra.mxu0 0.0
        %6777 = vmatpush.msra.mxu0 0.0
        %6778 = vmatpush.msra.mxu0 %v6762
        %6779 = vmatpush.msra.mxu0 %v6746
        %6780 = vmatpush.msra.mxu0 %v6744
        %6781 = vmatpush.msra.mxu0 %v6742
        %6782 = vmatpush.msra.mxu0 %v6740
        %6783 = vmatmul.f32.gmra.mxu0 %v6759
        %v6784 = vpop.f32.mrf.mxu0
        %v6785 = vadd.f32 %v6755, %v6784
        %6786 = vdwg.mxu0
        %6787 = vmatpush.msra.mxu0 0.0
        %6788 = vmatpush.msra.mxu0 0.0
        %6789 = vmatpush.msra.mxu0 0.0
        %6790 = vmatpush.msra.mxu0 0.0
        %6791 = vmatpush.msra.mxu0 0.0
        %6792 = vmatpush.msra.mxu0 0.0
        %6793 = vmatpush.msra.mxu0 0.0
        %6794 = vmatpush.msra.mxu0 0.0
        %6795 = vmatpush.msra.mxu0 0.0
        %6796 = vmatpush.msra.mxu0 0.0
        %6797 = vmatpush.msra.mxu0 0.0
        %6798 = vmatpush.msra.mxu0 %v6765
        %6799 = vmatpush.msra.mxu0 %v6747
        %6800 = vmatpush.msra.mxu0 %v6745
        %6801 = vmatpush.msra.mxu0 %v6743
        %6802 = vmatpush.msra.mxu0 %v6741
        %6803 = vmatmul.f32.gmra.mxu0 %v6759
        %v6804 = vpop.f32.mrf.mxu0
        %v6805 = vadd.f32 %v6755, %v6804
        %6806 = vdwg.mxu0
        %v6807 = vmul.f32 %v6785, 0.5
        %v6808 = vmul.f32 %v6805, 0.5
        %v6809 = vmul.f32 %v6785, 0.70710677
        %v6810 = vmul.f32 %v6805, 0.70710677
        %v6811 = vmul.f32 %v6809, %v6809
        %v6812 = vmin.f32 16.0, %v6811
        %v6813 = vmul.f32 %v6812, 2.1237322e-06
        %v6814 = vadd.f32 %v6813, 0.00028619796
        %v6815 = vmul.f32 %v6812, %v6814
        %v6816 = vadd.f32 %v6815, 0.0036580483
        %v6817 = vmul.f32 %v6812, %v6816
        %v6818 = vadd.f32 %v6817, 0.05243302
        %v6819 = vmul.f32 %v6812, %v6818
        %v6820 = vadd.f32 %v6819, 0.18741608
        %v6821 = vmul.f32 %v6812, %v6820
        %v6822 = vadd.f32 %v6821, 1.1283791
        %v6823 = vmul.f32 %v6809, %v6822
        %v6824 = vmul.f32 %v6812, 3.8918573e-05
        %v6825 = vadd.f32 %v6824, 0.001143296
        %v6826 = vmul.f32 %v6812, %v6825
        %v6827 = vadd.f32 %v6826, 0.014752088
        %v6828 = vmul.f32 %v6812, %v6827
        %v6829 = vadd.f32 %v6828, 0.112945676
        %v6830 = vmul.f32 %v6812, %v6829
        %v6831 = vadd.f32 %v6830, 0.4994258
        %v6832 = vmul.f32 %v6812, %v6831
        %v6833 = vadd.f32 %v6832, 1.0
        %v6834 = vrcp.pop %v6833
        %v6835 = vmul.f32 %v6833, %v6834
        %v6836 = vsub.f32 1.0, %v6835
        %v6837 = vmul.f32 %v6834, %v6836
        %v6838 = vadd.f32 %v6834, %v6837
        %vm6839 = vweird.f32 %v6833
        %vm6840 = vweird.f32 %v6834
        %vm6841 = vmor %vm6839, %vm6840
        %v6842 = vsel %vm6841, %v6834, %v6838
        %v6843 = vand.u32 2147483647, %v6833
        %vm6844 = vcmp.eq.f32.partialorder %v6843, 8.507059e+37
        %v6845 = vand.u32 %v6833, 2147483648
        %v6846 = vor.u32 1.1754944e-38, %v6845
        %v6847 = vsel %vm6844, %v6846, %v6842
        %v6848 = vmul.f32 %v6823, %v6847
        %v6849 = vmin.f32 %v6848, 1.0
        %v6850 = vmax.f32 %v6849, -1.0
        %v6851 = vmul.f32 %v6810, %v6810
        %v6852 = vmin.f32 16.0, %v6851
        %v6853 = vmul.f32 %v6852, 2.1237322e-06
        %v6854 = vadd.f32 %v6853, 0.00028619796
        %v6855 = vmul.f32 %v6852, %v6854
        %v6856 = vadd.f32 %v6855, 0.0036580483
        %v6857 = vmul.f32 %v6852, %v6856
        %v6858 = vadd.f32 %v6857, 0.05243302
        %v6859 = vmul.f32 %v6852, %v6858
        %v6860 = vadd.f32 %v6859, 0.18741608
        %v6861 = vmul.f32 %v6852, %v6860
        %v6862 = vadd.f32 %v6861, 1.1283791
        %v6863 = vmul.f32 %v6810, %v6862
        %v6864 = vmul.f32 %v6852, 3.8918573e-05
        %v6865 = vadd.f32 %v6864, 0.001143296
        %v6866 = vmul.f32 %v6852, %v6865
        %v6867 = vadd.f32 %v6866, 0.014752088
        %v6868 = vmul.f32 %v6852, %v6867
        %v6869 = vadd.f32 %v6868, 0.112945676
        %v6870 = vmul.f32 %v6852, %v6869
        %v6871 = vadd.f32 %v6870, 0.4994258
        %v6872 = vmul.f32 %v6852, %v6871
        %v6873 = vadd.f32 %v6872, 1.0
        %v6874 = vrcp.pop %v6873
        %v6875 = vmul.f32 %v6873, %v6874
        %v6876 = vsub.f32 1.0, %v6875
        %v6877 = vmul.f32 %v6874, %v6876
        %v6878 = vadd.f32 %v6874, %v6877
        %vm6879 = vweird.f32 %v6873
        %vm6880 = vweird.f32 %v6874
        %vm6881 = vmor %vm6879, %vm6880
        %v6882 = vsel %vm6881, %v6874, %v6878
        %v6883 = vand.u32 2147483647, %v6873
        %vm6884 = vcmp.eq.f32.partialorder %v6883, 8.507059e+37
        %v6885 = vand.u32 %v6873, 2147483648
        %v6886 = vor.u32 1.1754944e-38, %v6885
        %v6887 = vsel %vm6884, %v6886, %v6882
        %v6888 = vmul.f32 %v6863, %v6887
        %v6889 = vmin.f32 %v6888, 1.0
        %v6890 = vmax.f32 %v6889, -1.0
        %v6891 = vadd.f32 %v6850, 1.0
        %v6892 = vadd.f32 %v6890, 1.0
        %v6893 = vmul.f32 %v6807, %v6891
        %v6894 = vmul.f32 %v6808, %v6892
        %v6895 = vld [vmem:[%s13] sm:$0x1f]
        %v6896 = vld [vmem:[%s14] sm:$0x1f]
        %6898 = vset.pattern.permute.xlu0 0
        %6899 = vperm.xlu0 %6898, %v6896
        %v6900 = vpop.permute.xlu0 %6899
        %vm6902 = vcmask 31744
        %v6904 = vsel %vm6902, %v6895, 0
        %vm6906 = vcmask 1043456
        %v6908 = vsel %vm6906, %v6893, 0
        %v6911 = vsel %vm6906, %v6894, 0
        %6913 = vmatpush.msra.mxu0 0.0
        %6914 = vmatpush.msra.mxu0 0.0
        %6915 = vmatpush.msra.mxu0 0.0
        %6916 = vmatpush.msra.mxu0 0.0
        %6917 = vmatpush.msra.mxu0 0.0
        %6918 = vmatpush.msra.mxu0 0.0
        %6919 = vmatpush.msra.mxu0 0.0
        %6920 = vmatpush.msra.mxu0 0.0
        %6921 = vmatpush.msra.mxu0 0.0
        %6922 = vmatpush.msra.mxu0 0.0
        %6923 = vmatpush.msra.mxu0 0.0
        %6924 = vmatpush.msra.mxu0 0.0
        %6925 = vmatpush.msra.mxu0 0.0
        %6926 = vmatpush.msra.mxu0 0.0
        %6927 = vmatpush.msra.mxu0 0.0
        %6928 = vmatpush.msra.mxu0 %v6908
        %6929 = vmatmul.f32.gmra.mxu0 %v6904
        %v6930 = vpop.f32.mrf.mxu0
        %v6931 = vadd.f32 %v6900, %v6930
        %6932 = vdwg.mxu0
        %6933 = vmatpush.msra.mxu0 0.0
        %6934 = vmatpush.msra.mxu0 0.0
        %6935 = vmatpush.msra.mxu0 0.0
        %6936 = vmatpush.msra.mxu0 0.0
        %6937 = vmatpush.msra.mxu0 0.0
        %6938 = vmatpush.msra.mxu0 0.0
        %6939 = vmatpush.msra.mxu0 0.0
        %6940 = vmatpush.msra.mxu0 0.0
        %6941 = vmatpush.msra.mxu0 0.0
        %6942 = vmatpush.msra.mxu0 0.0
        %6943 = vmatpush.msra.mxu0 0.0
        %6944 = vmatpush.msra.mxu0 0.0
        %6945 = vmatpush.msra.mxu0 0.0
        %6946 = vmatpush.msra.mxu0 0.0
        %6947 = vmatpush.msra.mxu0 0.0
        %6948 = vmatpush.msra.mxu0 %v6911
        %6949 = vmatmul.f32.gmra.mxu0 %v6904
        %v6950 = vpop.f32.mrf.mxu0
        %v6951 = vadd.f32 %v6900, %v6950
        %6952 = vdwg.mxu0
        %v6953 = vmul.f32 %v6931, 0.5
        %v6954 = vmul.f32 %v6951, 0.5
        %v6955 = vmul.f32 %v6931, 0.70710677
        %v6956 = vmul.f32 %v6951, 0.70710677
        %v6957 = vmul.f32 %v6955, %v6955
        %v6958 = vmin.f32 16.0, %v6957
        %v6959 = vmul.f32 %v6958, 2.1237322e-06
        %v6960 = vadd.f32 %v6959, 0.00028619796
        %v6961 = vmul.f32 %v6958, %v6960
        %v6962 = vadd.f32 %v6961, 0.0036580483
        %v6963 = vmul.f32 %v6958, %v6962
        %v6964 = vadd.f32 %v6963, 0.05243302
        %v6965 = vmul.f32 %v6958, %v6964
        %v6966 = vadd.f32 %v6965, 0.18741608
        %v6967 = vmul.f32 %v6958, %v6966
        %v6968 = vadd.f32 %v6967, 1.1283791
        %v6969 = vmul.f32 %v6955, %v6968
        %v6970 = vmul.f32 %v6958, 3.8918573e-05
        %v6971 = vadd.f32 %v6970, 0.001143296
        %v6972 = vmul.f32 %v6958, %v6971
        %v6973 = vadd.f32 %v6972, 0.014752088
        %v6974 = vmul.f32 %v6958, %v6973
        %v6975 = vadd.f32 %v6974, 0.112945676
        %v6976 = vmul.f32 %v6958, %v6975
        %v6977 = vadd.f32 %v6976, 0.4994258
        %v6978 = vmul.f32 %v6958, %v6977
        %v6979 = vadd.f32 %v6978, 1.0
        %v6980 = vrcp.pop %v6979
        %v6981 = vmul.f32 %v6979, %v6980
        %v6982 = vsub.f32 1.0, %v6981
        %v6983 = vmul.f32 %v6980, %v6982
        %v6984 = vadd.f32 %v6980, %v6983
        %vm6985 = vweird.f32 %v6979
        %vm6986 = vweird.f32 %v6980
        %vm6987 = vmor %vm6985, %vm6986
        %v6988 = vsel %vm6987, %v6980, %v6984
        %v6989 = vand.u32 2147483647, %v6979
        %vm6990 = vcmp.eq.f32.partialorder %v6989, 8.507059e+37
        %v6991 = vand.u32 %v6979, 2147483648
        %v6992 = vor.u32 1.1754944e-38, %v6991
        %v6993 = vsel %vm6990, %v6992, %v6988
        %v6994 = vmul.f32 %v6969, %v6993
        %v6995 = vmin.f32 %v6994, 1.0
        %v6996 = vmax.f32 %v6995, -1.0
        %v6997 = vmul.f32 %v6956, %v6956
        %v6998 = vmin.f32 16.0, %v6997
        %v6999 = vmul.f32 %v6998, 2.1237322e-06
        %v7000 = vadd.f32 %v6999, 0.00028619796
        %v7001 = vmul.f32 %v6998, %v7000
        %v7002 = vadd.f32 %v7001, 0.0036580483
        %v7003 = vmul.f32 %v6998, %v7002
        %v7004 = vadd.f32 %v7003, 0.05243302
        %v7005 = vmul.f32 %v6998, %v7004
        %v7006 = vadd.f32 %v7005, 0.18741608
        %v7007 = vmul.f32 %v6998, %v7006
        %v7008 = vadd.f32 %v7007, 1.1283791
        %v7009 = vmul.f32 %v6956, %v7008
        %v7010 = vmul.f32 %v6998, 3.8918573e-05
        %v7011 = vadd.f32 %v7010, 0.001143296
        %v7012 = vmul.f32 %v6998, %v7011
        %v7013 = vadd.f32 %v7012, 0.014752088
        %v7014 = vmul.f32 %v6998, %v7013
        %v7015 = vadd.f32 %v7014, 0.112945676
        %v7016 = vmul.f32 %v6998, %v7015
        %v7017 = vadd.f32 %v7016, 0.4994258
        %v7018 = vmul.f32 %v6998, %v7017
        %v7019 = vadd.f32 %v7018, 1.0
        %v7020 = vrcp.pop %v7019
        %v7021 = vmul.f32 %v7019, %v7020
        %v7022 = vsub.f32 1.0, %v7021
        %v7023 = vmul.f32 %v7020, %v7022
        %v7024 = vadd.f32 %v7020, %v7023
        %vm7025 = vweird.f32 %v7019
        %vm7026 = vweird.f32 %v7020
        %vm7027 = vmor %vm7025, %vm7026
        %v7028 = vsel %vm7027, %v7020, %v7024
        %v7029 = vand.u32 2147483647, %v7019
        %vm7030 = vcmp.eq.f32.partialorder %v7029, 8.507059e+37
        %v7031 = vand.u32 %v7019, 2147483648
        %v7032 = vor.u32 1.1754944e-38, %v7031
        %v7033 = vsel %vm7030, %v7032, %v7028
        %v7034 = vmul.f32 %v7009, %v7033
        %v7035 = vmin.f32 %v7034, 1.0
        %v7036 = vmax.f32 %v7035, -1.0
        %v7037 = vadd.f32 %v6996, 1.0
        %v7038 = vadd.f32 %v7036, 1.0
        %v7039 = vmul.f32 %v6953, %v7037
        %v7040 = vmul.f32 %v6954, %v7038
        %v7041 = vld [vmem:[%s15] sm:$0xf]
        %v7042 = vld [vmem:[%s16] sm:$0xf]
        %7044 = vset.pattern.permute.xlu0 0
        %7045 = vperm.xlu0 %7044, %v7042
        %v7046 = vpop.permute.xlu0 %7045
        %vm7048 = vcmask 39936
        %v7050 = vsel %vm7048, %v7041, 0
        %v7053 = vsel %vm5370, %v7039, 0
        %v7056 = vsel %vm5370, %v7040, 0
        %7058 = vmatpush.msra.mxu0 0.0
        %7059 = vmatpush.msra.mxu0 0.0
        %7060 = vmatpush.msra.mxu0 0.0
        %7061 = vmatpush.msra.mxu0 0.0
        %7062 = vmatpush.msra.mxu0 0.0
        %7063 = vmatpush.msra.mxu0 0.0
        %7064 = vmatpush.msra.mxu0 0.0
        %7065 = vmatpush.msra.mxu0 0.0
        %7066 = vmatpush.msra.mxu0 0.0
        %7067 = vmatpush.msra.mxu0 0.0
        %7068 = vmatpush.msra.mxu0 0.0
        %7069 = vmatpush.msra.mxu0 0.0
        %7070 = vmatpush.msra.mxu0 0.0
        %7071 = vmatpush.msra.mxu0 0.0
        %7072 = vmatpush.msra.mxu0 0.0
        %7073 = vmatpush.msra.mxu0 %v7053
        %7074 = vmatmul.f32.gmra.mxu0 %v7050
        %v7075 = vpop.f32.mrf.mxu0
        %v7076 = vadd.f32 %v7046, %v7075
        %7077 = vdwg.mxu0
        %7078 = vmatpush.msra.mxu0 0.0
        %7079 = vmatpush.msra.mxu0 0.0
        %7080 = vmatpush.msra.mxu0 0.0
        %7081 = vmatpush.msra.mxu0 0.0
        %7082 = vmatpush.msra.mxu0 0.0
        %7083 = vmatpush.msra.mxu0 0.0
        %7084 = vmatpush.msra.mxu0 0.0
        %7085 = vmatpush.msra.mxu0 0.0
        %7086 = vmatpush.msra.mxu0 0.0
        %7087 = vmatpush.msra.mxu0 0.0
        %7088 = vmatpush.msra.mxu0 0.0
        %7089 = vmatpush.msra.mxu0 0.0
        %7090 = vmatpush.msra.mxu0 0.0
        %7091 = vmatpush.msra.mxu0 0.0
        %7092 = vmatpush.msra.mxu0 0.0
        %7093 = vmatpush.msra.mxu0 %v7056
        %7094 = vmatmul.f32.gmra.mxu0 %v7050
        %v7095 = vpop.f32.mrf.mxu0
        %v7096 = vadd.f32 %v7046, %v7095
        %7097 = vdwg.mxu0
        %v7098 = vmul.f32 %v7076, 0.5
        %v7099 = vmul.f32 %v7096, 0.5
        %v7100 = vmul.f32 %v7076, 0.70710677
        %v7101 = vmul.f32 %v7096, 0.70710677
        %v7102 = vmul.f32 %v7100, %v7100
        %v7103 = vmin.f32 16.0, %v7102
        %v7104 = vmul.f32 %v7103, 2.1237322e-06
        %v7105 = vadd.f32 %v7104, 0.00028619796
        %v7106 = vmul.f32 %v7103, %v7105
        %v7107 = vadd.f32 %v7106, 0.0036580483
        %v7108 = vmul.f32 %v7103, %v7107
        %v7109 = vadd.f32 %v7108, 0.05243302
        %v7110 = vmul.f32 %v7103, %v7109
        %v7111 = vadd.f32 %v7110, 0.18741608
        %v7112 = vmul.f32 %v7103, %v7111
        %v7113 = vadd.f32 %v7112, 1.1283791
        %v7114 = vmul.f32 %v7100, %v7113
        %v7115 = vmul.f32 %v7103, 3.8918573e-05
        %v7116 = vadd.f32 %v7115, 0.001143296
        %v7117 = vmul.f32 %v7103, %v7116
        %v7118 = vadd.f32 %v7117, 0.014752088
        %v7119 = vmul.f32 %v7103, %v7118
        %v7120 = vadd.f32 %v7119, 0.112945676
        %v7121 = vmul.f32 %v7103, %v7120
        %v7122 = vadd.f32 %v7121, 0.4994258
        %v7123 = vmul.f32 %v7103, %v7122
        %v7124 = vadd.f32 %v7123, 1.0
        %v7125 = vrcp.pop %v7124
        %v7126 = vmul.f32 %v7124, %v7125
        %v7127 = vsub.f32 1.0, %v7126
        %v7128 = vmul.f32 %v7125, %v7127
        %v7129 = vadd.f32 %v7125, %v7128
        %vm7130 = vweird.f32 %v7124
        %vm7131 = vweird.f32 %v7125
        %vm7132 = vmor %vm7130, %vm7131
        %v7133 = vsel %vm7132, %v7125, %v7129
        %v7134 = vand.u32 2147483647, %v7124
        %vm7135 = vcmp.eq.f32.partialorder %v7134, 8.507059e+37
        %v7136 = vand.u32 %v7124, 2147483648
        %v7137 = vor.u32 1.1754944e-38, %v7136
        %v7138 = vsel %vm7135, %v7137, %v7133
        %v7139 = vmul.f32 %v7114, %v7138
        %v7140 = vmin.f32 %v7139, 1.0
        %v7141 = vmax.f32 %v7140, -1.0
        %v7142 = vmul.f32 %v7101, %v7101
        %v7143 = vmin.f32 16.0, %v7142
        %v7144 = vmul.f32 %v7143, 2.1237322e-06
        %v7145 = vadd.f32 %v7144, 0.00028619796
        %v7146 = vmul.f32 %v7143, %v7145
        %v7147 = vadd.f32 %v7146, 0.0036580483
        %v7148 = vmul.f32 %v7143, %v7147
        %v7149 = vadd.f32 %v7148, 0.05243302
        %v7150 = vmul.f32 %v7143, %v7149
        %v7151 = vadd.f32 %v7150, 0.18741608
        %v7152 = vmul.f32 %v7143, %v7151
        %v7153 = vadd.f32 %v7152, 1.1283791
        %v7154 = vmul.f32 %v7101, %v7153
        %v7155 = vmul.f32 %v7143, 3.8918573e-05
        %v7156 = vadd.f32 %v7155, 0.001143296
        %v7157 = vmul.f32 %v7143, %v7156
        %v7158 = vadd.f32 %v7157, 0.014752088
        %v7159 = vmul.f32 %v7143, %v7158
        %v7160 = vadd.f32 %v7159, 0.112945676
        %v7161 = vmul.f32 %v7143, %v7160
        %v7162 = vadd.f32 %v7161, 0.4994258
        %v7163 = vmul.f32 %v7143, %v7162
        %v7164 = vadd.f32 %v7163, 1.0
        %v7165 = vrcp.pop %v7164
        %v7166 = vmul.f32 %v7164, %v7165
        %v7167 = vsub.f32 1.0, %v7166
        %v7168 = vmul.f32 %v7165, %v7167
        %v7169 = vadd.f32 %v7165, %v7168
        %vm7170 = vweird.f32 %v7164
        %vm7171 = vweird.f32 %v7165
        %vm7172 = vmor %vm7170, %vm7171
        %v7173 = vsel %vm7172, %v7165, %v7169
        %v7174 = vand.u32 2147483647, %v7164
        %vm7175 = vcmp.eq.f32.partialorder %v7174, 8.507059e+37
        %v7176 = vand.u32 %v7164, 2147483648
        %v7177 = vor.u32 1.1754944e-38, %v7176
        %v7178 = vsel %vm7175, %v7177, %v7173
        %v7179 = vmul.f32 %v7154, %v7178
        %v7180 = vmin.f32 %v7179, 1.0
        %v7181 = vmax.f32 %v7180, -1.0
        %v7182 = vadd.f32 %v7141, 1.0
        %v7183 = vadd.f32 %v7181, 1.0
        %v7184 = vmul.f32 %v7098, %v7182
        %v7185 = vmul.f32 %v7099, %v7183
        %v7186 = vld [vmem:[%s17] sm:$0x7]
        %v7187 = vld [vmem:[%s18] sm:$0x7]
        %7189 = vset.pattern.permute.xlu0 0
        %7190 = vperm.xlu0 %7189, %v7187
        %v7191 = vpop.permute.xlu0 %7190
        %v7194 = vsel %vm6902, %v7186, 0
        %v7197 = vsel %vm6906, %v7184, 0
        %v7200 = vsel %vm6906, %v7185, 0
        %7202 = vmatpush.msra.mxu0 0.0
        %7203 = vmatpush.msra.mxu0 0.0
        %7204 = vmatpush.msra.mxu0 0.0
        %7205 = vmatpush.msra.mxu0 0.0
        %7206 = vmatpush.msra.mxu0 0.0
        %7207 = vmatpush.msra.mxu0 0.0
        %7208 = vmatpush.msra.mxu0 0.0
        %7209 = vmatpush.msra.mxu0 0.0
        %7210 = vmatpush.msra.mxu0 0.0
        %7211 = vmatpush.msra.mxu0 0.0
        %7212 = vmatpush.msra.mxu0 0.0
        %7213 = vmatpush.msra.mxu0 0.0
        %7214 = vmatpush.msra.mxu0 0.0
        %7215 = vmatpush.msra.mxu0 0.0
        %7216 = vmatpush.msra.mxu0 0.0
        %7217 = vmatpush.msra.mxu0 %v7197
        %7218 = vmatmul.f32.gmra.mxu0 %v7194
        %v7219 = vpop.f32.mrf.mxu0
        %v7220 = vadd.f32 %v7191, %v7219
        %7221 = vdwg.mxu0
        %7222 = vmatpush.msra.mxu0 0.0
        %7223 = vmatpush.msra.mxu0 0.0
        %7224 = vmatpush.msra.mxu0 0.0
        %7225 = vmatpush.msra.mxu0 0.0
        %7226 = vmatpush.msra.mxu0 0.0
        %7227 = vmatpush.msra.mxu0 0.0
        %7228 = vmatpush.msra.mxu0 0.0
        %7229 = vmatpush.msra.mxu0 0.0
        %7230 = vmatpush.msra.mxu0 0.0
        %7231 = vmatpush.msra.mxu0 0.0
        %7232 = vmatpush.msra.mxu0 0.0
        %7233 = vmatpush.msra.mxu0 0.0
        %7234 = vmatpush.msra.mxu0 0.0
        %7235 = vmatpush.msra.mxu0 0.0
        %7236 = vmatpush.msra.mxu0 0.0
        %7237 = vmatpush.msra.mxu0 %v7200
        %7238 = vmatmul.f32.gmra.mxu0 %v7194
        %v7239 = vpop.f32.mrf.mxu0
        %v7240 = vadd.f32 %v7191, %v7239
        %7241 = vdwg.mxu0
        %v7244 = vrot.slane %v7240, 4
        %v7245 = vsel %vm6906, %v7220, %v7244
        %7247 = vst [vmem:[%s619] sm:$0x77] %v7245
        %p7248 = scmp.lt.s32.totalorder %s31, 1
        %s7249 = scalar_select %p7248, %s31, 1
        %s7250 = smul.addr %s7249, 2
        %s7251 = smul.addr %s7250, 4
        %s7252 = scalar_lea.vmem %s19, %s7251
        // Predicated region
        $region101: #{model_forward.1} parent=95 // pred_check
          %p7253 = pneg %p453
        $region102: #{model_forward.1} parent=95 // pred_check_branch
          %7255 = sbr.rel (%p7253) target = $region104
        $region103: #{model_forward.1} parent=95 // pred_region
          _
        $region104: #{model_forward.1} parent=95 // pred_fallthru
          _
      $region96: #{model_forward.1} parent=5 // pred_fallthru
        _
      %p7256 = scmp.le.s32.totalorder 2, %s26
      // Predicated region
      $region105: #{model_forward.1} parent=5 // pred_check
        %p7257 = pneg %p7256
      $region106: #{model_forward.1} parent=5 // pred_check_branch
        %7259 = sbr.rel (%p7257) target = $region108
      $region107: #{model_forward.1} parent=5 // pred_region
        %s7260 = ssub.s32 %s26, 2
        // Predicated region
        $region109: #{model_forward.1} parent=107 // pred_check
          %p7261 = pneg %p459
        $region110: #{model_forward.1} parent=107 // pred_check_branch
          %7263 = sbr.rel (%p7261) target = $region112
        $region111: #{model_forward.1} parent=107 // pred_region
          %p7264 = scmp.lt.s32.totalorder %s32, 1
          %s7265 = scalar_select %p7264, %s32, 1
          %s7266 = smul.addr %s7265, 2
          %s7267 = smul.addr %s7266, 4
          %s7268 = scalar_lea.vmem %s19, %s7267
        $region112: #{model_forward.1} parent=107 // pred_fallthru
          _
      $region108: #{model_forward.1} parent=5 // pred_fallthru
        _
    $region6: #{model_forward.1} parent=1 // loop_footer
      %s30 = sadd.s32 1, %s26
    $region7: #{model_forward.1} parent=1 // loop_footer_branch
      %25 = sbr.rel target = $region3
    $region8: #{model_forward.1} parent=1 // loop_exit
      _
    %7269 = vsyncpa [#allocation5], 1
    %s7270 = scalar_lea.sflag [#allocation5], 1
    %7271 = vsyncpa %s7270, 1

</llo_original>
